<compile_context>
chip_gen: v7x
topology: tpu7x:2x2x1
jax: 0.10.0
libtpu: 0.0.40
codegen_flags: <defaults>
</compile_context>

<pallas_src>
import functools

import jax
import jax.numpy as jnp
from jax.experimental import pallas as pl
from jax.experimental.pallas import tpu as pltpu

# Channel plan of the PyTorch Encoder: enc_l3 (1->32->64), pool2 (64->128),
# pool1 (128->256), pool0 (256->512).
_CHANNELS = ((1, 32), (32, 64), (64, 128), (128, 256), (256, 512))


def _pick_vmem_limit():
    """Generation-aware VMEM limit: ~3/4 of physical (≈96 MiB v5e/v6e, ≈48 MiB v7x)."""
    try:
        cap = getattr(pltpu.get_tpu_info(), "vmem_capacity_bytes", None)
        if cap:
            return max(32 * 1024 * 1024, min(int(cap) * 3 // 4, 112 * 1024 * 1024))
    except Exception:
        pass
    return 48 * 1024 * 1024


def _make_encoder_kernel(B, V3, K, eps):
    """Fused kernel: (ChebBN x2) -> (maxpool4 + ChebBN) x3, all resident in VMEM."""

    def bn_relu(y, gamma, beta):
        # BatchNorm1d (training mode, biased stats over batch*vertices), folded into
        # one per-channel FMA, then ReLU.  Conv bias is omitted (cancelled by mean).
        mean = jnp.mean(y, axis=0, keepdims=True)
        var = jnp.mean(jnp.square(y - mean), axis=0, keepdims=True)
        scale = gamma * jax.lax.rsqrt(var + eps)
        shift = beta - mean * scale
        return jnp.maximum(y * scale + shift, 0.0)

    def pool4(h, c):
        # HEALPix max-pool(4) on the live value: rows are batch-major (b*V + v) and
        # V % 4 == 0, so groups of 4 consecutive rows never cross a batch boundary.
        n = h.shape[0]
        return jnp.max(h.reshape(n // 4, 4, c), axis=1)

    def cheb_mxu_stage(h, L, w_ref, g_ref, beta_ref, tcat_ref, vin, cin, cout):
        # h: [B*vin, cin] f32 (batch-major rows).  Per-batch Chebyshev recursion
        # (B unrolled, plain [V,V] Laplacian); each order T_k is stored bf16 into
        # its lane slice of the tcat slab, keeping only 2 f32 arrays live.
        del cout  # implied by w_ref
        for bb in range(B):
            xb = h[bb * vin:(bb + 1) * vin, :]                       # [vin, cin]
            tcat_ref[pl.ds(bb * vin, vin), pl.ds(0, cin)] = xb.astype(jnp.bfloat16)
            if K > 1:
                t_prev = xb
                t_cur = jnp.dot(L, xb.astype(L.dtype),
                                preferred_element_type=jnp.float32)
                tcat_ref[pl.ds(bb * vin, vin), pl.ds(cin, cin)] = (
                    t_cur.astype(jnp.bfloat16))
                for k in range(2, K):
                    t_next = 2.0 * jnp.dot(L, t_cur.astype(L.dtype),
                                           preferred_element_type=jnp.float32) - t_prev
                    tcat_ref[pl.ds(bb * vin, vin), pl.ds(k * cin, cin)] = (
                        t_next.astype(jnp.bfloat16))
                    t_prev, t_cur = t_cur, t_next
        # One MXU contraction over (K, Cin) for the whole batch.
        y = jnp.dot(tcat_ref[...], w_ref[...], preferred_element_type=jnp.float32)
        return bn_relu(y, g_ref[...], beta_ref[...])                 # [B*vin, cout]

    def kernel(*refs):
        (x_ref, l3_ref, l2_ref, l1_ref, l0_ref,
         w0_ref, g0_ref, be0_ref,
         w1_ref, g1_ref, be1_ref,
         w2_ref, g2_ref, be2_ref,
         w3_ref, g3_ref, be3_ref,
         w4_ref, g4_ref, be4_ref,
         o0_ref, o1_ref, o2_ref, o3_ref,
         t1_ref, t2_ref, t3_ref, t4_ref) = refs

        L3 = l3_ref[...]

        # ---- stage 0 (first half of enc_l3): Cin=1.  Recursion in [V, B] layout,
        #      one L @ X matmul per order for the whole batch; filter contraction is
        #      a VPU broadcast-FMA (no [V,1]@[1,32] MXU outer products).
        xt = x_ref[...]                                              # [V3, B] f32
        ts = [xt]
        if K > 1:
            t_prev = xt
            t_cur = jnp.dot(L3, xt.astype(L3.dtype),
                            preferred_element_type=jnp.float32)
            ts.append(t_cur)
            for _ in range(2, K):
                t_next = 2.0 * jnp.dot(L3, t_cur.astype(L3.dtype),
                                       preferred_element_type=jnp.float32) - t_prev
                ts.append(t_next)
                t_prev, t_cur = t_cur, t_next
        w0 = w0_ref[...]                                             # [K, 32] f32
        ys = []
        for bb in range(B):
            yb = ts[0][:, bb:bb + 1] * w0[0:1, :]
            for k in range(1, K):
                yb = yb + ts[k][:, bb:bb + 1] * w0[k:k + 1, :]
            ys.append(yb)                                            # [V3, 32]
        h = bn_relu(jnp.concatenate(ys, axis=0), g0_ref[...], be0_ref[...])

        # ---- stage 1 (second half of enc_l3), full resolution, shared lap3.
        h3 = cheb_mxu_stage(h, L3, w1_ref, g1_ref, be1_ref, t1_ref, V3, 32, 64)
        o3_ref[...] = h3

        # ---- pool2 / pool1 / pool0: maxpool(4) on the live value + ChebBN + ReLU.
        h2 = cheb_mxu_stage(pool4(h3, 64), l2_ref[...], w2_ref, g2_ref, be2_ref,
                            t2_ref, V3 // 4, 64, 128)
        o2_ref[...] = h2
        h1 = cheb_mxu_stage(pool4(h2, 128), l1_ref[...], w3_ref, g3_ref, be3_ref,
                            t3_ref, V3 // 16, 128, 256)
        o1_ref[...] = h1
        h0 = cheb_mxu_stage(pool4(h1, 256), l0_ref[...], w4_ref, g4_ref, be4_ref,
                            t4_ref, V3 // 64, 256, 512)
        o0_ref[...] = h0

    return kernel


def encoder_forward(x, laps, params, *, kernel_size, eps=1e-5):
    """Spherical-UNet Encoder forward, one fused Pallas kernel.

    x:      [B, V3, 1] float32  (batch x vertices x features)
    laps:   (lap0, lap1, lap2, lap3) dense [Vi, Vi] rescaled Laplacians (coarse->fine)
    params: 5 tuples (weight[K, Cin, Cout], bias[Cout], gamma[Cout], beta[Cout])
    returns (x_enc0, x_enc1, x_enc2, x_enc3) in [batch, vertices, channels] layout.
    """
    B, V3, cin0 = x.shape
    assert cin0 == 1 and V3 % 64 == 0
    K = kernel_size

    lap3, lap2, lap1, lap0 = laps[3], laps[2], laps[1], laps[0]
    # Plain (non block-diagonal) Laplacians, bf16 operands, f32 accumulation.
    l_ops = [l.astype(jnp.bfloat16) for l in (lap3, lap2, lap1, lap0)]

    flat = []
    for i, (w, b, g, bt) in enumerate(params):
        kk, cin, cout = w.shape
        assert kk == K and (cin, cout) == _CHANNELS[i]
        if cin == 1:
            flat.append(w[:, 0, :].astype(jnp.float32))        # [K, 32] VPU path
        else:
            flat.append(w.reshape(K * cin, cout).astype(jnp.bfloat16))
        # conv bias `b` is intentionally NOT passed: with training-mode BatchNorm the
        # per-channel bias is exactly cancelled by the batch-mean subtraction.
        del b
        flat.append(g.reshape(1, cout).astype(jnp.float32))
        flat.append(bt.reshape(1, cout).astype(jnp.float32))

    x_vb = jnp.transpose(x[..., 0])                            # [V3, B]

    out_shapes = (
        jax.ShapeDtypeStruct((B * (V3 // 64), 512), jnp.float32),   # x_enc0
        jax.ShapeDtypeStruct((B * (V3 // 16), 256), jnp.float32),   # x_enc1
        jax.ShapeDtypeStruct((B * (V3 // 4), 128), jnp.float32),    # x_enc2
        jax.ShapeDtypeStruct((B * V3, 64), jnp.float32),            # x_enc3
    )
    # bf16 Chebyshev-order slabs for stages 1..4 (the MXU filter-contraction operand).
    scratch = [
        pltpu.VMEM((B * V3, K * 32), jnp.bfloat16),
        pltpu.VMEM((B * (V3 // 4), K * 64), jnp.bfloat16),
        pltpu.VMEM((B * (V3 // 16), K * 128), jnp.bfloat16),
        pltpu.VMEM((B * (V3 // 64), K * 256), jnp.bfloat16),
    ]
    n_in = 1 + 4 + 3 * 5

    o0, o1, o2, o3 = pl.pallas_call(
        _make_encoder_kernel(B, V3, K, eps),
        out_shape=out_shapes,
        in_specs=[pl.BlockSpec(memory_space=pltpu.MemorySpace.VMEM)] * n_in,
        out_specs=tuple(pl.BlockSpec(memory_space=pltpu.MemorySpace.VMEM)
                        for _ in out_shapes),
        scratch_shapes=scratch,
        compiler_params=pltpu.CompilerParams(vmem_limit_bytes=_pick_vmem_limit()),
    )(x_vb, *l_ops, *flat)

    # Rows are batch-major (b*V + v): these are pure reshapes (layout plumbing only).
    return (o0.reshape(B, V3 // 64, 512),
            o1.reshape(B, V3 // 16, 256),
            o2.reshape(B, V3 // 4, 128),
            o3.reshape(B, V3, 64))


def init_layer_params(key, K, cin, cout):
    """Deterministic synthetic params for one SphericalChebBN layer."""
    kw, kb = jax.random.split(key)
    std = (2.0 / (cin * K)) ** 0.5
    weight = jax.random.normal(kw, (K, cin, cout), jnp.float32) * std
    bias = jax.random.normal(kb, (cout,), jnp.float32) * 0.01
    gamma = jnp.ones((cout,), jnp.float32)
    beta = jnp.zeros((cout,), jnp.float32)
    return weight, bias, gamma, beta


def make_laplacian(key, V):
    """Deterministic dense symmetric stand-in for the (rescaled) sparse graph Laplacian."""
    m = jax.random.normal(key, (V, V), jnp.float32) * (1.0 / V)
    return 0.5 * (m + m.T)


if __name__ == "__main__":
    key = jax.random.PRNGKey(0)
    keys = jax.random.split(key, 10)

    B, V3, K = 2, 256, 3                      # small shapes: vertices 256 -> 64 -> 16 -> 4
    x = jax.random.normal(keys[0], (B, V3, 1), jnp.float32)

    lap3 = make_laplacian(keys[1], V3)
    lap2 = make_laplacian(keys[2], V3 // 4)
    lap1 = make_laplacian(keys[3], V3 // 16)
    lap0 = make_laplacian(keys[4], V3 // 64)
    laps = (lap0, lap1, lap2, lap3)           # coarsest .. finest, like the PyTorch list

    params = [init_layer_params(keys[5 + i], K, cin, cout)
              for i, (cin, cout) in enumerate(_CHANNELS)]

    encoder = jax.jit(functools.partial(encoder_forward, kernel_size=K))
    outs = encoder(x, laps, params)
    jax.block_until_ready(outs)

    x_enc0, x_enc1, x_enc2, x_enc3 = outs
    assert x_enc3.shape == (B, V3, 64)
    assert x_enc2.shape == (B, V3 // 4, 128)
    assert x_enc1.shape == (B, V3 // 16, 256)
    assert x_enc0.shape == (B, V3 // 64, 512)
    assert all(bool(jnp.isfinite(o).all()) for o in outs)
    print("KERNEL_OK")
</pallas_src>

<mosaic_0001>
module attributes {stable_mosaic.version = 11 : i64} {
  func.func @kernel(%arg0: memref<256x2xf32, #tpu.memory_space<vmem>>, %arg1: memref<256x256xbf16, #tpu.memory_space<vmem>>, %arg2: memref<64x64xbf16, #tpu.memory_space<vmem>>, %arg3: memref<16x16xbf16, #tpu.memory_space<vmem>>, %arg4: memref<4x4xbf16, #tpu.memory_space<vmem>>, %arg5: memref<3x32xf32, #tpu.memory_space<vmem>>, %arg6: memref<1x32xf32, #tpu.memory_space<vmem>>, %arg7: memref<1x32xf32, #tpu.memory_space<vmem>>, %arg8: memref<96x64xbf16, #tpu.memory_space<vmem>>, %arg9: memref<1x64xf32, #tpu.memory_space<vmem>>, %arg10: memref<1x64xf32, #tpu.memory_space<vmem>>, %arg11: memref<192x128xbf16, #tpu.memory_space<vmem>>, %arg12: memref<1x128xf32, #tpu.memory_space<vmem>>, %arg13: memref<1x128xf32, #tpu.memory_space<vmem>>, %arg14: memref<384x256xbf16, #tpu.memory_space<vmem>>, %arg15: memref<1x256xf32, #tpu.memory_space<vmem>>, %arg16: memref<1x256xf32, #tpu.memory_space<vmem>>, %arg17: memref<768x512xbf16, #tpu.memory_space<vmem>>, %arg18: memref<1x512xf32, #tpu.memory_space<vmem>>, %arg19: memref<1x512xf32, #tpu.memory_space<vmem>>, %arg20: memref<8x512xf32, #tpu.memory_space<vmem>>, %arg21: memref<32x256xf32, #tpu.memory_space<vmem>>, %arg22: memref<128x128xf32, #tpu.memory_space<vmem>>, %arg23: memref<512x64xf32, #tpu.memory_space<vmem>>, %arg24: memref<512x96xbf16, #tpu.memory_space<vmem>>, %arg25: memref<128x192xbf16, #tpu.memory_space<vmem>>, %arg26: memref<32x384xbf16, #tpu.memory_space<vmem>>, %arg27: memref<8x768xbf16, #tpu.memory_space<vmem>>) attributes {dimension_semantics = [], scalar_prefetch = 0 : i64, scratch_operands = 4 : i64, tpu.core_type = #tpu.core_type<tc>} {
    %c0 = arith.constant 0 : index
    %c0_0 = arith.constant 0 : index
    %0 = vector.load %arg1[%c0, %c0_0] : memref<256x256xbf16, #tpu.memory_space<vmem>>, vector<256x256xbf16>
    %c0_1 = arith.constant 0 : index
    %c0_2 = arith.constant 0 : index
    %1 = vector.load %arg0[%c0_1, %c0_2] : memref<256x2xf32, #tpu.memory_space<vmem>>, vector<256x2xf32>
    %2 = arith.truncf %1 : vector<256x2xf32> to vector<256x2xbf16>
    %cst = arith.constant dense<0.000000e+00> : vector<256x2xf32>
    %3 = tpu.matmul %0, %2, %cst {dimension_numbers = #tpu.dot_dimension_numbers<[1], [0], [0], [1], [0, 0, 1, 1], [], []>} : vector<256x256xbf16>, vector<256x2xbf16>, vector<256x2xf32> -> vector<256x2xf32>
    %4 = arith.truncf %3 : vector<256x2xf32> to vector<256x2xbf16>
    %cst_3 = arith.constant dense<0.000000e+00> : vector<256x2xf32>
    %5 = tpu.matmul %0, %4, %cst_3 {dimension_numbers = #tpu.dot_dimension_numbers<[1], [0], [0], [1], [0, 0, 1, 1], [], []>} : vector<256x256xbf16>, vector<256x2xbf16>, vector<256x2xf32> -> vector<256x2xf32>
    %cst_4 = arith.constant 2.000000e+00 : f32
    %6 = vector.broadcast %cst_4 : f32 to vector<256x2xf32>
    %7 = arith.mulf %6, %5 : vector<256x2xf32>
    %8 = arith.subf %7, %1 : vector<256x2xf32>
    %c0_5 = arith.constant 0 : index
    %c0_6 = arith.constant 0 : index
    %9 = vector.load %arg5[%c0_5, %c0_6] : memref<3x32xf32, #tpu.memory_space<vmem>>, vector<3x32xf32>
    %10 = vector.extract_strided_slice %1 {offsets = [0, 0], sizes = [256, 1], strides = [1, 1]} : vector<256x2xf32> to vector<256x1xf32>
    %11 = vector.extract_strided_slice %9 {offsets = [0, 0], sizes = [1, 32], strides = [1, 1]} : vector<3x32xf32> to vector<1x32xf32>
    %12 = vector.broadcast %10 : vector<256x1xf32> to vector<256x32xf32>
    %13 = vector.broadcast %11 : vector<1x32xf32> to vector<256x32xf32>
    %14 = arith.mulf %12, %13 : vector<256x32xf32>
    %15 = vector.extract_strided_slice %3 {offsets = [0, 0], sizes = [256, 1], strides = [1, 1]} : vector<256x2xf32> to vector<256x1xf32>
    %16 = vector.extract_strided_slice %9 {offsets = [1, 0], sizes = [1, 32], strides = [1, 1]} : vector<3x32xf32> to vector<1x32xf32>
    %17 = vector.broadcast %15 : vector<256x1xf32> to vector<256x32xf32>
    %18 = vector.broadcast %16 : vector<1x32xf32> to vector<256x32xf32>
    %19 = arith.mulf %17, %18 : vector<256x32xf32>
    %20 = arith.addf %14, %19 : vector<256x32xf32>
    %21 = vector.extract_strided_slice %8 {offsets = [0, 0], sizes = [256, 1], strides = [1, 1]} : vector<256x2xf32> to vector<256x1xf32>
    %22 = vector.extract_strided_slice %9 {offsets = [2, 0], sizes = [1, 32], strides = [1, 1]} : vector<3x32xf32> to vector<1x32xf32>
    %23 = vector.broadcast %21 : vector<256x1xf32> to vector<256x32xf32>
    %24 = vector.broadcast %22 : vector<1x32xf32> to vector<256x32xf32>
    %25 = arith.mulf %23, %24 : vector<256x32xf32>
    %26 = arith.addf %20, %25 : vector<256x32xf32>
    %27 = vector.extract_strided_slice %1 {offsets = [0, 1], sizes = [256, 1], strides = [1, 1]} : vector<256x2xf32> to vector<256x1xf32>
    %28 = vector.extract_strided_slice %9 {offsets = [0, 0], sizes = [1, 32], strides = [1, 1]} : vector<3x32xf32> to vector<1x32xf32>
    %29 = vector.broadcast %27 : vector<256x1xf32> to vector<256x32xf32>
    %30 = vector.broadcast %28 : vector<1x32xf32> to vector<256x32xf32>
    %31 = arith.mulf %29, %30 : vector<256x32xf32>
    %32 = vector.extract_strided_slice %3 {offsets = [0, 1], sizes = [256, 1], strides = [1, 1]} : vector<256x2xf32> to vector<256x1xf32>
    %33 = vector.extract_strided_slice %9 {offsets = [1, 0], sizes = [1, 32], strides = [1, 1]} : vector<3x32xf32> to vector<1x32xf32>
    %34 = vector.broadcast %32 : vector<256x1xf32> to vector<256x32xf32>
    %35 = vector.broadcast %33 : vector<1x32xf32> to vector<256x32xf32>
    %36 = arith.mulf %34, %35 : vector<256x32xf32>
    %37 = arith.addf %31, %36 : vector<256x32xf32>
    %38 = vector.extract_strided_slice %8 {offsets = [0, 1], sizes = [256, 1], strides = [1, 1]} : vector<256x2xf32> to vector<256x1xf32>
    %39 = vector.extract_strided_slice %9 {offsets = [2, 0], sizes = [1, 32], strides = [1, 1]} : vector<3x32xf32> to vector<1x32xf32>
    %40 = vector.broadcast %38 : vector<256x1xf32> to vector<256x32xf32>
    %41 = vector.broadcast %39 : vector<1x32xf32> to vector<256x32xf32>
    %42 = arith.mulf %40, %41 : vector<256x32xf32>
    %43 = arith.addf %37, %42 : vector<256x32xf32>
    %44 = tpu.concatenate %26, %43 in 0 : vector<256x32xf32>, vector<256x32xf32> -> vector<512x32xf32>
    %c0_7 = arith.constant 0 : index
    %c0_8 = arith.constant 0 : index
    %45 = vector.load %arg6[%c0_7, %c0_8] : memref<1x32xf32, #tpu.memory_space<vmem>>, vector<1x32xf32>
    %c0_9 = arith.constant 0 : index
    %c0_10 = arith.constant 0 : index
    %46 = vector.load %arg7[%c0_9, %c0_10] : memref<1x32xf32, #tpu.memory_space<vmem>>, vector<1x32xf32>
    %cst_11 = arith.constant dense<0.000000e+00> : vector<32xf32>
    %47 = vector.multi_reduction <add>, %44, %cst_11 [0] : vector<512x32xf32> to vector<32xf32>
    %48 = vector.shape_cast %47 : vector<32xf32> to vector<1x32xf32>
    %cst_12 = arith.constant 5.120000e+02 : f32
    %49 = vector.broadcast %cst_12 : f32 to vector<1x32xf32>
    %50 = arith.divf %48, %49 : vector<1x32xf32>
    %51 = vector.broadcast %50 : vector<1x32xf32> to vector<512x32xf32>
    %52 = arith.subf %44, %51 : vector<512x32xf32>
    %53 = arith.mulf %52, %52 : vector<512x32xf32>
    %cst_13 = arith.constant dense<0.000000e+00> : vector<32xf32>
    %54 = vector.multi_reduction <add>, %53, %cst_13 [0] : vector<512x32xf32> to vector<32xf32>
    %55 = vector.shape_cast %54 : vector<32xf32> to vector<1x32xf32>
    %cst_14 = arith.constant 5.120000e+02 : f32
    %56 = vector.broadcast %cst_14 : f32 to vector<1x32xf32>
    %57 = arith.divf %55, %56 : vector<1x32xf32>
    %cst_15 = arith.constant 9.99999974E-6 : f32
    %58 = vector.broadcast %cst_15 : f32 to vector<1x32xf32>
    %59 = arith.addf %57, %58 : vector<1x32xf32>
    %60 = math.rsqrt %59 : vector<1x32xf32>
    %61 = arith.mulf %45, %60 : vector<1x32xf32>
    %62 = arith.mulf %50, %61 : vector<1x32xf32>
    %63 = arith.subf %46, %62 : vector<1x32xf32>
    %64 = vector.broadcast %61 : vector<1x32xf32> to vector<512x32xf32>
    %65 = arith.mulf %44, %64 : vector<512x32xf32>
    %66 = vector.broadcast %63 : vector<1x32xf32> to vector<512x32xf32>
    %67 = arith.addf %65, %66 : vector<512x32xf32>
    %cst_16 = arith.constant 0.000000e+00 : f32
    %68 = vector.broadcast %cst_16 : f32 to vector<512x32xf32>
    %69 = arith.maximumf %67, %68 : vector<512x32xf32>
    %70 = vector.extract_strided_slice %69 {offsets = [0, 0], sizes = [256, 32], strides = [1, 1]} : vector<512x32xf32> to vector<256x32xf32>
    %71 = arith.truncf %70 : vector<256x32xf32> to vector<256x32xbf16>
    %c0_17 = arith.constant 0 : index
    %c0_18 = arith.constant 0 : index
    %72 = vector.load %arg24[%c0_17, %c0_18] : memref<512x96xbf16, #tpu.memory_space<vmem>>, vector<256x32xbf16>
    tpu.vector_store %arg24[%c0_17, %c0_18], %71 {strides = array<i32>} : memref<512x96xbf16, #tpu.memory_space<vmem>>, vector<256x32xbf16>,
    %73 = arith.truncf %70 : vector<256x32xf32> to vector<256x32xbf16>
    %cst_19 = arith.constant dense<0.000000e+00> : vector<256x32xf32>
    %74 = tpu.matmul %0, %73, %cst_19 {dimension_numbers = #tpu.dot_dimension_numbers<[1], [0], [0], [1], [0, 0, 1, 1], [], []>} : vector<256x256xbf16>, vector<256x32xbf16>, vector<256x32xf32> -> vector<256x32xf32>
    %75 = arith.truncf %74 : vector<256x32xf32> to vector<256x32xbf16>
    %c0_20 = arith.constant 0 : index
    %c32 = arith.constant 32 : index
    %76 = vector.load %arg24[%c0_20, %c32] : memref<512x96xbf16, #tpu.memory_space<vmem>>, vector<256x32xbf16>
    tpu.vector_store %arg24[%c0_20, %c32], %75 {strides = array<i32>} : memref<512x96xbf16, #tpu.memory_space<vmem>>, vector<256x32xbf16>,
    %77 = arith.truncf %74 : vector<256x32xf32> to vector<256x32xbf16>
    %cst_21 = arith.constant dense<0.000000e+00> : vector<256x32xf32>
    %78 = tpu.matmul %0, %77, %cst_21 {dimension_numbers = #tpu.dot_dimension_numbers<[1], [0], [0], [1], [0, 0, 1, 1], [], []>} : vector<256x256xbf16>, vector<256x32xbf16>, vector<256x32xf32> -> vector<256x32xf32>
    %cst_22 = arith.constant 2.000000e+00 : f32
    %79 = vector.broadcast %cst_22 : f32 to vector<256x32xf32>
    %80 = arith.mulf %79, %78 : vector<256x32xf32>
    %81 = arith.subf %80, %70 : vector<256x32xf32>
    %82 = arith.truncf %81 : vector<256x32xf32> to vector<256x32xbf16>
    %c0_23 = arith.constant 0 : index
    %c64 = arith.constant 64 : index
    %83 = vector.load %arg24[%c0_23, %c64] : memref<512x96xbf16, #tpu.memory_space<vmem>>, vector<256x32xbf16>
    tpu.vector_store %arg24[%c0_23, %c64], %82 {strides = array<i32>} : memref<512x96xbf16, #tpu.memory_space<vmem>>, vector<256x32xbf16>,
    %84 = vector.extract_strided_slice %69 {offsets = [256, 0], sizes = [256, 32], strides = [1, 1]} : vector<512x32xf32> to vector<256x32xf32>
    %85 = arith.truncf %84 : vector<256x32xf32> to vector<256x32xbf16>
    %c256 = arith.constant 256 : index
    %c0_24 = arith.constant 0 : index
    %86 = vector.load %arg24[%c256, %c0_24] : memref<512x96xbf16, #tpu.memory_space<vmem>>, vector<256x32xbf16>
    tpu.vector_store %arg24[%c256, %c0_24], %85 {strides = array<i32>} : memref<512x96xbf16, #tpu.memory_space<vmem>>, vector<256x32xbf16>,
    %87 = arith.truncf %84 : vector<256x32xf32> to vector<256x32xbf16>
    %cst_25 = arith.constant dense<0.000000e+00> : vector<256x32xf32>
    %88 = tpu.matmul %0, %87, %cst_25 {dimension_numbers = #tpu.dot_dimension_numbers<[1], [0], [0], [1], [0, 0, 1, 1], [], []>} : vector<256x256xbf16>, vector<256x32xbf16>, vector<256x32xf32> -> vector<256x32xf32>
    %89 = arith.truncf %88 : vector<256x32xf32> to vector<256x32xbf16>
    %c256_26 = arith.constant 256 : index
    %c32_27 = arith.constant 32 : index
    %90 = vector.load %arg24[%c256_26, %c32_27] : memref<512x96xbf16, #tpu.memory_space<vmem>>, vector<256x32xbf16>
    tpu.vector_store %arg24[%c256_26, %c32_27], %89 {strides = array<i32>} : memref<512x96xbf16, #tpu.memory_space<vmem>>, vector<256x32xbf16>,
    %91 = arith.truncf %88 : vector<256x32xf32> to vector<256x32xbf16>
    %cst_28 = arith.constant dense<0.000000e+00> : vector<256x32xf32>
    %92 = tpu.matmul %0, %91, %cst_28 {dimension_numbers = #tpu.dot_dimension_numbers<[1], [0], [0], [1], [0, 0, 1, 1], [], []>} : vector<256x256xbf16>, vector<256x32xbf16>, vector<256x32xf32> -> vector<256x32xf32>
    %cst_29 = arith.constant 2.000000e+00 : f32
    %93 = vector.broadcast %cst_29 : f32 to vector<256x32xf32>
    %94 = arith.mulf %93, %92 : vector<256x32xf32>
    %95 = arith.subf %94, %84 : vector<256x32xf32>
    %96 = arith.truncf %95 : vector<256x32xf32> to vector<256x32xbf16>
    %c256_30 = arith.constant 256 : index
    %c64_31 = arith.constant 64 : index
    %97 = vector.load %arg24[%c256_30, %c64_31] : memref<512x96xbf16, #tpu.memory_space<vmem>>, vector<256x32xbf16>
    tpu.vector_store %arg24[%c256_30, %c64_31], %96 {strides = array<i32>} : memref<512x96xbf16, #tpu.memory_space<vmem>>, vector<256x32xbf16>,
    %c0_32 = arith.constant 0 : index
    %c0_33 = arith.constant 0 : index
    %98 = vector.load %arg24[%c0_32, %c0_33] : memref<512x96xbf16, #tpu.memory_space<vmem>>, vector<512x96xbf16>
    %c0_34 = arith.constant 0 : index
    %c0_35 = arith.constant 0 : index
    %99 = vector.load %arg8[%c0_34, %c0_35] : memref<96x64xbf16, #tpu.memory_space<vmem>>, vector<96x64xbf16>
    %cst_36 = arith.constant dense<0.000000e+00> : vector<512x64xf32>
    %100 = tpu.matmul %98, %99, %cst_36 {dimension_numbers = #tpu.dot_dimension_numbers<[1], [0], [0], [1], [0, 0, 1, 1], [], []>} : vector<512x96xbf16>, vector<96x64xbf16>, vector<512x64xf32> -> vector<512x64xf32>
    %c0_37 = arith.constant 0 : index
    %c0_38 = arith.constant 0 : index
    %101 = vector.load %arg9[%c0_37, %c0_38] : memref<1x64xf32, #tpu.memory_space<vmem>>, vector<1x64xf32>
    %c0_39 = arith.constant 0 : index
    %c0_40 = arith.constant 0 : index
    %102 = vector.load %arg10[%c0_39, %c0_40] : memref<1x64xf32, #tpu.memory_space<vmem>>, vector<1x64xf32>
    %cst_41 = arith.constant dense<0.000000e+00> : vector<64xf32>
    %103 = vector.multi_reduction <add>, %100, %cst_41 [0] : vector<512x64xf32> to vector<64xf32>
    %104 = vector.shape_cast %103 : vector<64xf32> to vector<1x64xf32>
    %cst_42 = arith.constant 5.120000e+02 : f32
    %105 = vector.broadcast %cst_42 : f32 to vector<1x64xf32>
    %106 = arith.divf %104, %105 : vector<1x64xf32>
    %107 = vector.broadcast %106 : vector<1x64xf32> to vector<512x64xf32>
    %108 = arith.subf %100, %107 : vector<512x64xf32>
    %109 = arith.mulf %108, %108 : vector<512x64xf32>
    %cst_43 = arith.constant dense<0.000000e+00> : vector<64xf32>
    %110 = vector.multi_reduction <add>, %109, %cst_43 [0] : vector<512x64xf32> to vector<64xf32>
    %111 = vector.shape_cast %110 : vector<64xf32> to vector<1x64xf32>
    %cst_44 = arith.constant 5.120000e+02 : f32
    %112 = vector.broadcast %cst_44 : f32 to vector<1x64xf32>
    %113 = arith.divf %111, %112 : vector<1x64xf32>
    %cst_45 = arith.constant 9.99999974E-6 : f32
    %114 = vector.broadcast %cst_45 : f32 to vector<1x64xf32>
    %115 = arith.addf %113, %114 : vector<1x64xf32>
    %116 = math.rsqrt %115 : vector<1x64xf32>
    %117 = arith.mulf %101, %116 : vector<1x64xf32>
    %118 = arith.mulf %106, %117 : vector<1x64xf32>
    %119 = arith.subf %102, %118 : vector<1x64xf32>
    %120 = vector.broadcast %117 : vector<1x64xf32> to vector<512x64xf32>
    %121 = arith.mulf %100, %120 : vector<512x64xf32>
    %122 = vector.broadcast %119 : vector<1x64xf32> to vector<512x64xf32>
    %123 = arith.addf %121, %122 : vector<512x64xf32>
    %cst_46 = arith.constant 0.000000e+00 : f32
    %124 = vector.broadcast %cst_46 : f32 to vector<512x64xf32>
    %125 = arith.maximumf %123, %124 : vector<512x64xf32>
    %c0_47 = arith.constant 0 : index
    %c0_48 = arith.constant 0 : index
    %126 = vector.load %arg23[%c0_47, %c0_48] : memref<512x64xf32, #tpu.memory_space<vmem>>, vector<512x64xf32>
    tpu.vector_store %arg23[%c0_47, %c0_48], %125 {strides = array<i32>} : memref<512x64xf32, #tpu.memory_space<vmem>>, vector<512x64xf32>,
    %127 = vector.shape_cast %125 : vector<512x64xf32> to vector<128x4x64xf32>
    %cst_49 = arith.constant dense<0xFF800000> : vector<128x64xf32>
    %128 = vector.multi_reduction <maximumf>, %127, %cst_49 [1] : vector<128x4x64xf32> to vector<128x64xf32>
    %c0_50 = arith.constant 0 : index
    %c0_51 = arith.constant 0 : index
    %129 = vector.load %arg2[%c0_50, %c0_51] : memref<64x64xbf16, #tpu.memory_space<vmem>>, vector<64x64xbf16>
    %130 = vector.extract_strided_slice %128 {offsets = [0, 0], sizes = [64, 64], strides = [1, 1]} : vector<128x64xf32> to vector<64x64xf32>
    %131 = arith.truncf %130 : vector<64x64xf32> to vector<64x64xbf16>
    %c0_52 = arith.constant 0 : index
    %c0_53 = arith.constant 0 : index
    %132 = vector.load %arg25[%c0_52, %c0_53] : memref<128x192xbf16, #tpu.memory_space<vmem>>, vector<64x64xbf16>
    tpu.vector_store %arg25[%c0_52, %c0_53], %131 {strides = array<i32>} : memref<128x192xbf16, #tpu.memory_space<vmem>>, vector<64x64xbf16>,
    %133 = arith.truncf %130 : vector<64x64xf32> to vector<64x64xbf16>
    %cst_54 = arith.constant dense<0.000000e+00> : vector<64x64xf32>
    %134 = tpu.matmul %129, %133, %cst_54 {dimension_numbers = #tpu.dot_dimension_numbers<[1], [0], [0], [1], [0, 0, 1, 1], [], []>} : vector<64x64xbf16>, vector<64x64xbf16>, vector<64x64xf32> -> vector<64x64xf32>
    %135 = arith.truncf %134 : vector<64x64xf32> to vector<64x64xbf16>
    %c0_55 = arith.constant 0 : index
    %c64_56 = arith.constant 64 : index
    %136 = vector.load %arg25[%c0_55, %c64_56] : memref<128x192xbf16, #tpu.memory_space<vmem>>, vector<64x64xbf16>
    tpu.vector_store %arg25[%c0_55, %c64_56], %135 {strides = array<i32>} : memref<128x192xbf16, #tpu.memory_space<vmem>>, vector<64x64xbf16>,
    %137 = arith.truncf %134 : vector<64x64xf32> to vector<64x64xbf16>
    %cst_57 = arith.constant dense<0.000000e+00> : vector<64x64xf32>
    %138 = tpu.matmul %129, %137, %cst_57 {dimension_numbers = #tpu.dot_dimension_numbers<[1], [0], [0], [1], [0, 0, 1, 1], [], []>} : vector<64x64xbf16>, vector<64x64xbf16>, vector<64x64xf32> -> vector<64x64xf32>
    %cst_58 = arith.constant 2.000000e+00 : f32
    %139 = vector.broadcast %cst_58 : f32 to vector<64x64xf32>
    %140 = arith.mulf %139, %138 : vector<64x64xf32>
    %141 = arith.subf %140, %130 : vector<64x64xf32>
    %142 = arith.truncf %141 : vector<64x64xf32> to vector<64x64xbf16>
    %c0_59 = arith.constant 0 : index
    %c128 = arith.constant 128 : index
    %143 = vector.load %arg25[%c0_59, %c128] : memref<128x192xbf16, #tpu.memory_space<vmem>>, vector<64x64xbf16>
    tpu.vector_store %arg25[%c0_59, %c128], %142 {strides = array<i32>} : memref<128x192xbf16, #tpu.memory_space<vmem>>, vector<64x64xbf16>,
    %144 = vector.extract_strided_slice %128 {offsets = [64, 0], sizes = [64, 64], strides = [1, 1]} : vector<128x64xf32> to vector<64x64xf32>
    %145 = arith.truncf %144 : vector<64x64xf32> to vector<64x64xbf16>
    %c64_60 = arith.constant 64 : index
    %c0_61 = arith.constant 0 : index
    %146 = vector.load %arg25[%c64_60, %c0_61] : memref<128x192xbf16, #tpu.memory_space<vmem>>, vector<64x64xbf16>
    tpu.vector_store %arg25[%c64_60, %c0_61], %145 {strides = array<i32>} : memref<128x192xbf16, #tpu.memory_space<vmem>>, vector<64x64xbf16>,
    %147 = arith.truncf %144 : vector<64x64xf32> to vector<64x64xbf16>
    %cst_62 = arith.constant dense<0.000000e+00> : vector<64x64xf32>
    %148 = tpu.matmul %129, %147, %cst_62 {dimension_numbers = #tpu.dot_dimension_numbers<[1], [0], [0], [1], [0, 0, 1, 1], [], []>} : vector<64x64xbf16>, vector<64x64xbf16>, vector<64x64xf32> -> vector<64x64xf32>
    %149 = arith.truncf %148 : vector<64x64xf32> to vector<64x64xbf16>
    %c64_63 = arith.constant 64 : index
    %c64_64 = arith.constant 64 : index
    %150 = vector.load %arg25[%c64_63, %c64_64] : memref<128x192xbf16, #tpu.memory_space<vmem>>, vector<64x64xbf16>
    tpu.vector_store %arg25[%c64_63, %c64_64], %149 {strides = array<i32>} : memref<128x192xbf16, #tpu.memory_space<vmem>>, vector<64x64xbf16>,
    %151 = arith.truncf %148 : vector<64x64xf32> to vector<64x64xbf16>
    %cst_65 = arith.constant dense<0.000000e+00> : vector<64x64xf32>
    %152 = tpu.matmul %129, %151, %cst_65 {dimension_numbers = #tpu.dot_dimension_numbers<[1], [0], [0], [1], [0, 0, 1, 1], [], []>} : vector<64x64xbf16>, vector<64x64xbf16>, vector<64x64xf32> -> vector<64x64xf32>
    %cst_66 = arith.constant 2.000000e+00 : f32
    %153 = vector.broadcast %cst_66 : f32 to vector<64x64xf32>
    %154 = arith.mulf %153, %152 : vector<64x64xf32>
    %155 = arith.subf %154, %144 : vector<64x64xf32>
    %156 = arith.truncf %155 : vector<64x64xf32> to vector<64x64xbf16>
    %c64_67 = arith.constant 64 : index
    %c128_68 = arith.constant 128 : index
    %157 = vector.load %arg25[%c64_67, %c128_68] : memref<128x192xbf16, #tpu.memory_space<vmem>>, vector<64x64xbf16>
    tpu.vector_store %arg25[%c64_67, %c128_68], %156 {strides = array<i32>} : memref<128x192xbf16, #tpu.memory_space<vmem>>, vector<64x64xbf16>,
    %c0_69 = arith.constant 0 : index
    %c0_70 = arith.constant 0 : index
    %158 = vector.load %arg25[%c0_69, %c0_70] : memref<128x192xbf16, #tpu.memory_space<vmem>>, vector<128x192xbf16>
    %c0_71 = arith.constant 0 : index
    %c0_72 = arith.constant 0 : index
    %159 = vector.load %arg11[%c0_71, %c0_72] : memref<192x128xbf16, #tpu.memory_space<vmem>>, vector<192x128xbf16>
    %cst_73 = arith.constant dense<0.000000e+00> : vector<128x128xf32>
    %160 = tpu.matmul %158, %159, %cst_73 {dimension_numbers = #tpu.dot_dimension_numbers<[1], [0], [0], [1], [0, 0, 1, 1], [], []>} : vector<128x192xbf16>, vector<192x128xbf16>, vector<128x128xf32> -> vector<128x128xf32>
    %c0_74 = arith.constant 0 : index
    %c0_75 = arith.constant 0 : index
    %161 = vector.load %arg12[%c0_74, %c0_75] : memref<1x128xf32, #tpu.memory_space<vmem>>, vector<1x128xf32>
    %c0_76 = arith.constant 0 : index
    %c0_77 = arith.constant 0 : index
    %162 = vector.load %arg13[%c0_76, %c0_77] : memref<1x128xf32, #tpu.memory_space<vmem>>, vector<1x128xf32>
    %cst_78 = arith.constant dense<0.000000e+00> : vector<128xf32>
    %163 = vector.multi_reduction <add>, %160, %cst_78 [0] : vector<128x128xf32> to vector<128xf32>
    %164 = vector.shape_cast %163 : vector<128xf32> to vector<1x128xf32>
    %cst_79 = arith.constant 1.280000e+02 : f32
    %165 = vector.broadcast %cst_79 : f32 to vector<1x128xf32>
    %166 = arith.divf %164, %165 : vector<1x128xf32>
    %167 = vector.broadcast %166 : vector<1x128xf32> to vector<128x128xf32>
    %168 = arith.subf %160, %167 : vector<128x128xf32>
    %169 = arith.mulf %168, %168 : vector<128x128xf32>
    %cst_80 = arith.constant dense<0.000000e+00> : vector<128xf32>
    %170 = vector.multi_reduction <add>, %169, %cst_80 [0] : vector<128x128xf32> to vector<128xf32>
    %171 = vector.shape_cast %170 : vector<128xf32> to vector<1x128xf32>
    %cst_81 = arith.constant 1.280000e+02 : f32
    %172 = vector.broadcast %cst_81 : f32 to vector<1x128xf32>
    %173 = arith.divf %171, %172 : vector<1x128xf32>
    %cst_82 = arith.constant 9.99999974E-6 : f32
    %174 = vector.broadcast %cst_82 : f32 to vector<1x128xf32>
    %175 = arith.addf %173, %174 : vector<1x128xf32>
    %176 = math.rsqrt %175 : vector<1x128xf32>
    %177 = arith.mulf %161, %176 : vector<1x128xf32>
    %178 = arith.mulf %166, %177 : vector<1x128xf32>
    %179 = arith.subf %162, %178 : vector<1x128xf32>
    %180 = vector.broadcast %177 : vector<1x128xf32> to vector<128x128xf32>
    %181 = arith.mulf %160, %180 : vector<128x128xf32>
    %182 = vector.broadcast %179 : vector<1x128xf32> to vector<128x128xf32>
    %183 = arith.addf %181, %182 : vector<128x128xf32>
    %cst_83 = arith.constant 0.000000e+00 : f32
    %184 = vector.broadcast %cst_83 : f32 to vector<128x128xf32>
    %185 = arith.maximumf %183, %184 : vector<128x128xf32>
    %c0_84 = arith.constant 0 : index
    %c0_85 = arith.constant 0 : index
    %186 = vector.load %arg22[%c0_84, %c0_85] : memref<128x128xf32, #tpu.memory_space<vmem>>, vector<128x128xf32>
    tpu.vector_store %arg22[%c0_84, %c0_85], %185 {strides = array<i32>} : memref<128x128xf32, #tpu.memory_space<vmem>>, vector<128x128xf32>,
    %187 = vector.shape_cast %185 : vector<128x128xf32> to vector<32x4x128xf32>
    %cst_86 = arith.constant dense<0xFF800000> : vector<32x128xf32>
    %188 = vector.multi_reduction <maximumf>, %187, %cst_86 [1] : vector<32x4x128xf32> to vector<32x128xf32>
    %c0_87 = arith.constant 0 : index
    %c0_88 = arith.constant 0 : index
    %189 = vector.load %arg3[%c0_87, %c0_88] : memref<16x16xbf16, #tpu.memory_space<vmem>>, vector<16x16xbf16>
    %190 = vector.extract_strided_slice %188 {offsets = [0, 0], sizes = [16, 128], strides = [1, 1]} : vector<32x128xf32> to vector<16x128xf32>
    %191 = arith.truncf %190 : vector<16x128xf32> to vector<16x128xbf16>
    %c0_89 = arith.constant 0 : index
    %c0_90 = arith.constant 0 : index
    %192 = vector.load %arg26[%c0_89, %c0_90] : memref<32x384xbf16, #tpu.memory_space<vmem>>, vector<16x128xbf16>
    tpu.vector_store %arg26[%c0_89, %c0_90], %191 {strides = array<i32>} : memref<32x384xbf16, #tpu.memory_space<vmem>>, vector<16x128xbf16>,
    %193 = arith.truncf %190 : vector<16x128xf32> to vector<16x128xbf16>
    %cst_91 = arith.constant dense<0.000000e+00> : vector<16x128xf32>
    %194 = tpu.matmul %189, %193, %cst_91 {dimension_numbers = #tpu.dot_dimension_numbers<[1], [0], [0], [1], [0, 0, 1, 1], [], []>} : vector<16x16xbf16>, vector<16x128xbf16>, vector<16x128xf32> -> vector<16x128xf32>
    %195 = arith.truncf %194 : vector<16x128xf32> to vector<16x128xbf16>
    %c0_92 = arith.constant 0 : index
    %c128_93 = arith.constant 128 : index
    %196 = vector.load %arg26[%c0_92, %c128_93] : memref<32x384xbf16, #tpu.memory_space<vmem>>, vector<16x128xbf16>
    tpu.vector_store %arg26[%c0_92, %c128_93], %195 {strides = array<i32>} : memref<32x384xbf16, #tpu.memory_space<vmem>>, vector<16x128xbf16>,
    %197 = arith.truncf %194 : vector<16x128xf32> to vector<16x128xbf16>
    %cst_94 = arith.constant dense<0.000000e+00> : vector<16x128xf32>
    %198 = tpu.matmul %189, %197, %cst_94 {dimension_numbers = #tpu.dot_dimension_numbers<[1], [0], [0], [1], [0, 0, 1, 1], [], []>} : vector<16x16xbf16>, vector<16x128xbf16>, vector<16x128xf32> -> vector<16x128xf32>
    %cst_95 = arith.constant 2.000000e+00 : f32
    %199 = vector.broadcast %cst_95 : f32 to vector<16x128xf32>
    %200 = arith.mulf %199, %198 : vector<16x128xf32>
    %201 = arith.subf %200, %190 : vector<16x128xf32>
    %202 = arith.truncf %201 : vector<16x128xf32> to vector<16x128xbf16>
    %c0_96 = arith.constant 0 : index
    %c256_97 = arith.constant 256 : index
    %203 = vector.load %arg26[%c0_96, %c256_97] : memref<32x384xbf16, #tpu.memory_space<vmem>>, vector<16x128xbf16>
    tpu.vector_store %arg26[%c0_96, %c256_97], %202 {strides = array<i32>} : memref<32x384xbf16, #tpu.memory_space<vmem>>, vector<16x128xbf16>,
    %204 = vector.extract_strided_slice %188 {offsets = [16, 0], sizes = [16, 128], strides = [1, 1]} : vector<32x128xf32> to vector<16x128xf32>
    %205 = arith.truncf %204 : vector<16x128xf32> to vector<16x128xbf16>
    %c16 = arith.constant 16 : index
    %c0_98 = arith.constant 0 : index
    %206 = vector.load %arg26[%c16, %c0_98] : memref<32x384xbf16, #tpu.memory_space<vmem>>, vector<16x128xbf16>
    tpu.vector_store %arg26[%c16, %c0_98], %205 {strides = array<i32>} : memref<32x384xbf16, #tpu.memory_space<vmem>>, vector<16x128xbf16>,
    %207 = arith.truncf %204 : vector<16x128xf32> to vector<16x128xbf16>
    %cst_99 = arith.constant dense<0.000000e+00> : vector<16x128xf32>
    %208 = tpu.matmul %189, %207, %cst_99 {dimension_numbers = #tpu.dot_dimension_numbers<[1], [0], [0], [1], [0, 0, 1, 1], [], []>} : vector<16x16xbf16>, vector<16x128xbf16>, vector<16x128xf32> -> vector<16x128xf32>
    %209 = arith.truncf %208 : vector<16x128xf32> to vector<16x128xbf16>
    %c16_100 = arith.constant 16 : index
    %c128_101 = arith.constant 128 : index
    %210 = vector.load %arg26[%c16_100, %c128_101] : memref<32x384xbf16, #tpu.memory_space<vmem>>, vector<16x128xbf16>
    tpu.vector_store %arg26[%c16_100, %c128_101], %209 {strides = array<i32>} : memref<32x384xbf16, #tpu.memory_space<vmem>>, vector<16x128xbf16>,
    %211 = arith.truncf %208 : vector<16x128xf32> to vector<16x128xbf16>
    %cst_102 = arith.constant dense<0.000000e+00> : vector<16x128xf32>
    %212 = tpu.matmul %189, %211, %cst_102 {dimension_numbers = #tpu.dot_dimension_numbers<[1], [0], [0], [1], [0, 0, 1, 1], [], []>} : vector<16x16xbf16>, vector<16x128xbf16>, vector<16x128xf32> -> vector<16x128xf32>
    %cst_103 = arith.constant 2.000000e+00 : f32
    %213 = vector.broadcast %cst_103 : f32 to vector<16x128xf32>
    %214 = arith.mulf %213, %212 : vector<16x128xf32>
    %215 = arith.subf %214, %204 : vector<16x128xf32>
    %216 = arith.truncf %215 : vector<16x128xf32> to vector<16x128xbf16>
    %c16_104 = arith.constant 16 : index
    %c256_105 = arith.constant 256 : index
    %217 = vector.load %arg26[%c16_104, %c256_105] : memref<32x384xbf16, #tpu.memory_space<vmem>>, vector<16x128xbf16>
    tpu.vector_store %arg26[%c16_104, %c256_105], %216 {strides = array<i32>} : memref<32x384xbf16, #tpu.memory_space<vmem>>, vector<16x128xbf16>,
    %c0_106 = arith.constant 0 : index
    %c0_107 = arith.constant 0 : index
    %218 = vector.load %arg26[%c0_106, %c0_107] : memref<32x384xbf16, #tpu.memory_space<vmem>>, vector<32x384xbf16>
    %c0_108 = arith.constant 0 : index
    %c0_109 = arith.constant 0 : index
    %219 = vector.load %arg14[%c0_108, %c0_109] : memref<384x256xbf16, #tpu.memory_space<vmem>>, vector<384x256xbf16>
    %cst_110 = arith.constant dense<0.000000e+00> : vector<32x256xf32>
    %220 = tpu.matmul %218, %219, %cst_110 {dimension_numbers = #tpu.dot_dimension_numbers<[1], [0], [0], [1], [0, 0, 1, 1], [], []>} : vector<32x384xbf16>, vector<384x256xbf16>, vector<32x256xf32> -> vector<32x256xf32>
    %c0_111 = arith.constant 0 : index
    %c0_112 = arith.constant 0 : index
    %221 = vector.load %arg15[%c0_111, %c0_112] : memref<1x256xf32, #tpu.memory_space<vmem>>, vector<1x256xf32>
    %c0_113 = arith.constant 0 : index
    %c0_114 = arith.constant 0 : index
    %222 = vector.load %arg16[%c0_113, %c0_114] : memref<1x256xf32, #tpu.memory_space<vmem>>, vector<1x256xf32>
    %cst_115 = arith.constant dense<0.000000e+00> : vector<256xf32>
    %223 = vector.multi_reduction <add>, %220, %cst_115 [0] : vector<32x256xf32> to vector<256xf32>
    %224 = vector.shape_cast %223 : vector<256xf32> to vector<1x256xf32>
    %cst_116 = arith.constant 3.200000e+01 : f32
    %225 = vector.broadcast %cst_116 : f32 to vector<1x256xf32>
    %226 = arith.divf %224, %225 : vector<1x256xf32>
    %227 = vector.broadcast %226 : vector<1x256xf32> to vector<32x256xf32>
    %228 = arith.subf %220, %227 : vector<32x256xf32>
    %229 = arith.mulf %228, %228 : vector<32x256xf32>
    %cst_117 = arith.constant dense<0.000000e+00> : vector<256xf32>
    %230 = vector.multi_reduction <add>, %229, %cst_117 [0] : vector<32x256xf32> to vector<256xf32>
    %231 = vector.shape_cast %230 : vector<256xf32> to vector<1x256xf32>
    %cst_118 = arith.constant 3.200000e+01 : f32
    %232 = vector.broadcast %cst_118 : f32 to vector<1x256xf32>
    %233 = arith.divf %231, %232 : vector<1x256xf32>
    %cst_119 = arith.constant 9.99999974E-6 : f32
    %234 = vector.broadcast %cst_119 : f32 to vector<1x256xf32>
    %235 = arith.addf %233, %234 : vector<1x256xf32>
    %236 = math.rsqrt %235 : vector<1x256xf32>
    %237 = arith.mulf %221, %236 : vector<1x256xf32>
    %238 = arith.mulf %226, %237 : vector<1x256xf32>
    %239 = arith.subf %222, %238 : vector<1x256xf32>
    %240 = vector.broadcast %237 : vector<1x256xf32> to vector<32x256xf32>
    %241 = arith.mulf %220, %240 : vector<32x256xf32>
    %242 = vector.broadcast %239 : vector<1x256xf32> to vector<32x256xf32>
    %243 = arith.addf %241, %242 : vector<32x256xf32>
    %cst_120 = arith.constant 0.000000e+00 : f32
    %244 = vector.broadcast %cst_120 : f32 to vector<32x256xf32>
    %245 = arith.maximumf %243, %244 : vector<32x256xf32>
    %c0_121 = arith.constant 0 : index
    %c0_122 = arith.constant 0 : index
    %246 = vector.load %arg21[%c0_121, %c0_122] : memref<32x256xf32, #tpu.memory_space<vmem>>, vector<32x256xf32>
    tpu.vector_store %arg21[%c0_121, %c0_122], %245 {strides = array<i32>} : memref<32x256xf32, #tpu.memory_space<vmem>>, vector<32x256xf32>,
    %247 = vector.shape_cast %245 : vector<32x256xf32> to vector<8x4x256xf32>
    %cst_123 = arith.constant dense<0xFF800000> : vector<8x256xf32>
    %248 = vector.multi_reduction <maximumf>, %247, %cst_123 [1] : vector<8x4x256xf32> to vector<8x256xf32>
    %c0_124 = arith.constant 0 : index
    %c0_125 = arith.constant 0 : index
    %249 = vector.load %arg4[%c0_124, %c0_125] : memref<4x4xbf16, #tpu.memory_space<vmem>>, vector<4x4xbf16>
    %250 = vector.extract_strided_slice %248 {offsets = [0, 0], sizes = [4, 256], strides = [1, 1]} : vector<8x256xf32> to vector<4x256xf32>
    %251 = arith.truncf %250 : vector<4x256xf32> to vector<4x256xbf16>
    %c0_126 = arith.constant 0 : index
    %c0_127 = arith.constant 0 : index
    %252 = vector.load %arg27[%c0_126, %c0_127] : memref<8x768xbf16, #tpu.memory_space<vmem>>, vector<4x256xbf16>
    tpu.vector_store %arg27[%c0_126, %c0_127], %251 {strides = array<i32>} : memref<8x768xbf16, #tpu.memory_space<vmem>>, vector<4x256xbf16>,
    %253 = arith.truncf %250 : vector<4x256xf32> to vector<4x256xbf16>
    %cst_128 = arith.constant dense<0.000000e+00> : vector<4x256xf32>
    %254 = tpu.matmul %249, %253, %cst_128 {dimension_numbers = #tpu.dot_dimension_numbers<[1], [0], [0], [1], [0, 0, 1, 1], [], []>} : vector<4x4xbf16>, vector<4x256xbf16>, vector<4x256xf32> -> vector<4x256xf32>
    %255 = arith.truncf %254 : vector<4x256xf32> to vector<4x256xbf16>
    %c0_129 = arith.constant 0 : index
    %c256_130 = arith.constant 256 : index
    %256 = vector.load %arg27[%c0_129, %c256_130] : memref<8x768xbf16, #tpu.memory_space<vmem>>, vector<4x256xbf16>
    tpu.vector_store %arg27[%c0_129, %c256_130], %255 {strides = array<i32>} : memref<8x768xbf16, #tpu.memory_space<vmem>>, vector<4x256xbf16>,
    %257 = arith.truncf %254 : vector<4x256xf32> to vector<4x256xbf16>
    %cst_131 = arith.constant dense<0.000000e+00> : vector<4x256xf32>
    %258 = tpu.matmul %249, %257, %cst_131 {dimension_numbers = #tpu.dot_dimension_numbers<[1], [0], [0], [1], [0, 0, 1, 1], [], []>} : vector<4x4xbf16>, vector<4x256xbf16>, vector<4x256xf32> -> vector<4x256xf32>
    %cst_132 = arith.constant 2.000000e+00 : f32
    %259 = vector.broadcast %cst_132 : f32 to vector<4x256xf32>
    %260 = arith.mulf %259, %258 : vector<4x256xf32>
    %261 = arith.subf %260, %250 : vector<4x256xf32>
    %262 = arith.truncf %261 : vector<4x256xf32> to vector<4x256xbf16>
    %c0_133 = arith.constant 0 : index
    %c512 = arith.constant 512 : index
    %263 = vector.load %arg27[%c0_133, %c512] : memref<8x768xbf16, #tpu.memory_space<vmem>>, vector<4x256xbf16>
    tpu.vector_store %arg27[%c0_133, %c512], %262 {strides = array<i32>} : memref<8x768xbf16, #tpu.memory_space<vmem>>, vector<4x256xbf16>,
    %264 = vector.extract_strided_slice %248 {offsets = [4, 0], sizes = [4, 256], strides = [1, 1]} : vector<8x256xf32> to vector<4x256xf32>
    %265 = arith.truncf %264 : vector<4x256xf32> to vector<4x256xbf16>
    %c4 = arith.constant 4 : index
    %c0_134 = arith.constant 0 : index
    %266 = vector.load %arg27[%c4, %c0_134] : memref<8x768xbf16, #tpu.memory_space<vmem>>, vector<4x256xbf16>
    tpu.vector_store %arg27[%c4, %c0_134], %265 {strides = array<i32>} : memref<8x768xbf16, #tpu.memory_space<vmem>>, vector<4x256xbf16>,
    %267 = arith.truncf %264 : vector<4x256xf32> to vector<4x256xbf16>
    %cst_135 = arith.constant dense<0.000000e+00> : vector<4x256xf32>
    %268 = tpu.matmul %249, %267, %cst_135 {dimension_numbers = #tpu.dot_dimension_numbers<[1], [0], [0], [1], [0, 0, 1, 1], [], []>} : vector<4x4xbf16>, vector<4x256xbf16>, vector<4x256xf32> -> vector<4x256xf32>
    %269 = arith.truncf %268 : vector<4x256xf32> to vector<4x256xbf16>
    %c4_136 = arith.constant 4 : index
    %c256_137 = arith.constant 256 : index
    %270 = vector.load %arg27[%c4_136, %c256_137] : memref<8x768xbf16, #tpu.memory_space<vmem>>, vector<4x256xbf16>
    tpu.vector_store %arg27[%c4_136, %c256_137], %269 {strides = array<i32>} : memref<8x768xbf16, #tpu.memory_space<vmem>>, vector<4x256xbf16>,
    %271 = arith.truncf %268 : vector<4x256xf32> to vector<4x256xbf16>
    %cst_138 = arith.constant dense<0.000000e+00> : vector<4x256xf32>
    %272 = tpu.matmul %249, %271, %cst_138 {dimension_numbers = #tpu.dot_dimension_numbers<[1], [0], [0], [1], [0, 0, 1, 1], [], []>} : vector<4x4xbf16>, vector<4x256xbf16>, vector<4x256xf32> -> vector<4x256xf32>
    %cst_139 = arith.constant 2.000000e+00 : f32
    %273 = vector.broadcast %cst_139 : f32 to vector<4x256xf32>
    %274 = arith.mulf %273, %272 : vector<4x256xf32>
    %275 = arith.subf %274, %264 : vector<4x256xf32>
    %276 = arith.truncf %275 : vector<4x256xf32> to vector<4x256xbf16>
    %c4_140 = arith.constant 4 : index
    %c512_141 = arith.constant 512 : index
    %277 = vector.load %arg27[%c4_140, %c512_141] : memref<8x768xbf16, #tpu.memory_space<vmem>>, vector<4x256xbf16>
    tpu.vector_store %arg27[%c4_140, %c512_141], %276 {strides = array<i32>} : memref<8x768xbf16, #tpu.memory_space<vmem>>, vector<4x256xbf16>,
    %c0_142 = arith.constant 0 : index
    %c0_143 = arith.constant 0 : index
    %278 = vector.load %arg27[%c0_142, %c0_143] : memref<8x768xbf16, #tpu.memory_space<vmem>>, vector<8x768xbf16>
    %c0_144 = arith.constant 0 : index
    %c0_145 = arith.constant 0 : index
    %279 = vector.load %arg17[%c0_144, %c0_145] : memref<768x512xbf16, #tpu.memory_space<vmem>>, vector<768x512xbf16>
    %cst_146 = arith.constant dense<0.000000e+00> : vector<8x512xf32>
    %280 = tpu.matmul %278, %279, %cst_146 {dimension_numbers = #tpu.dot_dimension_numbers<[1], [0], [0], [1], [0, 0, 1, 1], [], []>} : vector<8x768xbf16>, vector<768x512xbf16>, vector<8x512xf32> -> vector<8x512xf32>
    %c0_147 = arith.constant 0 : index
    %c0_148 = arith.constant 0 : index
    %281 = vector.load %arg18[%c0_147, %c0_148] : memref<1x512xf32, #tpu.memory_space<vmem>>, vector<1x512xf32>
    %c0_149 = arith.constant 0 : index
    %c0_150 = arith.constant 0 : index
    %282 = vector.load %arg19[%c0_149, %c0_150] : memref<1x512xf32, #tpu.memory_space<vmem>>, vector<1x512xf32>
    %cst_151 = arith.constant dense<0.000000e+00> : vector<512xf32>
    %283 = vector.multi_reduction <add>, %280, %cst_151 [0] : vector<8x512xf32> to vector<512xf32>
    %284 = vector.shape_cast %283 : vector<512xf32> to vector<1x512xf32>
    %cst_152 = arith.constant 8.000000e+00 : f32
    %285 = vector.broadcast %cst_152 : f32 to vector<1x512xf32>
    %286 = arith.divf %284, %285 : vector<1x512xf32>
    %287 = vector.broadcast %286 : vector<1x512xf32> to vector<8x512xf32>
    %288 = arith.subf %280, %287 : vector<8x512xf32>
    %289 = arith.mulf %288, %288 : vector<8x512xf32>
    %cst_153 = arith.constant dense<0.000000e+00> : vector<512xf32>
    %290 = vector.multi_reduction <add>, %289, %cst_153 [0] : vector<8x512xf32> to vector<512xf32>
    %291 = vector.shape_cast %290 : vector<512xf32> to vector<1x512xf32>
    %cst_154 = arith.constant 8.000000e+00 : f32
    %292 = vector.broadcast %cst_154 : f32 to vector<1x512xf32>
    %293 = arith.divf %291, %292 : vector<1x512xf32>
    %cst_155 = arith.constant 9.99999974E-6 : f32
    %294 = vector.broadcast %cst_155 : f32 to vector<1x512xf32>
    %295 = arith.addf %293, %294 : vector<1x512xf32>
    %296 = math.rsqrt %295 : vector<1x512xf32>
    %297 = arith.mulf %281, %296 : vector<1x512xf32>
    %298 = arith.mulf %286, %297 : vector<1x512xf32>
    %299 = arith.subf %282, %298 : vector<1x512xf32>
    %300 = vector.broadcast %297 : vector<1x512xf32> to vector<8x512xf32>
    %301 = arith.mulf %280, %300 : vector<8x512xf32>
    %302 = vector.broadcast %299 : vector<1x512xf32> to vector<8x512xf32>
    %303 = arith.addf %301, %302 : vector<8x512xf32>
    %cst_156 = arith.constant 0.000000e+00 : f32
    %304 = vector.broadcast %cst_156 : f32 to vector<8x512xf32>
    %305 = arith.maximumf %303, %304 : vector<8x512xf32>
    %c0_157 = arith.constant 0 : index
    %c0_158 = arith.constant 0 : index
    %306 = vector.load %arg20[%c0_157, %c0_158] : memref<8x512xf32, #tpu.memory_space<vmem>>, vector<8x512xf32>
    tpu.vector_store %arg20[%c0_157, %c0_158], %305 {strides = array<i32>} : memref<8x512xf32, #tpu.memory_space<vmem>>, vector<8x512xf32>,
    return
  }
}

</mosaic_0001>

<llo_original>
// kernel: encoder_forward.1
$region0: #{encoder_forward.1}
  #allocation0 [shape = 'u32[]', space=smem, size = 0x4, offset = 0x4, fixed_abs, tag = 'smem constant byte address 0x4 - core index']
  #allocation1 [shape = 'u32[144,128]{1,0:T(1,128)}', space=vmem, size = 0x12000, scoped, tag = 'internal scratch']
  #allocation2 [shape = 'bf16[512,96]{1,0:T(16,128)(2,1)}', space=vmem, size = 0x20000, scoped, tag = 'scratch operand']
  #allocation3 [shape = 'bf16[128,192]{1,0:T(16,128)(2,1)}', space=vmem, size = 0x10000, scoped, tag = 'scratch operand']
  #allocation4 [shape = 'bf16[32,384]{1,0:T(16,128)(2,1)}', space=vmem, size = 0x6000, scoped, tag = 'scratch operand']
  #allocation5 [shape = 'bf16[8,768]{1,0:T(8,128)(2,1)}', space=vmem, size = 0x3000, scoped, tag = 'scratch operand']
  %s0 = inlined_call_operand.vmem [shape: f32[256,2], index: 0, kind: input, shape index: {}]
  %s1 = inlined_call_operand.vmem [shape: bf16[256,256], index: 1, kind: input, shape index: {}]
  %s2 = inlined_call_operand.vmem [shape: bf16[64,64], index: 2, kind: input, shape index: {}]
  %s3 = inlined_call_operand.vmem [shape: bf16[16,16], index: 3, kind: input, shape index: {}]
  %s4 = inlined_call_operand.vmem [shape: bf16[4,4], index: 4, kind: input, shape index: {}]
  %s5 = inlined_call_operand.vmem [shape: f32[3,32], index: 5, kind: input, shape index: {}]
  %s6 = inlined_call_operand.vmem [shape: f32[1,32], index: 6, kind: input, shape index: {}]
  %s7 = inlined_call_operand.vmem [shape: f32[1,32], index: 7, kind: input, shape index: {}]
  %s8 = inlined_call_operand.vmem [shape: bf16[96,64], index: 8, kind: input, shape index: {}]
  %s9 = inlined_call_operand.vmem [shape: f32[1,64], index: 9, kind: input, shape index: {}]
  %s10 = inlined_call_operand.vmem [shape: f32[1,64], index: 10, kind: input, shape index: {}]
  %s11 = inlined_call_operand.vmem [shape: bf16[192,128], index: 11, kind: input, shape index: {}]
  %s12 = inlined_call_operand.vmem [shape: f32[1,128], index: 12, kind: input, shape index: {}]
  %s13 = inlined_call_operand.vmem [shape: f32[1,128], index: 13, kind: input, shape index: {}]
  %s14 = inlined_call_operand.vmem [shape: bf16[384,256], index: 14, kind: input, shape index: {}]
  %s15 = inlined_call_operand.vmem [shape: f32[1,256], index: 15, kind: input, shape index: {}]
  %s16 = inlined_call_operand.vmem [shape: f32[1,256], index: 16, kind: input, shape index: {}]
  %s17 = inlined_call_operand.vmem [shape: bf16[768,512], index: 17, kind: input, shape index: {}]
  %s18 = inlined_call_operand.vmem [shape: f32[1,512], index: 18, kind: input, shape index: {}]
  %s19 = inlined_call_operand.vmem [shape: f32[1,512], index: 19, kind: input, shape index: {}]
  %s20 = inlined_call_operand.vmem [shape: f32[8,512], index: 20, kind: output, shape index: {0}]
  %s21 = inlined_call_operand.hbm [shape: f32[32,256], index: 21, kind: output, shape index: {1}]
  %s22 = inlined_call_operand.hbm [shape: f32[128,128], index: 22, kind: output, shape index: {2}]
  %s23 = inlined_call_operand.vmem [shape: f32[512,64], index: 23, kind: output, shape index: {3}]
  %24 = xla_tuple %s20, %s21, %s22, %s23
  %s25 = sld [smem:[#allocation0]]
  $region114: #{encoder_forward.1} parent=0
    _
  %s27 = ssub.s32 1, %s25
  %s28 = scalar_select 0, %s27, %s25
  $region1: #{encoder_forward.1} parent=0
    #allocation6 [shape = 'u8[32768]{0}', space=vmem, size = 0x8000, scoped, tag = 'output window, operand 1, single buffered']
    #allocation7 [shape = 's32[1]{0}', space=sflag, size = 0x4, scoped, tag = 'scoped memory for encoder_forward.1']
    #allocation8 [shape = 'u8[65536]{0}', space=vmem, size = 0x10000, scoped, tag = 'output window, operand 2, single buffered']
    #allocation9 [shape = 's32[1]{0}', space=sflag, size = 0x4, scoped, tag = 'scoped memory for encoder_forward.1']
    %29 = vsyncpa [#allocation7], 0
    %30 = vsyncpa [#allocation9], 0
    // Predicated region
    $region2: #{encoder_forward.1} parent=1 // pred_check
      _
    $region3: #{encoder_forward.1} parent=1 // pred_check_branch
      %32 = sbr.rel (0) target = $region5
    $region4: #{encoder_forward.1} parent=1 // pred_region
      _
    $region5: #{encoder_forward.1} parent=1 // pred_fallthru
      _
    // Predicated region
    $region6: #{encoder_forward.1} parent=1 // pred_check
      _
    $region7: #{encoder_forward.1} parent=1 // pred_check_branch
      %34 = sbr.rel (0) target = $region9
    $region8: #{encoder_forward.1} parent=1 // pred_region
      _
    $region9: #{encoder_forward.1} parent=1 // pred_fallthru
      _
    // Predicated region
    $region10: #{encoder_forward.1} parent=1 // pred_check
      _
    $region11: #{encoder_forward.1} parent=1 // pred_check_branch
      %36 = sbr.rel (0) target = $region13
    $region12: #{encoder_forward.1} parent=1 // pred_region
      _
    $region13: #{encoder_forward.1} parent=1 // pred_fallthru
      _
    // Predicated region
    $region14: #{encoder_forward.1} parent=1 // pred_check
      _
    $region15: #{encoder_forward.1} parent=1 // pred_check_branch
      %38 = sbr.rel (0) target = $region17
    $region16: #{encoder_forward.1} parent=1 // pred_region
      _
    $region17: #{encoder_forward.1} parent=1 // pred_fallthru
      _
    // Predicated region
    $region18: #{encoder_forward.1} parent=1 // pred_check
      _
    $region19: #{encoder_forward.1} parent=1 // pred_check_branch
      %40 = sbr.rel (0) target = $region21
    $region20: #{encoder_forward.1} parent=1 // pred_region
      _
    $region21: #{encoder_forward.1} parent=1 // pred_fallthru
      _
    // Predicated region
    $region22: #{encoder_forward.1} parent=1 // pred_check
      _
    $region23: #{encoder_forward.1} parent=1 // pred_check_branch
      %42 = sbr.rel (0) target = $region25
    $region24: #{encoder_forward.1} parent=1 // pred_region
      _
    $region25: #{encoder_forward.1} parent=1 // pred_fallthru
      _
    // Predicated region
    $region26: #{encoder_forward.1} parent=1 // pred_check
      _
    $region27: #{encoder_forward.1} parent=1 // pred_check_branch
      %44 = sbr.rel (0) target = $region29
    $region28: #{encoder_forward.1} parent=1 // pred_region
      _
    $region29: #{encoder_forward.1} parent=1 // pred_fallthru
      _
    // Predicated region
    $region30: #{encoder_forward.1} parent=1 // pred_check
      _
    $region31: #{encoder_forward.1} parent=1 // pred_check_branch
      %46 = sbr.rel (0) target = $region33
    $region32: #{encoder_forward.1} parent=1 // pred_region
      _
    $region33: #{encoder_forward.1} parent=1 // pred_fallthru
      _
    // Predicated region
    $region34: #{encoder_forward.1} parent=1 // pred_check
      _
    $region35: #{encoder_forward.1} parent=1 // pred_check_branch
      %48 = sbr.rel (0) target = $region37
    $region36: #{encoder_forward.1} parent=1 // pred_region
      _
    $region37: #{encoder_forward.1} parent=1 // pred_fallthru
      _
    // Predicated region
    $region38: #{encoder_forward.1} parent=1 // pred_check
      _
    $region39: #{encoder_forward.1} parent=1 // pred_check_branch
      %50 = sbr.rel (0) target = $region41
    $region40: #{encoder_forward.1} parent=1 // pred_region
      _
    $region41: #{encoder_forward.1} parent=1 // pred_fallthru
      _
    // Predicated region
    $region42: #{encoder_forward.1} parent=1 // pred_check
      _
    $region43: #{encoder_forward.1} parent=1 // pred_check_branch
      %52 = sbr.rel (0) target = $region45
    $region44: #{encoder_forward.1} parent=1 // pred_region
      _
    $region45: #{encoder_forward.1} parent=1 // pred_fallthru
      _
    // Predicated region
    $region46: #{encoder_forward.1} parent=1 // pred_check
      _
    $region47: #{encoder_forward.1} parent=1 // pred_check_branch
      %54 = sbr.rel (0) target = $region49
    $region48: #{encoder_forward.1} parent=1 // pred_region
      _
    $region49: #{encoder_forward.1} parent=1 // pred_fallthru
      _
    // Predicated region
    $region50: #{encoder_forward.1} parent=1 // pred_check
      _
    $region51: #{encoder_forward.1} parent=1 // pred_check_branch
      %56 = sbr.rel (0) target = $region53
    $region52: #{encoder_forward.1} parent=1 // pred_region
      _
    $region53: #{encoder_forward.1} parent=1 // pred_fallthru
      _
    // Predicated region
    $region54: #{encoder_forward.1} parent=1 // pred_check
      _
    $region55: #{encoder_forward.1} parent=1 // pred_check_branch
      %58 = sbr.rel (0) target = $region57
    $region56: #{encoder_forward.1} parent=1 // pred_region
      _
    $region57: #{encoder_forward.1} parent=1 // pred_fallthru
      _
    // Predicated region
    $region58: #{encoder_forward.1} parent=1 // pred_check
      _
    $region59: #{encoder_forward.1} parent=1 // pred_check_branch
      %60 = sbr.rel (0) target = $region61
    $region60: #{encoder_forward.1} parent=1 // pred_region
      _
    $region61: #{encoder_forward.1} parent=1 // pred_fallthru
      _
    // Predicated region
    $region62: #{encoder_forward.1} parent=1 // pred_check
      _
    $region63: #{encoder_forward.1} parent=1 // pred_check_branch
      %62 = sbr.rel (0) target = $region65
    $region64: #{encoder_forward.1} parent=1 // pred_region
      _
    $region65: #{encoder_forward.1} parent=1 // pred_fallthru
      _
    // Predicated region
    $region66: #{encoder_forward.1} parent=1 // pred_check
      _
    $region67: #{encoder_forward.1} parent=1 // pred_check_branch
      %64 = sbr.rel (0) target = $region69
    $region68: #{encoder_forward.1} parent=1 // pred_region
      _
    $region69: #{encoder_forward.1} parent=1 // pred_fallthru
      _
    // Predicated region
    $region70: #{encoder_forward.1} parent=1 // pred_check
      _
    $region71: #{encoder_forward.1} parent=1 // pred_check_branch
      %66 = sbr.rel (0) target = $region73
    $region72: #{encoder_forward.1} parent=1 // pred_region
      _
    $region73: #{encoder_forward.1} parent=1 // pred_fallthru
      _
    // Predicated region
    $region74: #{encoder_forward.1} parent=1 // pred_check
      _
    $region75: #{encoder_forward.1} parent=1 // pred_check_branch
      %68 = sbr.rel (0) target = $region77
    $region76: #{encoder_forward.1} parent=1 // pred_region
      _
    $region77: #{encoder_forward.1} parent=1 // pred_fallthru
      _
    // Predicated region
    $region78: #{encoder_forward.1} parent=1 // pred_check
      _
    $region79: #{encoder_forward.1} parent=1 // pred_check_branch
      %70 = sbr.rel (0) target = $region81
    $region80: #{encoder_forward.1} parent=1 // pred_region
      _
    $region81: #{encoder_forward.1} parent=1 // pred_fallthru
      _
    %v72 = vld [vmem:[%s1] sm:$0xff]
    %v73 = vld [vmem:[%s1 + $0x8] sm:$0xff]
    %v74 = vld [vmem:[%s1 + $0x10] sm:$0xff]
    %v75 = vld [vmem:[%s1 + $0x18] sm:$0xff]
    %v76 = vld [vmem:[%s1 + $0x20] sm:$0xff]
    %v77 = vld [vmem:[%s1 + $0x28] sm:$0xff]
    %v78 = vld [vmem:[%s1 + $0x30] sm:$0xff]
    %v79 = vld [vmem:[%s1 + $0x38] sm:$0xff]
    %v80 = vld [vmem:[%s1 + $0x40] sm:$0xff]
    %v81 = vld [vmem:[%s1 + $0x48] sm:$0xff]
    %v82 = vld [vmem:[%s1 + $0x50] sm:$0xff]
    %v83 = vld [vmem:[%s1 + $0x58] sm:$0xff]
    %v84 = vld [vmem:[%s1 + $0x60] sm:$0xff]
    %v85 = vld [vmem:[%s1 + $0x68] sm:$0xff]
    %v86 = vld [vmem:[%s1 + $0x70] sm:$0xff]
    %v87 = vld [vmem:[%s1 + $0x78] sm:$0xff]
    %v88 = vld [vmem:[%s1 + $0x80] sm:$0xff]
    %v89 = vld [vmem:[%s1 + $0x88] sm:$0xff]
    %v90 = vld [vmem:[%s1 + $0x90] sm:$0xff]
    %v91 = vld [vmem:[%s1 + $0x98] sm:$0xff]
    %v92 = vld [vmem:[%s1 + $0xa0] sm:$0xff]
    %v93 = vld [vmem:[%s1 + $0xa8] sm:$0xff]
    %v94 = vld [vmem:[%s1 + $0xb0] sm:$0xff]
    %v95 = vld [vmem:[%s1 + $0xb8] sm:$0xff]
    %v96 = vld [vmem:[%s1 + $0xc0] sm:$0xff]
    %v97 = vld [vmem:[%s1 + $0xc8] sm:$0xff]
    %v98 = vld [vmem:[%s1 + $0xd0] sm:$0xff]
    %v99 = vld [vmem:[%s1 + $0xd8] sm:$0xff]
    %v100 = vld [vmem:[%s1 + $0xe0] sm:$0xff]
    %v101 = vld [vmem:[%s1 + $0xe8] sm:$0xff]
    %v102 = vld [vmem:[%s1 + $0xf0] sm:$0xff]
    %v103 = vld [vmem:[%s1 + $0xf8] sm:$0xff]
    %v104 = vld [vmem:[%s0] sm:$0xff]
    %v105 = vld [vmem:[%s0 + $0x8] sm:$0xff]
    %v106 = vld [vmem:[%s0 + $0x10] sm:$0xff]
    %v107 = vld [vmem:[%s0 + $0x18] sm:$0xff]
    %v108 = vld [vmem:[%s0 + $0x20] sm:$0xff]
    %v109 = vld [vmem:[%s0 + $0x28] sm:$0xff]
    %v110 = vld [vmem:[%s0 + $0x30] sm:$0xff]
    %v111 = vld [vmem:[%s0 + $0x38] sm:$0xff]
    %v112 = vld [vmem:[%s0 + $0x40] sm:$0xff]
    %v113 = vld [vmem:[%s0 + $0x48] sm:$0xff]
    %v114 = vld [vmem:[%s0 + $0x50] sm:$0xff]
    %v115 = vld [vmem:[%s0 + $0x58] sm:$0xff]
    %v116 = vld [vmem:[%s0 + $0x60] sm:$0xff]
    %v117 = vld [vmem:[%s0 + $0x68] sm:$0xff]
    %v118 = vld [vmem:[%s0 + $0x70] sm:$0xff]
    %v119 = vld [vmem:[%s0 + $0x78] sm:$0xff]
    %v120 = vld [vmem:[%s0 + $0x80] sm:$0xff]
    %v121 = vld [vmem:[%s0 + $0x88] sm:$0xff]
    %v122 = vld [vmem:[%s0 + $0x90] sm:$0xff]
    %v123 = vld [vmem:[%s0 + $0x98] sm:$0xff]
    %v124 = vld [vmem:[%s0 + $0xa0] sm:$0xff]
    %v125 = vld [vmem:[%s0 + $0xa8] sm:$0xff]
    %v126 = vld [vmem:[%s0 + $0xb0] sm:$0xff]
    %v127 = vld [vmem:[%s0 + $0xb8] sm:$0xff]
    %v128 = vld [vmem:[%s0 + $0xc0] sm:$0xff]
    %v129 = vld [vmem:[%s0 + $0xc8] sm:$0xff]
    %v130 = vld [vmem:[%s0 + $0xd0] sm:$0xff]
    %v131 = vld [vmem:[%s0 + $0xd8] sm:$0xff]
    %v132 = vld [vmem:[%s0 + $0xe0] sm:$0xff]
    %v133 = vld [vmem:[%s0 + $0xe8] sm:$0xff]
    %v134 = vld [vmem:[%s0 + $0xf0] sm:$0xff]
    %v135 = vld [vmem:[%s0 + $0xf8] sm:$0xff]
    %v136 = vpack.c.bf16 %v105, %v104
    %v137 = vpack.c.bf16 %v107, %v106
    %v138 = vpack.c.bf16 %v109, %v108
    %v139 = vpack.c.bf16 %v111, %v110
    %v140 = vpack.c.bf16 %v113, %v112
    %v141 = vpack.c.bf16 %v115, %v114
    %v142 = vpack.c.bf16 %v117, %v116
    %v143 = vpack.c.bf16 %v119, %v118
    %v144 = vpack.c.bf16 %v121, %v120
    %v145 = vpack.c.bf16 %v123, %v122
    %v146 = vpack.c.bf16 %v125, %v124
    %v147 = vpack.c.bf16 %v127, %v126
    %v148 = vpack.c.bf16 %v129, %v128
    %v149 = vpack.c.bf16 %v131, %v130
    %v150 = vpack.c.bf16 %v133, %v132
    %v151 = vpack.c.bf16 %v135, %v134
    %v184 = vunpack.c.l.b16 %v72
    %v185 = vunpack.c.h.b16 %v72
    %v186 = vunpack.c.l.b16 %v73
    %v187 = vunpack.c.h.b16 %v73
    %v188 = vunpack.c.l.b16 %v74
    %v189 = vunpack.c.h.b16 %v74
    %v190 = vunpack.c.l.b16 %v75
    %v191 = vunpack.c.h.b16 %v75
    %v192 = vunpack.c.l.b16 %v76
    %v193 = vunpack.c.h.b16 %v76
    %v194 = vunpack.c.l.b16 %v77
    %v195 = vunpack.c.h.b16 %v77
    %v196 = vunpack.c.l.b16 %v78
    %v197 = vunpack.c.h.b16 %v78
    %v198 = vunpack.c.l.b16 %v79
    %v199 = vunpack.c.h.b16 %v79
    %v200 = vunpack.c.l.b16 %v80
    %v201 = vunpack.c.h.b16 %v80
    %v202 = vunpack.c.l.b16 %v81
    %v203 = vunpack.c.h.b16 %v81
    %v204 = vunpack.c.l.b16 %v82
    %v205 = vunpack.c.h.b16 %v82
    %v206 = vunpack.c.l.b16 %v83
    %v207 = vunpack.c.h.b16 %v83
    %v208 = vunpack.c.l.b16 %v84
    %v209 = vunpack.c.h.b16 %v84
    %v210 = vunpack.c.l.b16 %v85
    %v211 = vunpack.c.h.b16 %v85
    %v212 = vunpack.c.l.b16 %v86
    %v213 = vunpack.c.h.b16 %v86
    %v214 = vunpack.c.l.b16 %v87
    %v215 = vunpack.c.h.b16 %v87
    %v216 = vunpack.c.l.b16 %v88
    %v217 = vunpack.c.h.b16 %v88
    %v218 = vunpack.c.l.b16 %v89
    %v219 = vunpack.c.h.b16 %v89
    %v220 = vunpack.c.l.b16 %v90
    %v221 = vunpack.c.h.b16 %v90
    %v222 = vunpack.c.l.b16 %v91
    %v223 = vunpack.c.h.b16 %v91
    %v224 = vunpack.c.l.b16 %v92
    %v225 = vunpack.c.h.b16 %v92
    %v226 = vunpack.c.l.b16 %v93
    %v227 = vunpack.c.h.b16 %v93
    %v228 = vunpack.c.l.b16 %v94
    %v229 = vunpack.c.h.b16 %v94
    %v230 = vunpack.c.l.b16 %v95
    %v231 = vunpack.c.h.b16 %v95
    %v232 = vunpack.c.l.b16 %v96
    %v233 = vunpack.c.h.b16 %v96
    %v234 = vunpack.c.l.b16 %v97
    %v235 = vunpack.c.h.b16 %v97
    %v236 = vunpack.c.l.b16 %v98
    %v237 = vunpack.c.h.b16 %v98
    %v238 = vunpack.c.l.b16 %v99
    %v239 = vunpack.c.h.b16 %v99
    %v240 = vunpack.c.l.b16 %v100
    %v241 = vunpack.c.h.b16 %v100
    %v242 = vunpack.c.l.b16 %v101
    %v243 = vunpack.c.h.b16 %v101
    %v244 = vunpack.c.l.b16 %v102
    %v245 = vunpack.c.h.b16 %v102
    %v246 = vunpack.c.l.b16 %v103
    %v247 = vunpack.c.h.b16 %v103
    %v248 = vpack.c.b16 %v186, %v184
    %v249 = vpack.c.b16 %v187, %v185
    %v250 = vpack.c.b16 %v190, %v188
    %v251 = vpack.c.b16 %v191, %v189
    %v252 = vpack.c.b16 %v194, %v192
    %v253 = vpack.c.b16 %v195, %v193
    %v254 = vpack.c.b16 %v198, %v196
    %v255 = vpack.c.b16 %v199, %v197
    %v256 = vpack.c.b16 %v202, %v200
    %v257 = vpack.c.b16 %v203, %v201
    %v258 = vpack.c.b16 %v206, %v204
    %v259 = vpack.c.b16 %v207, %v205
    %v260 = vpack.c.b16 %v210, %v208
    %v261 = vpack.c.b16 %v211, %v209
    %v262 = vpack.c.b16 %v214, %v212
    %v263 = vpack.c.b16 %v215, %v213
    %v264 = vpack.c.b16 %v218, %v216
    %v265 = vpack.c.b16 %v219, %v217
    %v266 = vpack.c.b16 %v222, %v220
    %v267 = vpack.c.b16 %v223, %v221
    %v268 = vpack.c.b16 %v226, %v224
    %v269 = vpack.c.b16 %v227, %v225
    %v270 = vpack.c.b16 %v230, %v228
    %v271 = vpack.c.b16 %v231, %v229
    %v272 = vpack.c.b16 %v234, %v232
    %v273 = vpack.c.b16 %v235, %v233
    %v274 = vpack.c.b16 %v238, %v236
    %v275 = vpack.c.b16 %v239, %v237
    %v276 = vpack.c.b16 %v242, %v240
    %v277 = vpack.c.b16 %v243, %v241
    %v278 = vpack.c.b16 %v246, %v244
    %v279 = vpack.c.b16 %v247, %v245
    %312 = vmatprep.subr.bf16.mxu0 0
    %313 = vmatpush1.bf16.msra.mxu0 %v136
    %314 = vmatprep.subr.bf16.mxu0 0
    %315 = vmatpush1.bf16.msra.mxu0 %v137
    %316 = vmatprep.subr.bf16.mxu0 0
    %317 = vmatpush1.bf16.msra.mxu0 %v138
    %318 = vmatprep.subr.bf16.mxu0 0
    %319 = vmatpush1.bf16.msra.mxu0 %v139
    %320 = vmatprep.subr.bf16.mxu0 0
    %321 = vmatpush1.bf16.msra.mxu0 %v140
    %322 = vmatprep.subr.bf16.mxu0 0
    %323 = vmatpush1.bf16.msra.mxu0 %v141
    %324 = vmatprep.subr.bf16.mxu0 0
    %325 = vmatpush1.bf16.msra.mxu0 %v142
    %326 = vmatprep.subr.bf16.mxu0 0
    %327 = vmatpush1.bf16.msra.mxu0 %v143
    %328 = vmatprep.subr.bf16.mxu0 0
    %329 = vmatpush1.bf16.msra.mxu0 %v144
    %330 = vmatprep.subr.bf16.mxu0 0
    %331 = vmatpush1.bf16.msra.mxu0 %v145
    %332 = vmatprep.subr.bf16.mxu0 0
    %333 = vmatpush1.bf16.msra.mxu0 %v146
    %334 = vmatprep.subr.bf16.mxu0 0
    %335 = vmatpush1.bf16.msra.mxu0 %v147
    %336 = vmatprep.subr.bf16.mxu0 0
    %337 = vmatpush1.bf16.msra.mxu0 %v148
    %338 = vmatprep.subr.bf16.mxu0 0
    %339 = vmatpush1.bf16.msra.mxu0 %v149
    %340 = vmatprep.subr.bf16.mxu0 0
    %341 = vmatpush1.bf16.msra.mxu0 %v150
    %342 = vmatprep.subr.bf16.mxu0 0
    %343 = vmatpush1.bf16.msra.mxu0 %v151
    %344 = vmatprep.mubr.bf16.mxu0 %v249
    %345 = vmatmul.mubr.bf16.gmra.mrb[0].mxu0 %v248
    %v346 = vpop.f32.mrb[0].mxu0
    %v347 = vadd.f32 0.0, %v346
    %v348 = vpop.f32.mrb[0].mxu0
    %v349 = vpop.f32.mrb[0].mxu0
    %v350 = vadd.f32 0.0, %v349
    %v351 = vpop.f32.mrb[0].mxu0
    %352 = vmatprep.mubr.bf16.mxu0 %v251
    %353 = vmatmul.mubr.bf16.gmra.mrb[0].mxu0 %v250
    %v354 = vpop.f32.mrb[0].mxu0
    %v355 = vadd.f32 0.0, %v354
    %v356 = vpop.f32.mrb[0].mxu0
    %v357 = vpop.f32.mrb[0].mxu0
    %v358 = vadd.f32 0.0, %v357
    %v359 = vpop.f32.mrb[0].mxu0
    %360 = vmatprep.mubr.bf16.mxu0 %v253
    %361 = vmatmul.mubr.bf16.gmra.mrb[0].mxu0 %v252
    %v362 = vpop.f32.mrb[0].mxu0
    %v363 = vadd.f32 0.0, %v362
    %v364 = vpop.f32.mrb[0].mxu0
    %v365 = vpop.f32.mrb[0].mxu0
    %v366 = vadd.f32 0.0, %v365
    %v367 = vpop.f32.mrb[0].mxu0
    %368 = vmatprep.mubr.bf16.mxu0 %v255
    %369 = vmatmul.mubr.bf16.gmra.mrb[0].mxu0 %v254
    %v370 = vpop.f32.mrb[0].mxu0
    %v371 = vadd.f32 0.0, %v370
    %v372 = vpop.f32.mrb[0].mxu0
    %v373 = vpop.f32.mrb[0].mxu0
    %v374 = vadd.f32 0.0, %v373
    %v375 = vpop.f32.mrb[0].mxu0
    %376 = vmatprep.mubr.bf16.mxu0 %v257
    %377 = vmatmul.mubr.bf16.gmra.mrb[0].mxu0 %v256
    %v378 = vpop.f32.mrb[0].mxu0
    %v379 = vadd.f32 0.0, %v378
    %v380 = vpop.f32.mrb[0].mxu0
    %v381 = vpop.f32.mrb[0].mxu0
    %v382 = vadd.f32 0.0, %v381
    %v383 = vpop.f32.mrb[0].mxu0
    %384 = vmatprep.mubr.bf16.mxu0 %v259
    %385 = vmatmul.mubr.bf16.gmra.mrb[0].mxu0 %v258
    %v386 = vpop.f32.mrb[0].mxu0
    %v387 = vadd.f32 0.0, %v386
    %v388 = vpop.f32.mrb[0].mxu0
    %v389 = vpop.f32.mrb[0].mxu0
    %v390 = vadd.f32 0.0, %v389
    %v391 = vpop.f32.mrb[0].mxu0
    %392 = vmatprep.mubr.bf16.mxu0 %v261
    %393 = vmatmul.mubr.bf16.gmra.mrb[0].mxu0 %v260
    %v394 = vpop.f32.mrb[0].mxu0
    %v395 = vadd.f32 0.0, %v394
    %v396 = vpop.f32.mrb[0].mxu0
    %v397 = vpop.f32.mrb[0].mxu0
    %v398 = vadd.f32 0.0, %v397
    %v399 = vpop.f32.mrb[0].mxu0
    %400 = vmatprep.mubr.bf16.mxu0 %v263
    %401 = vmatmul.mubr.bf16.gmra.mrb[0].mxu0 %v262
    %v402 = vpop.f32.mrb[0].mxu0
    %v403 = vadd.f32 0.0, %v402
    %v404 = vpop.f32.mrb[0].mxu0
    %v405 = vpop.f32.mrb[0].mxu0
    %v406 = vadd.f32 0.0, %v405
    %v407 = vpop.f32.mrb[0].mxu0
    %408 = vmatprep.mubr.bf16.mxu0 %v265
    %409 = vmatmul.mubr.bf16.gmra.mrb[0].mxu0 %v264
    %v410 = vpop.f32.mrb[0].mxu0
    %v411 = vadd.f32 0.0, %v410
    %v412 = vpop.f32.mrb[0].mxu0
    %v413 = vpop.f32.mrb[0].mxu0
    %v414 = vadd.f32 0.0, %v413
    %v415 = vpop.f32.mrb[0].mxu0
    %416 = vmatprep.mubr.bf16.mxu0 %v267
    %417 = vmatmul.mubr.bf16.gmra.mrb[0].mxu0 %v266
    %v418 = vpop.f32.mrb[0].mxu0
    %v419 = vadd.f32 0.0, %v418
    %v420 = vpop.f32.mrb[0].mxu0
    %v421 = vpop.f32.mrb[0].mxu0
    %v422 = vadd.f32 0.0, %v421
    %v423 = vpop.f32.mrb[0].mxu0
    %424 = vmatprep.mubr.bf16.mxu0 %v269
    %425 = vmatmul.mubr.bf16.gmra.mrb[0].mxu0 %v268
    %v426 = vpop.f32.mrb[0].mxu0
    %v427 = vadd.f32 0.0, %v426
    %v428 = vpop.f32.mrb[0].mxu0
    %v429 = vpop.f32.mrb[0].mxu0
    %v430 = vadd.f32 0.0, %v429
    %v431 = vpop.f32.mrb[0].mxu0
    %432 = vmatprep.mubr.bf16.mxu0 %v271
    %433 = vmatmul.mubr.bf16.gmra.mrb[0].mxu0 %v270
    %v434 = vpop.f32.mrb[0].mxu0
    %v435 = vadd.f32 0.0, %v434
    %v436 = vpop.f32.mrb[0].mxu0
    %v437 = vpop.f32.mrb[0].mxu0
    %v438 = vadd.f32 0.0, %v437
    %v439 = vpop.f32.mrb[0].mxu0
    %440 = vmatprep.mubr.bf16.mxu0 %v273
    %441 = vmatmul.mubr.bf16.gmra.mrb[0].mxu0 %v272
    %v442 = vpop.f32.mrb[0].mxu0
    %v443 = vadd.f32 0.0, %v442
    %v444 = vpop.f32.mrb[0].mxu0
    %v445 = vpop.f32.mrb[0].mxu0
    %v446 = vadd.f32 0.0, %v445
    %v447 = vpop.f32.mrb[0].mxu0
    %448 = vmatprep.mubr.bf16.mxu0 %v275
    %449 = vmatmul.mubr.bf16.gmra.mrb[0].mxu0 %v274
    %v450 = vpop.f32.mrb[0].mxu0
    %v451 = vadd.f32 0.0, %v450
    %v452 = vpop.f32.mrb[0].mxu0
    %v453 = vpop.f32.mrb[0].mxu0
    %v454 = vadd.f32 0.0, %v453
    %v455 = vpop.f32.mrb[0].mxu0
    %456 = vmatprep.mubr.bf16.mxu0 %v277
    %457 = vmatmul.mubr.bf16.gmra.mrb[0].mxu0 %v276
    %v458 = vpop.f32.mrb[0].mxu0
    %v459 = vadd.f32 0.0, %v458
    %v460 = vpop.f32.mrb[0].mxu0
    %v461 = vpop.f32.mrb[0].mxu0
    %v462 = vadd.f32 0.0, %v461
    %v463 = vpop.f32.mrb[0].mxu0
    %464 = vmatprep.mubr.bf16.mxu0 %v279
    %465 = vmatmul.mubr.bf16.gmra.mrb[0].mxu0 %v278
    %v466 = vpop.f32.mrb[0].mxu0
    %v467 = vadd.f32 0.0, %v466
    %v468 = vpop.f32.mrb[0].mxu0
    %v469 = vpop.f32.mrb[0].mxu0
    %v470 = vadd.f32 0.0, %v469
    %v471 = vpop.f32.mrb[0].mxu0
    %472 = vdwg.mxu0
    %v473 = vpack.c.bf16 %v350, %v347
    %v474 = vpack.c.bf16 %v358, %v355
    %v475 = vpack.c.bf16 %v366, %v363
    %v476 = vpack.c.bf16 %v374, %v371
    %v477 = vpack.c.bf16 %v382, %v379
    %v478 = vpack.c.bf16 %v390, %v387
    %v479 = vpack.c.bf16 %v398, %v395
    %v480 = vpack.c.bf16 %v406, %v403
    %v481 = vpack.c.bf16 %v414, %v411
    %v482 = vpack.c.bf16 %v422, %v419
    %v483 = vpack.c.bf16 %v430, %v427
    %v484 = vpack.c.bf16 %v438, %v435
    %v485 = vpack.c.bf16 %v446, %v443
    %v486 = vpack.c.bf16 %v454, %v451
    %v487 = vpack.c.bf16 %v462, %v459
    %v488 = vpack.c.bf16 %v470, %v467
    %489 = vmatprep.subr.bf16.mxu0 0
    %490 = vmatpush1.bf16.msra.mxu0 %v473
    %491 = vmatprep.subr.bf16.mxu0 0
    %492 = vmatpush1.bf16.msra.mxu0 %v474
    %493 = vmatprep.subr.bf16.mxu0 0
    %494 = vmatpush1.bf16.msra.mxu0 %v475
    %495 = vmatprep.subr.bf16.mxu0 0
    %496 = vmatpush1.bf16.msra.mxu0 %v476
    %497 = vmatprep.subr.bf16.mxu0 0
    %498 = vmatpush1.bf16.msra.mxu0 %v477
    %499 = vmatprep.subr.bf16.mxu0 0
    %500 = vmatpush1.bf16.msra.mxu0 %v478
    %501 = vmatprep.subr.bf16.mxu0 0
    %502 = vmatpush1.bf16.msra.mxu0 %v479
    %503 = vmatprep.subr.bf16.mxu0 0
    %504 = vmatpush1.bf16.msra.mxu0 %v480
    %505 = vmatprep.subr.bf16.mxu0 0
    %506 = vmatpush1.bf16.msra.mxu0 %v481
    %507 = vmatprep.subr.bf16.mxu0 0
    %508 = vmatpush1.bf16.msra.mxu0 %v482
    %509 = vmatprep.subr.bf16.mxu0 0
    %510 = vmatpush1.bf16.msra.mxu0 %v483
    %511 = vmatprep.subr.bf16.mxu0 0
    %512 = vmatpush1.bf16.msra.mxu0 %v484
    %513 = vmatprep.subr.bf16.mxu0 0
    %514 = vmatpush1.bf16.msra.mxu0 %v485
    %515 = vmatprep.subr.bf16.mxu0 0
    %516 = vmatpush1.bf16.msra.mxu0 %v486
    %517 = vmatprep.subr.bf16.mxu0 0
    %518 = vmatpush1.bf16.msra.mxu0 %v487
    %519 = vmatprep.subr.bf16.mxu0 0
    %520 = vmatpush1.bf16.msra.mxu0 %v488
    %521 = vmatprep.mubr.bf16.mxu0 %v249
    %522 = vmatmul.mubr.bf16.gmra.mrb[0].mxu0 %v248
    %v523 = vpop.f32.mrb[0].mxu0
    %v524 = vadd.f32 0.0, %v523
    %v525 = vpop.f32.mrb[0].mxu0
    %v526 = vpop.f32.mrb[0].mxu0
    %v527 = vadd.f32 0.0, %v526
    %v528 = vpop.f32.mrb[0].mxu0
    %529 = vmatprep.mubr.bf16.mxu0 %v251
    %530 = vmatmul.mubr.bf16.gmra.mrb[0].mxu0 %v250
    %v531 = vpop.f32.mrb[0].mxu0
    %v532 = vadd.f32 0.0, %v531
    %v533 = vpop.f32.mrb[0].mxu0
    %v534 = vpop.f32.mrb[0].mxu0
    %v535 = vadd.f32 0.0, %v534
    %v536 = vpop.f32.mrb[0].mxu0
    %537 = vmatprep.mubr.bf16.mxu0 %v253
    %538 = vmatmul.mubr.bf16.gmra.mrb[0].mxu0 %v252
    %v539 = vpop.f32.mrb[0].mxu0
    %v540 = vadd.f32 0.0, %v539
    %v541 = vpop.f32.mrb[0].mxu0
    %v542 = vpop.f32.mrb[0].mxu0
    %v543 = vadd.f32 0.0, %v542
    %v544 = vpop.f32.mrb[0].mxu0
    %545 = vmatprep.mubr.bf16.mxu0 %v255
    %546 = vmatmul.mubr.bf16.gmra.mrb[0].mxu0 %v254
    %v547 = vpop.f32.mrb[0].mxu0
    %v548 = vadd.f32 0.0, %v547
    %v549 = vpop.f32.mrb[0].mxu0
    %v550 = vpop.f32.mrb[0].mxu0
    %v551 = vadd.f32 0.0, %v550
    %v552 = vpop.f32.mrb[0].mxu0
    %553 = vmatprep.mubr.bf16.mxu0 %v257
    %554 = vmatmul.mubr.bf16.gmra.mrb[0].mxu0 %v256
    %v555 = vpop.f32.mrb[0].mxu0
    %v556 = vadd.f32 0.0, %v555
    %v557 = vpop.f32.mrb[0].mxu0
    %v558 = vpop.f32.mrb[0].mxu0
    %v559 = vadd.f32 0.0, %v558
    %v560 = vpop.f32.mrb[0].mxu0
    %561 = vmatprep.mubr.bf16.mxu0 %v259
    %562 = vmatmul.mubr.bf16.gmra.mrb[0].mxu0 %v258
    %v563 = vpop.f32.mrb[0].mxu0
    %v564 = vadd.f32 0.0, %v563
    %v565 = vpop.f32.mrb[0].mxu0
    %v566 = vpop.f32.mrb[0].mxu0
    %v567 = vadd.f32 0.0, %v566
    %v568 = vpop.f32.mrb[0].mxu0
    %569 = vmatprep.mubr.bf16.mxu0 %v261
    %570 = vmatmul.mubr.bf16.gmra.mrb[0].mxu0 %v260
    %v571 = vpop.f32.mrb[0].mxu0
    %v572 = vadd.f32 0.0, %v571
    %v573 = vpop.f32.mrb[0].mxu0
    %v574 = vpop.f32.mrb[0].mxu0
    %v575 = vadd.f32 0.0, %v574
    %v576 = vpop.f32.mrb[0].mxu0
    %577 = vmatprep.mubr.bf16.mxu0 %v263
    %578 = vmatmul.mubr.bf16.gmra.mrb[0].mxu0 %v262
    %v579 = vpop.f32.mrb[0].mxu0
    %v580 = vadd.f32 0.0, %v579
    %v581 = vpop.f32.mrb[0].mxu0
    %v582 = vpop.f32.mrb[0].mxu0
    %v583 = vadd.f32 0.0, %v582
    %v584 = vpop.f32.mrb[0].mxu0
    %585 = vmatprep.mubr.bf16.mxu0 %v265
    %586 = vmatmul.mubr.bf16.gmra.mrb[0].mxu0 %v264
    %v587 = vpop.f32.mrb[0].mxu0
    %v588 = vadd.f32 0.0, %v587
    %v589 = vpop.f32.mrb[0].mxu0
    %v590 = vpop.f32.mrb[0].mxu0
    %v591 = vadd.f32 0.0, %v590
    %v592 = vpop.f32.mrb[0].mxu0
    %593 = vmatprep.mubr.bf16.mxu0 %v267
    %594 = vmatmul.mubr.bf16.gmra.mrb[0].mxu0 %v266
    %v595 = vpop.f32.mrb[0].mxu0
    %v596 = vadd.f32 0.0, %v595
    %v597 = vpop.f32.mrb[0].mxu0
    %v598 = vpop.f32.mrb[0].mxu0
    %v599 = vadd.f32 0.0, %v598
    %v600 = vpop.f32.mrb[0].mxu0
    %601 = vmatprep.mubr.bf16.mxu0 %v269
    %602 = vmatmul.mubr.bf16.gmra.mrb[0].mxu0 %v268
    %v603 = vpop.f32.mrb[0].mxu0
    %v604 = vadd.f32 0.0, %v603
    %v605 = vpop.f32.mrb[0].mxu0
    %v606 = vpop.f32.mrb[0].mxu0
    %v607 = vadd.f32 0.0, %v606
    %v608 = vpop.f32.mrb[0].mxu0
    %609 = vmatprep.mubr.bf16.mxu0 %v271
    %610 = vmatmul.mubr.bf16.gmra.mrb[0].mxu0 %v270
    %v611 = vpop.f32.mrb[0].mxu0
    %v612 = vadd.f32 0.0, %v611
    %v613 = vpop.f32.mrb[0].mxu0
    %v614 = vpop.f32.mrb[0].mxu0
    %v615 = vadd.f32 0.0, %v614
    %v616 = vpop.f32.mrb[0].mxu0
    %617 = vmatprep.mubr.bf16.mxu0 %v273
    %618 = vmatmul.mubr.bf16.gmra.mrb[0].mxu0 %v272
    %v619 = vpop.f32.mrb[0].mxu0
    %v620 = vadd.f32 0.0, %v619
    %v621 = vpop.f32.mrb[0].mxu0
    %v622 = vpop.f32.mrb[0].mxu0
    %v623 = vadd.f32 0.0, %v622
    %v624 = vpop.f32.mrb[0].mxu0
    %625 = vmatprep.mubr.bf16.mxu0 %v275
    %626 = vmatmul.mubr.bf16.gmra.mrb[0].mxu0 %v274
    %v627 = vpop.f32.mrb[0].mxu0
    %v628 = vadd.f32 0.0, %v627
    %v629 = vpop.f32.mrb[0].mxu0
    %v630 = vpop.f32.mrb[0].mxu0
    %v631 = vadd.f32 0.0, %v630
    %v632 = vpop.f32.mrb[0].mxu0
    %633 = vmatprep.mubr.bf16.mxu0 %v277
    %634 = vmatmul.mubr.bf16.gmra.mrb[0].mxu0 %v276
    %v635 = vpop.f32.mrb[0].mxu0
    %v636 = vadd.f32 0.0, %v635
    %v637 = vpop.f32.mrb[0].mxu0
    %v638 = vpop.f32.mrb[0].mxu0
    %v639 = vadd.f32 0.0, %v638
    %v640 = vpop.f32.mrb[0].mxu0
    %641 = vmatprep.mubr.bf16.mxu0 %v279
    %642 = vmatmul.mubr.bf16.gmra.mrb[0].mxu0 %v278
    %v643 = vpop.f32.mrb[0].mxu0
    %v644 = vadd.f32 0.0, %v643
    %v645 = vpop.f32.mrb[0].mxu0
    %v646 = vpop.f32.mrb[0].mxu0
    %v647 = vadd.f32 0.0, %v646
    %v648 = vpop.f32.mrb[0].mxu0
    %649 = vdwg.mxu0
    %v650 = vmul.f32 %v524, 2.0
    %v651 = vmul.f32 %v527, 2.0
    %v652 = vmul.f32 %v532, 2.0
    %v653 = vmul.f32 %v535, 2.0
    %v654 = vmul.f32 %v540, 2.0
    %v655 = vmul.f32 %v543, 2.0
    %v656 = vmul.f32 %v548, 2.0
    %v657 = vmul.f32 %v551, 2.0
    %v658 = vmul.f32 %v556, 2.0
    %v659 = vmul.f32 %v559, 2.0
    %v660 = vmul.f32 %v564, 2.0
    %v661 = vmul.f32 %v567, 2.0
    %v662 = vmul.f32 %v572, 2.0
    %v663 = vmul.f32 %v575, 2.0
    %v664 = vmul.f32 %v580, 2.0
    %v665 = vmul.f32 %v583, 2.0
    %v666 = vmul.f32 %v588, 2.0
    %v667 = vmul.f32 %v591, 2.0
    %v668 = vmul.f32 %v596, 2.0
    %v669 = vmul.f32 %v599, 2.0
    %v670 = vmul.f32 %v604, 2.0
    %v671 = vmul.f32 %v607, 2.0
    %v672 = vmul.f32 %v612, 2.0
    %v673 = vmul.f32 %v615, 2.0
    %v674 = vmul.f32 %v620, 2.0
    %v675 = vmul.f32 %v623, 2.0
    %v676 = vmul.f32 %v628, 2.0
    %v677 = vmul.f32 %v631, 2.0
    %v678 = vmul.f32 %v636, 2.0
    %v679 = vmul.f32 %v639, 2.0
    %v680 = vmul.f32 %v644, 2.0
    %v681 = vmul.f32 %v647, 2.0
    %v682 = vsub.f32 %v650, %v104
    %v683 = vsub.f32 %v651, %v105
    %v684 = vsub.f32 %v652, %v106
    %v685 = vsub.f32 %v653, %v107
    %v686 = vsub.f32 %v654, %v108
    %v687 = vsub.f32 %v655, %v109
    %v688 = vsub.f32 %v656, %v110
    %v689 = vsub.f32 %v657, %v111
    %v690 = vsub.f32 %v658, %v112
    %v691 = vsub.f32 %v659, %v113
    %v692 = vsub.f32 %v660, %v114
    %v693 = vsub.f32 %v661, %v115
    %v694 = vsub.f32 %v662, %v116
    %v695 = vsub.f32 %v663, %v117
    %v696 = vsub.f32 %v664, %v118
    %v697 = vsub.f32 %v665, %v119
    %v698 = vsub.f32 %v666, %v120
    %v699 = vsub.f32 %v667, %v121
    %v700 = vsub.f32 %v668, %v122
    %v701 = vsub.f32 %v669, %v123
    %v702 = vsub.f32 %v670, %v124
    %v703 = vsub.f32 %v671, %v125
    %v704 = vsub.f32 %v672, %v126
    %v705 = vsub.f32 %v673, %v127
    %v706 = vsub.f32 %v674, %v128
    %v707 = vsub.f32 %v675, %v129
    %v708 = vsub.f32 %v676, %v130
    %v709 = vsub.f32 %v677, %v131
    %v710 = vsub.f32 %v678, %v132
    %v711 = vsub.f32 %v679, %v133
    %v712 = vsub.f32 %v680, %v134
    %v713 = vsub.f32 %v681, %v135
    %v714 = vld [vmem:[%s5] sm:$0x7]
    %716 = vset.pattern.permute.xlu0 0
    %717 = vperm.xlu0 %716, %v104
    %v718 = vpop.permute.xlu0 %717
    %721 = vset.pattern.permute.xlu0 0
    %722 = vperm.xlu0 %721, %v105
    %v723 = vpop.permute.xlu0 %722
    %726 = vset.pattern.permute.xlu0 0
    %727 = vperm.xlu0 %726, %v106
    %v728 = vpop.permute.xlu0 %727
    %731 = vset.pattern.permute.xlu0 0
    %732 = vperm.xlu0 %731, %v107
    %v733 = vpop.permute.xlu0 %732
    %736 = vset.pattern.permute.xlu0 0
    %737 = vperm.xlu0 %736, %v108
    %v738 = vpop.permute.xlu0 %737
    %741 = vset.pattern.permute.xlu0 0
    %742 = vperm.xlu0 %741, %v109
    %v743 = vpop.permute.xlu0 %742
    %746 = vset.pattern.permute.xlu0 0
    %747 = vperm.xlu0 %746, %v110
    %v748 = vpop.permute.xlu0 %747
    %751 = vset.pattern.permute.xlu0 0
    %752 = vperm.xlu0 %751, %v111
    %v753 = vpop.permute.xlu0 %752
    %756 = vset.pattern.permute.xlu0 0
    %757 = vperm.xlu0 %756, %v112
    %v758 = vpop.permute.xlu0 %757
    %761 = vset.pattern.permute.xlu0 0
    %762 = vperm.xlu0 %761, %v113
    %v763 = vpop.permute.xlu0 %762
    %766 = vset.pattern.permute.xlu0 0
    %767 = vperm.xlu0 %766, %v114
    %v768 = vpop.permute.xlu0 %767
    %771 = vset.pattern.permute.xlu0 0
    %772 = vperm.xlu0 %771, %v115
    %v773 = vpop.permute.xlu0 %772
    %776 = vset.pattern.permute.xlu0 0
    %777 = vperm.xlu0 %776, %v116
    %v778 = vpop.permute.xlu0 %777
    %781 = vset.pattern.permute.xlu0 0
    %782 = vperm.xlu0 %781, %v117
    %v783 = vpop.permute.xlu0 %782
    %786 = vset.pattern.permute.xlu0 0
    %787 = vperm.xlu0 %786, %v118
    %v788 = vpop.permute.xlu0 %787
    %791 = vset.pattern.permute.xlu0 0
    %792 = vperm.xlu0 %791, %v119
    %v793 = vpop.permute.xlu0 %792
    %796 = vset.pattern.permute.xlu0 0
    %797 = vperm.xlu0 %796, %v120
    %v798 = vpop.permute.xlu0 %797
    %801 = vset.pattern.permute.xlu0 0
    %802 = vperm.xlu0 %801, %v121
    %v803 = vpop.permute.xlu0 %802
    %806 = vset.pattern.permute.xlu0 0
    %807 = vperm.xlu0 %806, %v122
    %v808 = vpop.permute.xlu0 %807
    %811 = vset.pattern.permute.xlu0 0
    %812 = vperm.xlu0 %811, %v123
    %v813 = vpop.permute.xlu0 %812
    %816 = vset.pattern.permute.xlu0 0
    %817 = vperm.xlu0 %816, %v124
    %v818 = vpop.permute.xlu0 %817
    %821 = vset.pattern.permute.xlu0 0
    %822 = vperm.xlu0 %821, %v125
    %v823 = vpop.permute.xlu0 %822
    %826 = vset.pattern.permute.xlu0 0
    %827 = vperm.xlu0 %826, %v126
    %v828 = vpop.permute.xlu0 %827
    %831 = vset.pattern.permute.xlu0 0
    %832 = vperm.xlu0 %831, %v127
    %v833 = vpop.permute.xlu0 %832
    %836 = vset.pattern.permute.xlu0 0
    %837 = vperm.xlu0 %836, %v128
    %v838 = vpop.permute.xlu0 %837
    %841 = vset.pattern.permute.xlu0 0
    %842 = vperm.xlu0 %841, %v129
    %v843 = vpop.permute.xlu0 %842
    %846 = vset.pattern.permute.xlu0 0
    %847 = vperm.xlu0 %846, %v130
    %v848 = vpop.permute.xlu0 %847
    %851 = vset.pattern.permute.xlu0 0
    %852 = vperm.xlu0 %851, %v131
    %v853 = vpop.permute.xlu0 %852
    %856 = vset.pattern.permute.xlu0 0
    %857 = vperm.xlu0 %856, %v132
    %v858 = vpop.permute.xlu0 %857
    %861 = vset.pattern.permute.xlu0 0
    %862 = vperm.xlu0 %861, %v133
    %v863 = vpop.permute.xlu0 %862
    %866 = vset.pattern.permute.xlu0 0
    %867 = vperm.xlu0 %866, %v134
    %v868 = vpop.permute.xlu0 %867
    %871 = vset.pattern.permute.xlu0 0
    %872 = vperm.xlu0 %871, %v135
    %v873 = vpop.permute.xlu0 %872
    %v875 = vlaneseq
    %v876 = vshrl.u32 %v875, 7
    %v877 = vsub.s32 0, %v876
    %v878 = vrot.slane %v714, %v877
    %v879 = vmul.f32 %v718, %v878
    %v880 = vmul.f32 %v723, %v878
    %v881 = vmul.f32 %v728, %v878
    %v882 = vmul.f32 %v733, %v878
    %v883 = vmul.f32 %v738, %v878
    %v884 = vmul.f32 %v743, %v878
    %v885 = vmul.f32 %v748, %v878
    %v886 = vmul.f32 %v753, %v878
    %v887 = vmul.f32 %v758, %v878
    %v888 = vmul.f32 %v763, %v878
    %v889 = vmul.f32 %v768, %v878
    %v890 = vmul.f32 %v773, %v878
    %v891 = vmul.f32 %v778, %v878
    %v892 = vmul.f32 %v783, %v878
    %v893 = vmul.f32 %v788, %v878
    %v894 = vmul.f32 %v793, %v878
    %v895 = vmul.f32 %v798, %v878
    %v896 = vmul.f32 %v803, %v878
    %v897 = vmul.f32 %v808, %v878
    %v898 = vmul.f32 %v813, %v878
    %v899 = vmul.f32 %v818, %v878
    %v900 = vmul.f32 %v823, %v878
    %v901 = vmul.f32 %v828, %v878
    %v902 = vmul.f32 %v833, %v878
    %v903 = vmul.f32 %v838, %v878
    %v904 = vmul.f32 %v843, %v878
    %v905 = vmul.f32 %v848, %v878
    %v906 = vmul.f32 %v853, %v878
    %v907 = vmul.f32 %v858, %v878
    %v908 = vmul.f32 %v863, %v878
    %v909 = vmul.f32 %v868, %v878
    %v910 = vmul.f32 %v873, %v878
    %912 = vset.pattern.permute.xlu0 0
    %913 = vperm.xlu0 %912, %v347
    %v914 = vpop.permute.xlu0 %913
    %917 = vset.pattern.permute.xlu0 0
    %918 = vperm.xlu0 %917, %v350
    %v919 = vpop.permute.xlu0 %918
    %922 = vset.pattern.permute.xlu0 0
    %923 = vperm.xlu0 %922, %v355
    %v924 = vpop.permute.xlu0 %923
    %927 = vset.pattern.permute.xlu0 0
    %928 = vperm.xlu0 %927, %v358
    %v929 = vpop.permute.xlu0 %928
    %932 = vset.pattern.permute.xlu0 0
    %933 = vperm.xlu0 %932, %v363
    %v934 = vpop.permute.xlu0 %933
    %937 = vset.pattern.permute.xlu0 0
    %938 = vperm.xlu0 %937, %v366
    %v939 = vpop.permute.xlu0 %938
    %942 = vset.pattern.permute.xlu0 0
    %943 = vperm.xlu0 %942, %v371
    %v944 = vpop.permute.xlu0 %943
    %947 = vset.pattern.permute.xlu0 0
    %948 = vperm.xlu0 %947, %v374
    %v949 = vpop.permute.xlu0 %948
    %952 = vset.pattern.permute.xlu0 0
    %953 = vperm.xlu0 %952, %v379
    %v954 = vpop.permute.xlu0 %953
    %957 = vset.pattern.permute.xlu0 0
    %958 = vperm.xlu0 %957, %v382
    %v959 = vpop.permute.xlu0 %958
    %962 = vset.pattern.permute.xlu0 0
    %963 = vperm.xlu0 %962, %v387
    %v964 = vpop.permute.xlu0 %963
    %967 = vset.pattern.permute.xlu0 0
    %968 = vperm.xlu0 %967, %v390
    %v969 = vpop.permute.xlu0 %968
    %972 = vset.pattern.permute.xlu0 0
    %973 = vperm.xlu0 %972, %v395
    %v974 = vpop.permute.xlu0 %973
    %977 = vset.pattern.permute.xlu0 0
    %978 = vperm.xlu0 %977, %v398
    %v979 = vpop.permute.xlu0 %978
    %982 = vset.pattern.permute.xlu0 0
    %983 = vperm.xlu0 %982, %v403
    %v984 = vpop.permute.xlu0 %983
    %987 = vset.pattern.permute.xlu0 0
    %988 = vperm.xlu0 %987, %v406
    %v989 = vpop.permute.xlu0 %988
    %992 = vset.pattern.permute.xlu0 0
    %993 = vperm.xlu0 %992, %v411
    %v994 = vpop.permute.xlu0 %993
    %997 = vset.pattern.permute.xlu0 0
    %998 = vperm.xlu0 %997, %v414
    %v999 = vpop.permute.xlu0 %998
    %1002 = vset.pattern.permute.xlu0 0
    %1003 = vperm.xlu0 %1002, %v419
    %v1004 = vpop.permute.xlu0 %1003
    %1007 = vset.pattern.permute.xlu0 0
    %1008 = vperm.xlu0 %1007, %v422
    %v1009 = vpop.permute.xlu0 %1008
    %1012 = vset.pattern.permute.xlu0 0
    %1013 = vperm.xlu0 %1012, %v427
    %v1014 = vpop.permute.xlu0 %1013
    %1017 = vset.pattern.permute.xlu0 0
    %1018 = vperm.xlu0 %1017, %v430
    %v1019 = vpop.permute.xlu0 %1018
    %1022 = vset.pattern.permute.xlu0 0
    %1023 = vperm.xlu0 %1022, %v435
    %v1024 = vpop.permute.xlu0 %1023
    %1027 = vset.pattern.permute.xlu0 0
    %1028 = vperm.xlu0 %1027, %v438
    %v1029 = vpop.permute.xlu0 %1028
    %1032 = vset.pattern.permute.xlu0 0
    %1033 = vperm.xlu0 %1032, %v443
    %v1034 = vpop.permute.xlu0 %1033
    %1037 = vset.pattern.permute.xlu0 0
    %1038 = vperm.xlu0 %1037, %v446
    %v1039 = vpop.permute.xlu0 %1038
    %1042 = vset.pattern.permute.xlu0 0
    %1043 = vperm.xlu0 %1042, %v451
    %v1044 = vpop.permute.xlu0 %1043
    %1047 = vset.pattern.permute.xlu0 0
    %1048 = vperm.xlu0 %1047, %v454
    %v1049 = vpop.permute.xlu0 %1048
    %1052 = vset.pattern.permute.xlu0 0
    %1053 = vperm.xlu0 %1052, %v459
    %v1054 = vpop.permute.xlu0 %1053
    %1057 = vset.pattern.permute.xlu0 0
    %1058 = vperm.xlu0 %1057, %v462
    %v1059 = vpop.permute.xlu0 %1058
    %1062 = vset.pattern.permute.xlu0 0
    %1063 = vperm.xlu0 %1062, %v467
    %v1064 = vpop.permute.xlu0 %1063
    %1067 = vset.pattern.permute.xlu0 0
    %1068 = vperm.xlu0 %1067, %v470
    %v1069 = vpop.permute.xlu0 %1068
    %v1071 = vlaneseq
    %v1072 = vshrl.u32 %v1071, 7
    %v1073 = vsub.s32 1, %v1072
    %v1074 = vrot.slane %v714, %v1073
    %v1075 = vmul.f32 %v914, %v1074
    %v1076 = vmul.f32 %v919, %v1074
    %v1077 = vmul.f32 %v924, %v1074
    %v1078 = vmul.f32 %v929, %v1074
    %v1079 = vmul.f32 %v934, %v1074
    %v1080 = vmul.f32 %v939, %v1074
    %v1081 = vmul.f32 %v944, %v1074
    %v1082 = vmul.f32 %v949, %v1074
    %v1083 = vmul.f32 %v954, %v1074
    %v1084 = vmul.f32 %v959, %v1074
    %v1085 = vmul.f32 %v964, %v1074
    %v1086 = vmul.f32 %v969, %v1074
    %v1087 = vmul.f32 %v974, %v1074
    %v1088 = vmul.f32 %v979, %v1074
    %v1089 = vmul.f32 %v984, %v1074
    %v1090 = vmul.f32 %v989, %v1074
    %v1091 = vmul.f32 %v994, %v1074
    %v1092 = vmul.f32 %v999, %v1074
    %v1093 = vmul.f32 %v1004, %v1074
    %v1094 = vmul.f32 %v1009, %v1074
    %v1095 = vmul.f32 %v1014, %v1074
    %v1096 = vmul.f32 %v1019, %v1074
    %v1097 = vmul.f32 %v1024, %v1074
    %v1098 = vmul.f32 %v1029, %v1074
    %v1099 = vmul.f32 %v1034, %v1074
    %v1100 = vmul.f32 %v1039, %v1074
    %v1101 = vmul.f32 %v1044, %v1074
    %v1102 = vmul.f32 %v1049, %v1074
    %v1103 = vmul.f32 %v1054, %v1074
    %v1104 = vmul.f32 %v1059, %v1074
    %v1105 = vmul.f32 %v1064, %v1074
    %v1106 = vmul.f32 %v1069, %v1074
    %v1107 = vadd.f32 %v879, %v1075
    %v1108 = vadd.f32 %v880, %v1076
    %v1109 = vadd.f32 %v881, %v1077
    %v1110 = vadd.f32 %v882, %v1078
    %v1111 = vadd.f32 %v883, %v1079
    %v1112 = vadd.f32 %v884, %v1080
    %v1113 = vadd.f32 %v885, %v1081
    %v1114 = vadd.f32 %v886, %v1082
    %v1115 = vadd.f32 %v887, %v1083
    %v1116 = vadd.f32 %v888, %v1084
    %v1117 = vadd.f32 %v889, %v1085
    %v1118 = vadd.f32 %v890, %v1086
    %v1119 = vadd.f32 %v891, %v1087
    %v1120 = vadd.f32 %v892, %v1088
    %v1121 = vadd.f32 %v893, %v1089
    %v1122 = vadd.f32 %v894, %v1090
    %v1123 = vadd.f32 %v895, %v1091
    %v1124 = vadd.f32 %v896, %v1092
    %v1125 = vadd.f32 %v897, %v1093
    %v1126 = vadd.f32 %v898, %v1094
    %v1127 = vadd.f32 %v899, %v1095
    %v1128 = vadd.f32 %v900, %v1096
    %v1129 = vadd.f32 %v901, %v1097
    %v1130 = vadd.f32 %v902, %v1098
    %v1131 = vadd.f32 %v903, %v1099
    %v1132 = vadd.f32 %v904, %v1100
    %v1133 = vadd.f32 %v905, %v1101
    %v1134 = vadd.f32 %v906, %v1102
    %v1135 = vadd.f32 %v907, %v1103
    %v1136 = vadd.f32 %v908, %v1104
    %v1137 = vadd.f32 %v909, %v1105
    %v1138 = vadd.f32 %v910, %v1106
    %1140 = vset.pattern.permute.xlu0 0
    %1141 = vperm.xlu0 %1140, %v682
    %v1142 = vpop.permute.xlu0 %1141
    %1145 = vset.pattern.permute.xlu0 0
    %1146 = vperm.xlu0 %1145, %v683
    %v1147 = vpop.permute.xlu0 %1146
    %1150 = vset.pattern.permute.xlu0 0
    %1151 = vperm.xlu0 %1150, %v684
    %v1152 = vpop.permute.xlu0 %1151
    %1155 = vset.pattern.permute.xlu0 0
    %1156 = vperm.xlu0 %1155, %v685
    %v1157 = vpop.permute.xlu0 %1156
    %1160 = vset.pattern.permute.xlu0 0
    %1161 = vperm.xlu0 %1160, %v686
    %v1162 = vpop.permute.xlu0 %1161
    %1165 = vset.pattern.permute.xlu0 0
    %1166 = vperm.xlu0 %1165, %v687
    %v1167 = vpop.permute.xlu0 %1166
    %1170 = vset.pattern.permute.xlu0 0
    %1171 = vperm.xlu0 %1170, %v688
    %v1172 = vpop.permute.xlu0 %1171
    %1175 = vset.pattern.permute.xlu0 0
    %1176 = vperm.xlu0 %1175, %v689
    %v1177 = vpop.permute.xlu0 %1176
    %1180 = vset.pattern.permute.xlu0 0
    %1181 = vperm.xlu0 %1180, %v690
    %v1182 = vpop.permute.xlu0 %1181
    %1185 = vset.pattern.permute.xlu0 0
    %1186 = vperm.xlu0 %1185, %v691
    %v1187 = vpop.permute.xlu0 %1186
    %1190 = vset.pattern.permute.xlu0 0
    %1191 = vperm.xlu0 %1190, %v692
    %v1192 = vpop.permute.xlu0 %1191
    %1195 = vset.pattern.permute.xlu0 0
    %1196 = vperm.xlu0 %1195, %v693
    %v1197 = vpop.permute.xlu0 %1196
    %1200 = vset.pattern.permute.xlu0 0
    %1201 = vperm.xlu0 %1200, %v694
    %v1202 = vpop.permute.xlu0 %1201
    %1205 = vset.pattern.permute.xlu0 0
    %1206 = vperm.xlu0 %1205, %v695
    %v1207 = vpop.permute.xlu0 %1206
    %1210 = vset.pattern.permute.xlu0 0
    %1211 = vperm.xlu0 %1210, %v696
    %v1212 = vpop.permute.xlu0 %1211
    %1215 = vset.pattern.permute.xlu0 0
    %1216 = vperm.xlu0 %1215, %v697
    %v1217 = vpop.permute.xlu0 %1216
    %1220 = vset.pattern.permute.xlu0 0
    %1221 = vperm.xlu0 %1220, %v698
    %v1222 = vpop.permute.xlu0 %1221
    %1225 = vset.pattern.permute.xlu0 0
    %1226 = vperm.xlu0 %1225, %v699
    %v1227 = vpop.permute.xlu0 %1226
    %1230 = vset.pattern.permute.xlu0 0
    %1231 = vperm.xlu0 %1230, %v700
    %v1232 = vpop.permute.xlu0 %1231
    %1235 = vset.pattern.permute.xlu0 0
    %1236 = vperm.xlu0 %1235, %v701
    %v1237 = vpop.permute.xlu0 %1236
    %1240 = vset.pattern.permute.xlu0 0
    %1241 = vperm.xlu0 %1240, %v702
    %v1242 = vpop.permute.xlu0 %1241
    %1245 = vset.pattern.permute.xlu0 0
    %1246 = vperm.xlu0 %1245, %v703
    %v1247 = vpop.permute.xlu0 %1246
    %1250 = vset.pattern.permute.xlu0 0
    %1251 = vperm.xlu0 %1250, %v704
    %v1252 = vpop.permute.xlu0 %1251
    %1255 = vset.pattern.permute.xlu0 0
    %1256 = vperm.xlu0 %1255, %v705
    %v1257 = vpop.permute.xlu0 %1256
    %1260 = vset.pattern.permute.xlu0 0
    %1261 = vperm.xlu0 %1260, %v706
    %v1262 = vpop.permute.xlu0 %1261
    %1265 = vset.pattern.permute.xlu0 0
    %1266 = vperm.xlu0 %1265, %v707
    %v1267 = vpop.permute.xlu0 %1266
    %1270 = vset.pattern.permute.xlu0 0
    %1271 = vperm.xlu0 %1270, %v708
    %v1272 = vpop.permute.xlu0 %1271
    %1275 = vset.pattern.permute.xlu0 0
    %1276 = vperm.xlu0 %1275, %v709
    %v1277 = vpop.permute.xlu0 %1276
    %1280 = vset.pattern.permute.xlu0 0
    %1281 = vperm.xlu0 %1280, %v710
    %v1282 = vpop.permute.xlu0 %1281
    %1285 = vset.pattern.permute.xlu0 0
    %1286 = vperm.xlu0 %1285, %v711
    %v1287 = vpop.permute.xlu0 %1286
    %1290 = vset.pattern.permute.xlu0 0
    %1291 = vperm.xlu0 %1290, %v712
    %v1292 = vpop.permute.xlu0 %1291
    %1295 = vset.pattern.permute.xlu0 0
    %1296 = vperm.xlu0 %1295, %v713
    %v1297 = vpop.permute.xlu0 %1296
    %v1299 = vlaneseq
    %v1300 = vshrl.u32 %v1299, 7
    %v1301 = vsub.s32 2, %v1300
    %v1302 = vrot.slane %v714, %v1301
    %v1303 = vmul.f32 %v1142, %v1302
    %v1304 = vmul.f32 %v1147, %v1302
    %v1305 = vmul.f32 %v1152, %v1302
    %v1306 = vmul.f32 %v1157, %v1302
    %v1307 = vmul.f32 %v1162, %v1302
    %v1308 = vmul.f32 %v1167, %v1302
    %v1309 = vmul.f32 %v1172, %v1302
    %v1310 = vmul.f32 %v1177, %v1302
    %v1311 = vmul.f32 %v1182, %v1302
    %v1312 = vmul.f32 %v1187, %v1302
    %v1313 = vmul.f32 %v1192, %v1302
    %v1314 = vmul.f32 %v1197, %v1302
    %v1315 = vmul.f32 %v1202, %v1302
    %v1316 = vmul.f32 %v1207, %v1302
    %v1317 = vmul.f32 %v1212, %v1302
    %v1318 = vmul.f32 %v1217, %v1302
    %v1319 = vmul.f32 %v1222, %v1302
    %v1320 = vmul.f32 %v1227, %v1302
    %v1321 = vmul.f32 %v1232, %v1302
    %v1322 = vmul.f32 %v1237, %v1302
    %v1323 = vmul.f32 %v1242, %v1302
    %v1324 = vmul.f32 %v1247, %v1302
    %v1325 = vmul.f32 %v1252, %v1302
    %v1326 = vmul.f32 %v1257, %v1302
    %v1327 = vmul.f32 %v1262, %v1302
    %v1328 = vmul.f32 %v1267, %v1302
    %v1329 = vmul.f32 %v1272, %v1302
    %v1330 = vmul.f32 %v1277, %v1302
    %v1331 = vmul.f32 %v1282, %v1302
    %v1332 = vmul.f32 %v1287, %v1302
    %v1333 = vmul.f32 %v1292, %v1302
    %v1334 = vmul.f32 %v1297, %v1302
    %v1335 = vadd.f32 %v1107, %v1303
    %v1336 = vadd.f32 %v1108, %v1304
    %v1337 = vadd.f32 %v1109, %v1305
    %v1338 = vadd.f32 %v1110, %v1306
    %v1339 = vadd.f32 %v1111, %v1307
    %v1340 = vadd.f32 %v1112, %v1308
    %v1341 = vadd.f32 %v1113, %v1309
    %v1342 = vadd.f32 %v1114, %v1310
    %v1343 = vadd.f32 %v1115, %v1311
    %v1344 = vadd.f32 %v1116, %v1312
    %v1345 = vadd.f32 %v1117, %v1313
    %v1346 = vadd.f32 %v1118, %v1314
    %v1347 = vadd.f32 %v1119, %v1315
    %v1348 = vadd.f32 %v1120, %v1316
    %v1349 = vadd.f32 %v1121, %v1317
    %v1350 = vadd.f32 %v1122, %v1318
    %v1351 = vadd.f32 %v1123, %v1319
    %v1352 = vadd.f32 %v1124, %v1320
    %v1353 = vadd.f32 %v1125, %v1321
    %v1354 = vadd.f32 %v1126, %v1322
    %v1355 = vadd.f32 %v1127, %v1323
    %v1356 = vadd.f32 %v1128, %v1324
    %v1357 = vadd.f32 %v1129, %v1325
    %v1358 = vadd.f32 %v1130, %v1326
    %v1359 = vadd.f32 %v1131, %v1327
    %v1360 = vadd.f32 %v1132, %v1328
    %v1361 = vadd.f32 %v1133, %v1329
    %v1362 = vadd.f32 %v1134, %v1330
    %v1363 = vadd.f32 %v1135, %v1331
    %v1364 = vadd.f32 %v1136, %v1332
    %v1365 = vadd.f32 %v1137, %v1333
    %v1366 = vadd.f32 %v1138, %v1334
    %1367 = vset.pattern.permute.xlu0 1
    %1368 = vperm.xlu0 %1367, %v104
    %v1369 = vpop.permute.xlu0 %1368
    %1371 = vset.pattern.permute.xlu0 1
    %1372 = vperm.xlu0 %1371, %v105
    %v1373 = vpop.permute.xlu0 %1372
    %1375 = vset.pattern.permute.xlu0 1
    %1376 = vperm.xlu0 %1375, %v106
    %v1377 = vpop.permute.xlu0 %1376
    %1379 = vset.pattern.permute.xlu0 1
    %1380 = vperm.xlu0 %1379, %v107
    %v1381 = vpop.permute.xlu0 %1380
    %1383 = vset.pattern.permute.xlu0 1
    %1384 = vperm.xlu0 %1383, %v108
    %v1385 = vpop.permute.xlu0 %1384
    %1387 = vset.pattern.permute.xlu0 1
    %1388 = vperm.xlu0 %1387, %v109
    %v1389 = vpop.permute.xlu0 %1388
    %1391 = vset.pattern.permute.xlu0 1
    %1392 = vperm.xlu0 %1391, %v110
    %v1393 = vpop.permute.xlu0 %1392
    %1395 = vset.pattern.permute.xlu0 1
    %1396 = vperm.xlu0 %1395, %v111
    %v1397 = vpop.permute.xlu0 %1396
    %1399 = vset.pattern.permute.xlu0 1
    %1400 = vperm.xlu0 %1399, %v112
    %v1401 = vpop.permute.xlu0 %1400
    %1403 = vset.pattern.permute.xlu0 1
    %1404 = vperm.xlu0 %1403, %v113
    %v1405 = vpop.permute.xlu0 %1404
    %1407 = vset.pattern.permute.xlu0 1
    %1408 = vperm.xlu0 %1407, %v114
    %v1409 = vpop.permute.xlu0 %1408
    %1411 = vset.pattern.permute.xlu0 1
    %1412 = vperm.xlu0 %1411, %v115
    %v1413 = vpop.permute.xlu0 %1412
    %1415 = vset.pattern.permute.xlu0 1
    %1416 = vperm.xlu0 %1415, %v116
    %v1417 = vpop.permute.xlu0 %1416
    %1419 = vset.pattern.permute.xlu0 1
    %1420 = vperm.xlu0 %1419, %v117
    %v1421 = vpop.permute.xlu0 %1420
    %1423 = vset.pattern.permute.xlu0 1
    %1424 = vperm.xlu0 %1423, %v118
    %v1425 = vpop.permute.xlu0 %1424
    %1427 = vset.pattern.permute.xlu0 1
    %1428 = vperm.xlu0 %1427, %v119
    %v1429 = vpop.permute.xlu0 %1428
    %1431 = vset.pattern.permute.xlu0 1
    %1432 = vperm.xlu0 %1431, %v120
    %v1433 = vpop.permute.xlu0 %1432
    %1435 = vset.pattern.permute.xlu0 1
    %1436 = vperm.xlu0 %1435, %v121
    %v1437 = vpop.permute.xlu0 %1436
    %1439 = vset.pattern.permute.xlu0 1
    %1440 = vperm.xlu0 %1439, %v122
    %v1441 = vpop.permute.xlu0 %1440
    %1443 = vset.pattern.permute.xlu0 1
    %1444 = vperm.xlu0 %1443, %v123
    %v1445 = vpop.permute.xlu0 %1444
    %1447 = vset.pattern.permute.xlu0 1
    %1448 = vperm.xlu0 %1447, %v124
    %v1449 = vpop.permute.xlu0 %1448
    %1451 = vset.pattern.permute.xlu0 1
    %1452 = vperm.xlu0 %1451, %v125
    %v1453 = vpop.permute.xlu0 %1452
    %1455 = vset.pattern.permute.xlu0 1
    %1456 = vperm.xlu0 %1455, %v126
    %v1457 = vpop.permute.xlu0 %1456
    %1459 = vset.pattern.permute.xlu0 1
    %1460 = vperm.xlu0 %1459, %v127
    %v1461 = vpop.permute.xlu0 %1460
    %1463 = vset.pattern.permute.xlu0 1
    %1464 = vperm.xlu0 %1463, %v128
    %v1465 = vpop.permute.xlu0 %1464
    %1467 = vset.pattern.permute.xlu0 1
    %1468 = vperm.xlu0 %1467, %v129
    %v1469 = vpop.permute.xlu0 %1468
    %1471 = vset.pattern.permute.xlu0 1
    %1472 = vperm.xlu0 %1471, %v130
    %v1473 = vpop.permute.xlu0 %1472
    %1475 = vset.pattern.permute.xlu0 1
    %1476 = vperm.xlu0 %1475, %v131
    %v1477 = vpop.permute.xlu0 %1476
    %1479 = vset.pattern.permute.xlu0 1
    %1480 = vperm.xlu0 %1479, %v132
    %v1481 = vpop.permute.xlu0 %1480
    %1483 = vset.pattern.permute.xlu0 1
    %1484 = vperm.xlu0 %1483, %v133
    %v1485 = vpop.permute.xlu0 %1484
    %1487 = vset.pattern.permute.xlu0 1
    %1488 = vperm.xlu0 %1487, %v134
    %v1489 = vpop.permute.xlu0 %1488
    %1491 = vset.pattern.permute.xlu0 1
    %1492 = vperm.xlu0 %1491, %v135
    %v1493 = vpop.permute.xlu0 %1492
    %v1495 = vmul.f32 %v1369, %v878
    %v1496 = vmul.f32 %v1373, %v878
    %v1497 = vmul.f32 %v1377, %v878
    %v1498 = vmul.f32 %v1381, %v878
    %v1499 = vmul.f32 %v1385, %v878
    %v1500 = vmul.f32 %v1389, %v878
    %v1501 = vmul.f32 %v1393, %v878
    %v1502 = vmul.f32 %v1397, %v878
    %v1503 = vmul.f32 %v1401, %v878
    %v1504 = vmul.f32 %v1405, %v878
    %v1505 = vmul.f32 %v1409, %v878
    %v1506 = vmul.f32 %v1413, %v878
    %v1507 = vmul.f32 %v1417, %v878
    %v1508 = vmul.f32 %v1421, %v878
    %v1509 = vmul.f32 %v1425, %v878
    %v1510 = vmul.f32 %v1429, %v878
    %v1511 = vmul.f32 %v1433, %v878
    %v1512 = vmul.f32 %v1437, %v878
    %v1513 = vmul.f32 %v1441, %v878
    %v1514 = vmul.f32 %v1445, %v878
    %v1515 = vmul.f32 %v1449, %v878
    %v1516 = vmul.f32 %v1453, %v878
    %v1517 = vmul.f32 %v1457, %v878
    %v1518 = vmul.f32 %v1461, %v878
    %v1519 = vmul.f32 %v1465, %v878
    %v1520 = vmul.f32 %v1469, %v878
    %v1521 = vmul.f32 %v1473, %v878
    %v1522 = vmul.f32 %v1477, %v878
    %v1523 = vmul.f32 %v1481, %v878
    %v1524 = vmul.f32 %v1485, %v878
    %v1525 = vmul.f32 %v1489, %v878
    %v1526 = vmul.f32 %v1493, %v878
    %1527 = vset.pattern.permute.xlu0 1
    %1528 = vperm.xlu0 %1527, %v347
    %v1529 = vpop.permute.xlu0 %1528
    %1531 = vset.pattern.permute.xlu0 1
    %1532 = vperm.xlu0 %1531, %v350
    %v1533 = vpop.permute.xlu0 %1532
    %1535 = vset.pattern.permute.xlu0 1
    %1536 = vperm.xlu0 %1535, %v355
    %v1537 = vpop.permute.xlu0 %1536
    %1539 = vset.pattern.permute.xlu0 1
    %1540 = vperm.xlu0 %1539, %v358
    %v1541 = vpop.permute.xlu0 %1540
    %1543 = vset.pattern.permute.xlu0 1
    %1544 = vperm.xlu0 %1543, %v363
    %v1545 = vpop.permute.xlu0 %1544
    %1547 = vset.pattern.permute.xlu0 1
    %1548 = vperm.xlu0 %1547, %v366
    %v1549 = vpop.permute.xlu0 %1548
    %1551 = vset.pattern.permute.xlu0 1
    %1552 = vperm.xlu0 %1551, %v371
    %v1553 = vpop.permute.xlu0 %1552
    %1555 = vset.pattern.permute.xlu0 1
    %1556 = vperm.xlu0 %1555, %v374
    %v1557 = vpop.permute.xlu0 %1556
    %1559 = vset.pattern.permute.xlu0 1
    %1560 = vperm.xlu0 %1559, %v379
    %v1561 = vpop.permute.xlu0 %1560
    %1563 = vset.pattern.permute.xlu0 1
    %1564 = vperm.xlu0 %1563, %v382
    %v1565 = vpop.permute.xlu0 %1564
    %1567 = vset.pattern.permute.xlu0 1
    %1568 = vperm.xlu0 %1567, %v387
    %v1569 = vpop.permute.xlu0 %1568
    %1571 = vset.pattern.permute.xlu0 1
    %1572 = vperm.xlu0 %1571, %v390
    %v1573 = vpop.permute.xlu0 %1572
    %1575 = vset.pattern.permute.xlu0 1
    %1576 = vperm.xlu0 %1575, %v395
    %v1577 = vpop.permute.xlu0 %1576
    %1579 = vset.pattern.permute.xlu0 1
    %1580 = vperm.xlu0 %1579, %v398
    %v1581 = vpop.permute.xlu0 %1580
    %1583 = vset.pattern.permute.xlu0 1
    %1584 = vperm.xlu0 %1583, %v403
    %v1585 = vpop.permute.xlu0 %1584
    %1587 = vset.pattern.permute.xlu0 1
    %1588 = vperm.xlu0 %1587, %v406
    %v1589 = vpop.permute.xlu0 %1588
    %1591 = vset.pattern.permute.xlu0 1
    %1592 = vperm.xlu0 %1591, %v411
    %v1593 = vpop.permute.xlu0 %1592
    %1595 = vset.pattern.permute.xlu0 1
    %1596 = vperm.xlu0 %1595, %v414
    %v1597 = vpop.permute.xlu0 %1596
    %1599 = vset.pattern.permute.xlu0 1
    %1600 = vperm.xlu0 %1599, %v419
    %v1601 = vpop.permute.xlu0 %1600
    %1603 = vset.pattern.permute.xlu0 1
    %1604 = vperm.xlu0 %1603, %v422
    %v1605 = vpop.permute.xlu0 %1604
    %1607 = vset.pattern.permute.xlu0 1
    %1608 = vperm.xlu0 %1607, %v427
    %v1609 = vpop.permute.xlu0 %1608
    %1611 = vset.pattern.permute.xlu0 1
    %1612 = vperm.xlu0 %1611, %v430
    %v1613 = vpop.permute.xlu0 %1612
    %1615 = vset.pattern.permute.xlu0 1
    %1616 = vperm.xlu0 %1615, %v435
    %v1617 = vpop.permute.xlu0 %1616
    %1619 = vset.pattern.permute.xlu0 1
    %1620 = vperm.xlu0 %1619, %v438
    %v1621 = vpop.permute.xlu0 %1620
    %1623 = vset.pattern.permute.xlu0 1
    %1624 = vperm.xlu0 %1623, %v443
    %v1625 = vpop.permute.xlu0 %1624
    %1627 = vset.pattern.permute.xlu0 1
    %1628 = vperm.xlu0 %1627, %v446
    %v1629 = vpop.permute.xlu0 %1628
    %1631 = vset.pattern.permute.xlu0 1
    %1632 = vperm.xlu0 %1631, %v451
    %v1633 = vpop.permute.xlu0 %1632
    %1635 = vset.pattern.permute.xlu0 1
    %1636 = vperm.xlu0 %1635, %v454
    %v1637 = vpop.permute.xlu0 %1636
    %1639 = vset.pattern.permute.xlu0 1
    %1640 = vperm.xlu0 %1639, %v459
    %v1641 = vpop.permute.xlu0 %1640
    %1643 = vset.pattern.permute.xlu0 1
    %1644 = vperm.xlu0 %1643, %v462
    %v1645 = vpop.permute.xlu0 %1644
    %1647 = vset.pattern.permute.xlu0 1
    %1648 = vperm.xlu0 %1647, %v467
    %v1649 = vpop.permute.xlu0 %1648
    %1651 = vset.pattern.permute.xlu0 1
    %1652 = vperm.xlu0 %1651, %v470
    %v1653 = vpop.permute.xlu0 %1652
    %v1655 = vmul.f32 %v1529, %v1074
    %v1656 = vmul.f32 %v1533, %v1074
    %v1657 = vmul.f32 %v1537, %v1074
    %v1658 = vmul.f32 %v1541, %v1074
    %v1659 = vmul.f32 %v1545, %v1074
    %v1660 = vmul.f32 %v1549, %v1074
    %v1661 = vmul.f32 %v1553, %v1074
    %v1662 = vmul.f32 %v1557, %v1074
    %v1663 = vmul.f32 %v1561, %v1074
    %v1664 = vmul.f32 %v1565, %v1074
    %v1665 = vmul.f32 %v1569, %v1074
    %v1666 = vmul.f32 %v1573, %v1074
    %v1667 = vmul.f32 %v1577, %v1074
    %v1668 = vmul.f32 %v1581, %v1074
    %v1669 = vmul.f32 %v1585, %v1074
    %v1670 = vmul.f32 %v1589, %v1074
    %v1671 = vmul.f32 %v1593, %v1074
    %v1672 = vmul.f32 %v1597, %v1074
    %v1673 = vmul.f32 %v1601, %v1074
    %v1674 = vmul.f32 %v1605, %v1074
    %v1675 = vmul.f32 %v1609, %v1074
    %v1676 = vmul.f32 %v1613, %v1074
    %v1677 = vmul.f32 %v1617, %v1074
    %v1678 = vmul.f32 %v1621, %v1074
    %v1679 = vmul.f32 %v1625, %v1074
    %v1680 = vmul.f32 %v1629, %v1074
    %v1681 = vmul.f32 %v1633, %v1074
    %v1682 = vmul.f32 %v1637, %v1074
    %v1683 = vmul.f32 %v1641, %v1074
    %v1684 = vmul.f32 %v1645, %v1074
    %v1685 = vmul.f32 %v1649, %v1074
    %v1686 = vmul.f32 %v1653, %v1074
    %v1687 = vadd.f32 %v1495, %v1655
    %v1688 = vadd.f32 %v1496, %v1656
    %v1689 = vadd.f32 %v1497, %v1657
    %v1690 = vadd.f32 %v1498, %v1658
    %v1691 = vadd.f32 %v1499, %v1659
    %v1692 = vadd.f32 %v1500, %v1660
    %v1693 = vadd.f32 %v1501, %v1661
    %v1694 = vadd.f32 %v1502, %v1662
    %v1695 = vadd.f32 %v1503, %v1663
    %v1696 = vadd.f32 %v1504, %v1664
    %v1697 = vadd.f32 %v1505, %v1665
    %v1698 = vadd.f32 %v1506, %v1666
    %v1699 = vadd.f32 %v1507, %v1667
    %v1700 = vadd.f32 %v1508, %v1668
    %v1701 = vadd.f32 %v1509, %v1669
    %v1702 = vadd.f32 %v1510, %v1670
    %v1703 = vadd.f32 %v1511, %v1671
    %v1704 = vadd.f32 %v1512, %v1672
    %v1705 = vadd.f32 %v1513, %v1673
    %v1706 = vadd.f32 %v1514, %v1674
    %v1707 = vadd.f32 %v1515, %v1675
    %v1708 = vadd.f32 %v1516, %v1676
    %v1709 = vadd.f32 %v1517, %v1677
    %v1710 = vadd.f32 %v1518, %v1678
    %v1711 = vadd.f32 %v1519, %v1679
    %v1712 = vadd.f32 %v1520, %v1680
    %v1713 = vadd.f32 %v1521, %v1681
    %v1714 = vadd.f32 %v1522, %v1682
    %v1715 = vadd.f32 %v1523, %v1683
    %v1716 = vadd.f32 %v1524, %v1684
    %v1717 = vadd.f32 %v1525, %v1685
    %v1718 = vadd.f32 %v1526, %v1686
    %1719 = vset.pattern.permute.xlu0 1
    %1720 = vperm.xlu0 %1719, %v682
    %v1721 = vpop.permute.xlu0 %1720
    %1723 = vset.pattern.permute.xlu0 1
    %1724 = vperm.xlu0 %1723, %v683
    %v1725 = vpop.permute.xlu0 %1724
    %1727 = vset.pattern.permute.xlu0 1
    %1728 = vperm.xlu0 %1727, %v684
    %v1729 = vpop.permute.xlu0 %1728
    %1731 = vset.pattern.permute.xlu0 1
    %1732 = vperm.xlu0 %1731, %v685
    %v1733 = vpop.permute.xlu0 %1732
    %1735 = vset.pattern.permute.xlu0 1
    %1736 = vperm.xlu0 %1735, %v686
    %v1737 = vpop.permute.xlu0 %1736
    %1739 = vset.pattern.permute.xlu0 1
    %1740 = vperm.xlu0 %1739, %v687
    %v1741 = vpop.permute.xlu0 %1740
    %1743 = vset.pattern.permute.xlu0 1
    %1744 = vperm.xlu0 %1743, %v688
    %v1745 = vpop.permute.xlu0 %1744
    %1747 = vset.pattern.permute.xlu0 1
    %1748 = vperm.xlu0 %1747, %v689
    %v1749 = vpop.permute.xlu0 %1748
    %1751 = vset.pattern.permute.xlu0 1
    %1752 = vperm.xlu0 %1751, %v690
    %v1753 = vpop.permute.xlu0 %1752
    %1755 = vset.pattern.permute.xlu0 1
    %1756 = vperm.xlu0 %1755, %v691
    %v1757 = vpop.permute.xlu0 %1756
    %1759 = vset.pattern.permute.xlu0 1
    %1760 = vperm.xlu0 %1759, %v692
    %v1761 = vpop.permute.xlu0 %1760
    %1763 = vset.pattern.permute.xlu0 1
    %1764 = vperm.xlu0 %1763, %v693
    %v1765 = vpop.permute.xlu0 %1764
    %1767 = vset.pattern.permute.xlu0 1
    %1768 = vperm.xlu0 %1767, %v694
    %v1769 = vpop.permute.xlu0 %1768
    %1771 = vset.pattern.permute.xlu0 1
    %1772 = vperm.xlu0 %1771, %v695
    %v1773 = vpop.permute.xlu0 %1772
    %1775 = vset.pattern.permute.xlu0 1
    %1776 = vperm.xlu0 %1775, %v696
    %v1777 = vpop.permute.xlu0 %1776
    %1779 = vset.pattern.permute.xlu0 1
    %1780 = vperm.xlu0 %1779, %v697
    %v1781 = vpop.permute.xlu0 %1780
    %1783 = vset.pattern.permute.xlu0 1
    %1784 = vperm.xlu0 %1783, %v698
    %v1785 = vpop.permute.xlu0 %1784
    %1787 = vset.pattern.permute.xlu0 1
    %1788 = vperm.xlu0 %1787, %v699
    %v1789 = vpop.permute.xlu0 %1788
    %1791 = vset.pattern.permute.xlu0 1
    %1792 = vperm.xlu0 %1791, %v700
    %v1793 = vpop.permute.xlu0 %1792
    %1795 = vset.pattern.permute.xlu0 1
    %1796 = vperm.xlu0 %1795, %v701
    %v1797 = vpop.permute.xlu0 %1796
    %1799 = vset.pattern.permute.xlu0 1
    %1800 = vperm.xlu0 %1799, %v702
    %v1801 = vpop.permute.xlu0 %1800
    %1803 = vset.pattern.permute.xlu0 1
    %1804 = vperm.xlu0 %1803, %v703
    %v1805 = vpop.permute.xlu0 %1804
    %1807 = vset.pattern.permute.xlu0 1
    %1808 = vperm.xlu0 %1807, %v704
    %v1809 = vpop.permute.xlu0 %1808
    %1811 = vset.pattern.permute.xlu0 1
    %1812 = vperm.xlu0 %1811, %v705
    %v1813 = vpop.permute.xlu0 %1812
    %1815 = vset.pattern.permute.xlu0 1
    %1816 = vperm.xlu0 %1815, %v706
    %v1817 = vpop.permute.xlu0 %1816
    %1819 = vset.pattern.permute.xlu0 1
    %1820 = vperm.xlu0 %1819, %v707
    %v1821 = vpop.permute.xlu0 %1820
    %1823 = vset.pattern.permute.xlu0 1
    %1824 = vperm.xlu0 %1823, %v708
    %v1825 = vpop.permute.xlu0 %1824
    %1827 = vset.pattern.permute.xlu0 1
    %1828 = vperm.xlu0 %1827, %v709
    %v1829 = vpop.permute.xlu0 %1828
    %1831 = vset.pattern.permute.xlu0 1
    %1832 = vperm.xlu0 %1831, %v710
    %v1833 = vpop.permute.xlu0 %1832
    %1835 = vset.pattern.permute.xlu0 1
    %1836 = vperm.xlu0 %1835, %v711
    %v1837 = vpop.permute.xlu0 %1836
    %1839 = vset.pattern.permute.xlu0 1
    %1840 = vperm.xlu0 %1839, %v712
    %v1841 = vpop.permute.xlu0 %1840
    %1843 = vset.pattern.permute.xlu0 1
    %1844 = vperm.xlu0 %1843, %v713
    %v1845 = vpop.permute.xlu0 %1844
    %v1847 = vmul.f32 %v1721, %v1302
    %v1848 = vmul.f32 %v1725, %v1302
    %v1849 = vmul.f32 %v1729, %v1302
    %v1850 = vmul.f32 %v1733, %v1302
    %v1851 = vmul.f32 %v1737, %v1302
    %v1852 = vmul.f32 %v1741, %v1302
    %v1853 = vmul.f32 %v1745, %v1302
    %v1854 = vmul.f32 %v1749, %v1302
    %v1855 = vmul.f32 %v1753, %v1302
    %v1856 = vmul.f32 %v1757, %v1302
    %v1857 = vmul.f32 %v1761, %v1302
    %v1858 = vmul.f32 %v1765, %v1302
    %v1859 = vmul.f32 %v1769, %v1302
    %v1860 = vmul.f32 %v1773, %v1302
    %v1861 = vmul.f32 %v1777, %v1302
    %v1862 = vmul.f32 %v1781, %v1302
    %v1863 = vmul.f32 %v1785, %v1302
    %v1864 = vmul.f32 %v1789, %v1302
    %v1865 = vmul.f32 %v1793, %v1302
    %v1866 = vmul.f32 %v1797, %v1302
    %v1867 = vmul.f32 %v1801, %v1302
    %v1868 = vmul.f32 %v1805, %v1302
    %v1869 = vmul.f32 %v1809, %v1302
    %v1870 = vmul.f32 %v1813, %v1302
    %v1871 = vmul.f32 %v1817, %v1302
    %v1872 = vmul.f32 %v1821, %v1302
    %v1873 = vmul.f32 %v1825, %v1302
    %v1874 = vmul.f32 %v1829, %v1302
    %v1875 = vmul.f32 %v1833, %v1302
    %v1876 = vmul.f32 %v1837, %v1302
    %v1877 = vmul.f32 %v1841, %v1302
    %v1878 = vmul.f32 %v1845, %v1302
    %v1879 = vadd.f32 %v1687, %v1847
    %v1880 = vadd.f32 %v1688, %v1848
    %v1881 = vadd.f32 %v1689, %v1849
    %v1882 = vadd.f32 %v1690, %v1850
    %v1883 = vadd.f32 %v1691, %v1851
    %v1884 = vadd.f32 %v1692, %v1852
    %v1885 = vadd.f32 %v1693, %v1853
    %v1886 = vadd.f32 %v1694, %v1854
    %v1887 = vadd.f32 %v1695, %v1855
    %v1888 = vadd.f32 %v1696, %v1856
    %v1889 = vadd.f32 %v1697, %v1857
    %v1890 = vadd.f32 %v1698, %v1858
    %v1891 = vadd.f32 %v1699, %v1859
    %v1892 = vadd.f32 %v1700, %v1860
    %v1893 = vadd.f32 %v1701, %v1861
    %v1894 = vadd.f32 %v1702, %v1862
    %v1895 = vadd.f32 %v1703, %v1863
    %v1896 = vadd.f32 %v1704, %v1864
    %v1897 = vadd.f32 %v1705, %v1865
    %v1898 = vadd.f32 %v1706, %v1866
    %v1899 = vadd.f32 %v1707, %v1867
    %v1900 = vadd.f32 %v1708, %v1868
    %v1901 = vadd.f32 %v1709, %v1869
    %v1902 = vadd.f32 %v1710, %v1870
    %v1903 = vadd.f32 %v1711, %v1871
    %v1904 = vadd.f32 %v1712, %v1872
    %v1905 = vadd.f32 %v1713, %v1873
    %v1906 = vadd.f32 %v1714, %v1874
    %v1907 = vadd.f32 %v1715, %v1875
    %v1908 = vadd.f32 %v1716, %v1876
    %v1909 = vadd.f32 %v1717, %v1877
    %v1910 = vadd.f32 %v1718, %v1878
    %v1911 = vld [vmem:[%s6] sm:$0x1]
    %v1912 = vld [vmem:[%s7] sm:$0x1]
    %vm1913 = vcmask 261120
    %v1914 = vsel %vm1913, %v1335, 0.0
    %v1915 = vsel %vm1913, %v1336, 0.0
    %v1916 = vadd.f32 %v1914, %v1915
    %v1917 = vsel %vm1913, %v1337, 0.0
    %v1918 = vadd.f32 %v1916, %v1917
    %v1919 = vsel %vm1913, %v1338, 0.0
    %v1920 = vadd.f32 %v1918, %v1919
    %v1921 = vsel %vm1913, %v1339, 0.0
    %v1922 = vadd.f32 %v1920, %v1921
    %v1923 = vsel %vm1913, %v1340, 0.0
    %v1924 = vadd.f32 %v1922, %v1923
    %v1925 = vsel %vm1913, %v1341, 0.0
    %v1926 = vadd.f32 %v1924, %v1925
    %v1927 = vsel %vm1913, %v1342, 0.0
    %v1928 = vadd.f32 %v1926, %v1927
    %v1929 = vsel %vm1913, %v1343, 0.0
    %v1930 = vadd.f32 %v1928, %v1929
    %v1931 = vsel %vm1913, %v1344, 0.0
    %v1932 = vadd.f32 %v1930, %v1931
    %v1933 = vsel %vm1913, %v1345, 0.0
    %v1934 = vadd.f32 %v1932, %v1933
    %v1935 = vsel %vm1913, %v1346, 0.0
    %v1936 = vadd.f32 %v1934, %v1935
    %v1937 = vsel %vm1913, %v1347, 0.0
    %v1938 = vadd.f32 %v1936, %v1937
    %v1939 = vsel %vm1913, %v1348, 0.0
    %v1940 = vadd.f32 %v1938, %v1939
    %v1941 = vsel %vm1913, %v1349, 0.0
    %v1942 = vadd.f32 %v1940, %v1941
    %v1943 = vsel %vm1913, %v1350, 0.0
    %v1944 = vadd.f32 %v1942, %v1943
    %v1945 = vsel %vm1913, %v1351, 0.0
    %v1946 = vadd.f32 %v1944, %v1945
    %v1947 = vsel %vm1913, %v1352, 0.0
    %v1948 = vadd.f32 %v1946, %v1947
    %v1949 = vsel %vm1913, %v1353, 0.0
    %v1950 = vadd.f32 %v1948, %v1949
    %v1951 = vsel %vm1913, %v1354, 0.0
    %v1952 = vadd.f32 %v1950, %v1951
    %v1953 = vsel %vm1913, %v1355, 0.0
    %v1954 = vadd.f32 %v1952, %v1953
    %v1955 = vsel %vm1913, %v1356, 0.0
    %v1956 = vadd.f32 %v1954, %v1955
    %v1957 = vsel %vm1913, %v1357, 0.0
    %v1958 = vadd.f32 %v1956, %v1957
    %v1959 = vsel %vm1913, %v1358, 0.0
    %v1960 = vadd.f32 %v1958, %v1959
    %v1961 = vsel %vm1913, %v1359, 0.0
    %v1962 = vadd.f32 %v1960, %v1961
    %v1963 = vsel %vm1913, %v1360, 0.0
    %v1964 = vadd.f32 %v1962, %v1963
    %v1965 = vsel %vm1913, %v1361, 0.0
    %v1966 = vadd.f32 %v1964, %v1965
    %v1967 = vsel %vm1913, %v1362, 0.0
    %v1968 = vadd.f32 %v1966, %v1967
    %v1969 = vsel %vm1913, %v1363, 0.0
    %v1970 = vadd.f32 %v1968, %v1969
    %v1971 = vsel %vm1913, %v1364, 0.0
    %v1972 = vadd.f32 %v1970, %v1971
    %v1973 = vsel %vm1913, %v1365, 0.0
    %v1974 = vadd.f32 %v1972, %v1973
    %v1975 = vsel %vm1913, %v1366, 0.0
    %v1976 = vadd.f32 %v1974, %v1975
    %v1977 = vsel %vm1913, %v1879, 0.0
    %v1978 = vadd.f32 %v1976, %v1977
    %v1979 = vsel %vm1913, %v1880, 0.0
    %v1980 = vadd.f32 %v1978, %v1979
    %v1981 = vsel %vm1913, %v1881, 0.0
    %v1982 = vadd.f32 %v1980, %v1981
    %v1983 = vsel %vm1913, %v1882, 0.0
    %v1984 = vadd.f32 %v1982, %v1983
    %v1985 = vsel %vm1913, %v1883, 0.0
    %v1986 = vadd.f32 %v1984, %v1985
    %v1987 = vsel %vm1913, %v1884, 0.0
    %v1988 = vadd.f32 %v1986, %v1987
    %v1989 = vsel %vm1913, %v1885, 0.0
    %v1990 = vadd.f32 %v1988, %v1989
    %v1991 = vsel %vm1913, %v1886, 0.0
    %v1992 = vadd.f32 %v1990, %v1991
    %v1993 = vsel %vm1913, %v1887, 0.0
    %v1994 = vadd.f32 %v1992, %v1993
    %v1995 = vsel %vm1913, %v1888, 0.0
    %v1996 = vadd.f32 %v1994, %v1995
    %v1997 = vsel %vm1913, %v1889, 0.0
    %v1998 = vadd.f32 %v1996, %v1997
    %v1999 = vsel %vm1913, %v1890, 0.0
    %v2000 = vadd.f32 %v1998, %v1999
    %v2001 = vsel %vm1913, %v1891, 0.0
    %v2002 = vadd.f32 %v2000, %v2001
    %v2003 = vsel %vm1913, %v1892, 0.0
    %v2004 = vadd.f32 %v2002, %v2003
    %v2005 = vsel %vm1913, %v1893, 0.0
    %v2006 = vadd.f32 %v2004, %v2005
    %v2007 = vsel %vm1913, %v1894, 0.0
    %v2008 = vadd.f32 %v2006, %v2007
    %v2009 = vsel %vm1913, %v1895, 0.0
    %v2010 = vadd.f32 %v2008, %v2009
    %v2011 = vsel %vm1913, %v1896, 0.0
    %v2012 = vadd.f32 %v2010, %v2011
    %v2013 = vsel %vm1913, %v1897, 0.0
    %v2014 = vadd.f32 %v2012, %v2013
    %v2015 = vsel %vm1913, %v1898, 0.0
    %v2016 = vadd.f32 %v2014, %v2015
    %v2017 = vsel %vm1913, %v1899, 0.0
    %v2018 = vadd.f32 %v2016, %v2017
    %v2019 = vsel %vm1913, %v1900, 0.0
    %v2020 = vadd.f32 %v2018, %v2019
    %v2021 = vsel %vm1913, %v1901, 0.0
    %v2022 = vadd.f32 %v2020, %v2021
    %v2023 = vsel %vm1913, %v1902, 0.0
    %v2024 = vadd.f32 %v2022, %v2023
    %v2025 = vsel %vm1913, %v1903, 0.0
    %v2026 = vadd.f32 %v2024, %v2025
    %v2027 = vsel %vm1913, %v1904, 0.0
    %v2028 = vadd.f32 %v2026, %v2027
    %v2029 = vsel %vm1913, %v1905, 0.0
    %v2030 = vadd.f32 %v2028, %v2029
    %v2031 = vsel %vm1913, %v1906, 0.0
    %v2032 = vadd.f32 %v2030, %v2031
    %v2033 = vsel %vm1913, %v1907, 0.0
    %v2034 = vadd.f32 %v2032, %v2033
    %v2035 = vsel %vm1913, %v1908, 0.0
    %v2036 = vadd.f32 %v2034, %v2035
    %v2037 = vsel %vm1913, %v1909, 0.0
    %v2038 = vadd.f32 %v2036, %v2037
    %v2039 = vsel %vm1913, %v1910, 0.0
    %v2040 = vadd.f32 %v2038, %v2039
    %v2041 = vrot.slane %v2040, 4
    %v2042 = vadd.f32 %v2040, %v2041
    %v2043 = vrot.slane %v2042, 2
    %v2044 = vadd.f32 %v2042, %v2043
    %v2045 = vrot.slane %v2044, 1
    %v2046 = vadd.f32 %v2044, %v2045
    %v2047 = vrcp.pop 512.0
    %v2048 = vmul.f32 %v2046, %v2047
    %v2049 = vsub.f32 %v1335, %v2048
    %v2050 = vsub.f32 %v1336, %v2048
    %v2051 = vsub.f32 %v1337, %v2048
    %v2052 = vsub.f32 %v1338, %v2048
    %v2053 = vsub.f32 %v1339, %v2048
    %v2054 = vsub.f32 %v1340, %v2048
    %v2055 = vsub.f32 %v1341, %v2048
    %v2056 = vsub.f32 %v1342, %v2048
    %v2057 = vsub.f32 %v1343, %v2048
    %v2058 = vsub.f32 %v1344, %v2048
    %v2059 = vsub.f32 %v1345, %v2048
    %v2060 = vsub.f32 %v1346, %v2048
    %v2061 = vsub.f32 %v1347, %v2048
    %v2062 = vsub.f32 %v1348, %v2048
    %v2063 = vsub.f32 %v1349, %v2048
    %v2064 = vsub.f32 %v1350, %v2048
    %v2065 = vsub.f32 %v1351, %v2048
    %v2066 = vsub.f32 %v1352, %v2048
    %v2067 = vsub.f32 %v1353, %v2048
    %v2068 = vsub.f32 %v1354, %v2048
    %v2069 = vsub.f32 %v1355, %v2048
    %v2070 = vsub.f32 %v1356, %v2048
    %v2071 = vsub.f32 %v1357, %v2048
    %v2072 = vsub.f32 %v1358, %v2048
    %v2073 = vsub.f32 %v1359, %v2048
    %v2074 = vsub.f32 %v1360, %v2048
    %v2075 = vsub.f32 %v1361, %v2048
    %v2076 = vsub.f32 %v1362, %v2048
    %v2077 = vsub.f32 %v1363, %v2048
    %v2078 = vsub.f32 %v1364, %v2048
    %v2079 = vsub.f32 %v1365, %v2048
    %v2080 = vsub.f32 %v1366, %v2048
    %v2081 = vsub.f32 %v1879, %v2048
    %v2082 = vsub.f32 %v1880, %v2048
    %v2083 = vsub.f32 %v1881, %v2048
    %v2084 = vsub.f32 %v1882, %v2048
    %v2085 = vsub.f32 %v1883, %v2048
    %v2086 = vsub.f32 %v1884, %v2048
    %v2087 = vsub.f32 %v1885, %v2048
    %v2088 = vsub.f32 %v1886, %v2048
    %v2089 = vsub.f32 %v1887, %v2048
    %v2090 = vsub.f32 %v1888, %v2048
    %v2091 = vsub.f32 %v1889, %v2048
    %v2092 = vsub.f32 %v1890, %v2048
    %v2093 = vsub.f32 %v1891, %v2048
    %v2094 = vsub.f32 %v1892, %v2048
    %v2095 = vsub.f32 %v1893, %v2048
    %v2096 = vsub.f32 %v1894, %v2048
    %v2097 = vsub.f32 %v1895, %v2048
    %v2098 = vsub.f32 %v1896, %v2048
    %v2099 = vsub.f32 %v1897, %v2048
    %v2100 = vsub.f32 %v1898, %v2048
    %v2101 = vsub.f32 %v1899, %v2048
    %v2102 = vsub.f32 %v1900, %v2048
    %v2103 = vsub.f32 %v1901, %v2048
    %v2104 = vsub.f32 %v1902, %v2048
    %v2105 = vsub.f32 %v1903, %v2048
    %v2106 = vsub.f32 %v1904, %v2048
    %v2107 = vsub.f32 %v1905, %v2048
    %v2108 = vsub.f32 %v1906, %v2048
    %v2109 = vsub.f32 %v1907, %v2048
    %v2110 = vsub.f32 %v1908, %v2048
    %v2111 = vsub.f32 %v1909, %v2048
    %v2112 = vsub.f32 %v1910, %v2048
    %v2113 = vmul.f32 %v2049, %v2049
    %v2114 = vmul.f32 %v2050, %v2050
    %v2115 = vmul.f32 %v2051, %v2051
    %v2116 = vmul.f32 %v2052, %v2052
    %v2117 = vmul.f32 %v2053, %v2053
    %v2118 = vmul.f32 %v2054, %v2054
    %v2119 = vmul.f32 %v2055, %v2055
    %v2120 = vmul.f32 %v2056, %v2056
    %v2121 = vmul.f32 %v2057, %v2057
    %v2122 = vmul.f32 %v2058, %v2058
    %v2123 = vmul.f32 %v2059, %v2059
    %v2124 = vmul.f32 %v2060, %v2060
    %v2125 = vmul.f32 %v2061, %v2061
    %v2126 = vmul.f32 %v2062, %v2062
    %v2127 = vmul.f32 %v2063, %v2063
    %v2128 = vmul.f32 %v2064, %v2064
    %v2129 = vmul.f32 %v2065, %v2065
    %v2130 = vmul.f32 %v2066, %v2066
    %v2131 = vmul.f32 %v2067, %v2067
    %v2132 = vmul.f32 %v2068, %v2068
    %v2133 = vmul.f32 %v2069, %v2069
    %v2134 = vmul.f32 %v2070, %v2070
    %v2135 = vmul.f32 %v2071, %v2071
    %v2136 = vmul.f32 %v2072, %v2072
    %v2137 = vmul.f32 %v2073, %v2073
    %v2138 = vmul.f32 %v2074, %v2074
    %v2139 = vmul.f32 %v2075, %v2075
    %v2140 = vmul.f32 %v2076, %v2076
    %v2141 = vmul.f32 %v2077, %v2077
    %v2142 = vmul.f32 %v2078, %v2078
    %v2143 = vmul.f32 %v2079, %v2079
    %v2144 = vmul.f32 %v2080, %v2080
    %v2145 = vmul.f32 %v2081, %v2081
    %v2146 = vmul.f32 %v2082, %v2082
    %v2147 = vmul.f32 %v2083, %v2083
    %v2148 = vmul.f32 %v2084, %v2084
    %v2149 = vmul.f32 %v2085, %v2085
    %v2150 = vmul.f32 %v2086, %v2086
    %v2151 = vmul.f32 %v2087, %v2087
    %v2152 = vmul.f32 %v2088, %v2088
    %v2153 = vmul.f32 %v2089, %v2089
    %v2154 = vmul.f32 %v2090, %v2090
    %v2155 = vmul.f32 %v2091, %v2091
    %v2156 = vmul.f32 %v2092, %v2092
    %v2157 = vmul.f32 %v2093, %v2093
    %v2158 = vmul.f32 %v2094, %v2094
    %v2159 = vmul.f32 %v2095, %v2095
    %v2160 = vmul.f32 %v2096, %v2096
    %v2161 = vmul.f32 %v2097, %v2097
    %v2162 = vmul.f32 %v2098, %v2098
    %v2163 = vmul.f32 %v2099, %v2099
    %v2164 = vmul.f32 %v2100, %v2100
    %v2165 = vmul.f32 %v2101, %v2101
    %v2166 = vmul.f32 %v2102, %v2102
    %v2167 = vmul.f32 %v2103, %v2103
    %v2168 = vmul.f32 %v2104, %v2104
    %v2169 = vmul.f32 %v2105, %v2105
    %v2170 = vmul.f32 %v2106, %v2106
    %v2171 = vmul.f32 %v2107, %v2107
    %v2172 = vmul.f32 %v2108, %v2108
    %v2173 = vmul.f32 %v2109, %v2109
    %v2174 = vmul.f32 %v2110, %v2110
    %v2175 = vmul.f32 %v2111, %v2111
    %v2176 = vmul.f32 %v2112, %v2112
    %v2177 = vsel %vm1913, %v2113, 0.0
    %v2178 = vsel %vm1913, %v2114, 0.0
    %v2179 = vadd.f32 %v2177, %v2178
    %v2180 = vsel %vm1913, %v2115, 0.0
    %v2181 = vadd.f32 %v2179, %v2180
    %v2182 = vsel %vm1913, %v2116, 0.0
    %v2183 = vadd.f32 %v2181, %v2182
    %v2184 = vsel %vm1913, %v2117, 0.0
    %v2185 = vadd.f32 %v2183, %v2184
    %v2186 = vsel %vm1913, %v2118, 0.0
    %v2187 = vadd.f32 %v2185, %v2186
    %v2188 = vsel %vm1913, %v2119, 0.0
    %v2189 = vadd.f32 %v2187, %v2188
    %v2190 = vsel %vm1913, %v2120, 0.0
    %v2191 = vadd.f32 %v2189, %v2190
    %v2192 = vsel %vm1913, %v2121, 0.0
    %v2193 = vadd.f32 %v2191, %v2192
    %v2194 = vsel %vm1913, %v2122, 0.0
    %v2195 = vadd.f32 %v2193, %v2194
    %v2196 = vsel %vm1913, %v2123, 0.0
    %v2197 = vadd.f32 %v2195, %v2196
    %v2198 = vsel %vm1913, %v2124, 0.0
    %v2199 = vadd.f32 %v2197, %v2198
    %v2200 = vsel %vm1913, %v2125, 0.0
    %v2201 = vadd.f32 %v2199, %v2200
    %v2202 = vsel %vm1913, %v2126, 0.0
    %v2203 = vadd.f32 %v2201, %v2202
    %v2204 = vsel %vm1913, %v2127, 0.0
    %v2205 = vadd.f32 %v2203, %v2204
    %v2206 = vsel %vm1913, %v2128, 0.0
    %v2207 = vadd.f32 %v2205, %v2206
    %v2208 = vsel %vm1913, %v2129, 0.0
    %v2209 = vadd.f32 %v2207, %v2208
    %v2210 = vsel %vm1913, %v2130, 0.0
    %v2211 = vadd.f32 %v2209, %v2210
    %v2212 = vsel %vm1913, %v2131, 0.0
    %v2213 = vadd.f32 %v2211, %v2212
    %v2214 = vsel %vm1913, %v2132, 0.0
    %v2215 = vadd.f32 %v2213, %v2214
    %v2216 = vsel %vm1913, %v2133, 0.0
    %v2217 = vadd.f32 %v2215, %v2216
    %v2218 = vsel %vm1913, %v2134, 0.0
    %v2219 = vadd.f32 %v2217, %v2218
    %v2220 = vsel %vm1913, %v2135, 0.0
    %v2221 = vadd.f32 %v2219, %v2220
    %v2222 = vsel %vm1913, %v2136, 0.0
    %v2223 = vadd.f32 %v2221, %v2222
    %v2224 = vsel %vm1913, %v2137, 0.0
    %v2225 = vadd.f32 %v2223, %v2224
    %v2226 = vsel %vm1913, %v2138, 0.0
    %v2227 = vadd.f32 %v2225, %v2226
    %v2228 = vsel %vm1913, %v2139, 0.0
    %v2229 = vadd.f32 %v2227, %v2228
    %v2230 = vsel %vm1913, %v2140, 0.0
    %v2231 = vadd.f32 %v2229, %v2230
    %v2232 = vsel %vm1913, %v2141, 0.0
    %v2233 = vadd.f32 %v2231, %v2232
    %v2234 = vsel %vm1913, %v2142, 0.0
    %v2235 = vadd.f32 %v2233, %v2234
    %v2236 = vsel %vm1913, %v2143, 0.0
    %v2237 = vadd.f32 %v2235, %v2236
    %v2238 = vsel %vm1913, %v2144, 0.0
    %v2239 = vadd.f32 %v2237, %v2238
    %v2240 = vsel %vm1913, %v2145, 0.0
    %v2241 = vadd.f32 %v2239, %v2240
    %v2242 = vsel %vm1913, %v2146, 0.0
    %v2243 = vadd.f32 %v2241, %v2242
    %v2244 = vsel %vm1913, %v2147, 0.0
    %v2245 = vadd.f32 %v2243, %v2244
    %v2246 = vsel %vm1913, %v2148, 0.0
    %v2247 = vadd.f32 %v2245, %v2246
    %v2248 = vsel %vm1913, %v2149, 0.0
    %v2249 = vadd.f32 %v2247, %v2248
    %v2250 = vsel %vm1913, %v2150, 0.0
    %v2251 = vadd.f32 %v2249, %v2250
    %v2252 = vsel %vm1913, %v2151, 0.0
    %v2253 = vadd.f32 %v2251, %v2252
    %v2254 = vsel %vm1913, %v2152, 0.0
    %v2255 = vadd.f32 %v2253, %v2254
    %v2256 = vsel %vm1913, %v2153, 0.0
    %v2257 = vadd.f32 %v2255, %v2256
    %v2258 = vsel %vm1913, %v2154, 0.0
    %v2259 = vadd.f32 %v2257, %v2258
    %v2260 = vsel %vm1913, %v2155, 0.0
    %v2261 = vadd.f32 %v2259, %v2260
    %v2262 = vsel %vm1913, %v2156, 0.0
    %v2263 = vadd.f32 %v2261, %v2262
    %v2264 = vsel %vm1913, %v2157, 0.0
    %v2265 = vadd.f32 %v2263, %v2264
    %v2266 = vsel %vm1913, %v2158, 0.0
    %v2267 = vadd.f32 %v2265, %v2266
    %v2268 = vsel %vm1913, %v2159, 0.0
    %v2269 = vadd.f32 %v2267, %v2268
    %v2270 = vsel %vm1913, %v2160, 0.0
    %v2271 = vadd.f32 %v2269, %v2270
    %v2272 = vsel %vm1913, %v2161, 0.0
    %v2273 = vadd.f32 %v2271, %v2272
    %v2274 = vsel %vm1913, %v2162, 0.0
    %v2275 = vadd.f32 %v2273, %v2274
    %v2276 = vsel %vm1913, %v2163, 0.0
    %v2277 = vadd.f32 %v2275, %v2276
    %v2278 = vsel %vm1913, %v2164, 0.0
    %v2279 = vadd.f32 %v2277, %v2278
    %v2280 = vsel %vm1913, %v2165, 0.0
    %v2281 = vadd.f32 %v2279, %v2280
    %v2282 = vsel %vm1913, %v2166, 0.0
    %v2283 = vadd.f32 %v2281, %v2282
    %v2284 = vsel %vm1913, %v2167, 0.0
    %v2285 = vadd.f32 %v2283, %v2284
    %v2286 = vsel %vm1913, %v2168, 0.0
    %v2287 = vadd.f32 %v2285, %v2286
    %v2288 = vsel %vm1913, %v2169, 0.0
    %v2289 = vadd.f32 %v2287, %v2288
    %v2290 = vsel %vm1913, %v2170, 0.0
    %v2291 = vadd.f32 %v2289, %v2290
    %v2292 = vsel %vm1913, %v2171, 0.0
    %v2293 = vadd.f32 %v2291, %v2292
    %v2294 = vsel %vm1913, %v2172, 0.0
    %v2295 = vadd.f32 %v2293, %v2294
    %v2296 = vsel %vm1913, %v2173, 0.0
    %v2297 = vadd.f32 %v2295, %v2296
    %v2298 = vsel %vm1913, %v2174, 0.0
    %v2299 = vadd.f32 %v2297, %v2298
    %v2300 = vsel %vm1913, %v2175, 0.0
    %v2301 = vadd.f32 %v2299, %v2300
    %v2302 = vsel %vm1913, %v2176, 0.0
    %v2303 = vadd.f32 %v2301, %v2302
    %v2304 = vrot.slane %v2303, 4
    %v2305 = vadd.f32 %v2303, %v2304
    %v2306 = vrot.slane %v2305, 2
    %v2307 = vadd.f32 %v2305, %v2306
    %v2308 = vrot.slane %v2307, 1
    %v2309 = vadd.f32 %v2307, %v2308
    %v2310 = vmul.f32 %v2309, %v2047
    %v2311 = vadd.f32 %v2310, 1e-05
    %v2312 = vrsqrt.pop %v2311
    %v2313 = vmul.f32 %v1911, %v2312
    %v2314 = vmul.f32 %v2048, %v2313
    %v2315 = vsub.f32 %v1912, %v2314
    %v2317 = vlaneseq
    %v2318 = vshrl.u32 %v2317, 7
    %v2319 = vsub.s32 0, %v2318
    %v2320 = vrot.slane %v2313, %v2319
    %v2322 = vmul.f32 %v1335, %v2320
    %v2323 = vmul.f32 %v1336, %v2320
    %v2324 = vmul.f32 %v1337, %v2320
    %v2325 = vmul.f32 %v1338, %v2320
    %v2326 = vmul.f32 %v1339, %v2320
    %v2327 = vmul.f32 %v1340, %v2320
    %v2328 = vmul.f32 %v1341, %v2320
    %v2329 = vmul.f32 %v1342, %v2320
    %v2330 = vmul.f32 %v1343, %v2320
    %v2331 = vmul.f32 %v1344, %v2320
    %v2332 = vmul.f32 %v1345, %v2320
    %v2333 = vmul.f32 %v1346, %v2320
    %v2334 = vmul.f32 %v1347, %v2320
    %v2335 = vmul.f32 %v1348, %v2320
    %v2336 = vmul.f32 %v1349, %v2320
    %v2337 = vmul.f32 %v1350, %v2320
    %v2338 = vmul.f32 %v1351, %v2320
    %v2339 = vmul.f32 %v1352, %v2320
    %v2340 = vmul.f32 %v1353, %v2320
    %v2341 = vmul.f32 %v1354, %v2320
    %v2342 = vmul.f32 %v1355, %v2320
    %v2343 = vmul.f32 %v1356, %v2320
    %v2344 = vmul.f32 %v1357, %v2320
    %v2345 = vmul.f32 %v1358, %v2320
    %v2346 = vmul.f32 %v1359, %v2320
    %v2347 = vmul.f32 %v1360, %v2320
    %v2348 = vmul.f32 %v1361, %v2320
    %v2349 = vmul.f32 %v1362, %v2320
    %v2350 = vmul.f32 %v1363, %v2320
    %v2351 = vmul.f32 %v1364, %v2320
    %v2352 = vmul.f32 %v1365, %v2320
    %v2353 = vmul.f32 %v1366, %v2320
    %v2354 = vmul.f32 %v1879, %v2320
    %v2355 = vmul.f32 %v1880, %v2320
    %v2356 = vmul.f32 %v1881, %v2320
    %v2357 = vmul.f32 %v1882, %v2320
    %v2358 = vmul.f32 %v1883, %v2320
    %v2359 = vmul.f32 %v1884, %v2320
    %v2360 = vmul.f32 %v1885, %v2320
    %v2361 = vmul.f32 %v1886, %v2320
    %v2362 = vmul.f32 %v1887, %v2320
    %v2363 = vmul.f32 %v1888, %v2320
    %v2364 = vmul.f32 %v1889, %v2320
    %v2365 = vmul.f32 %v1890, %v2320
    %v2366 = vmul.f32 %v1891, %v2320
    %v2367 = vmul.f32 %v1892, %v2320
    %v2368 = vmul.f32 %v1893, %v2320
    %v2369 = vmul.f32 %v1894, %v2320
    %v2370 = vmul.f32 %v1895, %v2320
    %v2371 = vmul.f32 %v1896, %v2320
    %v2372 = vmul.f32 %v1897, %v2320
    %v2373 = vmul.f32 %v1898, %v2320
    %v2374 = vmul.f32 %v1899, %v2320
    %v2375 = vmul.f32 %v1900, %v2320
    %v2376 = vmul.f32 %v1901, %v2320
    %v2377 = vmul.f32 %v1902, %v2320
    %v2378 = vmul.f32 %v1903, %v2320
    %v2379 = vmul.f32 %v1904, %v2320
    %v2380 = vmul.f32 %v1905, %v2320
    %v2381 = vmul.f32 %v1906, %v2320
    %v2382 = vmul.f32 %v1907, %v2320
    %v2383 = vmul.f32 %v1908, %v2320
    %v2384 = vmul.f32 %v1909, %v2320
    %v2385 = vmul.f32 %v1910, %v2320
    %v2387 = vlaneseq
    %v2388 = vshrl.u32 %v2387, 7
    %v2389 = vsub.s32 0, %v2388
    %v2390 = vrot.slane %v2315, %v2389
    %v2392 = vadd.f32 %v2322, %v2390
    %v2393 = vadd.f32 %v2323, %v2390
    %v2394 = vadd.f32 %v2324, %v2390
    %v2395 = vadd.f32 %v2325, %v2390
    %v2396 = vadd.f32 %v2326, %v2390
    %v2397 = vadd.f32 %v2327, %v2390
    %v2398 = vadd.f32 %v2328, %v2390
    %v2399 = vadd.f32 %v2329, %v2390
    %v2400 = vadd.f32 %v2330, %v2390
    %v2401 = vadd.f32 %v2331, %v2390
    %v2402 = vadd.f32 %v2332, %v2390
    %v2403 = vadd.f32 %v2333, %v2390
    %v2404 = vadd.f32 %v2334, %v2390
    %v2405 = vadd.f32 %v2335, %v2390
    %v2406 = vadd.f32 %v2336, %v2390
    %v2407 = vadd.f32 %v2337, %v2390
    %v2408 = vadd.f32 %v2338, %v2390
    %v2409 = vadd.f32 %v2339, %v2390
    %v2410 = vadd.f32 %v2340, %v2390
    %v2411 = vadd.f32 %v2341, %v2390
    %v2412 = vadd.f32 %v2342, %v2390
    %v2413 = vadd.f32 %v2343, %v2390
    %v2414 = vadd.f32 %v2344, %v2390
    %v2415 = vadd.f32 %v2345, %v2390
    %v2416 = vadd.f32 %v2346, %v2390
    %v2417 = vadd.f32 %v2347, %v2390
    %v2418 = vadd.f32 %v2348, %v2390
    %v2419 = vadd.f32 %v2349, %v2390
    %v2420 = vadd.f32 %v2350, %v2390
    %v2421 = vadd.f32 %v2351, %v2390
    %v2422 = vadd.f32 %v2352, %v2390
    %v2423 = vadd.f32 %v2353, %v2390
    %v2424 = vadd.f32 %v2354, %v2390
    %v2425 = vadd.f32 %v2355, %v2390
    %v2426 = vadd.f32 %v2356, %v2390
    %v2427 = vadd.f32 %v2357, %v2390
    %v2428 = vadd.f32 %v2358, %v2390
    %v2429 = vadd.f32 %v2359, %v2390
    %v2430 = vadd.f32 %v2360, %v2390
    %v2431 = vadd.f32 %v2361, %v2390
    %v2432 = vadd.f32 %v2362, %v2390
    %v2433 = vadd.f32 %v2363, %v2390
    %v2434 = vadd.f32 %v2364, %v2390
    %v2435 = vadd.f32 %v2365, %v2390
    %v2436 = vadd.f32 %v2366, %v2390
    %v2437 = vadd.f32 %v2367, %v2390
    %v2438 = vadd.f32 %v2368, %v2390
    %v2439 = vadd.f32 %v2369, %v2390
    %v2440 = vadd.f32 %v2370, %v2390
    %v2441 = vadd.f32 %v2371, %v2390
    %v2442 = vadd.f32 %v2372, %v2390
    %v2443 = vadd.f32 %v2373, %v2390
    %v2444 = vadd.f32 %v2374, %v2390
    %v2445 = vadd.f32 %v2375, %v2390
    %v2446 = vadd.f32 %v2376, %v2390
    %v2447 = vadd.f32 %v2377, %v2390
    %v2448 = vadd.f32 %v2378, %v2390
    %v2449 = vadd.f32 %v2379, %v2390
    %v2450 = vadd.f32 %v2380, %v2390
    %v2451 = vadd.f32 %v2381, %v2390
    %v2452 = vadd.f32 %v2382, %v2390
    %v2453 = vadd.f32 %v2383, %v2390
    %v2454 = vadd.f32 %v2384, %v2390
    %v2455 = vadd.f32 %v2385, %v2390
    %v2456 = vmax.f32 %v2392, 0.0
    %v2457 = vmax.f32 %v2393, 0.0
    %v2458 = vmax.f32 %v2394, 0.0
    %v2459 = vmax.f32 %v2395, 0.0
    %v2460 = vmax.f32 %v2396, 0.0
    %v2461 = vmax.f32 %v2397, 0.0
    %v2462 = vmax.f32 %v2398, 0.0
    %v2463 = vmax.f32 %v2399, 0.0
    %v2464 = vmax.f32 %v2400, 0.0
    %v2465 = vmax.f32 %v2401, 0.0
    %v2466 = vmax.f32 %v2402, 0.0
    %v2467 = vmax.f32 %v2403, 0.0
    %v2468 = vmax.f32 %v2404, 0.0
    %v2469 = vmax.f32 %v2405, 0.0
    %v2470 = vmax.f32 %v2406, 0.0
    %v2471 = vmax.f32 %v2407, 0.0
    %v2472 = vmax.f32 %v2408, 0.0
    %v2473 = vmax.f32 %v2409, 0.0
    %v2474 = vmax.f32 %v2410, 0.0
    %v2475 = vmax.f32 %v2411, 0.0
    %v2476 = vmax.f32 %v2412, 0.0
    %v2477 = vmax.f32 %v2413, 0.0
    %v2478 = vmax.f32 %v2414, 0.0
    %v2479 = vmax.f32 %v2415, 0.0
    %v2480 = vmax.f32 %v2416, 0.0
    %v2481 = vmax.f32 %v2417, 0.0
    %v2482 = vmax.f32 %v2418, 0.0
    %v2483 = vmax.f32 %v2419, 0.0
    %v2484 = vmax.f32 %v2420, 0.0
    %v2485 = vmax.f32 %v2421, 0.0
    %v2486 = vmax.f32 %v2422, 0.0
    %v2487 = vmax.f32 %v2423, 0.0
    %v2488 = vmax.f32 %v2424, 0.0
    %v2489 = vmax.f32 %v2425, 0.0
    %v2490 = vmax.f32 %v2426, 0.0
    %v2491 = vmax.f32 %v2427, 0.0
    %v2492 = vmax.f32 %v2428, 0.0
    %v2493 = vmax.f32 %v2429, 0.0
    %v2494 = vmax.f32 %v2430, 0.0
    %v2495 = vmax.f32 %v2431, 0.0
    %v2496 = vmax.f32 %v2432, 0.0
    %v2497 = vmax.f32 %v2433, 0.0
    %v2498 = vmax.f32 %v2434, 0.0
    %v2499 = vmax.f32 %v2435, 0.0
    %v2500 = vmax.f32 %v2436, 0.0
    %v2501 = vmax.f32 %v2437, 0.0
    %v2502 = vmax.f32 %v2438, 0.0
    %v2503 = vmax.f32 %v2439, 0.0
    %v2504 = vmax.f32 %v2440, 0.0
    %v2505 = vmax.f32 %v2441, 0.0
    %v2506 = vmax.f32 %v2442, 0.0
    %v2507 = vmax.f32 %v2443, 0.0
    %v2508 = vmax.f32 %v2444, 0.0
    %v2509 = vmax.f32 %v2445, 0.0
    %v2510 = vmax.f32 %v2446, 0.0
    %v2511 = vmax.f32 %v2447, 0.0
    %v2512 = vmax.f32 %v2448, 0.0
    %v2513 = vmax.f32 %v2449, 0.0
    %v2514 = vmax.f32 %v2450, 0.0
    %v2515 = vmax.f32 %v2451, 0.0
    %v2516 = vmax.f32 %v2452, 0.0
    %v2517 = vmax.f32 %v2453, 0.0
    %v2518 = vmax.f32 %v2454, 0.0
    %v2519 = vmax.f32 %v2455, 0.0
    %v2520 = vpack.c.bf16 %v2457, %v2456
    %v2521 = vpack.c.bf16 %v2459, %v2458
    %v2522 = vpack.c.bf16 %v2461, %v2460
    %v2523 = vpack.c.bf16 %v2463, %v2462
    %v2524 = vpack.c.bf16 %v2465, %v2464
    %v2525 = vpack.c.bf16 %v2467, %v2466
    %v2526 = vpack.c.bf16 %v2469, %v2468
    %v2527 = vpack.c.bf16 %v2471, %v2470
    %v2528 = vpack.c.bf16 %v2473, %v2472
    %v2529 = vpack.c.bf16 %v2475, %v2474
    %v2530 = vpack.c.bf16 %v2477, %v2476
    %v2531 = vpack.c.bf16 %v2479, %v2478
    %v2532 = vpack.c.bf16 %v2481, %v2480
    %v2533 = vpack.c.bf16 %v2483, %v2482
    %v2534 = vpack.c.bf16 %v2485, %v2484
    %v2535 = vpack.c.bf16 %v2487, %v2486
    %2536 = vst.msk [vmem:[#allocation2] sm:$0xff] %vm1913, %v2520
    %2537 = vst.msk [vmem:[#allocation2 + $0x8] sm:$0xff] %vm1913, %v2521
    %2538 = vst.msk [vmem:[#allocation2 + $0x10] sm:$0xff] %vm1913, %v2522
    %2539 = vst.msk [vmem:[#allocation2 + $0x18] sm:$0xff] %vm1913, %v2523
    %2540 = vst.msk [vmem:[#allocation2 + $0x20] sm:$0xff] %vm1913, %v2524
    %2541 = vst.msk [vmem:[#allocation2 + $0x28] sm:$0xff] %vm1913, %v2525
    %2542 = vst.msk [vmem:[#allocation2 + $0x30] sm:$0xff] %vm1913, %v2526
    %2543 = vst.msk [vmem:[#allocation2 + $0x38] sm:$0xff] %vm1913, %v2527
    %2544 = vst.msk [vmem:[#allocation2 + $0x40] sm:$0xff] %vm1913, %v2528
    %2545 = vst.msk [vmem:[#allocation2 + $0x48] sm:$0xff] %vm1913, %v2529
    %2546 = vst.msk [vmem:[#allocation2 + $0x50] sm:$0xff] %vm1913, %v2530
    %2547 = vst.msk [vmem:[#allocation2 + $0x58] sm:$0xff] %vm1913, %v2531
    %2548 = vst.msk [vmem:[#allocation2 + $0x60] sm:$0xff] %vm1913, %v2532
    %2549 = vst.msk [vmem:[#allocation2 + $0x68] sm:$0xff] %vm1913, %v2533
    %2550 = vst.msk [vmem:[#allocation2 + $0x70] sm:$0xff] %vm1913, %v2534
    %2551 = vst.msk [vmem:[#allocation2 + $0x78] sm:$0xff] %vm1913, %v2535
    %2552 = vmatprep.subr.bf16.mxu0 0
    %2553 = vmatpush1.bf16.msra.mxu0 %v2520
    %2554 = vmatprep.subr.bf16.mxu0 0
    %2555 = vmatpush1.bf16.msra.mxu0 %v2521
    %2556 = vmatprep.subr.bf16.mxu0 0
    %2557 = vmatpush1.bf16.msra.mxu0 %v2522
    %2558 = vmatprep.subr.bf16.mxu0 0
    %2559 = vmatpush1.bf16.msra.mxu0 %v2523
    %2560 = vmatprep.subr.bf16.mxu0 0
    %2561 = vmatpush1.bf16.msra.mxu0 %v2524
    %2562 = vmatprep.subr.bf16.mxu0 0
    %2563 = vmatpush1.bf16.msra.mxu0 %v2525
    %2564 = vmatprep.subr.bf16.mxu0 0
    %2565 = vmatpush1.bf16.msra.mxu0 %v2526
    %2566 = vmatprep.subr.bf16.mxu0 0
    %2567 = vmatpush1.bf16.msra.mxu0 %v2527
    %2568 = vmatprep.subr.bf16.mxu0 0
    %2569 = vmatpush1.bf16.msra.mxu0 %v2528
    %2570 = vmatprep.subr.bf16.mxu0 0
    %2571 = vmatpush1.bf16.msra.mxu0 %v2529
    %2572 = vmatprep.subr.bf16.mxu0 0
    %2573 = vmatpush1.bf16.msra.mxu0 %v2530
    %2574 = vmatprep.subr.bf16.mxu0 0
    %2575 = vmatpush1.bf16.msra.mxu0 %v2531
    %2576 = vmatprep.subr.bf16.mxu0 0
    %2577 = vmatpush1.bf16.msra.mxu0 %v2532
    %2578 = vmatprep.subr.bf16.mxu0 0
    %2579 = vmatpush1.bf16.msra.mxu0 %v2533
    %2580 = vmatprep.subr.bf16.mxu0 0
    %2581 = vmatpush1.bf16.msra.mxu0 %v2534
    %2582 = vmatprep.subr.bf16.mxu0 0
    %2583 = vmatpush1.bf16.msra.mxu0 %v2535
    %2584 = vmatprep.mubr.bf16.mxu0 %v249
    %2585 = vmatmul.mubr.bf16.gmra.mrb[0].mxu0 %v248
    %v2586 = vpop.f32.mrb[0].mxu0
    %v2587 = vadd.f32 0.0, %v2586
    %v2588 = vpop.f32.mrb[0].mxu0
    %v2589 = vpop.f32.mrb[0].mxu0
    %v2590 = vadd.f32 0.0, %v2589
    %v2591 = vpop.f32.mrb[0].mxu0
    %2592 = vmatprep.mubr.bf16.mxu0 %v251
    %2593 = vmatmul.mubr.bf16.gmra.mrb[0].mxu0 %v250
    %v2594 = vpop.f32.mrb[0].mxu0
    %v2595 = vadd.f32 0.0, %v2594
    %v2596 = vpop.f32.mrb[0].mxu0
    %v2597 = vpop.f32.mrb[0].mxu0
    %v2598 = vadd.f32 0.0, %v2597
    %v2599 = vpop.f32.mrb[0].mxu0
    %2600 = vmatprep.mubr.bf16.mxu0 %v253
    %2601 = vmatmul.mubr.bf16.gmra.mrb[0].mxu0 %v252
    %v2602 = vpop.f32.mrb[0].mxu0
    %v2603 = vadd.f32 0.0, %v2602
    %v2604 = vpop.f32.mrb[0].mxu0
    %v2605 = vpop.f32.mrb[0].mxu0
    %v2606 = vadd.f32 0.0, %v2605
    %v2607 = vpop.f32.mrb[0].mxu0
    %2608 = vmatprep.mubr.bf16.mxu0 %v255
    %2609 = vmatmul.mubr.bf16.gmra.mrb[0].mxu0 %v254
    %v2610 = vpop.f32.mrb[0].mxu0
    %v2611 = vadd.f32 0.0, %v2610
    %v2612 = vpop.f32.mrb[0].mxu0
    %v2613 = vpop.f32.mrb[0].mxu0
    %v2614 = vadd.f32 0.0, %v2613
    %v2615 = vpop.f32.mrb[0].mxu0
    %2616 = vmatprep.mubr.bf16.mxu0 %v257
    %2617 = vmatmul.mubr.bf16.gmra.mrb[0].mxu0 %v256
    %v2618 = vpop.f32.mrb[0].mxu0
    %v2619 = vadd.f32 0.0, %v2618
    %v2620 = vpop.f32.mrb[0].mxu0
    %v2621 = vpop.f32.mrb[0].mxu0
    %v2622 = vadd.f32 0.0, %v2621
    %v2623 = vpop.f32.mrb[0].mxu0
    %2624 = vmatprep.mubr.bf16.mxu0 %v259
    %2625 = vmatmul.mubr.bf16.gmra.mrb[0].mxu0 %v258
    %v2626 = vpop.f32.mrb[0].mxu0
    %v2627 = vadd.f32 0.0, %v2626
    %v2628 = vpop.f32.mrb[0].mxu0
    %v2629 = vpop.f32.mrb[0].mxu0
    %v2630 = vadd.f32 0.0, %v2629
    %v2631 = vpop.f32.mrb[0].mxu0
    %2632 = vmatprep.mubr.bf16.mxu0 %v261
    %2633 = vmatmul.mubr.bf16.gmra.mrb[0].mxu0 %v260
    %v2634 = vpop.f32.mrb[0].mxu0
    %v2635 = vadd.f32 0.0, %v2634
    %v2636 = vpop.f32.mrb[0].mxu0
    %v2637 = vpop.f32.mrb[0].mxu0
    %v2638 = vadd.f32 0.0, %v2637
    %v2639 = vpop.f32.mrb[0].mxu0
    %2640 = vmatprep.mubr.bf16.mxu0 %v263
    %2641 = vmatmul.mubr.bf16.gmra.mrb[0].mxu0 %v262
    %v2642 = vpop.f32.mrb[0].mxu0
    %v2643 = vadd.f32 0.0, %v2642
    %v2644 = vpop.f32.mrb[0].mxu0
    %v2645 = vpop.f32.mrb[0].mxu0
    %v2646 = vadd.f32 0.0, %v2645
    %v2647 = vpop.f32.mrb[0].mxu0
    %2648 = vmatprep.mubr.bf16.mxu0 %v265
    %2649 = vmatmul.mubr.bf16.gmra.mrb[0].mxu0 %v264
    %v2650 = vpop.f32.mrb[0].mxu0
    %v2651 = vadd.f32 0.0, %v2650
    %v2652 = vpop.f32.mrb[0].mxu0
    %v2653 = vpop.f32.mrb[0].mxu0
    %v2654 = vadd.f32 0.0, %v2653
    %v2655 = vpop.f32.mrb[0].mxu0
    %2656 = vmatprep.mubr.bf16.mxu0 %v267
    %2657 = vmatmul.mubr.bf16.gmra.mrb[0].mxu0 %v266
    %v2658 = vpop.f32.mrb[0].mxu0
    %v2659 = vadd.f32 0.0, %v2658
    %v2660 = vpop.f32.mrb[0].mxu0
    %v2661 = vpop.f32.mrb[0].mxu0
    %v2662 = vadd.f32 0.0, %v2661
    %v2663 = vpop.f32.mrb[0].mxu0
    %2664 = vmatprep.mubr.bf16.mxu0 %v269
    %2665 = vmatmul.mubr.bf16.gmra.mrb[0].mxu0 %v268
    %v2666 = vpop.f32.mrb[0].mxu0
    %v2667 = vadd.f32 0.0, %v2666
    %v2668 = vpop.f32.mrb[0].mxu0
    %v2669 = vpop.f32.mrb[0].mxu0
    %v2670 = vadd.f32 0.0, %v2669
    %v2671 = vpop.f32.mrb[0].mxu0
    %2672 = vmatprep.mubr.bf16.mxu0 %v271
    %2673 = vmatmul.mubr.bf16.gmra.mrb[0].mxu0 %v270
    %v2674 = vpop.f32.mrb[0].mxu0
    %v2675 = vadd.f32 0.0, %v2674
    %v2676 = vpop.f32.mrb[0].mxu0
    %v2677 = vpop.f32.mrb[0].mxu0
    %v2678 = vadd.f32 0.0, %v2677
    %v2679 = vpop.f32.mrb[0].mxu0
    %2680 = vmatprep.mubr.bf16.mxu0 %v273
    %2681 = vmatmul.mubr.bf16.gmra.mrb[0].mxu0 %v272
    %v2682 = vpop.f32.mrb[0].mxu0
    %v2683 = vadd.f32 0.0, %v2682
    %v2684 = vpop.f32.mrb[0].mxu0
    %v2685 = vpop.f32.mrb[0].mxu0
    %v2686 = vadd.f32 0.0, %v2685
    %v2687 = vpop.f32.mrb[0].mxu0
    %2688 = vmatprep.mubr.bf16.mxu0 %v275
    %2689 = vmatmul.mubr.bf16.gmra.mrb[0].mxu0 %v274
    %v2690 = vpop.f32.mrb[0].mxu0
    %v2691 = vadd.f32 0.0, %v2690
    %v2692 = vpop.f32.mrb[0].mxu0
    %v2693 = vpop.f32.mrb[0].mxu0
    %v2694 = vadd.f32 0.0, %v2693
    %v2695 = vpop.f32.mrb[0].mxu0
    %2696 = vmatprep.mubr.bf16.mxu0 %v277
    %2697 = vmatmul.mubr.bf16.gmra.mrb[0].mxu0 %v276
    %v2698 = vpop.f32.mrb[0].mxu0
    %v2699 = vadd.f32 0.0, %v2698
    %v2700 = vpop.f32.mrb[0].mxu0
    %v2701 = vpop.f32.mrb[0].mxu0
    %v2702 = vadd.f32 0.0, %v2701
    %v2703 = vpop.f32.mrb[0].mxu0
    %2704 = vmatprep.mubr.bf16.mxu0 %v279
    %2705 = vmatmul.mubr.bf16.gmra.mrb[0].mxu0 %v278
    %v2706 = vpop.f32.mrb[0].mxu0
    %v2707 = vadd.f32 0.0, %v2706
    %v2708 = vpop.f32.mrb[0].mxu0
    %v2709 = vpop.f32.mrb[0].mxu0
    %v2710 = vadd.f32 0.0, %v2709
    %v2711 = vpop.f32.mrb[0].mxu0
    %2712 = vdwg.mxu0
    %v2713 = vpack.c.bf16 %v2590, %v2587
    %v2714 = vpack.c.bf16 %v2598, %v2595
    %v2715 = vpack.c.bf16 %v2606, %v2603
    %v2716 = vpack.c.bf16 %v2614, %v2611
    %v2717 = vpack.c.bf16 %v2622, %v2619
    %v2718 = vpack.c.bf16 %v2630, %v2627
    %v2719 = vpack.c.bf16 %v2638, %v2635
    %v2720 = vpack.c.bf16 %v2646, %v2643
    %v2721 = vpack.c.bf16 %v2654, %v2651
    %v2722 = vpack.c.bf16 %v2662, %v2659
    %v2723 = vpack.c.bf16 %v2670, %v2667
    %v2724 = vpack.c.bf16 %v2678, %v2675
    %v2725 = vpack.c.bf16 %v2686, %v2683
    %v2726 = vpack.c.bf16 %v2694, %v2691
    %v2727 = vpack.c.bf16 %v2702, %v2699
    %v2728 = vpack.c.bf16 %v2710, %v2707
    %2745 = vrot.lane.b32.xlu0 %v2713, 32
    %v2746 = vpop.permute.xlu0 %2745
    %2747 = vrot.lane.b32.xlu0 %v2714, 32
    %v2748 = vpop.permute.xlu0 %2747
    %2749 = vrot.lane.b32.xlu0 %v2715, 32
    %v2750 = vpop.permute.xlu0 %2749
    %2751 = vrot.lane.b32.xlu0 %v2716, 32
    %v2752 = vpop.permute.xlu0 %2751
    %2753 = vrot.lane.b32.xlu0 %v2717, 32
    %v2754 = vpop.permute.xlu0 %2753
    %2755 = vrot.lane.b32.xlu0 %v2718, 32
    %v2756 = vpop.permute.xlu0 %2755
    %2757 = vrot.lane.b32.xlu0 %v2719, 32
    %v2758 = vpop.permute.xlu0 %2757
    %2759 = vrot.lane.b32.xlu0 %v2720, 32
    %v2760 = vpop.permute.xlu0 %2759
    %2761 = vrot.lane.b32.xlu0 %v2721, 32
    %v2762 = vpop.permute.xlu0 %2761
    %2763 = vrot.lane.b32.xlu0 %v2722, 32
    %v2764 = vpop.permute.xlu0 %2763
    %2765 = vrot.lane.b32.xlu0 %v2723, 32
    %v2766 = vpop.permute.xlu0 %2765
    %2767 = vrot.lane.b32.xlu0 %v2724, 32
    %v2768 = vpop.permute.xlu0 %2767
    %2769 = vrot.lane.b32.xlu0 %v2725, 32
    %v2770 = vpop.permute.xlu0 %2769
    %2771 = vrot.lane.b32.xlu0 %v2726, 32
    %v2772 = vpop.permute.xlu0 %2771
    %2773 = vrot.lane.b32.xlu0 %v2727, 32
    %v2774 = vpop.permute.xlu0 %2773
    %2775 = vrot.lane.b32.xlu0 %v2728, 32
    %v2776 = vpop.permute.xlu0 %2775
    %vm2793 = vcmask 523520
    %2794 = vst.msk [vmem:[#allocation2] sm:$0xff] %vm2793, %v2746
    %2795 = vst.msk [vmem:[#allocation2 + $0x8] sm:$0xff] %vm2793, %v2748
    %2796 = vst.msk [vmem:[#allocation2 + $0x10] sm:$0xff] %vm2793, %v2750
    %2797 = vst.msk [vmem:[#allocation2 + $0x18] sm:$0xff] %vm2793, %v2752
    %2798 = vst.msk [vmem:[#allocation2 + $0x20] sm:$0xff] %vm2793, %v2754
    %2799 = vst.msk [vmem:[#allocation2 + $0x28] sm:$0xff] %vm2793, %v2756
    %2800 = vst.msk [vmem:[#allocation2 + $0x30] sm:$0xff] %vm2793, %v2758
    %2801 = vst.msk [vmem:[#allocation2 + $0x38] sm:$0xff] %vm2793, %v2760
    %2802 = vst.msk [vmem:[#allocation2 + $0x40] sm:$0xff] %vm2793, %v2762
    %2803 = vst.msk [vmem:[#allocation2 + $0x48] sm:$0xff] %vm2793, %v2764
    %2804 = vst.msk [vmem:[#allocation2 + $0x50] sm:$0xff] %vm2793, %v2766
    %2805 = vst.msk [vmem:[#allocation2 + $0x58] sm:$0xff] %vm2793, %v2768
    %2806 = vst.msk [vmem:[#allocation2 + $0x60] sm:$0xff] %vm2793, %v2770
    %2807 = vst.msk [vmem:[#allocation2 + $0x68] sm:$0xff] %vm2793, %v2772
    %2808 = vst.msk [vmem:[#allocation2 + $0x70] sm:$0xff] %vm2793, %v2774
    %2809 = vst.msk [vmem:[#allocation2 + $0x78] sm:$0xff] %vm2793, %v2776
    %2810 = vmatprep.subr.bf16.mxu0 0
    %2811 = vmatpush1.bf16.msra.mxu0 %v2713
    %2812 = vmatprep.subr.bf16.mxu0 0
    %2813 = vmatpush1.bf16.msra.mxu0 %v2714
    %2814 = vmatprep.subr.bf16.mxu0 0
    %2815 = vmatpush1.bf16.msra.mxu0 %v2715
    %2816 = vmatprep.subr.bf16.mxu0 0
    %2817 = vmatpush1.bf16.msra.mxu0 %v2716
    %2818 = vmatprep.subr.bf16.mxu0 0
    %2819 = vmatpush1.bf16.msra.mxu0 %v2717
    %2820 = vmatprep.subr.bf16.mxu0 0
    %2821 = vmatpush1.bf16.msra.mxu0 %v2718
    %2822 = vmatprep.subr.bf16.mxu0 0
    %2823 = vmatpush1.bf16.msra.mxu0 %v2719
    %2824 = vmatprep.subr.bf16.mxu0 0
    %2825 = vmatpush1.bf16.msra.mxu0 %v2720
    %2826 = vmatprep.subr.bf16.mxu0 0
    %2827 = vmatpush1.bf16.msra.mxu0 %v2721
    %2828 = vmatprep.subr.bf16.mxu0 0
    %2829 = vmatpush1.bf16.msra.mxu0 %v2722
    %2830 = vmatprep.subr.bf16.mxu0 0
    %2831 = vmatpush1.bf16.msra.mxu0 %v2723
    %2832 = vmatprep.subr.bf16.mxu0 0
    %2833 = vmatpush1.bf16.msra.mxu0 %v2724
    %2834 = vmatprep.subr.bf16.mxu0 0
    %2835 = vmatpush1.bf16.msra.mxu0 %v2725
    %2836 = vmatprep.subr.bf16.mxu0 0
    %2837 = vmatpush1.bf16.msra.mxu0 %v2726
    %2838 = vmatprep.subr.bf16.mxu0 0
    %2839 = vmatpush1.bf16.msra.mxu0 %v2727
    %2840 = vmatprep.subr.bf16.mxu0 0
    %2841 = vmatpush1.bf16.msra.mxu0 %v2728
    %2842 = vmatprep.mubr.bf16.mxu0 %v249
    %2843 = vmatmul.mubr.bf16.gmra.mrb[0].mxu0 %v248
    %v2844 = vpop.f32.mrb[0].mxu0
    %v2845 = vadd.f32 0.0, %v2844
    %v2846 = vpop.f32.mrb[0].mxu0
    %v2847 = vpop.f32.mrb[0].mxu0
    %v2848 = vadd.f32 0.0, %v2847
    %v2849 = vpop.f32.mrb[0].mxu0
    %2850 = vmatprep.mubr.bf16.mxu0 %v251
    %2851 = vmatmul.mubr.bf16.gmra.mrb[0].mxu0 %v250
    %v2852 = vpop.f32.mrb[0].mxu0
    %v2853 = vadd.f32 0.0, %v2852
    %v2854 = vpop.f32.mrb[0].mxu0
    %v2855 = vpop.f32.mrb[0].mxu0
    %v2856 = vadd.f32 0.0, %v2855
    %v2857 = vpop.f32.mrb[0].mxu0
    %2858 = vmatprep.mubr.bf16.mxu0 %v253
    %2859 = vmatmul.mubr.bf16.gmra.mrb[0].mxu0 %v252
    %v2860 = vpop.f32.mrb[0].mxu0
    %v2861 = vadd.f32 0.0, %v2860
    %v2862 = vpop.f32.mrb[0].mxu0
    %v2863 = vpop.f32.mrb[0].mxu0
    %v2864 = vadd.f32 0.0, %v2863
    %v2865 = vpop.f32.mrb[0].mxu0
    %2866 = vmatprep.mubr.bf16.mxu0 %v255
    %2867 = vmatmul.mubr.bf16.gmra.mrb[0].mxu0 %v254
    %v2868 = vpop.f32.mrb[0].mxu0
    %v2869 = vadd.f32 0.0, %v2868
    %v2870 = vpop.f32.mrb[0].mxu0
    %v2871 = vpop.f32.mrb[0].mxu0
    %v2872 = vadd.f32 0.0, %v2871
    %v2873 = vpop.f32.mrb[0].mxu0
    %2874 = vmatprep.mubr.bf16.mxu0 %v257
    %2875 = vmatmul.mubr.bf16.gmra.mrb[0].mxu0 %v256
    %v2876 = vpop.f32.mrb[0].mxu0
    %v2877 = vadd.f32 0.0, %v2876
    %v2878 = vpop.f32.mrb[0].mxu0
    %v2879 = vpop.f32.mrb[0].mxu0
    %v2880 = vadd.f32 0.0, %v2879
    %v2881 = vpop.f32.mrb[0].mxu0
    %2882 = vmatprep.mubr.bf16.mxu0 %v259
    %2883 = vmatmul.mubr.bf16.gmra.mrb[0].mxu0 %v258
    %v2884 = vpop.f32.mrb[0].mxu0
    %v2885 = vadd.f32 0.0, %v2884
    %v2886 = vpop.f32.mrb[0].mxu0
    %v2887 = vpop.f32.mrb[0].mxu0
    %v2888 = vadd.f32 0.0, %v2887
    %v2889 = vpop.f32.mrb[0].mxu0
    %2890 = vmatprep.mubr.bf16.mxu0 %v261
    %2891 = vmatmul.mubr.bf16.gmra.mrb[0].mxu0 %v260
    %v2892 = vpop.f32.mrb[0].mxu0
    %v2893 = vadd.f32 0.0, %v2892
    %v2894 = vpop.f32.mrb[0].mxu0
    %v2895 = vpop.f32.mrb[0].mxu0
    %v2896 = vadd.f32 0.0, %v2895
    %v2897 = vpop.f32.mrb[0].mxu0
    %2898 = vmatprep.mubr.bf16.mxu0 %v263
    %2899 = vmatmul.mubr.bf16.gmra.mrb[0].mxu0 %v262
    %v2900 = vpop.f32.mrb[0].mxu0
    %v2901 = vadd.f32 0.0, %v2900
    %v2902 = vpop.f32.mrb[0].mxu0
    %v2903 = vpop.f32.mrb[0].mxu0
    %v2904 = vadd.f32 0.0, %v2903
    %v2905 = vpop.f32.mrb[0].mxu0
    %2906 = vmatprep.mubr.bf16.mxu0 %v265
    %2907 = vmatmul.mubr.bf16.gmra.mrb[0].mxu0 %v264
    %v2908 = vpop.f32.mrb[0].mxu0
    %v2909 = vadd.f32 0.0, %v2908
    %v2910 = vpop.f32.mrb[0].mxu0
    %v2911 = vpop.f32.mrb[0].mxu0
    %v2912 = vadd.f32 0.0, %v2911
    %v2913 = vpop.f32.mrb[0].mxu0
    %2914 = vmatprep.mubr.bf16.mxu0 %v267
    %2915 = vmatmul.mubr.bf16.gmra.mrb[0].mxu0 %v266
    %v2916 = vpop.f32.mrb[0].mxu0
    %v2917 = vadd.f32 0.0, %v2916
    %v2918 = vpop.f32.mrb[0].mxu0
    %v2919 = vpop.f32.mrb[0].mxu0
    %v2920 = vadd.f32 0.0, %v2919
    %v2921 = vpop.f32.mrb[0].mxu0
    %2922 = vmatprep.mubr.bf16.mxu0 %v269
    %2923 = vmatmul.mubr.bf16.gmra.mrb[0].mxu0 %v268
    %v2924 = vpop.f32.mrb[0].mxu0
    %v2925 = vadd.f32 0.0, %v2924
    %v2926 = vpop.f32.mrb[0].mxu0
    %v2927 = vpop.f32.mrb[0].mxu0
    %v2928 = vadd.f32 0.0, %v2927
    %v2929 = vpop.f32.mrb[0].mxu0
    %2930 = vmatprep.mubr.bf16.mxu0 %v271
    %2931 = vmatmul.mubr.bf16.gmra.mrb[0].mxu0 %v270
    %v2932 = vpop.f32.mrb[0].mxu0
    %v2933 = vadd.f32 0.0, %v2932
    %v2934 = vpop.f32.mrb[0].mxu0
    %v2935 = vpop.f32.mrb[0].mxu0
    %v2936 = vadd.f32 0.0, %v2935
    %v2937 = vpop.f32.mrb[0].mxu0
    %2938 = vmatprep.mubr.bf16.mxu0 %v273
    %2939 = vmatmul.mubr.bf16.gmra.mrb[0].mxu0 %v272
    %v2940 = vpop.f32.mrb[0].mxu0
    %v2941 = vadd.f32 0.0, %v2940
    %v2942 = vpop.f32.mrb[0].mxu0
    %v2943 = vpop.f32.mrb[0].mxu0
    %v2944 = vadd.f32 0.0, %v2943
    %v2945 = vpop.f32.mrb[0].mxu0
    %2946 = vmatprep.mubr.bf16.mxu0 %v275
    %2947 = vmatmul.mubr.bf16.gmra.mrb[0].mxu0 %v274
    %v2948 = vpop.f32.mrb[0].mxu0
    %v2949 = vadd.f32 0.0, %v2948
    %v2950 = vpop.f32.mrb[0].mxu0
    %v2951 = vpop.f32.mrb[0].mxu0
    %v2952 = vadd.f32 0.0, %v2951
    %v2953 = vpop.f32.mrb[0].mxu0
    %2954 = vmatprep.mubr.bf16.mxu0 %v277
    %2955 = vmatmul.mubr.bf16.gmra.mrb[0].mxu0 %v276
    %v2956 = vpop.f32.mrb[0].mxu0
    %v2957 = vadd.f32 0.0, %v2956
    %v2958 = vpop.f32.mrb[0].mxu0
    %v2959 = vpop.f32.mrb[0].mxu0
    %v2960 = vadd.f32 0.0, %v2959
    %v2961 = vpop.f32.mrb[0].mxu0
    %2962 = vmatprep.mubr.bf16.mxu0 %v279
    %2963 = vmatmul.mubr.bf16.gmra.mrb[0].mxu0 %v278
    %v2964 = vpop.f32.mrb[0].mxu0
    %v2965 = vadd.f32 0.0, %v2964
    %v2966 = vpop.f32.mrb[0].mxu0
    %v2967 = vpop.f32.mrb[0].mxu0
    %v2968 = vadd.f32 0.0, %v2967
    %v2969 = vpop.f32.mrb[0].mxu0
    %2970 = vdwg.mxu0
    %v2971 = vmul.f32 %v2845, 2.0
    %v2972 = vmul.f32 %v2848, 2.0
    %v2973 = vmul.f32 %v2853, 2.0
    %v2974 = vmul.f32 %v2856, 2.0
    %v2975 = vmul.f32 %v2861, 2.0
    %v2976 = vmul.f32 %v2864, 2.0
    %v2977 = vmul.f32 %v2869, 2.0
    %v2978 = vmul.f32 %v2872, 2.0
    %v2979 = vmul.f32 %v2877, 2.0
    %v2980 = vmul.f32 %v2880, 2.0
    %v2981 = vmul.f32 %v2885, 2.0
    %v2982 = vmul.f32 %v2888, 2.0
    %v2983 = vmul.f32 %v2893, 2.0
    %v2984 = vmul.f32 %v2896, 2.0
    %v2985 = vmul.f32 %v2901, 2.0
    %v2986 = vmul.f32 %v2904, 2.0
    %v2987 = vmul.f32 %v2909, 2.0
    %v2988 = vmul.f32 %v2912, 2.0
    %v2989 = vmul.f32 %v2917, 2.0
    %v2990 = vmul.f32 %v2920, 2.0
    %v2991 = vmul.f32 %v2925, 2.0
    %v2992 = vmul.f32 %v2928, 2.0
    %v2993 = vmul.f32 %v2933, 2.0
    %v2994 = vmul.f32 %v2936, 2.0
    %v2995 = vmul.f32 %v2941, 2.0
    %v2996 = vmul.f32 %v2944, 2.0
    %v2997 = vmul.f32 %v2949, 2.0
    %v2998 = vmul.f32 %v2952, 2.0
    %v2999 = vmul.f32 %v2957, 2.0
    %v3000 = vmul.f32 %v2960, 2.0
    %v3001 = vmul.f32 %v2965, 2.0
    %v3002 = vmul.f32 %v2968, 2.0
    %v3003 = vsub.f32 %v2971, %v2456
    %v3004 = vsub.f32 %v2972, %v2457
    %v3005 = vsub.f32 %v2973, %v2458
    %v3006 = vsub.f32 %v2974, %v2459
    %v3007 = vsub.f32 %v2975, %v2460
    %v3008 = vsub.f32 %v2976, %v2461
    %v3009 = vsub.f32 %v2977, %v2462
    %v3010 = vsub.f32 %v2978, %v2463
    %v3011 = vsub.f32 %v2979, %v2464
    %v3012 = vsub.f32 %v2980, %v2465
    %v3013 = vsub.f32 %v2981, %v2466
    %v3014 = vsub.f32 %v2982, %v2467
    %v3015 = vsub.f32 %v2983, %v2468
    %v3016 = vsub.f32 %v2984, %v2469
    %v3017 = vsub.f32 %v2985, %v2470
    %v3018 = vsub.f32 %v2986, %v2471
    %v3019 = vsub.f32 %v2987, %v2472
    %v3020 = vsub.f32 %v2988, %v2473
    %v3021 = vsub.f32 %v2989, %v2474
    %v3022 = vsub.f32 %v2990, %v2475
    %v3023 = vsub.f32 %v2991, %v2476
    %v3024 = vsub.f32 %v2992, %v2477
    %v3025 = vsub.f32 %v2993, %v2478
    %v3026 = vsub.f32 %v2994, %v2479
    %v3027 = vsub.f32 %v2995, %v2480
    %v3028 = vsub.f32 %v2996, %v2481
    %v3029 = vsub.f32 %v2997, %v2482
    %v3030 = vsub.f32 %v2998, %v2483
    %v3031 = vsub.f32 %v2999, %v2484
    %v3032 = vsub.f32 %v3000, %v2485
    %v3033 = vsub.f32 %v3001, %v2486
    %v3034 = vsub.f32 %v3002, %v2487
    %v3035 = vpack.c.bf16 %v3004, %v3003
    %v3036 = vpack.c.bf16 %v3006, %v3005
    %v3037 = vpack.c.bf16 %v3008, %v3007
    %v3038 = vpack.c.bf16 %v3010, %v3009
    %v3039 = vpack.c.bf16 %v3012, %v3011
    %v3040 = vpack.c.bf16 %v3014, %v3013
    %v3041 = vpack.c.bf16 %v3016, %v3015
    %v3042 = vpack.c.bf16 %v3018, %v3017
    %v3043 = vpack.c.bf16 %v3020, %v3019
    %v3044 = vpack.c.bf16 %v3022, %v3021
    %v3045 = vpack.c.bf16 %v3024, %v3023
    %v3046 = vpack.c.bf16 %v3026, %v3025
    %v3047 = vpack.c.bf16 %v3028, %v3027
    %v3048 = vpack.c.bf16 %v3030, %v3029
    %v3049 = vpack.c.bf16 %v3032, %v3031
    %v3050 = vpack.c.bf16 %v3034, %v3033
    %3067 = vrot.lane.b32.xlu0 %v3035, 64
    %v3068 = vpop.permute.xlu0 %3067
    %3069 = vrot.lane.b32.xlu0 %v3036, 64
    %v3070 = vpop.permute.xlu0 %3069
    %3071 = vrot.lane.b32.xlu0 %v3037, 64
    %v3072 = vpop.permute.xlu0 %3071
    %3073 = vrot.lane.b32.xlu0 %v3038, 64
    %v3074 = vpop.permute.xlu0 %3073
    %3075 = vrot.lane.b32.xlu0 %v3039, 64
    %v3076 = vpop.permute.xlu0 %3075
    %3077 = vrot.lane.b32.xlu0 %v3040, 64
    %v3078 = vpop.permute.xlu0 %3077
    %3079 = vrot.lane.b32.xlu0 %v3041, 64
    %v3080 = vpop.permute.xlu0 %3079
    %3081 = vrot.lane.b32.xlu0 %v3042, 64
    %v3082 = vpop.permute.xlu0 %3081
    %3083 = vrot.lane.b32.xlu0 %v3043, 64
    %v3084 = vpop.permute.xlu0 %3083
    %3085 = vrot.lane.b32.xlu0 %v3044, 64
    %v3086 = vpop.permute.xlu0 %3085
    %3087 = vrot.lane.b32.xlu0 %v3045, 64
    %v3088 = vpop.permute.xlu0 %3087
    %3089 = vrot.lane.b32.xlu0 %v3046, 64
    %v3090 = vpop.permute.xlu0 %3089
    %3091 = vrot.lane.b32.xlu0 %v3047, 64
    %v3092 = vpop.permute.xlu0 %3091
    %3093 = vrot.lane.b32.xlu0 %v3048, 64
    %v3094 = vpop.permute.xlu0 %3093
    %3095 = vrot.lane.b32.xlu0 %v3049, 64
    %v3096 = vpop.permute.xlu0 %3095
    %3097 = vrot.lane.b32.xlu0 %v3050, 64
    %v3098 = vpop.permute.xlu0 %3097
    %vm3115 = vcmask 785920
    %3116 = vst.msk [vmem:[#allocation2] sm:$0xff] %vm3115, %v3068
    %3117 = vst.msk [vmem:[#allocation2 + $0x8] sm:$0xff] %vm3115, %v3070
    %3118 = vst.msk [vmem:[#allocation2 + $0x10] sm:$0xff] %vm3115, %v3072
    %3119 = vst.msk [vmem:[#allocation2 + $0x18] sm:$0xff] %vm3115, %v3074
    %3120 = vst.msk [vmem:[#allocation2 + $0x20] sm:$0xff] %vm3115, %v3076
    %3121 = vst.msk [vmem:[#allocation2 + $0x28] sm:$0xff] %vm3115, %v3078
    %3122 = vst.msk [vmem:[#allocation2 + $0x30] sm:$0xff] %vm3115, %v3080
    %3123 = vst.msk [vmem:[#allocation2 + $0x38] sm:$0xff] %vm3115, %v3082
    %3124 = vst.msk [vmem:[#allocation2 + $0x40] sm:$0xff] %vm3115, %v3084
    %3125 = vst.msk [vmem:[#allocation2 + $0x48] sm:$0xff] %vm3115, %v3086
    %3126 = vst.msk [vmem:[#allocation2 + $0x50] sm:$0xff] %vm3115, %v3088
    %3127 = vst.msk [vmem:[#allocation2 + $0x58] sm:$0xff] %vm3115, %v3090
    %3128 = vst.msk [vmem:[#allocation2 + $0x60] sm:$0xff] %vm3115, %v3092
    %3129 = vst.msk [vmem:[#allocation2 + $0x68] sm:$0xff] %vm3115, %v3094
    %3130 = vst.msk [vmem:[#allocation2 + $0x70] sm:$0xff] %vm3115, %v3096
    %3131 = vst.msk [vmem:[#allocation2 + $0x78] sm:$0xff] %vm3115, %v3098
    %v3132 = vpack.c.bf16 %v2489, %v2488
    %v3133 = vpack.c.bf16 %v2491, %v2490
    %v3134 = vpack.c.bf16 %v2493, %v2492
    %v3135 = vpack.c.bf16 %v2495, %v2494
    %v3136 = vpack.c.bf16 %v2497, %v2496
    %v3137 = vpack.c.bf16 %v2499, %v2498
    %v3138 = vpack.c.bf16 %v2501, %v2500
    %v3139 = vpack.c.bf16 %v2503, %v2502
    %v3140 = vpack.c.bf16 %v2505, %v2504
    %v3141 = vpack.c.bf16 %v2507, %v2506
    %v3142 = vpack.c.bf16 %v2509, %v2508
    %v3143 = vpack.c.bf16 %v2511, %v2510
    %v3144 = vpack.c.bf16 %v2513, %v2512
    %v3145 = vpack.c.bf16 %v2515, %v2514
    %v3146 = vpack.c.bf16 %v2517, %v2516
    %v3147 = vpack.c.bf16 %v2519, %v2518
    %3148 = vst.msk [vmem:[#allocation2 + $0x80] sm:$0xff] %vm1913, %v3132
    %3149 = vst.msk [vmem:[#allocation2 + $0x88] sm:$0xff] %vm1913, %v3133
    %3150 = vst.msk [vmem:[#allocation2 + $0x90] sm:$0xff] %vm1913, %v3134
    %3151 = vst.msk [vmem:[#allocation2 + $0x98] sm:$0xff] %vm1913, %v3135
    %3152 = vst.msk [vmem:[#allocation2 + $0xa0] sm:$0xff] %vm1913, %v3136
    %3153 = vst.msk [vmem:[#allocation2 + $0xa8] sm:$0xff] %vm1913, %v3137
    %3154 = vst.msk [vmem:[#allocation2 + $0xb0] sm:$0xff] %vm1913, %v3138
    %3155 = vst.msk [vmem:[#allocation2 + $0xb8] sm:$0xff] %vm1913, %v3139
    %3156 = vst.msk [vmem:[#allocation2 + $0xc0] sm:$0xff] %vm1913, %v3140
    %3157 = vst.msk [vmem:[#allocation2 + $0xc8] sm:$0xff] %vm1913, %v3141
    %3158 = vst.msk [vmem:[#allocation2 + $0xd0] sm:$0xff] %vm1913, %v3142
    %3159 = vst.msk [vmem:[#allocation2 + $0xd8] sm:$0xff] %vm1913, %v3143
    %3160 = vst.msk [vmem:[#allocation2 + $0xe0] sm:$0xff] %vm1913, %v3144
    %3161 = vst.msk [vmem:[#allocation2 + $0xe8] sm:$0xff] %vm1913, %v3145
    %3162 = vst.msk [vmem:[#allocation2 + $0xf0] sm:$0xff] %vm1913, %v3146
    %3163 = vst.msk [vmem:[#allocation2 + $0xf8] sm:$0xff] %vm1913, %v3147
    %3164 = vmatprep.subr.bf16.mxu0 0
    %3165 = vmatpush1.bf16.msra.mxu0 %v3132
    %3166 = vmatprep.subr.bf16.mxu0 0
    %3167 = vmatpush1.bf16.msra.mxu0 %v3133
    %3168 = vmatprep.subr.bf16.mxu0 0
    %3169 = vmatpush1.bf16.msra.mxu0 %v3134
    %3170 = vmatprep.subr.bf16.mxu0 0
    %3171 = vmatpush1.bf16.msra.mxu0 %v3135
    %3172 = vmatprep.subr.bf16.mxu0 0
    %3173 = vmatpush1.bf16.msra.mxu0 %v3136
    %3174 = vmatprep.subr.bf16.mxu0 0
    %3175 = vmatpush1.bf16.msra.mxu0 %v3137
    %3176 = vmatprep.subr.bf16.mxu0 0
    %3177 = vmatpush1.bf16.msra.mxu0 %v3138
    %3178 = vmatprep.subr.bf16.mxu0 0
    %3179 = vmatpush1.bf16.msra.mxu0 %v3139
    %3180 = vmatprep.subr.bf16.mxu0 0
    %3181 = vmatpush1.bf16.msra.mxu0 %v3140
    %3182 = vmatprep.subr.bf16.mxu0 0
    %3183 = vmatpush1.bf16.msra.mxu0 %v3141
    %3184 = vmatprep.subr.bf16.mxu0 0
    %3185 = vmatpush1.bf16.msra.mxu0 %v3142
    %3186 = vmatprep.subr.bf16.mxu0 0
    %3187 = vmatpush1.bf16.msra.mxu0 %v3143
    %3188 = vmatprep.subr.bf16.mxu0 0
    %3189 = vmatpush1.bf16.msra.mxu0 %v3144
    %3190 = vmatprep.subr.bf16.mxu0 0
    %3191 = vmatpush1.bf16.msra.mxu0 %v3145
    %3192 = vmatprep.subr.bf16.mxu0 0
    %3193 = vmatpush1.bf16.msra.mxu0 %v3146
    %3194 = vmatprep.subr.bf16.mxu0 0
    %3195 = vmatpush1.bf16.msra.mxu0 %v3147
    %3196 = vmatprep.mubr.bf16.mxu0 %v249
    %3197 = vmatmul.mubr.bf16.gmra.mrb[0].mxu0 %v248
    %v3198 = vpop.f32.mrb[0].mxu0
    %v3199 = vadd.f32 0.0, %v3198
    %v3200 = vpop.f32.mrb[0].mxu0
    %v3201 = vpop.f32.mrb[0].mxu0
    %v3202 = vadd.f32 0.0, %v3201
    %v3203 = vpop.f32.mrb[0].mxu0
    %3204 = vmatprep.mubr.bf16.mxu0 %v251
    %3205 = vmatmul.mubr.bf16.gmra.mrb[0].mxu0 %v250
    %v3206 = vpop.f32.mrb[0].mxu0
    %v3207 = vadd.f32 0.0, %v3206
    %v3208 = vpop.f32.mrb[0].mxu0
    %v3209 = vpop.f32.mrb[0].mxu0
    %v3210 = vadd.f32 0.0, %v3209
    %v3211 = vpop.f32.mrb[0].mxu0
    %3212 = vmatprep.mubr.bf16.mxu0 %v253
    %3213 = vmatmul.mubr.bf16.gmra.mrb[0].mxu0 %v252
    %v3214 = vpop.f32.mrb[0].mxu0
    %v3215 = vadd.f32 0.0, %v3214
    %v3216 = vpop.f32.mrb[0].mxu0
    %v3217 = vpop.f32.mrb[0].mxu0
    %v3218 = vadd.f32 0.0, %v3217
    %v3219 = vpop.f32.mrb[0].mxu0
    %3220 = vmatprep.mubr.bf16.mxu0 %v255
    %3221 = vmatmul.mubr.bf16.gmra.mrb[0].mxu0 %v254
    %v3222 = vpop.f32.mrb[0].mxu0
    %v3223 = vadd.f32 0.0, %v3222
    %v3224 = vpop.f32.mrb[0].mxu0
    %v3225 = vpop.f32.mrb[0].mxu0
    %v3226 = vadd.f32 0.0, %v3225
    %v3227 = vpop.f32.mrb[0].mxu0
    %3228 = vmatprep.mubr.bf16.mxu0 %v257
    %3229 = vmatmul.mubr.bf16.gmra.mrb[0].mxu0 %v256
    %v3230 = vpop.f32.mrb[0].mxu0
    %v3231 = vadd.f32 0.0, %v3230
    %v3232 = vpop.f32.mrb[0].mxu0
    %v3233 = vpop.f32.mrb[0].mxu0
    %v3234 = vadd.f32 0.0, %v3233
    %v3235 = vpop.f32.mrb[0].mxu0
    %3236 = vmatprep.mubr.bf16.mxu0 %v259
    %3237 = vmatmul.mubr.bf16.gmra.mrb[0].mxu0 %v258
    %v3238 = vpop.f32.mrb[0].mxu0
    %v3239 = vadd.f32 0.0, %v3238
    %v3240 = vpop.f32.mrb[0].mxu0
    %v3241 = vpop.f32.mrb[0].mxu0
    %v3242 = vadd.f32 0.0, %v3241
    %v3243 = vpop.f32.mrb[0].mxu0
    %3244 = vmatprep.mubr.bf16.mxu0 %v261
    %3245 = vmatmul.mubr.bf16.gmra.mrb[0].mxu0 %v260
    %v3246 = vpop.f32.mrb[0].mxu0
    %v3247 = vadd.f32 0.0, %v3246
    %v3248 = vpop.f32.mrb[0].mxu0
    %v3249 = vpop.f32.mrb[0].mxu0
    %v3250 = vadd.f32 0.0, %v3249
    %v3251 = vpop.f32.mrb[0].mxu0
    %3252 = vmatprep.mubr.bf16.mxu0 %v263
    %3253 = vmatmul.mubr.bf16.gmra.mrb[0].mxu0 %v262
    %v3254 = vpop.f32.mrb[0].mxu0
    %v3255 = vadd.f32 0.0, %v3254
    %v3256 = vpop.f32.mrb[0].mxu0
    %v3257 = vpop.f32.mrb[0].mxu0
    %v3258 = vadd.f32 0.0, %v3257
    %v3259 = vpop.f32.mrb[0].mxu0
    %3260 = vmatprep.mubr.bf16.mxu0 %v265
    %3261 = vmatmul.mubr.bf16.gmra.mrb[0].mxu0 %v264
    %v3262 = vpop.f32.mrb[0].mxu0
    %v3263 = vadd.f32 0.0, %v3262
    %v3264 = vpop.f32.mrb[0].mxu0
    %v3265 = vpop.f32.mrb[0].mxu0
    %v3266 = vadd.f32 0.0, %v3265
    %v3267 = vpop.f32.mrb[0].mxu0
    %3268 = vmatprep.mubr.bf16.mxu0 %v267
    %3269 = vmatmul.mubr.bf16.gmra.mrb[0].mxu0 %v266
    %v3270 = vpop.f32.mrb[0].mxu0
    %v3271 = vadd.f32 0.0, %v3270
    %v3272 = vpop.f32.mrb[0].mxu0
    %v3273 = vpop.f32.mrb[0].mxu0
    %v3274 = vadd.f32 0.0, %v3273
    %v3275 = vpop.f32.mrb[0].mxu0
    %3276 = vmatprep.mubr.bf16.mxu0 %v269
    %3277 = vmatmul.mubr.bf16.gmra.mrb[0].mxu0 %v268
    %v3278 = vpop.f32.mrb[0].mxu0
    %v3279 = vadd.f32 0.0, %v3278
    %v3280 = vpop.f32.mrb[0].mxu0
    %v3281 = vpop.f32.mrb[0].mxu0
    %v3282 = vadd.f32 0.0, %v3281
    %v3283 = vpop.f32.mrb[0].mxu0
    %3284 = vmatprep.mubr.bf16.mxu0 %v271
    %3285 = vmatmul.mubr.bf16.gmra.mrb[0].mxu0 %v270
    %v3286 = vpop.f32.mrb[0].mxu0
    %v3287 = vadd.f32 0.0, %v3286
    %v3288 = vpop.f32.mrb[0].mxu0
    %v3289 = vpop.f32.mrb[0].mxu0
    %v3290 = vadd.f32 0.0, %v3289
    %v3291 = vpop.f32.mrb[0].mxu0
    %3292 = vmatprep.mubr.bf16.mxu0 %v273
    %3293 = vmatmul.mubr.bf16.gmra.mrb[0].mxu0 %v272
    %v3294 = vpop.f32.mrb[0].mxu0
    %v3295 = vadd.f32 0.0, %v3294
    %v3296 = vpop.f32.mrb[0].mxu0
    %v3297 = vpop.f32.mrb[0].mxu0
    %v3298 = vadd.f32 0.0, %v3297
    %v3299 = vpop.f32.mrb[0].mxu0
    %3300 = vmatprep.mubr.bf16.mxu0 %v275
    %3301 = vmatmul.mubr.bf16.gmra.mrb[0].mxu0 %v274
    %v3302 = vpop.f32.mrb[0].mxu0
    %v3303 = vadd.f32 0.0, %v3302
    %v3304 = vpop.f32.mrb[0].mxu0
    %v3305 = vpop.f32.mrb[0].mxu0
    %v3306 = vadd.f32 0.0, %v3305
    %v3307 = vpop.f32.mrb[0].mxu0
    %3308 = vmatprep.mubr.bf16.mxu0 %v277
    %3309 = vmatmul.mubr.bf16.gmra.mrb[0].mxu0 %v276
    %v3310 = vpop.f32.mrb[0].mxu0
    %v3311 = vadd.f32 0.0, %v3310
    %v3312 = vpop.f32.mrb[0].mxu0
    %v3313 = vpop.f32.mrb[0].mxu0
    %v3314 = vadd.f32 0.0, %v3313
    %v3315 = vpop.f32.mrb[0].mxu0
    %3316 = vmatprep.mubr.bf16.mxu0 %v279
    %3317 = vmatmul.mubr.bf16.gmra.mrb[0].mxu0 %v278
    %v3318 = vpop.f32.mrb[0].mxu0
    %v3319 = vadd.f32 0.0, %v3318
    %v3320 = vpop.f32.mrb[0].mxu0
    %v3321 = vpop.f32.mrb[0].mxu0
    %v3322 = vadd.f32 0.0, %v3321
    %v3323 = vpop.f32.mrb[0].mxu0
    %3324 = vdwg.mxu0
    %v3325 = vpack.c.bf16 %v3202, %v3199
    %v3326 = vpack.c.bf16 %v3210, %v3207
    %v3327 = vpack.c.bf16 %v3218, %v3215
    %v3328 = vpack.c.bf16 %v3226, %v3223
    %v3329 = vpack.c.bf16 %v3234, %v3231
    %v3330 = vpack.c.bf16 %v3242, %v3239
    %v3331 = vpack.c.bf16 %v3250, %v3247
    %v3332 = vpack.c.bf16 %v3258, %v3255
    %v3333 = vpack.c.bf16 %v3266, %v3263
    %v3334 = vpack.c.bf16 %v3274, %v3271
    %v3335 = vpack.c.bf16 %v3282, %v3279
    %v3336 = vpack.c.bf16 %v3290, %v3287
    %v3337 = vpack.c.bf16 %v3298, %v3295
    %v3338 = vpack.c.bf16 %v3306, %v3303
    %v3339 = vpack.c.bf16 %v3314, %v3311
    %v3340 = vpack.c.bf16 %v3322, %v3319
    %3357 = vrot.lane.b32.xlu0 %v3325, 32
    %v3358 = vpop.permute.xlu0 %3357
    %3359 = vrot.lane.b32.xlu0 %v3326, 32
    %v3360 = vpop.permute.xlu0 %3359
    %3361 = vrot.lane.b32.xlu0 %v3327, 32
    %v3362 = vpop.permute.xlu0 %3361
    %3363 = vrot.lane.b32.xlu0 %v3328, 32
    %v3364 = vpop.permute.xlu0 %3363
    %3365 = vrot.lane.b32.xlu0 %v3329, 32
    %v3366 = vpop.permute.xlu0 %3365
    %3367 = vrot.lane.b32.xlu0 %v3330, 32
    %v3368 = vpop.permute.xlu0 %3367
    %3369 = vrot.lane.b32.xlu0 %v3331, 32
    %v3370 = vpop.permute.xlu0 %3369
    %3371 = vrot.lane.b32.xlu0 %v3332, 32
    %v3372 = vpop.permute.xlu0 %3371
    %3373 = vrot.lane.b32.xlu0 %v3333, 32
    %v3374 = vpop.permute.xlu0 %3373
    %3375 = vrot.lane.b32.xlu0 %v3334, 32
    %v3376 = vpop.permute.xlu0 %3375
    %3377 = vrot.lane.b32.xlu0 %v3335, 32
    %v3378 = vpop.permute.xlu0 %3377
    %3379 = vrot.lane.b32.xlu0 %v3336, 32
    %v3380 = vpop.permute.xlu0 %3379
    %3381 = vrot.lane.b32.xlu0 %v3337, 32
    %v3382 = vpop.permute.xlu0 %3381
    %3383 = vrot.lane.b32.xlu0 %v3338, 32
    %v3384 = vpop.permute.xlu0 %3383
    %3385 = vrot.lane.b32.xlu0 %v3339, 32
    %v3386 = vpop.permute.xlu0 %3385
    %3387 = vrot.lane.b32.xlu0 %v3340, 32
    %v3388 = vpop.permute.xlu0 %3387
    %3405 = vst.msk [vmem:[#allocation2 + $0x80] sm:$0xff] %vm2793, %v3358
    %3406 = vst.msk [vmem:[#allocation2 + $0x88] sm:$0xff] %vm2793, %v3360
    %3407 = vst.msk [vmem:[#allocation2 + $0x90] sm:$0xff] %vm2793, %v3362
    %3408 = vst.msk [vmem:[#allocation2 + $0x98] sm:$0xff] %vm2793, %v3364
    %3409 = vst.msk [vmem:[#allocation2 + $0xa0] sm:$0xff] %vm2793, %v3366
    %3410 = vst.msk [vmem:[#allocation2 + $0xa8] sm:$0xff] %vm2793, %v3368
    %3411 = vst.msk [vmem:[#allocation2 + $0xb0] sm:$0xff] %vm2793, %v3370
    %3412 = vst.msk [vmem:[#allocation2 + $0xb8] sm:$0xff] %vm2793, %v3372
    %3413 = vst.msk [vmem:[#allocation2 + $0xc0] sm:$0xff] %vm2793, %v3374
    %3414 = vst.msk [vmem:[#allocation2 + $0xc8] sm:$0xff] %vm2793, %v3376
    %3415 = vst.msk [vmem:[#allocation2 + $0xd0] sm:$0xff] %vm2793, %v3378
    %3416 = vst.msk [vmem:[#allocation2 + $0xd8] sm:$0xff] %vm2793, %v3380
    %3417 = vst.msk [vmem:[#allocation2 + $0xe0] sm:$0xff] %vm2793, %v3382
    %3418 = vst.msk [vmem:[#allocation2 + $0xe8] sm:$0xff] %vm2793, %v3384
    %3419 = vst.msk [vmem:[#allocation2 + $0xf0] sm:$0xff] %vm2793, %v3386
    %3420 = vst.msk [vmem:[#allocation2 + $0xf8] sm:$0xff] %vm2793, %v3388
    %3421 = vmatprep.subr.bf16.mxu0 0
    %3422 = vmatpush1.bf16.msra.mxu0 %v3325
    %3423 = vmatprep.subr.bf16.mxu0 0
    %3424 = vmatpush1.bf16.msra.mxu0 %v3326
    %3425 = vmatprep.subr.bf16.mxu0 0
    %3426 = vmatpush1.bf16.msra.mxu0 %v3327
    %3427 = vmatprep.subr.bf16.mxu0 0
    %3428 = vmatpush1.bf16.msra.mxu0 %v3328
    %3429 = vmatprep.subr.bf16.mxu0 0
    %3430 = vmatpush1.bf16.msra.mxu0 %v3329
    %3431 = vmatprep.subr.bf16.mxu0 0
    %3432 = vmatpush1.bf16.msra.mxu0 %v3330
    %3433 = vmatprep.subr.bf16.mxu0 0
    %3434 = vmatpush1.bf16.msra.mxu0 %v3331
    %3435 = vmatprep.subr.bf16.mxu0 0
    %3436 = vmatpush1.bf16.msra.mxu0 %v3332
    %3437 = vmatprep.subr.bf16.mxu0 0
    %3438 = vmatpush1.bf16.msra.mxu0 %v3333
    %3439 = vmatprep.subr.bf16.mxu0 0
    %3440 = vmatpush1.bf16.msra.mxu0 %v3334
    %3441 = vmatprep.subr.bf16.mxu0 0
    %3442 = vmatpush1.bf16.msra.mxu0 %v3335
    %3443 = vmatprep.subr.bf16.mxu0 0
    %3444 = vmatpush1.bf16.msra.mxu0 %v3336
    %3445 = vmatprep.subr.bf16.mxu0 0
    %3446 = vmatpush1.bf16.msra.mxu0 %v3337
    %3447 = vmatprep.subr.bf16.mxu0 0
    %3448 = vmatpush1.bf16.msra.mxu0 %v3338
    %3449 = vmatprep.subr.bf16.mxu0 0
    %3450 = vmatpush1.bf16.msra.mxu0 %v3339
    %3451 = vmatprep.subr.bf16.mxu0 0
    %3452 = vmatpush1.bf16.msra.mxu0 %v3340
    %3453 = vmatprep.mubr.bf16.mxu0 %v249
    %3454 = vmatmul.mubr.bf16.gmra.mrb[0].mxu0 %v248
    %v3455 = vpop.f32.mrb[0].mxu0
    %v3456 = vadd.f32 0.0, %v3455
    %v3457 = vpop.f32.mrb[0].mxu0
    %v3458 = vpop.f32.mrb[0].mxu0
    %v3459 = vadd.f32 0.0, %v3458
    %v3460 = vpop.f32.mrb[0].mxu0
    %3461 = vmatprep.mubr.bf16.mxu0 %v251
    %3462 = vmatmul.mubr.bf16.gmra.mrb[0].mxu0 %v250
    %v3463 = vpop.f32.mrb[0].mxu0
    %v3464 = vadd.f32 0.0, %v3463
    %v3465 = vpop.f32.mrb[0].mxu0
    %v3466 = vpop.f32.mrb[0].mxu0
    %v3467 = vadd.f32 0.0, %v3466
    %v3468 = vpop.f32.mrb[0].mxu0
    %3469 = vmatprep.mubr.bf16.mxu0 %v253
    %3470 = vmatmul.mubr.bf16.gmra.mrb[0].mxu0 %v252
    %v3471 = vpop.f32.mrb[0].mxu0
    %v3472 = vadd.f32 0.0, %v3471
    %v3473 = vpop.f32.mrb[0].mxu0
    %v3474 = vpop.f32.mrb[0].mxu0
    %v3475 = vadd.f32 0.0, %v3474
    %v3476 = vpop.f32.mrb[0].mxu0
    %3477 = vmatprep.mubr.bf16.mxu0 %v255
    %3478 = vmatmul.mubr.bf16.gmra.mrb[0].mxu0 %v254
    %v3479 = vpop.f32.mrb[0].mxu0
    %v3480 = vadd.f32 0.0, %v3479
    %v3481 = vpop.f32.mrb[0].mxu0
    %v3482 = vpop.f32.mrb[0].mxu0
    %v3483 = vadd.f32 0.0, %v3482
    %v3484 = vpop.f32.mrb[0].mxu0
    %3485 = vmatprep.mubr.bf16.mxu0 %v257
    %3486 = vmatmul.mubr.bf16.gmra.mrb[0].mxu0 %v256
    %v3487 = vpop.f32.mrb[0].mxu0
    %v3488 = vadd.f32 0.0, %v3487
    %v3489 = vpop.f32.mrb[0].mxu0
    %v3490 = vpop.f32.mrb[0].mxu0
    %v3491 = vadd.f32 0.0, %v3490
    %v3492 = vpop.f32.mrb[0].mxu0
    %3493 = vmatprep.mubr.bf16.mxu0 %v259
    %3494 = vmatmul.mubr.bf16.gmra.mrb[0].mxu0 %v258
    %v3495 = vpop.f32.mrb[0].mxu0
    %v3496 = vadd.f32 0.0, %v3495
    %v3497 = vpop.f32.mrb[0].mxu0
    %v3498 = vpop.f32.mrb[0].mxu0
    %v3499 = vadd.f32 0.0, %v3498
    %v3500 = vpop.f32.mrb[0].mxu0
    %3501 = vmatprep.mubr.bf16.mxu0 %v261
    %3502 = vmatmul.mubr.bf16.gmra.mrb[0].mxu0 %v260
    %v3503 = vpop.f32.mrb[0].mxu0
    %v3504 = vadd.f32 0.0, %v3503
    %v3505 = vpop.f32.mrb[0].mxu0
    %v3506 = vpop.f32.mrb[0].mxu0
    %v3507 = vadd.f32 0.0, %v3506
    %v3508 = vpop.f32.mrb[0].mxu0
    %3509 = vmatprep.mubr.bf16.mxu0 %v263
    %3510 = vmatmul.mubr.bf16.gmra.mrb[0].mxu0 %v262
    %v3511 = vpop.f32.mrb[0].mxu0
    %v3512 = vadd.f32 0.0, %v3511
    %v3513 = vpop.f32.mrb[0].mxu0
    %v3514 = vpop.f32.mrb[0].mxu0
    %v3515 = vadd.f32 0.0, %v3514
    %v3516 = vpop.f32.mrb[0].mxu0
    %3517 = vmatprep.mubr.bf16.mxu0 %v265
    %3518 = vmatmul.mubr.bf16.gmra.mrb[0].mxu0 %v264
    %v3519 = vpop.f32.mrb[0].mxu0
    %v3520 = vadd.f32 0.0, %v3519
    %v3521 = vpop.f32.mrb[0].mxu0
    %v3522 = vpop.f32.mrb[0].mxu0
    %v3523 = vadd.f32 0.0, %v3522
    %v3524 = vpop.f32.mrb[0].mxu0
    %3525 = vmatprep.mubr.bf16.mxu0 %v267
    %3526 = vmatmul.mubr.bf16.gmra.mrb[0].mxu0 %v266
    %v3527 = vpop.f32.mrb[0].mxu0
    %v3528 = vadd.f32 0.0, %v3527
    %v3529 = vpop.f32.mrb[0].mxu0
    %v3530 = vpop.f32.mrb[0].mxu0
    %v3531 = vadd.f32 0.0, %v3530
    %v3532 = vpop.f32.mrb[0].mxu0
    %3533 = vmatprep.mubr.bf16.mxu0 %v269
    %3534 = vmatmul.mubr.bf16.gmra.mrb[0].mxu0 %v268
    %v3535 = vpop.f32.mrb[0].mxu0
    %v3536 = vadd.f32 0.0, %v3535
    %v3537 = vpop.f32.mrb[0].mxu0
    %v3538 = vpop.f32.mrb[0].mxu0
    %v3539 = vadd.f32 0.0, %v3538
    %v3540 = vpop.f32.mrb[0].mxu0
    %3541 = vmatprep.mubr.bf16.mxu0 %v271
    %3542 = vmatmul.mubr.bf16.gmra.mrb[0].mxu0 %v270
    %v3543 = vpop.f32.mrb[0].mxu0
    %v3544 = vadd.f32 0.0, %v3543
    %v3545 = vpop.f32.mrb[0].mxu0
    %v3546 = vpop.f32.mrb[0].mxu0
    %v3547 = vadd.f32 0.0, %v3546
    %v3548 = vpop.f32.mrb[0].mxu0
    %3549 = vmatprep.mubr.bf16.mxu0 %v273
    %3550 = vmatmul.mubr.bf16.gmra.mrb[0].mxu0 %v272
    %v3551 = vpop.f32.mrb[0].mxu0
    %v3552 = vadd.f32 0.0, %v3551
    %v3553 = vpop.f32.mrb[0].mxu0
    %v3554 = vpop.f32.mrb[0].mxu0
    %v3555 = vadd.f32 0.0, %v3554
    %v3556 = vpop.f32.mrb[0].mxu0
    %3557 = vmatprep.mubr.bf16.mxu0 %v275
    %3558 = vmatmul.mubr.bf16.gmra.mrb[0].mxu0 %v274
    %v3559 = vpop.f32.mrb[0].mxu0
    %v3560 = vadd.f32 0.0, %v3559
    %v3561 = vpop.f32.mrb[0].mxu0
    %v3562 = vpop.f32.mrb[0].mxu0
    %v3563 = vadd.f32 0.0, %v3562
    %v3564 = vpop.f32.mrb[0].mxu0
    %3565 = vmatprep.mubr.bf16.mxu0 %v277
    %3566 = vmatmul.mubr.bf16.gmra.mrb[0].mxu0 %v276
    %v3567 = vpop.f32.mrb[0].mxu0
    %v3568 = vadd.f32 0.0, %v3567
    %v3569 = vpop.f32.mrb[0].mxu0
    %v3570 = vpop.f32.mrb[0].mxu0
    %v3571 = vadd.f32 0.0, %v3570
    %v3572 = vpop.f32.mrb[0].mxu0
    %3573 = vmatprep.mubr.bf16.mxu0 %v279
    %3574 = vmatmul.mubr.bf16.gmra.mrb[0].mxu0 %v278
    %v3575 = vpop.f32.mrb[0].mxu0
    %v3576 = vadd.f32 0.0, %v3575
    %v3577 = vpop.f32.mrb[0].mxu0
    %v3578 = vpop.f32.mrb[0].mxu0
    %v3579 = vadd.f32 0.0, %v3578
    %v3580 = vpop.f32.mrb[0].mxu0
    %3581 = vdwg.mxu0
    %v3582 = vmul.f32 %v3456, 2.0
    %v3583 = vmul.f32 %v3459, 2.0
    %v3584 = vmul.f32 %v3464, 2.0
    %v3585 = vmul.f32 %v3467, 2.0
    %v3586 = vmul.f32 %v3472, 2.0
    %v3587 = vmul.f32 %v3475, 2.0
    %v3588 = vmul.f32 %v3480, 2.0
    %v3589 = vmul.f32 %v3483, 2.0
    %v3590 = vmul.f32 %v3488, 2.0
    %v3591 = vmul.f32 %v3491, 2.0
    %v3592 = vmul.f32 %v3496, 2.0
    %v3593 = vmul.f32 %v3499, 2.0
    %v3594 = vmul.f32 %v3504, 2.0
    %v3595 = vmul.f32 %v3507, 2.0
    %v3596 = vmul.f32 %v3512, 2.0
    %v3597 = vmul.f32 %v3515, 2.0
    %v3598 = vmul.f32 %v3520, 2.0
    %v3599 = vmul.f32 %v3523, 2.0
    %v3600 = vmul.f32 %v3528, 2.0
    %v3601 = vmul.f32 %v3531, 2.0
    %v3602 = vmul.f32 %v3536, 2.0
    %v3603 = vmul.f32 %v3539, 2.0
    %v3604 = vmul.f32 %v3544, 2.0
    %v3605 = vmul.f32 %v3547, 2.0
    %v3606 = vmul.f32 %v3552, 2.0
    %v3607 = vmul.f32 %v3555, 2.0
    %v3608 = vmul.f32 %v3560, 2.0
    %v3609 = vmul.f32 %v3563, 2.0
    %v3610 = vmul.f32 %v3568, 2.0
    %v3611 = vmul.f32 %v3571, 2.0
    %v3612 = vmul.f32 %v3576, 2.0
    %v3613 = vmul.f32 %v3579, 2.0
    %v3614 = vsub.f32 %v3582, %v2488
    %v3615 = vsub.f32 %v3583, %v2489
    %v3616 = vsub.f32 %v3584, %v2490
    %v3617 = vsub.f32 %v3585, %v2491
    %v3618 = vsub.f32 %v3586, %v2492
    %v3619 = vsub.f32 %v3587, %v2493
    %v3620 = vsub.f32 %v3588, %v2494
    %v3621 = vsub.f32 %v3589, %v2495
    %v3622 = vsub.f32 %v3590, %v2496
    %v3623 = vsub.f32 %v3591, %v2497
    %v3624 = vsub.f32 %v3592, %v2498
    %v3625 = vsub.f32 %v3593, %v2499
    %v3626 = vsub.f32 %v3594, %v2500
    %v3627 = vsub.f32 %v3595, %v2501
    %v3628 = vsub.f32 %v3596, %v2502
    %v3629 = vsub.f32 %v3597, %v2503
    %v3630 = vsub.f32 %v3598, %v2504
    %v3631 = vsub.f32 %v3599, %v2505
    %v3632 = vsub.f32 %v3600, %v2506
    %v3633 = vsub.f32 %v3601, %v2507
    %v3634 = vsub.f32 %v3602, %v2508
    %v3635 = vsub.f32 %v3603, %v2509
    %v3636 = vsub.f32 %v3604, %v2510
    %v3637 = vsub.f32 %v3605, %v2511
    %v3638 = vsub.f32 %v3606, %v2512
    %v3639 = vsub.f32 %v3607, %v2513
    %v3640 = vsub.f32 %v3608, %v2514
    %v3641 = vsub.f32 %v3609, %v2515
    %v3642 = vsub.f32 %v3610, %v2516
    %v3643 = vsub.f32 %v3611, %v2517
    %v3644 = vsub.f32 %v3612, %v2518
    %v3645 = vsub.f32 %v3613, %v2519
    %v3646 = vpack.c.bf16 %v3615, %v3614
    %v3647 = vpack.c.bf16 %v3617, %v3616
    %v3648 = vpack.c.bf16 %v3619, %v3618
    %v3649 = vpack.c.bf16 %v3621, %v3620
    %v3650 = vpack.c.bf16 %v3623, %v3622
    %v3651 = vpack.c.bf16 %v3625, %v3624
    %v3652 = vpack.c.bf16 %v3627, %v3626
    %v3653 = vpack.c.bf16 %v3629, %v3628
    %v3654 = vpack.c.bf16 %v3631, %v3630
    %v3655 = vpack.c.bf16 %v3633, %v3632
    %v3656 = vpack.c.bf16 %v3635, %v3634
    %v3657 = vpack.c.bf16 %v3637, %v3636
    %v3658 = vpack.c.bf16 %v3639, %v3638
    %v3659 = vpack.c.bf16 %v3641, %v3640
    %v3660 = vpack.c.bf16 %v3643, %v3642
    %v3661 = vpack.c.bf16 %v3645, %v3644
    %3678 = vrot.lane.b32.xlu0 %v3646, 64
    %v3679 = vpop.permute.xlu0 %3678
    %3680 = vrot.lane.b32.xlu0 %v3647, 64
    %v3681 = vpop.permute.xlu0 %3680
    %3682 = vrot.lane.b32.xlu0 %v3648, 64
    %v3683 = vpop.permute.xlu0 %3682
    %3684 = vrot.lane.b32.xlu0 %v3649, 64
    %v3685 = vpop.permute.xlu0 %3684
    %3686 = vrot.lane.b32.xlu0 %v3650, 64
    %v3687 = vpop.permute.xlu0 %3686
    %3688 = vrot.lane.b32.xlu0 %v3651, 64
    %v3689 = vpop.permute.xlu0 %3688
    %3690 = vrot.lane.b32.xlu0 %v3652, 64
    %v3691 = vpop.permute.xlu0 %3690
    %3692 = vrot.lane.b32.xlu0 %v3653, 64
    %v3693 = vpop.permute.xlu0 %3692
    %3694 = vrot.lane.b32.xlu0 %v3654, 64
    %v3695 = vpop.permute.xlu0 %3694
    %3696 = vrot.lane.b32.xlu0 %v3655, 64
    %v3697 = vpop.permute.xlu0 %3696
    %3698 = vrot.lane.b32.xlu0 %v3656, 64
    %v3699 = vpop.permute.xlu0 %3698
    %3700 = vrot.lane.b32.xlu0 %v3657, 64
    %v3701 = vpop.permute.xlu0 %3700
    %3702 = vrot.lane.b32.xlu0 %v3658, 64
    %v3703 = vpop.permute.xlu0 %3702
    %3704 = vrot.lane.b32.xlu0 %v3659, 64
    %v3705 = vpop.permute.xlu0 %3704
    %3706 = vrot.lane.b32.xlu0 %v3660, 64
    %v3707 = vpop.permute.xlu0 %3706
    %3708 = vrot.lane.b32.xlu0 %v3661, 64
    %v3709 = vpop.permute.xlu0 %3708
    %3726 = vst.msk [vmem:[#allocation2 + $0x80] sm:$0xff] %vm3115, %v3679
    %3727 = vst.msk [vmem:[#allocation2 + $0x88] sm:$0xff] %vm3115, %v3681
    %3728 = vst.msk [vmem:[#allocation2 + $0x90] sm:$0xff] %vm3115, %v3683
    %3729 = vst.msk [vmem:[#allocation2 + $0x98] sm:$0xff] %vm3115, %v3685
    %3730 = vst.msk [vmem:[#allocation2 + $0xa0] sm:$0xff] %vm3115, %v3687
    %3731 = vst.msk [vmem:[#allocation2 + $0xa8] sm:$0xff] %vm3115, %v3689
    %3732 = vst.msk [vmem:[#allocation2 + $0xb0] sm:$0xff] %vm3115, %v3691
    %3733 = vst.msk [vmem:[#allocation2 + $0xb8] sm:$0xff] %vm3115, %v3693
    %3734 = vst.msk [vmem:[#allocation2 + $0xc0] sm:$0xff] %vm3115, %v3695
    %3735 = vst.msk [vmem:[#allocation2 + $0xc8] sm:$0xff] %vm3115, %v3697
    %3736 = vst.msk [vmem:[#allocation2 + $0xd0] sm:$0xff] %vm3115, %v3699
    %3737 = vst.msk [vmem:[#allocation2 + $0xd8] sm:$0xff] %vm3115, %v3701
    %3738 = vst.msk [vmem:[#allocation2 + $0xe0] sm:$0xff] %vm3115, %v3703
    %3739 = vst.msk [vmem:[#allocation2 + $0xe8] sm:$0xff] %vm3115, %v3705
    %3740 = vst.msk [vmem:[#allocation2 + $0xf0] sm:$0xff] %vm3115, %v3707
    %3741 = vst.msk [vmem:[#allocation2 + $0xf8] sm:$0xff] %vm3115, %v3709
    %v3742 = vld [vmem:[#allocation2] sm:$0xff]
    %v3743 = vld [vmem:[#allocation2 + $0x8] sm:$0xff]
    %v3744 = vld [vmem:[#allocation2 + $0x10] sm:$0xff]
    %v3745 = vld [vmem:[#allocation2 + $0x18] sm:$0xff]
    %v3746 = vld [vmem:[#allocation2 + $0x20] sm:$0xff]
    %v3747 = vld [vmem:[#allocation2 + $0x28] sm:$0xff]
    %v3748 = vld [vmem:[#allocation2 + $0x30] sm:$0xff]
    %v3749 = vld [vmem:[#allocation2 + $0x38] sm:$0xff]
    %v3750 = vld [vmem:[#allocation2 + $0x40] sm:$0xff]
    %v3751 = vld [vmem:[#allocation2 + $0x48] sm:$0xff]
    %v3752 = vld [vmem:[#allocation2 + $0x50] sm:$0xff]
    %v3753 = vld [vmem:[#allocation2 + $0x58] sm:$0xff]
    %v3754 = vld [vmem:[#allocation2 + $0x60] sm:$0xff]
    %v3755 = vld [vmem:[#allocation2 + $0x68] sm:$0xff]
    %v3756 = vld [vmem:[#allocation2 + $0x70] sm:$0xff]
    %v3757 = vld [vmem:[#allocation2 + $0x78] sm:$0xff]
    %v3758 = vld [vmem:[#allocation2 + $0x80] sm:$0xff]
    %v3759 = vld [vmem:[#allocation2 + $0x88] sm:$0xff]
    %v3760 = vld [vmem:[#allocation2 + $0x90] sm:$0xff]
    %v3761 = vld [vmem:[#allocation2 + $0x98] sm:$0xff]
    %v3762 = vld [vmem:[#allocation2 + $0xa0] sm:$0xff]
    %v3763 = vld [vmem:[#allocation2 + $0xa8] sm:$0xff]
    %v3764 = vld [vmem:[#allocation2 + $0xb0] sm:$0xff]
    %v3765 = vld [vmem:[#allocation2 + $0xb8] sm:$0xff]
    %v3766 = vld [vmem:[#allocation2 + $0xc0] sm:$0xff]
    %v3767 = vld [vmem:[#allocation2 + $0xc8] sm:$0xff]
    %v3768 = vld [vmem:[#allocation2 + $0xd0] sm:$0xff]
    %v3769 = vld [vmem:[#allocation2 + $0xd8] sm:$0xff]
    %v3770 = vld [vmem:[#allocation2 + $0xe0] sm:$0xff]
    %v3771 = vld [vmem:[#allocation2 + $0xe8] sm:$0xff]
    %v3772 = vld [vmem:[#allocation2 + $0xf0] sm:$0xff]
    %v3773 = vld [vmem:[#allocation2 + $0xf8] sm:$0xff]
    %v3774 = vld [vmem:[%s8] sm:$0xf]
    %v3775 = vld [vmem:[%s8 + $0x4] sm:$0xf]
    %v3776 = vld [vmem:[%s8 + $0x8] sm:$0xf]
    %v3777 = vld [vmem:[%s8 + $0xc] sm:$0xf]
    %v3778 = vld [vmem:[%s8 + $0x10] sm:$0xf]
    %v3779 = vld [vmem:[%s8 + $0x14] sm:$0xf]
    %v3780 = vld [vmem:[%s8 + $0x18] sm:$0xf]
    %v3781 = vld [vmem:[%s8 + $0x1c] sm:$0xf]
    %v3782 = vld [vmem:[%s8 + $0x20] sm:$0xf]
    %v3783 = vld [vmem:[%s8 + $0x24] sm:$0xf]
    %v3784 = vld [vmem:[%s8 + $0x28] sm:$0xf]
    %v3785 = vld [vmem:[%s8 + $0x2c] sm:$0xf]
    %v3798 = vunpack.c.l.b16 %v3774
    %v3799 = vunpack.c.l.b16 %v3775
    %v3800 = vunpack.c.l.b16 %v3776
    %v3801 = vunpack.c.l.b16 %v3777
    %v3802 = vunpack.c.l.b16 %v3778
    %v3803 = vunpack.c.l.b16 %v3779
    %v3804 = vunpack.c.l.b16 %v3780
    %v3805 = vunpack.c.l.b16 %v3781
    %v3806 = vunpack.c.l.b16 %v3782
    %v3807 = vunpack.c.l.b16 %v3783
    %v3808 = vunpack.c.l.b16 %v3784
    %v3809 = vunpack.c.l.b16 %v3785
    %v3810 = vpack.c.b16 %v3799, %v3798
    %v3811 = vpack.c.b16 %v3801, %v3800
    %v3812 = vpack.c.b16 %v3803, %v3802
    %v3813 = vpack.c.b16 %v3805, %v3804
    %v3814 = vpack.c.b16 %v3807, %v3806
    %v3815 = vpack.c.b16 %v3809, %v3808
    %vm3822 = vcmask 785408
    %v3824 = vsel %vm3822, %v3742, 0
    %v3827 = vsel %vm3822, %v3743, 0
    %v3830 = vsel %vm3822, %v3744, 0
    %v3833 = vsel %vm3822, %v3745, 0
    %v3836 = vsel %vm3822, %v3746, 0
    %v3839 = vsel %vm3822, %v3747, 0
    %v3842 = vsel %vm3822, %v3748, 0
    %v3845 = vsel %vm3822, %v3749, 0
    %v3848 = vsel %vm3822, %v3750, 0
    %v3851 = vsel %vm3822, %v3751, 0
    %v3854 = vsel %vm3822, %v3752, 0
    %v3857 = vsel %vm3822, %v3753, 0
    %v3860 = vsel %vm3822, %v3754, 0
    %v3863 = vsel %vm3822, %v3755, 0
    %v3866 = vsel %vm3822, %v3756, 0
    %v3869 = vsel %vm3822, %v3757, 0
    %v3872 = vsel %vm3822, %v3758, 0
    %v3875 = vsel %vm3822, %v3759, 0
    %v3878 = vsel %vm3822, %v3760, 0
    %v3881 = vsel %vm3822, %v3761, 0
    %v3884 = vsel %vm3822, %v3762, 0
    %v3887 = vsel %vm3822, %v3763, 0
    %v3890 = vsel %vm3822, %v3764, 0
    %v3893 = vsel %vm3822, %v3765, 0
    %v3896 = vsel %vm3822, %v3766, 0
    %v3899 = vsel %vm3822, %v3767, 0
    %v3902 = vsel %vm3822, %v3768, 0
    %v3905 = vsel %vm3822, %v3769, 0
    %v3908 = vsel %vm3822, %v3770, 0
    %v3911 = vsel %vm3822, %v3771, 0
    %v3914 = vsel %vm3822, %v3772, 0
    %v3917 = vsel %vm3822, %v3773, 0
    %3919 = vmatprep.subr.bf16.mxu0 0
    %3920 = vmatpush1.bf16.msra.mxu0 %v3810
    %3921 = vmatprep.subr.bf16.mxu0 0
    %3922 = vmatpush1.bf16.msra.mxu0 %v3811
    %3923 = vmatprep.subr.bf16.mxu0 0
    %3924 = vmatpush1.bf16.msra.mxu0 %v3812
    %3925 = vmatprep.subr.bf16.mxu0 0
    %3926 = vmatpush1.bf16.msra.mxu0 %v3813
    %3927 = vmatprep.subr.bf16.mxu0 0
    %3928 = vmatpush1.bf16.msra.mxu0 %v3814
    %3929 = vmatprep.subr.bf16.mxu0 0
    %3930 = vmatpush1.bf16.msra.mxu0 %v3815
    %3931 = vmatprep.subr.bf16.mxu0 0
    %3932 = vmatpush1.bf16.msra.mxu0 0
    %3933 = vmatprep.subr.bf16.mxu0 0
    %3934 = vmatpush1.bf16.msra.mxu0 0
    %3935 = vmatprep.subr.bf16.mxu0 0
    %3936 = vmatpush1.bf16.msra.mxu0 0
    %3937 = vmatprep.subr.bf16.mxu0 0
    %3938 = vmatpush1.bf16.msra.mxu0 0
    %3939 = vmatprep.subr.bf16.mxu0 0
    %3940 = vmatpush1.bf16.msra.mxu0 0
    %3941 = vmatprep.subr.bf16.mxu0 0
    %3942 = vmatpush1.bf16.msra.mxu0 0
    %3943 = vmatprep.subr.bf16.mxu0 0
    %3944 = vmatpush1.bf16.msra.mxu0 0
    %3945 = vmatprep.subr.bf16.mxu0 0
    %3946 = vmatpush1.bf16.msra.mxu0 0
    %3947 = vmatprep.subr.bf16.mxu0 0
    %3948 = vmatpush1.bf16.msra.mxu0 0
    %3949 = vmatprep.subr.bf16.mxu0 0
    %3950 = vmatpush1.bf16.msra.mxu0 0
    %3951 = vmatprep.mubr.bf16.mxu0 0
    %3952 = vmatmul.mubr.bf16.gmra.mrb[0].mxu0 %v3824
    %v3953 = vpop.f32.mrb[0].mxu0
    %v3954 = vadd.f32 0.0, %v3953
    %v3955 = vpop.f32.mrb[0].mxu0
    %v3956 = vpop.f32.mrb[0].mxu0
    %v3957 = vadd.f32 0.0, %v3956
    %v3958 = vpop.f32.mrb[0].mxu0
    %3959 = vmatprep.mubr.bf16.mxu0 0
    %3960 = vmatmul.mubr.bf16.gmra.mrb[0].mxu0 %v3827
    %v3961 = vpop.f32.mrb[0].mxu0
    %v3962 = vadd.f32 0.0, %v3961
    %v3963 = vpop.f32.mrb[0].mxu0
    %v3964 = vpop.f32.mrb[0].mxu0
    %v3965 = vadd.f32 0.0, %v3964
    %v3966 = vpop.f32.mrb[0].mxu0
    %3967 = vmatprep.mubr.bf16.mxu0 0
    %3968 = vmatmul.mubr.bf16.gmra.mrb[0].mxu0 %v3830
    %v3969 = vpop.f32.mrb[0].mxu0
    %v3970 = vadd.f32 0.0, %v3969
    %v3971 = vpop.f32.mrb[0].mxu0
    %v3972 = vpop.f32.mrb[0].mxu0
    %v3973 = vadd.f32 0.0, %v3972
    %v3974 = vpop.f32.mrb[0].mxu0
    %3975 = vmatprep.mubr.bf16.mxu0 0
    %3976 = vmatmul.mubr.bf16.gmra.mrb[0].mxu0 %v3833
    %v3977 = vpop.f32.mrb[0].mxu0
    %v3978 = vadd.f32 0.0, %v3977
    %v3979 = vpop.f32.mrb[0].mxu0
    %v3980 = vpop.f32.mrb[0].mxu0
    %v3981 = vadd.f32 0.0, %v3980
    %v3982 = vpop.f32.mrb[0].mxu0
    %3983 = vmatprep.mubr.bf16.mxu0 0
    %3984 = vmatmul.mubr.bf16.gmra.mrb[0].mxu0 %v3836
    %v3985 = vpop.f32.mrb[0].mxu0
    %v3986 = vadd.f32 0.0, %v3985
    %v3987 = vpop.f32.mrb[0].mxu0
    %v3988 = vpop.f32.mrb[0].mxu0
    %v3989 = vadd.f32 0.0, %v3988
    %v3990 = vpop.f32.mrb[0].mxu0
    %3991 = vmatprep.mubr.bf16.mxu0 0
    %3992 = vmatmul.mubr.bf16.gmra.mrb[0].mxu0 %v3839
    %v3993 = vpop.f32.mrb[0].mxu0
    %v3994 = vadd.f32 0.0, %v3993
    %v3995 = vpop.f32.mrb[0].mxu0
    %v3996 = vpop.f32.mrb[0].mxu0
    %v3997 = vadd.f32 0.0, %v3996
    %v3998 = vpop.f32.mrb[0].mxu0
    %3999 = vmatprep.mubr.bf16.mxu0 0
    %4000 = vmatmul.mubr.bf16.gmra.mrb[0].mxu0 %v3842
    %v4001 = vpop.f32.mrb[0].mxu0
    %v4002 = vadd.f32 0.0, %v4001
    %v4003 = vpop.f32.mrb[0].mxu0
    %v4004 = vpop.f32.mrb[0].mxu0
    %v4005 = vadd.f32 0.0, %v4004
    %v4006 = vpop.f32.mrb[0].mxu0
    %4007 = vmatprep.mubr.bf16.mxu0 0
    %4008 = vmatmul.mubr.bf16.gmra.mrb[0].mxu0 %v3845
    %v4009 = vpop.f32.mrb[0].mxu0
    %v4010 = vadd.f32 0.0, %v4009
    %v4011 = vpop.f32.mrb[0].mxu0
    %v4012 = vpop.f32.mrb[0].mxu0
    %v4013 = vadd.f32 0.0, %v4012
    %v4014 = vpop.f32.mrb[0].mxu0
    %4015 = vmatprep.mubr.bf16.mxu0 0
    %4016 = vmatmul.mubr.bf16.gmra.mrb[0].mxu0 %v3848
    %v4017 = vpop.f32.mrb[0].mxu0
    %v4018 = vadd.f32 0.0, %v4017
    %v4019 = vpop.f32.mrb[0].mxu0
    %v4020 = vpop.f32.mrb[0].mxu0
    %v4021 = vadd.f32 0.0, %v4020
    %v4022 = vpop.f32.mrb[0].mxu0
    %4023 = vmatprep.mubr.bf16.mxu0 0
    %4024 = vmatmul.mubr.bf16.gmra.mrb[0].mxu0 %v3851
    %v4025 = vpop.f32.mrb[0].mxu0
    %v4026 = vadd.f32 0.0, %v4025
    %v4027 = vpop.f32.mrb[0].mxu0
    %v4028 = vpop.f32.mrb[0].mxu0
    %v4029 = vadd.f32 0.0, %v4028
    %v4030 = vpop.f32.mrb[0].mxu0
    %4031 = vmatprep.mubr.bf16.mxu0 0
    %4032 = vmatmul.mubr.bf16.gmra.mrb[0].mxu0 %v3854
    %v4033 = vpop.f32.mrb[0].mxu0
    %v4034 = vadd.f32 0.0, %v4033
    %v4035 = vpop.f32.mrb[0].mxu0
    %v4036 = vpop.f32.mrb[0].mxu0
    %v4037 = vadd.f32 0.0, %v4036
    %v4038 = vpop.f32.mrb[0].mxu0
    %4039 = vmatprep.mubr.bf16.mxu0 0
    %4040 = vmatmul.mubr.bf16.gmra.mrb[0].mxu0 %v3857
    %v4041 = vpop.f32.mrb[0].mxu0
    %v4042 = vadd.f32 0.0, %v4041
    %v4043 = vpop.f32.mrb[0].mxu0
    %v4044 = vpop.f32.mrb[0].mxu0
    %v4045 = vadd.f32 0.0, %v4044
    %v4046 = vpop.f32.mrb[0].mxu0
    %4047 = vmatprep.mubr.bf16.mxu0 0
    %4048 = vmatmul.mubr.bf16.gmra.mrb[0].mxu0 %v3860
    %v4049 = vpop.f32.mrb[0].mxu0
    %v4050 = vadd.f32 0.0, %v4049
    %v4051 = vpop.f32.mrb[0].mxu0
    %v4052 = vpop.f32.mrb[0].mxu0
    %v4053 = vadd.f32 0.0, %v4052
    %v4054 = vpop.f32.mrb[0].mxu0
    %4055 = vmatprep.mubr.bf16.mxu0 0
    %4056 = vmatmul.mubr.bf16.gmra.mrb[0].mxu0 %v3863
    %v4057 = vpop.f32.mrb[0].mxu0
    %v4058 = vadd.f32 0.0, %v4057
    %v4059 = vpop.f32.mrb[0].mxu0
    %v4060 = vpop.f32.mrb[0].mxu0
    %v4061 = vadd.f32 0.0, %v4060
    %v4062 = vpop.f32.mrb[0].mxu0
    %4063 = vmatprep.mubr.bf16.mxu0 0
    %4064 = vmatmul.mubr.bf16.gmra.mrb[0].mxu0 %v3866
    %v4065 = vpop.f32.mrb[0].mxu0
    %v4066 = vadd.f32 0.0, %v4065
    %v4067 = vpop.f32.mrb[0].mxu0
    %v4068 = vpop.f32.mrb[0].mxu0
    %v4069 = vadd.f32 0.0, %v4068
    %v4070 = vpop.f32.mrb[0].mxu0
    %4071 = vmatprep.mubr.bf16.mxu0 0
    %4072 = vmatmul.mubr.bf16.gmra.mrb[0].mxu0 %v3869
    %v4073 = vpop.f32.mrb[0].mxu0
    %v4074 = vadd.f32 0.0, %v4073
    %v4075 = vpop.f32.mrb[0].mxu0
    %v4076 = vpop.f32.mrb[0].mxu0
    %v4077 = vadd.f32 0.0, %v4076
    %v4078 = vpop.f32.mrb[0].mxu0
    %4079 = vmatprep.mubr.bf16.mxu0 0
    %4080 = vmatmul.mubr.bf16.gmra.mrb[0].mxu0 %v3872
    %v4081 = vpop.f32.mrb[0].mxu0
    %v4082 = vadd.f32 0.0, %v4081
    %v4083 = vpop.f32.mrb[0].mxu0
    %v4084 = vpop.f32.mrb[0].mxu0
    %v4085 = vadd.f32 0.0, %v4084
    %v4086 = vpop.f32.mrb[0].mxu0
    %4087 = vmatprep.mubr.bf16.mxu0 0
    %4088 = vmatmul.mubr.bf16.gmra.mrb[0].mxu0 %v3875
    %v4089 = vpop.f32.mrb[0].mxu0
    %v4090 = vadd.f32 0.0, %v4089
    %v4091 = vpop.f32.mrb[0].mxu0
    %v4092 = vpop.f32.mrb[0].mxu0
    %v4093 = vadd.f32 0.0, %v4092
    %v4094 = vpop.f32.mrb[0].mxu0
    %4095 = vmatprep.mubr.bf16.mxu0 0
    %4096 = vmatmul.mubr.bf16.gmra.mrb[0].mxu0 %v3878
    %v4097 = vpop.f32.mrb[0].mxu0
    %v4098 = vadd.f32 0.0, %v4097
    %v4099 = vpop.f32.mrb[0].mxu0
    %v4100 = vpop.f32.mrb[0].mxu0
    %v4101 = vadd.f32 0.0, %v4100
    %v4102 = vpop.f32.mrb[0].mxu0
    %4103 = vmatprep.mubr.bf16.mxu0 0
    %4104 = vmatmul.mubr.bf16.gmra.mrb[0].mxu0 %v3881
    %v4105 = vpop.f32.mrb[0].mxu0
    %v4106 = vadd.f32 0.0, %v4105
    %v4107 = vpop.f32.mrb[0].mxu0
    %v4108 = vpop.f32.mrb[0].mxu0
    %v4109 = vadd.f32 0.0, %v4108
    %v4110 = vpop.f32.mrb[0].mxu0
    %4111 = vmatprep.mubr.bf16.mxu0 0
    %4112 = vmatmul.mubr.bf16.gmra.mrb[0].mxu0 %v3884
    %v4113 = vpop.f32.mrb[0].mxu0
    %v4114 = vadd.f32 0.0, %v4113
    %v4115 = vpop.f32.mrb[0].mxu0
    %v4116 = vpop.f32.mrb[0].mxu0
    %v4117 = vadd.f32 0.0, %v4116
    %v4118 = vpop.f32.mrb[0].mxu0
    %4119 = vmatprep.mubr.bf16.mxu0 0
    %4120 = vmatmul.mubr.bf16.gmra.mrb[0].mxu0 %v3887
    %v4121 = vpop.f32.mrb[0].mxu0
    %v4122 = vadd.f32 0.0, %v4121
    %v4123 = vpop.f32.mrb[0].mxu0
    %v4124 = vpop.f32.mrb[0].mxu0
    %v4125 = vadd.f32 0.0, %v4124
    %v4126 = vpop.f32.mrb[0].mxu0
    %4127 = vmatprep.mubr.bf16.mxu0 0
    %4128 = vmatmul.mubr.bf16.gmra.mrb[0].mxu0 %v3890
    %v4129 = vpop.f32.mrb[0].mxu0
    %v4130 = vadd.f32 0.0, %v4129
    %v4131 = vpop.f32.mrb[0].mxu0
    %v4132 = vpop.f32.mrb[0].mxu0
    %v4133 = vadd.f32 0.0, %v4132
    %v4134 = vpop.f32.mrb[0].mxu0
    %4135 = vmatprep.mubr.bf16.mxu0 0
    %4136 = vmatmul.mubr.bf16.gmra.mrb[0].mxu0 %v3893
    %v4137 = vpop.f32.mrb[0].mxu0
    %v4138 = vadd.f32 0.0, %v4137
    %v4139 = vpop.f32.mrb[0].mxu0
    %v4140 = vpop.f32.mrb[0].mxu0
    %v4141 = vadd.f32 0.0, %v4140
    %v4142 = vpop.f32.mrb[0].mxu0
    %4143 = vmatprep.mubr.bf16.mxu0 0
    %4144 = vmatmul.mubr.bf16.gmra.mrb[0].mxu0 %v3896
    %v4145 = vpop.f32.mrb[0].mxu0
    %v4146 = vadd.f32 0.0, %v4145
    %v4147 = vpop.f32.mrb[0].mxu0
    %v4148 = vpop.f32.mrb[0].mxu0
    %v4149 = vadd.f32 0.0, %v4148
    %v4150 = vpop.f32.mrb[0].mxu0
    %4151 = vmatprep.mubr.bf16.mxu0 0
    %4152 = vmatmul.mubr.bf16.gmra.mrb[0].mxu0 %v3899
    %v4153 = vpop.f32.mrb[0].mxu0
    %v4154 = vadd.f32 0.0, %v4153
    %v4155 = vpop.f32.mrb[0].mxu0
    %v4156 = vpop.f32.mrb[0].mxu0
    %v4157 = vadd.f32 0.0, %v4156
    %v4158 = vpop.f32.mrb[0].mxu0
    %4159 = vmatprep.mubr.bf16.mxu0 0
    %4160 = vmatmul.mubr.bf16.gmra.mrb[0].mxu0 %v3902
    %v4161 = vpop.f32.mrb[0].mxu0
    %v4162 = vadd.f32 0.0, %v4161
    %v4163 = vpop.f32.mrb[0].mxu0
    %v4164 = vpop.f32.mrb[0].mxu0
    %v4165 = vadd.f32 0.0, %v4164
    %v4166 = vpop.f32.mrb[0].mxu0
    %4167 = vmatprep.mubr.bf16.mxu0 0
    %4168 = vmatmul.mubr.bf16.gmra.mrb[0].mxu0 %v3905
    %v4169 = vpop.f32.mrb[0].mxu0
    %v4170 = vadd.f32 0.0, %v4169
    %v4171 = vpop.f32.mrb[0].mxu0
    %v4172 = vpop.f32.mrb[0].mxu0
    %v4173 = vadd.f32 0.0, %v4172
    %v4174 = vpop.f32.mrb[0].mxu0
    %4175 = vmatprep.mubr.bf16.mxu0 0
    %4176 = vmatmul.mubr.bf16.gmra.mrb[0].mxu0 %v3908
    %v4177 = vpop.f32.mrb[0].mxu0
    %v4178 = vadd.f32 0.0, %v4177
    %v4179 = vpop.f32.mrb[0].mxu0
    %v4180 = vpop.f32.mrb[0].mxu0
    %v4181 = vadd.f32 0.0, %v4180
    %v4182 = vpop.f32.mrb[0].mxu0
    %4183 = vmatprep.mubr.bf16.mxu0 0
    %4184 = vmatmul.mubr.bf16.gmra.mrb[0].mxu0 %v3911
    %v4185 = vpop.f32.mrb[0].mxu0
    %v4186 = vadd.f32 0.0, %v4185
    %v4187 = vpop.f32.mrb[0].mxu0
    %v4188 = vpop.f32.mrb[0].mxu0
    %v4189 = vadd.f32 0.0, %v4188
    %v4190 = vpop.f32.mrb[0].mxu0
    %4191 = vmatprep.mubr.bf16.mxu0 0
    %4192 = vmatmul.mubr.bf16.gmra.mrb[0].mxu0 %v3914
    %v4193 = vpop.f32.mrb[0].mxu0
    %v4194 = vadd.f32 0.0, %v4193
    %v4195 = vpop.f32.mrb[0].mxu0
    %v4196 = vpop.f32.mrb[0].mxu0
    %v4197 = vadd.f32 0.0, %v4196
    %v4198 = vpop.f32.mrb[0].mxu0
    %4199 = vmatprep.mubr.bf16.mxu0 0
    %4200 = vmatmul.mubr.bf16.gmra.mrb[0].mxu0 %v3917
    %v4201 = vpop.f32.mrb[0].mxu0
    %v4202 = vadd.f32 0.0, %v4201
    %v4203 = vpop.f32.mrb[0].mxu0
    %v4204 = vpop.f32.mrb[0].mxu0
    %v4205 = vadd.f32 0.0, %v4204
    %v4206 = vpop.f32.mrb[0].mxu0
    %4207 = vdwg.mxu0
    %v4208 = vld [vmem:[%s9] sm:$0x1]
    %v4209 = vld [vmem:[%s10] sm:$0x1]
    %vm4210 = vcmask 523264
    %v4211 = vsel %vm4210, %v3954, 0.0
    %v4212 = vsel %vm4210, %v3957, 0.0
    %v4213 = vadd.f32 %v4211, %v4212
    %v4214 = vsel %vm4210, %v3962, 0.0
    %v4215 = vadd.f32 %v4213, %v4214
    %v4216 = vsel %vm4210, %v3965, 0.0
    %v4217 = vadd.f32 %v4215, %v4216
    %v4218 = vsel %vm4210, %v3970, 0.0
    %v4219 = vadd.f32 %v4217, %v4218
    %v4220 = vsel %vm4210, %v3973, 0.0
    %v4221 = vadd.f32 %v4219, %v4220
    %v4222 = vsel %vm4210, %v3978, 0.0
    %v4223 = vadd.f32 %v4221, %v4222
    %v4224 = vsel %vm4210, %v3981, 0.0
    %v4225 = vadd.f32 %v4223, %v4224
    %v4226 = vsel %vm4210, %v3986, 0.0
    %v4227 = vadd.f32 %v4225, %v4226
    %v4228 = vsel %vm4210, %v3989, 0.0
    %v4229 = vadd.f32 %v4227, %v4228
    %v4230 = vsel %vm4210, %v3994, 0.0
    %v4231 = vadd.f32 %v4229, %v4230
    %v4232 = vsel %vm4210, %v3997, 0.0
    %v4233 = vadd.f32 %v4231, %v4232
    %v4234 = vsel %vm4210, %v4002, 0.0
    %v4235 = vadd.f32 %v4233, %v4234
    %v4236 = vsel %vm4210, %v4005, 0.0
    %v4237 = vadd.f32 %v4235, %v4236
    %v4238 = vsel %vm4210, %v4010, 0.0
    %v4239 = vadd.f32 %v4237, %v4238
    %v4240 = vsel %vm4210, %v4013, 0.0
    %v4241 = vadd.f32 %v4239, %v4240
    %v4242 = vsel %vm4210, %v4018, 0.0
    %v4243 = vadd.f32 %v4241, %v4242
    %v4244 = vsel %vm4210, %v4021, 0.0
    %v4245 = vadd.f32 %v4243, %v4244
    %v4246 = vsel %vm4210, %v4026, 0.0
    %v4247 = vadd.f32 %v4245, %v4246
    %v4248 = vsel %vm4210, %v4029, 0.0
    %v4249 = vadd.f32 %v4247, %v4248
    %v4250 = vsel %vm4210, %v4034, 0.0
    %v4251 = vadd.f32 %v4249, %v4250
    %v4252 = vsel %vm4210, %v4037, 0.0
    %v4253 = vadd.f32 %v4251, %v4252
    %v4254 = vsel %vm4210, %v4042, 0.0
    %v4255 = vadd.f32 %v4253, %v4254
    %v4256 = vsel %vm4210, %v4045, 0.0
    %v4257 = vadd.f32 %v4255, %v4256
    %v4258 = vsel %vm4210, %v4050, 0.0
    %v4259 = vadd.f32 %v4257, %v4258
    %v4260 = vsel %vm4210, %v4053, 0.0
    %v4261 = vadd.f32 %v4259, %v4260
    %v4262 = vsel %vm4210, %v4058, 0.0
    %v4263 = vadd.f32 %v4261, %v4262
    %v4264 = vsel %vm4210, %v4061, 0.0
    %v4265 = vadd.f32 %v4263, %v4264
    %v4266 = vsel %vm4210, %v4066, 0.0
    %v4267 = vadd.f32 %v4265, %v4266
    %v4268 = vsel %vm4210, %v4069, 0.0
    %v4269 = vadd.f32 %v4267, %v4268
    %v4270 = vsel %vm4210, %v4074, 0.0
    %v4271 = vadd.f32 %v4269, %v4270
    %v4272 = vsel %vm4210, %v4077, 0.0
    %v4273 = vadd.f32 %v4271, %v4272
    %v4274 = vsel %vm4210, %v4082, 0.0
    %v4275 = vadd.f32 %v4273, %v4274
    %v4276 = vsel %vm4210, %v4085, 0.0
    %v4277 = vadd.f32 %v4275, %v4276
    %v4278 = vsel %vm4210, %v4090, 0.0
    %v4279 = vadd.f32 %v4277, %v4278
    %v4280 = vsel %vm4210, %v4093, 0.0
    %v4281 = vadd.f32 %v4279, %v4280
    %v4282 = vsel %vm4210, %v4098, 0.0
    %v4283 = vadd.f32 %v4281, %v4282
    %v4284 = vsel %vm4210, %v4101, 0.0
    %v4285 = vadd.f32 %v4283, %v4284
    %v4286 = vsel %vm4210, %v4106, 0.0
    %v4287 = vadd.f32 %v4285, %v4286
    %v4288 = vsel %vm4210, %v4109, 0.0
    %v4289 = vadd.f32 %v4287, %v4288
    %v4290 = vsel %vm4210, %v4114, 0.0
    %v4291 = vadd.f32 %v4289, %v4290
    %v4292 = vsel %vm4210, %v4117, 0.0
    %v4293 = vadd.f32 %v4291, %v4292
    %v4294 = vsel %vm4210, %v4122, 0.0
    %v4295 = vadd.f32 %v4293, %v4294
    %v4296 = vsel %vm4210, %v4125, 0.0
    %v4297 = vadd.f32 %v4295, %v4296
    %v4298 = vsel %vm4210, %v4130, 0.0
    %v4299 = vadd.f32 %v4297, %v4298
    %v4300 = vsel %vm4210, %v4133, 0.0
    %v4301 = vadd.f32 %v4299, %v4300
    %v4302 = vsel %vm4210, %v4138, 0.0
    %v4303 = vadd.f32 %v4301, %v4302
    %v4304 = vsel %vm4210, %v4141, 0.0
    %v4305 = vadd.f32 %v4303, %v4304
    %v4306 = vsel %vm4210, %v4146, 0.0
    %v4307 = vadd.f32 %v4305, %v4306
    %v4308 = vsel %vm4210, %v4149, 0.0
    %v4309 = vadd.f32 %v4307, %v4308
    %v4310 = vsel %vm4210, %v4154, 0.0
    %v4311 = vadd.f32 %v4309, %v4310
    %v4312 = vsel %vm4210, %v4157, 0.0
    %v4313 = vadd.f32 %v4311, %v4312
    %v4314 = vsel %vm4210, %v4162, 0.0
    %v4315 = vadd.f32 %v4313, %v4314
    %v4316 = vsel %vm4210, %v4165, 0.0
    %v4317 = vadd.f32 %v4315, %v4316
    %v4318 = vsel %vm4210, %v4170, 0.0
    %v4319 = vadd.f32 %v4317, %v4318
    %v4320 = vsel %vm4210, %v4173, 0.0
    %v4321 = vadd.f32 %v4319, %v4320
    %v4322 = vsel %vm4210, %v4178, 0.0
    %v4323 = vadd.f32 %v4321, %v4322
    %v4324 = vsel %vm4210, %v4181, 0.0
    %v4325 = vadd.f32 %v4323, %v4324
    %v4326 = vsel %vm4210, %v4186, 0.0
    %v4327 = vadd.f32 %v4325, %v4326
    %v4328 = vsel %vm4210, %v4189, 0.0
    %v4329 = vadd.f32 %v4327, %v4328
    %v4330 = vsel %vm4210, %v4194, 0.0
    %v4331 = vadd.f32 %v4329, %v4330
    %v4332 = vsel %vm4210, %v4197, 0.0
    %v4333 = vadd.f32 %v4331, %v4332
    %v4334 = vsel %vm4210, %v4202, 0.0
    %v4335 = vadd.f32 %v4333, %v4334
    %v4336 = vsel %vm4210, %v4205, 0.0
    %v4337 = vadd.f32 %v4335, %v4336
    %v4338 = vrot.slane %v4337, 4
    %v4339 = vadd.f32 %v4337, %v4338
    %v4340 = vrot.slane %v4339, 2
    %v4341 = vadd.f32 %v4339, %v4340
    %v4342 = vrot.slane %v4341, 1
    %v4343 = vadd.f32 %v4341, %v4342
    %v4344 = vmul.f32 %v4343, %v2047
    %v4345 = vsub.f32 %v3954, %v4344
    %v4346 = vsub.f32 %v3957, %v4344
    %v4347 = vsub.f32 %v3962, %v4344
    %v4348 = vsub.f32 %v3965, %v4344
    %v4349 = vsub.f32 %v3970, %v4344
    %v4350 = vsub.f32 %v3973, %v4344
    %v4351 = vsub.f32 %v3978, %v4344
    %v4352 = vsub.f32 %v3981, %v4344
    %v4353 = vsub.f32 %v3986, %v4344
    %v4354 = vsub.f32 %v3989, %v4344
    %v4355 = vsub.f32 %v3994, %v4344
    %v4356 = vsub.f32 %v3997, %v4344
    %v4357 = vsub.f32 %v4002, %v4344
    %v4358 = vsub.f32 %v4005, %v4344
    %v4359 = vsub.f32 %v4010, %v4344
    %v4360 = vsub.f32 %v4013, %v4344
    %v4361 = vsub.f32 %v4018, %v4344
    %v4362 = vsub.f32 %v4021, %v4344
    %v4363 = vsub.f32 %v4026, %v4344
    %v4364 = vsub.f32 %v4029, %v4344
    %v4365 = vsub.f32 %v4034, %v4344
    %v4366 = vsub.f32 %v4037, %v4344
    %v4367 = vsub.f32 %v4042, %v4344
    %v4368 = vsub.f32 %v4045, %v4344
    %v4369 = vsub.f32 %v4050, %v4344
    %v4370 = vsub.f32 %v4053, %v4344
    %v4371 = vsub.f32 %v4058, %v4344
    %v4372 = vsub.f32 %v4061, %v4344
    %v4373 = vsub.f32 %v4066, %v4344
    %v4374 = vsub.f32 %v4069, %v4344
    %v4375 = vsub.f32 %v4074, %v4344
    %v4376 = vsub.f32 %v4077, %v4344
    %v4377 = vsub.f32 %v4082, %v4344
    %v4378 = vsub.f32 %v4085, %v4344
    %v4379 = vsub.f32 %v4090, %v4344
    %v4380 = vsub.f32 %v4093, %v4344
    %v4381 = vsub.f32 %v4098, %v4344
    %v4382 = vsub.f32 %v4101, %v4344
    %v4383 = vsub.f32 %v4106, %v4344
    %v4384 = vsub.f32 %v4109, %v4344
    %v4385 = vsub.f32 %v4114, %v4344
    %v4386 = vsub.f32 %v4117, %v4344
    %v4387 = vsub.f32 %v4122, %v4344
    %v4388 = vsub.f32 %v4125, %v4344
    %v4389 = vsub.f32 %v4130, %v4344
    %v4390 = vsub.f32 %v4133, %v4344
    %v4391 = vsub.f32 %v4138, %v4344
    %v4392 = vsub.f32 %v4141, %v4344
    %v4393 = vsub.f32 %v4146, %v4344
    %v4394 = vsub.f32 %v4149, %v4344
    %v4395 = vsub.f32 %v4154, %v4344
    %v4396 = vsub.f32 %v4157, %v4344
    %v4397 = vsub.f32 %v4162, %v4344
    %v4398 = vsub.f32 %v4165, %v4344
    %v4399 = vsub.f32 %v4170, %v4344
    %v4400 = vsub.f32 %v4173, %v4344
    %v4401 = vsub.f32 %v4178, %v4344
    %v4402 = vsub.f32 %v4181, %v4344
    %v4403 = vsub.f32 %v4186, %v4344
    %v4404 = vsub.f32 %v4189, %v4344
    %v4405 = vsub.f32 %v4194, %v4344
    %v4406 = vsub.f32 %v4197, %v4344
    %v4407 = vsub.f32 %v4202, %v4344
    %v4408 = vsub.f32 %v4205, %v4344
    %v4409 = vmul.f32 %v4345, %v4345
    %v4410 = vmul.f32 %v4346, %v4346
    %v4411 = vmul.f32 %v4347, %v4347
    %v4412 = vmul.f32 %v4348, %v4348
    %v4413 = vmul.f32 %v4349, %v4349
    %v4414 = vmul.f32 %v4350, %v4350
    %v4415 = vmul.f32 %v4351, %v4351
    %v4416 = vmul.f32 %v4352, %v4352
    %v4417 = vmul.f32 %v4353, %v4353
    %v4418 = vmul.f32 %v4354, %v4354
    %v4419 = vmul.f32 %v4355, %v4355
    %v4420 = vmul.f32 %v4356, %v4356
    %v4421 = vmul.f32 %v4357, %v4357
    %v4422 = vmul.f32 %v4358, %v4358
    %v4423 = vmul.f32 %v4359, %v4359
    %v4424 = vmul.f32 %v4360, %v4360
    %v4425 = vmul.f32 %v4361, %v4361
    %v4426 = vmul.f32 %v4362, %v4362
    %v4427 = vmul.f32 %v4363, %v4363
    %v4428 = vmul.f32 %v4364, %v4364
    %v4429 = vmul.f32 %v4365, %v4365
    %v4430 = vmul.f32 %v4366, %v4366
    %v4431 = vmul.f32 %v4367, %v4367
    %v4432 = vmul.f32 %v4368, %v4368
    %v4433 = vmul.f32 %v4369, %v4369
    %v4434 = vmul.f32 %v4370, %v4370
    %v4435 = vmul.f32 %v4371, %v4371
    %v4436 = vmul.f32 %v4372, %v4372
    %v4437 = vmul.f32 %v4373, %v4373
    %v4438 = vmul.f32 %v4374, %v4374
    %v4439 = vmul.f32 %v4375, %v4375
    %v4440 = vmul.f32 %v4376, %v4376
    %v4441 = vmul.f32 %v4377, %v4377
    %v4442 = vmul.f32 %v4378, %v4378
    %v4443 = vmul.f32 %v4379, %v4379
    %v4444 = vmul.f32 %v4380, %v4380
    %v4445 = vmul.f32 %v4381, %v4381
    %v4446 = vmul.f32 %v4382, %v4382
    %v4447 = vmul.f32 %v4383, %v4383
    %v4448 = vmul.f32 %v4384, %v4384
    %v4449 = vmul.f32 %v4385, %v4385
    %v4450 = vmul.f32 %v4386, %v4386
    %v4451 = vmul.f32 %v4387, %v4387
    %v4452 = vmul.f32 %v4388, %v4388
    %v4453 = vmul.f32 %v4389, %v4389
    %v4454 = vmul.f32 %v4390, %v4390
    %v4455 = vmul.f32 %v4391, %v4391
    %v4456 = vmul.f32 %v4392, %v4392
    %v4457 = vmul.f32 %v4393, %v4393
    %v4458 = vmul.f32 %v4394, %v4394
    %v4459 = vmul.f32 %v4395, %v4395
    %v4460 = vmul.f32 %v4396, %v4396
    %v4461 = vmul.f32 %v4397, %v4397
    %v4462 = vmul.f32 %v4398, %v4398
    %v4463 = vmul.f32 %v4399, %v4399
    %v4464 = vmul.f32 %v4400, %v4400
    %v4465 = vmul.f32 %v4401, %v4401
    %v4466 = vmul.f32 %v4402, %v4402
    %v4467 = vmul.f32 %v4403, %v4403
    %v4468 = vmul.f32 %v4404, %v4404
    %v4469 = vmul.f32 %v4405, %v4405
    %v4470 = vmul.f32 %v4406, %v4406
    %v4471 = vmul.f32 %v4407, %v4407
    %v4472 = vmul.f32 %v4408, %v4408
    %v4473 = vsel %vm4210, %v4409, 0.0
    %v4474 = vsel %vm4210, %v4410, 0.0
    %v4475 = vadd.f32 %v4473, %v4474
    %v4476 = vsel %vm4210, %v4411, 0.0
    %v4477 = vadd.f32 %v4475, %v4476
    %v4478 = vsel %vm4210, %v4412, 0.0
    %v4479 = vadd.f32 %v4477, %v4478
    %v4480 = vsel %vm4210, %v4413, 0.0
    %v4481 = vadd.f32 %v4479, %v4480
    %v4482 = vsel %vm4210, %v4414, 0.0
    %v4483 = vadd.f32 %v4481, %v4482
    %v4484 = vsel %vm4210, %v4415, 0.0
    %v4485 = vadd.f32 %v4483, %v4484
    %v4486 = vsel %vm4210, %v4416, 0.0
    %v4487 = vadd.f32 %v4485, %v4486
    %v4488 = vsel %vm4210, %v4417, 0.0
    %v4489 = vadd.f32 %v4487, %v4488
    %v4490 = vsel %vm4210, %v4418, 0.0
    %v4491 = vadd.f32 %v4489, %v4490
    %v4492 = vsel %vm4210, %v4419, 0.0
    %v4493 = vadd.f32 %v4491, %v4492
    %v4494 = vsel %vm4210, %v4420, 0.0
    %v4495 = vadd.f32 %v4493, %v4494
    %v4496 = vsel %vm4210, %v4421, 0.0
    %v4497 = vadd.f32 %v4495, %v4496
    %v4498 = vsel %vm4210, %v4422, 0.0
    %v4499 = vadd.f32 %v4497, %v4498
    %v4500 = vsel %vm4210, %v4423, 0.0
    %v4501 = vadd.f32 %v4499, %v4500
    %v4502 = vsel %vm4210, %v4424, 0.0
    %v4503 = vadd.f32 %v4501, %v4502
    %v4504 = vsel %vm4210, %v4425, 0.0
    %v4505 = vadd.f32 %v4503, %v4504
    %v4506 = vsel %vm4210, %v4426, 0.0
    %v4507 = vadd.f32 %v4505, %v4506
    %v4508 = vsel %vm4210, %v4427, 0.0
    %v4509 = vadd.f32 %v4507, %v4508
    %v4510 = vsel %vm4210, %v4428, 0.0
    %v4511 = vadd.f32 %v4509, %v4510
    %v4512 = vsel %vm4210, %v4429, 0.0
    %v4513 = vadd.f32 %v4511, %v4512
    %v4514 = vsel %vm4210, %v4430, 0.0
    %v4515 = vadd.f32 %v4513, %v4514
    %v4516 = vsel %vm4210, %v4431, 0.0
    %v4517 = vadd.f32 %v4515, %v4516
    %v4518 = vsel %vm4210, %v4432, 0.0
    %v4519 = vadd.f32 %v4517, %v4518
    %v4520 = vsel %vm4210, %v4433, 0.0
    %v4521 = vadd.f32 %v4519, %v4520
    %v4522 = vsel %vm4210, %v4434, 0.0
    %v4523 = vadd.f32 %v4521, %v4522
    %v4524 = vsel %vm4210, %v4435, 0.0
    %v4525 = vadd.f32 %v4523, %v4524
    %v4526 = vsel %vm4210, %v4436, 0.0
    %v4527 = vadd.f32 %v4525, %v4526
    %v4528 = vsel %vm4210, %v4437, 0.0
    %v4529 = vadd.f32 %v4527, %v4528
    %v4530 = vsel %vm4210, %v4438, 0.0
    %v4531 = vadd.f32 %v4529, %v4530
    %v4532 = vsel %vm4210, %v4439, 0.0
    %v4533 = vadd.f32 %v4531, %v4532
    %v4534 = vsel %vm4210, %v4440, 0.0
    %v4535 = vadd.f32 %v4533, %v4534
    %v4536 = vsel %vm4210, %v4441, 0.0
    %v4537 = vadd.f32 %v4535, %v4536
    %v4538 = vsel %vm4210, %v4442, 0.0
    %v4539 = vadd.f32 %v4537, %v4538
    %v4540 = vsel %vm4210, %v4443, 0.0
    %v4541 = vadd.f32 %v4539, %v4540
    %v4542 = vsel %vm4210, %v4444, 0.0
    %v4543 = vadd.f32 %v4541, %v4542
    %v4544 = vsel %vm4210, %v4445, 0.0
    %v4545 = vadd.f32 %v4543, %v4544
    %v4546 = vsel %vm4210, %v4446, 0.0
    %v4547 = vadd.f32 %v4545, %v4546
    %v4548 = vsel %vm4210, %v4447, 0.0
    %v4549 = vadd.f32 %v4547, %v4548
    %v4550 = vsel %vm4210, %v4448, 0.0
    %v4551 = vadd.f32 %v4549, %v4550
    %v4552 = vsel %vm4210, %v4449, 0.0
    %v4553 = vadd.f32 %v4551, %v4552
    %v4554 = vsel %vm4210, %v4450, 0.0
    %v4555 = vadd.f32 %v4553, %v4554
    %v4556 = vsel %vm4210, %v4451, 0.0
    %v4557 = vadd.f32 %v4555, %v4556
    %v4558 = vsel %vm4210, %v4452, 0.0
    %v4559 = vadd.f32 %v4557, %v4558
    %v4560 = vsel %vm4210, %v4453, 0.0
    %v4561 = vadd.f32 %v4559, %v4560
    %v4562 = vsel %vm4210, %v4454, 0.0
    %v4563 = vadd.f32 %v4561, %v4562
    %v4564 = vsel %vm4210, %v4455, 0.0
    %v4565 = vadd.f32 %v4563, %v4564
    %v4566 = vsel %vm4210, %v4456, 0.0
    %v4567 = vadd.f32 %v4565, %v4566
    %v4568 = vsel %vm4210, %v4457, 0.0
    %v4569 = vadd.f32 %v4567, %v4568
    %v4570 = vsel %vm4210, %v4458, 0.0
    %v4571 = vadd.f32 %v4569, %v4570
    %v4572 = vsel %vm4210, %v4459, 0.0
    %v4573 = vadd.f32 %v4571, %v4572
    %v4574 = vsel %vm4210, %v4460, 0.0
    %v4575 = vadd.f32 %v4573, %v4574
    %v4576 = vsel %vm4210, %v4461, 0.0
    %v4577 = vadd.f32 %v4575, %v4576
    %v4578 = vsel %vm4210, %v4462, 0.0
    %v4579 = vadd.f32 %v4577, %v4578
    %v4580 = vsel %vm4210, %v4463, 0.0
    %v4581 = vadd.f32 %v4579, %v4580
    %v4582 = vsel %vm4210, %v4464, 0.0
    %v4583 = vadd.f32 %v4581, %v4582
    %v4584 = vsel %vm4210, %v4465, 0.0
    %v4585 = vadd.f32 %v4583, %v4584
    %v4586 = vsel %vm4210, %v4466, 0.0
    %v4587 = vadd.f32 %v4585, %v4586
    %v4588 = vsel %vm4210, %v4467, 0.0
    %v4589 = vadd.f32 %v4587, %v4588
    %v4590 = vsel %vm4210, %v4468, 0.0
    %v4591 = vadd.f32 %v4589, %v4590
    %v4592 = vsel %vm4210, %v4469, 0.0
    %v4593 = vadd.f32 %v4591, %v4592
    %v4594 = vsel %vm4210, %v4470, 0.0
    %v4595 = vadd.f32 %v4593, %v4594
    %v4596 = vsel %vm4210, %v4471, 0.0
    %v4597 = vadd.f32 %v4595, %v4596
    %v4598 = vsel %vm4210, %v4472, 0.0
    %v4599 = vadd.f32 %v4597, %v4598
    %v4600 = vrot.slane %v4599, 4
    %v4601 = vadd.f32 %v4599, %v4600
    %v4602 = vrot.slane %v4601, 2
    %v4603 = vadd.f32 %v4601, %v4602
    %v4604 = vrot.slane %v4603, 1
    %v4605 = vadd.f32 %v4603, %v4604
    %v4606 = vmul.f32 %v4605, %v2047
    %v4607 = vadd.f32 %v4606, 1e-05
    %v4608 = vrsqrt.pop %v4607
    %v4609 = vmul.f32 %v4208, %v4608
    %v4610 = vmul.f32 %v4344, %v4609
    %v4611 = vsub.f32 %v4209, %v4610
    %v4613 = vlaneseq
    %v4614 = vshrl.u32 %v4613, 7
    %v4615 = vsub.s32 0, %v4614
    %v4616 = vrot.slane %v4609, %v4615
    %v4618 = vmul.f32 %v3954, %v4616
    %v4619 = vmul.f32 %v3957, %v4616
    %v4620 = vmul.f32 %v3962, %v4616
    %v4621 = vmul.f32 %v3965, %v4616
    %v4622 = vmul.f32 %v3970, %v4616
    %v4623 = vmul.f32 %v3973, %v4616
    %v4624 = vmul.f32 %v3978, %v4616
    %v4625 = vmul.f32 %v3981, %v4616
    %v4626 = vmul.f32 %v3986, %v4616
    %v4627 = vmul.f32 %v3989, %v4616
    %v4628 = vmul.f32 %v3994, %v4616
    %v4629 = vmul.f32 %v3997, %v4616
    %v4630 = vmul.f32 %v4002, %v4616
    %v4631 = vmul.f32 %v4005, %v4616
    %v4632 = vmul.f32 %v4010, %v4616
    %v4633 = vmul.f32 %v4013, %v4616
    %v4634 = vmul.f32 %v4018, %v4616
    %v4635 = vmul.f32 %v4021, %v4616
    %v4636 = vmul.f32 %v4026, %v4616
    %v4637 = vmul.f32 %v4029, %v4616
    %v4638 = vmul.f32 %v4034, %v4616
    %v4639 = vmul.f32 %v4037, %v4616
    %v4640 = vmul.f32 %v4042, %v4616
    %v4641 = vmul.f32 %v4045, %v4616
    %v4642 = vmul.f32 %v4050, %v4616
    %v4643 = vmul.f32 %v4053, %v4616
    %v4644 = vmul.f32 %v4058, %v4616
    %v4645 = vmul.f32 %v4061, %v4616
    %v4646 = vmul.f32 %v4066, %v4616
    %v4647 = vmul.f32 %v4069, %v4616
    %v4648 = vmul.f32 %v4074, %v4616
    %v4649 = vmul.f32 %v4077, %v4616
    %v4650 = vmul.f32 %v4082, %v4616
    %v4651 = vmul.f32 %v4085, %v4616
    %v4652 = vmul.f32 %v4090, %v4616
    %v4653 = vmul.f32 %v4093, %v4616
    %v4654 = vmul.f32 %v4098, %v4616
    %v4655 = vmul.f32 %v4101, %v4616
    %v4656 = vmul.f32 %v4106, %v4616
    %v4657 = vmul.f32 %v4109, %v4616
    %v4658 = vmul.f32 %v4114, %v4616
    %v4659 = vmul.f32 %v4117, %v4616
    %v4660 = vmul.f32 %v4122, %v4616
    %v4661 = vmul.f32 %v4125, %v4616
    %v4662 = vmul.f32 %v4130, %v4616
    %v4663 = vmul.f32 %v4133, %v4616
    %v4664 = vmul.f32 %v4138, %v4616
    %v4665 = vmul.f32 %v4141, %v4616
    %v4666 = vmul.f32 %v4146, %v4616
    %v4667 = vmul.f32 %v4149, %v4616
    %v4668 = vmul.f32 %v4154, %v4616
    %v4669 = vmul.f32 %v4157, %v4616
    %v4670 = vmul.f32 %v4162, %v4616
    %v4671 = vmul.f32 %v4165, %v4616
    %v4672 = vmul.f32 %v4170, %v4616
    %v4673 = vmul.f32 %v4173, %v4616
    %v4674 = vmul.f32 %v4178, %v4616
    %v4675 = vmul.f32 %v4181, %v4616
    %v4676 = vmul.f32 %v4186, %v4616
    %v4677 = vmul.f32 %v4189, %v4616
    %v4678 = vmul.f32 %v4194, %v4616
    %v4679 = vmul.f32 %v4197, %v4616
    %v4680 = vmul.f32 %v4202, %v4616
    %v4681 = vmul.f32 %v4205, %v4616
    %v4683 = vlaneseq
    %v4684 = vshrl.u32 %v4683, 7
    %v4685 = vsub.s32 0, %v4684
    %v4686 = vrot.slane %v4611, %v4685
    %v4688 = vadd.f32 %v4618, %v4686
    %v4689 = vadd.f32 %v4619, %v4686
    %v4690 = vadd.f32 %v4620, %v4686
    %v4691 = vadd.f32 %v4621, %v4686
    %v4692 = vadd.f32 %v4622, %v4686
    %v4693 = vadd.f32 %v4623, %v4686
    %v4694 = vadd.f32 %v4624, %v4686
    %v4695 = vadd.f32 %v4625, %v4686
    %v4696 = vadd.f32 %v4626, %v4686
    %v4697 = vadd.f32 %v4627, %v4686
    %v4698 = vadd.f32 %v4628, %v4686
    %v4699 = vadd.f32 %v4629, %v4686
    %v4700 = vadd.f32 %v4630, %v4686
    %v4701 = vadd.f32 %v4631, %v4686
    %v4702 = vadd.f32 %v4632, %v4686
    %v4703 = vadd.f32 %v4633, %v4686
    %v4704 = vadd.f32 %v4634, %v4686
    %v4705 = vadd.f32 %v4635, %v4686
    %v4706 = vadd.f32 %v4636, %v4686
    %v4707 = vadd.f32 %v4637, %v4686
    %v4708 = vadd.f32 %v4638, %v4686
    %v4709 = vadd.f32 %v4639, %v4686
    %v4710 = vadd.f32 %v4640, %v4686
    %v4711 = vadd.f32 %v4641, %v4686
    %v4712 = vadd.f32 %v4642, %v4686
    %v4713 = vadd.f32 %v4643, %v4686
    %v4714 = vadd.f32 %v4644, %v4686
    %v4715 = vadd.f32 %v4645, %v4686
    %v4716 = vadd.f32 %v4646, %v4686
    %v4717 = vadd.f32 %v4647, %v4686
    %v4718 = vadd.f32 %v4648, %v4686
    %v4719 = vadd.f32 %v4649, %v4686
    %v4720 = vadd.f32 %v4650, %v4686
    %v4721 = vadd.f32 %v4651, %v4686
    %v4722 = vadd.f32 %v4652, %v4686
    %v4723 = vadd.f32 %v4653, %v4686
    %v4724 = vadd.f32 %v4654, %v4686
    %v4725 = vadd.f32 %v4655, %v4686
    %v4726 = vadd.f32 %v4656, %v4686
    %v4727 = vadd.f32 %v4657, %v4686
    %v4728 = vadd.f32 %v4658, %v4686
    %v4729 = vadd.f32 %v4659, %v4686
    %v4730 = vadd.f32 %v4660, %v4686
    %v4731 = vadd.f32 %v4661, %v4686
    %v4732 = vadd.f32 %v4662, %v4686
    %v4733 = vadd.f32 %v4663, %v4686
    %v4734 = vadd.f32 %v4664, %v4686
    %v4735 = vadd.f32 %v4665, %v4686
    %v4736 = vadd.f32 %v4666, %v4686
    %v4737 = vadd.f32 %v4667, %v4686
    %v4738 = vadd.f32 %v4668, %v4686
    %v4739 = vadd.f32 %v4669, %v4686
    %v4740 = vadd.f32 %v4670, %v4686
    %v4741 = vadd.f32 %v4671, %v4686
    %v4742 = vadd.f32 %v4672, %v4686
    %v4743 = vadd.f32 %v4673, %v4686
    %v4744 = vadd.f32 %v4674, %v4686
    %v4745 = vadd.f32 %v4675, %v4686
    %v4746 = vadd.f32 %v4676, %v4686
    %v4747 = vadd.f32 %v4677, %v4686
    %v4748 = vadd.f32 %v4678, %v4686
    %v4749 = vadd.f32 %v4679, %v4686
    %v4750 = vadd.f32 %v4680, %v4686
    %v4751 = vadd.f32 %v4681, %v4686
    %v4752 = vmax.f32 %v4688, 0.0
    %v4753 = vmax.f32 %v4689, 0.0
    %v4754 = vmax.f32 %v4690, 0.0
    %v4755 = vmax.f32 %v4691, 0.0
    %v4756 = vmax.f32 %v4692, 0.0
    %v4757 = vmax.f32 %v4693, 0.0
    %v4758 = vmax.f32 %v4694, 0.0
    %v4759 = vmax.f32 %v4695, 0.0
    %v4760 = vmax.f32 %v4696, 0.0
    %v4761 = vmax.f32 %v4697, 0.0
    %v4762 = vmax.f32 %v4698, 0.0
    %v4763 = vmax.f32 %v4699, 0.0
    %v4764 = vmax.f32 %v4700, 0.0
    %v4765 = vmax.f32 %v4701, 0.0
    %v4766 = vmax.f32 %v4702, 0.0
    %v4767 = vmax.f32 %v4703, 0.0
    %v4768 = vmax.f32 %v4704, 0.0
    %v4769 = vmax.f32 %v4705, 0.0
    %v4770 = vmax.f32 %v4706, 0.0
    %v4771 = vmax.f32 %v4707, 0.0
    %v4772 = vmax.f32 %v4708, 0.0
    %v4773 = vmax.f32 %v4709, 0.0
    %v4774 = vmax.f32 %v4710, 0.0
    %v4775 = vmax.f32 %v4711, 0.0
    %v4776 = vmax.f32 %v4712, 0.0
    %v4777 = vmax.f32 %v4713, 0.0
    %v4778 = vmax.f32 %v4714, 0.0
    %v4779 = vmax.f32 %v4715, 0.0
    %v4780 = vmax.f32 %v4716, 0.0
    %v4781 = vmax.f32 %v4717, 0.0
    %v4782 = vmax.f32 %v4718, 0.0
    %v4783 = vmax.f32 %v4719, 0.0
    %v4784 = vmax.f32 %v4720, 0.0
    %v4785 = vmax.f32 %v4721, 0.0
    %v4786 = vmax.f32 %v4722, 0.0
    %v4787 = vmax.f32 %v4723, 0.0
    %v4788 = vmax.f32 %v4724, 0.0
    %v4789 = vmax.f32 %v4725, 0.0
    %v4790 = vmax.f32 %v4726, 0.0
    %v4791 = vmax.f32 %v4727, 0.0
    %v4792 = vmax.f32 %v4728, 0.0
    %v4793 = vmax.f32 %v4729, 0.0
    %v4794 = vmax.f32 %v4730, 0.0
    %v4795 = vmax.f32 %v4731, 0.0
    %v4796 = vmax.f32 %v4732, 0.0
    %v4797 = vmax.f32 %v4733, 0.0
    %v4798 = vmax.f32 %v4734, 0.0
    %v4799 = vmax.f32 %v4735, 0.0
    %v4800 = vmax.f32 %v4736, 0.0
    %v4801 = vmax.f32 %v4737, 0.0
    %v4802 = vmax.f32 %v4738, 0.0
    %v4803 = vmax.f32 %v4739, 0.0
    %v4804 = vmax.f32 %v4740, 0.0
    %v4805 = vmax.f32 %v4741, 0.0
    %v4806 = vmax.f32 %v4742, 0.0
    %v4807 = vmax.f32 %v4743, 0.0
    %v4808 = vmax.f32 %v4744, 0.0
    %v4809 = vmax.f32 %v4745, 0.0
    %v4810 = vmax.f32 %v4746, 0.0
    %v4811 = vmax.f32 %v4747, 0.0
    %v4812 = vmax.f32 %v4748, 0.0
    %v4813 = vmax.f32 %v4749, 0.0
    %v4814 = vmax.f32 %v4750, 0.0
    %v4815 = vmax.f32 %v4751, 0.0
    %4816 = vst.msk [vmem:[%s23] sm:$0xff] %vm4210, %v4752
    %4817 = vst.msk [vmem:[%s23 + $0x8] sm:$0xff] %vm4210, %v4753
    %4818 = vst.msk [vmem:[%s23 + $0x10] sm:$0xff] %vm4210, %v4754
    %4819 = vst.msk [vmem:[%s23 + $0x18] sm:$0xff] %vm4210, %v4755
    %4820 = vst.msk [vmem:[%s23 + $0x20] sm:$0xff] %vm4210, %v4756
    %4821 = vst.msk [vmem:[%s23 + $0x28] sm:$0xff] %vm4210, %v4757
    %4822 = vst.msk [vmem:[%s23 + $0x30] sm:$0xff] %vm4210, %v4758
    %4823 = vst.msk [vmem:[%s23 + $0x38] sm:$0xff] %vm4210, %v4759
    %4824 = vst.msk [vmem:[%s23 + $0x40] sm:$0xff] %vm4210, %v4760
    %4825 = vst.msk [vmem:[%s23 + $0x48] sm:$0xff] %vm4210, %v4761
    %4826 = vst.msk [vmem:[%s23 + $0x50] sm:$0xff] %vm4210, %v4762
    %4827 = vst.msk [vmem:[%s23 + $0x58] sm:$0xff] %vm4210, %v4763
    %4828 = vst.msk [vmem:[%s23 + $0x60] sm:$0xff] %vm4210, %v4764
    %4829 = vst.msk [vmem:[%s23 + $0x68] sm:$0xff] %vm4210, %v4765
    %4830 = vst.msk [vmem:[%s23 + $0x70] sm:$0xff] %vm4210, %v4766
    %4831 = vst.msk [vmem:[%s23 + $0x78] sm:$0xff] %vm4210, %v4767
    %4832 = vst.msk [vmem:[%s23 + $0x80] sm:$0xff] %vm4210, %v4768
    %4833 = vst.msk [vmem:[%s23 + $0x88] sm:$0xff] %vm4210, %v4769
    %4834 = vst.msk [vmem:[%s23 + $0x90] sm:$0xff] %vm4210, %v4770
    %4835 = vst.msk [vmem:[%s23 + $0x98] sm:$0xff] %vm4210, %v4771
    %4836 = vst.msk [vmem:[%s23 + $0xa0] sm:$0xff] %vm4210, %v4772
    %4837 = vst.msk [vmem:[%s23 + $0xa8] sm:$0xff] %vm4210, %v4773
    %4838 = vst.msk [vmem:[%s23 + $0xb0] sm:$0xff] %vm4210, %v4774
    %4839 = vst.msk [vmem:[%s23 + $0xb8] sm:$0xff] %vm4210, %v4775
    %4840 = vst.msk [vmem:[%s23 + $0xc0] sm:$0xff] %vm4210, %v4776
    %4841 = vst.msk [vmem:[%s23 + $0xc8] sm:$0xff] %vm4210, %v4777
    %4842 = vst.msk [vmem:[%s23 + $0xd0] sm:$0xff] %vm4210, %v4778
    %4843 = vst.msk [vmem:[%s23 + $0xd8] sm:$0xff] %vm4210, %v4779
    %4844 = vst.msk [vmem:[%s23 + $0xe0] sm:$0xff] %vm4210, %v4780
    %4845 = vst.msk [vmem:[%s23 + $0xe8] sm:$0xff] %vm4210, %v4781
    %4846 = vst.msk [vmem:[%s23 + $0xf0] sm:$0xff] %vm4210, %v4782
    %4847 = vst.msk [vmem:[%s23 + $0xf8] sm:$0xff] %vm4210, %v4783
    %4848 = vst.msk [vmem:[%s23 + $0x100] sm:$0xff] %vm4210, %v4784
    %4849 = vst.msk [vmem:[%s23 + $0x108] sm:$0xff] %vm4210, %v4785
    %4850 = vst.msk [vmem:[%s23 + $0x110] sm:$0xff] %vm4210, %v4786
    %4851 = vst.msk [vmem:[%s23 + $0x118] sm:$0xff] %vm4210, %v4787
    %4852 = vst.msk [vmem:[%s23 + $0x120] sm:$0xff] %vm4210, %v4788
    %4853 = vst.msk [vmem:[%s23 + $0x128] sm:$0xff] %vm4210, %v4789
    %4854 = vst.msk [vmem:[%s23 + $0x130] sm:$0xff] %vm4210, %v4790
    %4855 = vst.msk [vmem:[%s23 + $0x138] sm:$0xff] %vm4210, %v4791
    %4856 = vst.msk [vmem:[%s23 + $0x140] sm:$0xff] %vm4210, %v4792
    %4857 = vst.msk [vmem:[%s23 + $0x148] sm:$0xff] %vm4210, %v4793
    %4858 = vst.msk [vmem:[%s23 + $0x150] sm:$0xff] %vm4210, %v4794
    %4859 = vst.msk [vmem:[%s23 + $0x158] sm:$0xff] %vm4210, %v4795
    %4860 = vst.msk [vmem:[%s23 + $0x160] sm:$0xff] %vm4210, %v4796
    %4861 = vst.msk [vmem:[%s23 + $0x168] sm:$0xff] %vm4210, %v4797
    %4862 = vst.msk [vmem:[%s23 + $0x170] sm:$0xff] %vm4210, %v4798
    %4863 = vst.msk [vmem:[%s23 + $0x178] sm:$0xff] %vm4210, %v4799
    %4864 = vst.msk [vmem:[%s23 + $0x180] sm:$0xff] %vm4210, %v4800
    %4865 = vst.msk [vmem:[%s23 + $0x188] sm:$0xff] %vm4210, %v4801
    %4866 = vst.msk [vmem:[%s23 + $0x190] sm:$0xff] %vm4210, %v4802
    %4867 = vst.msk [vmem:[%s23 + $0x198] sm:$0xff] %vm4210, %v4803
    %4868 = vst.msk [vmem:[%s23 + $0x1a0] sm:$0xff] %vm4210, %v4804
    %4869 = vst.msk [vmem:[%s23 + $0x1a8] sm:$0xff] %vm4210, %v4805
    %4870 = vst.msk [vmem:[%s23 + $0x1b0] sm:$0xff] %vm4210, %v4806
    %4871 = vst.msk [vmem:[%s23 + $0x1b8] sm:$0xff] %vm4210, %v4807
    %4872 = vst.msk [vmem:[%s23 + $0x1c0] sm:$0xff] %vm4210, %v4808
    %4873 = vst.msk [vmem:[%s23 + $0x1c8] sm:$0xff] %vm4210, %v4809
    %4874 = vst.msk [vmem:[%s23 + $0x1d0] sm:$0xff] %vm4210, %v4810
    %4875 = vst.msk [vmem:[%s23 + $0x1d8] sm:$0xff] %vm4210, %v4811
    %4876 = vst.msk [vmem:[%s23 + $0x1e0] sm:$0xff] %vm4210, %v4812
    %4877 = vst.msk [vmem:[%s23 + $0x1e8] sm:$0xff] %vm4210, %v4813
    %4878 = vst.msk [vmem:[%s23 + $0x1f0] sm:$0xff] %vm4210, %v4814
    %4879 = vst.msk [vmem:[%s23 + $0x1f8] sm:$0xff] %vm4210, %v4815
    %v4944 = vcombine.high %v4752, %v4752
    %v4945 = vcombine.high %v4753, %v4753
    %v4946 = vcombine.high %v4754, %v4754
    %v4947 = vcombine.high %v4755, %v4755
    %v4948 = vcombine.high %v4756, %v4756
    %v4949 = vcombine.high %v4757, %v4757
    %v4950 = vcombine.high %v4758, %v4758
    %v4951 = vcombine.high %v4759, %v4759
    %v4952 = vcombine.high %v4760, %v4760
    %v4953 = vcombine.high %v4761, %v4761
    %v4954 = vcombine.high %v4762, %v4762
    %v4955 = vcombine.high %v4763, %v4763
    %v4956 = vcombine.high %v4764, %v4764
    %v4957 = vcombine.high %v4765, %v4765
    %v4958 = vcombine.high %v4766, %v4766
    %v4959 = vcombine.high %v4767, %v4767
    %v4960 = vcombine.high %v4768, %v4768
    %v4961 = vcombine.high %v4769, %v4769
    %v4962 = vcombine.high %v4770, %v4770
    %v4963 = vcombine.high %v4771, %v4771
    %v4964 = vcombine.high %v4772, %v4772
    %v4965 = vcombine.high %v4773, %v4773
    %v4966 = vcombine.high %v4774, %v4774
    %v4967 = vcombine.high %v4775, %v4775
    %v4968 = vcombine.high %v4776, %v4776
    %v4969 = vcombine.high %v4777, %v4777
    %v4970 = vcombine.high %v4778, %v4778
    %v4971 = vcombine.high %v4779, %v4779
    %v4972 = vcombine.high %v4780, %v4780
    %v4973 = vcombine.high %v4781, %v4781
    %v4974 = vcombine.high %v4782, %v4782
    %v4975 = vcombine.high %v4783, %v4783
    %v4976 = vcombine.high %v4784, %v4784
    %v4977 = vcombine.high %v4785, %v4785
    %v4978 = vcombine.high %v4786, %v4786
    %v4979 = vcombine.high %v4787, %v4787
    %v4980 = vcombine.high %v4788, %v4788
    %v4981 = vcombine.high %v4789, %v4789
    %v4982 = vcombine.high %v4790, %v4790
    %v4983 = vcombine.high %v4791, %v4791
    %v4984 = vcombine.high %v4792, %v4792
    %v4985 = vcombine.high %v4793, %v4793
    %v4986 = vcombine.high %v4794, %v4794
    %v4987 = vcombine.high %v4795, %v4795
    %v4988 = vcombine.high %v4796, %v4796
    %v4989 = vcombine.high %v4797, %v4797
    %v4990 = vcombine.high %v4798, %v4798
    %v4991 = vcombine.high %v4799, %v4799
    %v4992 = vcombine.high %v4800, %v4800
    %v4993 = vcombine.high %v4801, %v4801
    %v4994 = vcombine.high %v4802, %v4802
    %v4995 = vcombine.high %v4803, %v4803
    %v4996 = vcombine.high %v4804, %v4804
    %v4997 = vcombine.high %v4805, %v4805
    %v4998 = vcombine.high %v4806, %v4806
    %v4999 = vcombine.high %v4807, %v4807
    %v5000 = vcombine.high %v4808, %v4808
    %v5001 = vcombine.high %v4809, %v4809
    %v5002 = vcombine.high %v4810, %v4810
    %v5003 = vcombine.high %v4811, %v4811
    %v5004 = vcombine.high %v4812, %v4812
    %v5005 = vcombine.high %v4813, %v4813
    %v5006 = vcombine.high %v4814, %v4814
    %v5007 = vcombine.high %v4815, %v4815
    %vm5072 = vcmask 519168
    %v5073 = vsel %vm5072, %v4752, -inf
    %v5074 = vrot.slane %v5073, 4
    %v5075 = vmax.f32 %v5073, %v5074
    %v5076 = vrot.slane %v5075, 2
    %v5077 = vmax.f32 %v5075, %v5076
    %v5078 = vrot.slane %v5077, 1
    %v5079 = vmax.f32 %v5077, %v5078
    %v5080 = vsel %vm5072, %v4944, -inf
    %v5081 = vrot.slane %v5080, 4
    %v5082 = vmax.f32 %v5080, %v5081
    %v5083 = vrot.slane %v5082, 2
    %v5084 = vmax.f32 %v5082, %v5083
    %v5085 = vrot.slane %v5084, 1
    %v5086 = vmax.f32 %v5084, %v5085
    %v5087 = vsel %vm5072, %v4753, -inf
    %v5088 = vrot.slane %v5087, 4
    %v5089 = vmax.f32 %v5087, %v5088
    %v5090 = vrot.slane %v5089, 2
    %v5091 = vmax.f32 %v5089, %v5090
    %v5092 = vrot.slane %v5091, 1
    %v5093 = vmax.f32 %v5091, %v5092
    %v5094 = vsel %vm5072, %v4945, -inf
    %v5095 = vrot.slane %v5094, 4
    %v5096 = vmax.f32 %v5094, %v5095
    %v5097 = vrot.slane %v5096, 2
    %v5098 = vmax.f32 %v5096, %v5097
    %v5099 = vrot.slane %v5098, 1
    %v5100 = vmax.f32 %v5098, %v5099
    %v5101 = vsel %vm5072, %v4754, -inf
    %v5102 = vrot.slane %v5101, 4
    %v5103 = vmax.f32 %v5101, %v5102
    %v5104 = vrot.slane %v5103, 2
    %v5105 = vmax.f32 %v5103, %v5104
    %v5106 = vrot.slane %v5105, 1
    %v5107 = vmax.f32 %v5105, %v5106
    %v5108 = vsel %vm5072, %v4946, -inf
    %v5109 = vrot.slane %v5108, 4
    %v5110 = vmax.f32 %v5108, %v5109
    %v5111 = vrot.slane %v5110, 2
    %v5112 = vmax.f32 %v5110, %v5111
    %v5113 = vrot.slane %v5112, 1
    %v5114 = vmax.f32 %v5112, %v5113
    %v5115 = vsel %vm5072, %v4755, -inf
    %v5116 = vrot.slane %v5115, 4
    %v5117 = vmax.f32 %v5115, %v5116
    %v5118 = vrot.slane %v5117, 2
    %v5119 = vmax.f32 %v5117, %v5118
    %v5120 = vrot.slane %v5119, 1
    %v5121 = vmax.f32 %v5119, %v5120
    %v5122 = vsel %vm5072, %v4947, -inf
    %v5123 = vrot.slane %v5122, 4
    %v5124 = vmax.f32 %v5122, %v5123
    %v5125 = vrot.slane %v5124, 2
    %v5126 = vmax.f32 %v5124, %v5125
    %v5127 = vrot.slane %v5126, 1
    %v5128 = vmax.f32 %v5126, %v5127
    %v5129 = vsel %vm5072, %v4756, -inf
    %v5130 = vrot.slane %v5129, 4
    %v5131 = vmax.f32 %v5129, %v5130
    %v5132 = vrot.slane %v5131, 2
    %v5133 = vmax.f32 %v5131, %v5132
    %v5134 = vrot.slane %v5133, 1
    %v5135 = vmax.f32 %v5133, %v5134
    %v5136 = vsel %vm5072, %v4948, -inf
    %v5137 = vrot.slane %v5136, 4
    %v5138 = vmax.f32 %v5136, %v5137
    %v5139 = vrot.slane %v5138, 2
    %v5140 = vmax.f32 %v5138, %v5139
    %v5141 = vrot.slane %v5140, 1
    %v5142 = vmax.f32 %v5140, %v5141
    %v5143 = vsel %vm5072, %v4757, -inf
    %v5144 = vrot.slane %v5143, 4
    %v5145 = vmax.f32 %v5143, %v5144
    %v5146 = vrot.slane %v5145, 2
    %v5147 = vmax.f32 %v5145, %v5146
    %v5148 = vrot.slane %v5147, 1
    %v5149 = vmax.f32 %v5147, %v5148
    %v5150 = vsel %vm5072, %v4949, -inf
    %v5151 = vrot.slane %v5150, 4
    %v5152 = vmax.f32 %v5150, %v5151
    %v5153 = vrot.slane %v5152, 2
    %v5154 = vmax.f32 %v5152, %v5153
    %v5155 = vrot.slane %v5154, 1
    %v5156 = vmax.f32 %v5154, %v5155
    %v5157 = vsel %vm5072, %v4758, -inf
    %v5158 = vrot.slane %v5157, 4
    %v5159 = vmax.f32 %v5157, %v5158
    %v5160 = vrot.slane %v5159, 2
    %v5161 = vmax.f32 %v5159, %v5160
    %v5162 = vrot.slane %v5161, 1
    %v5163 = vmax.f32 %v5161, %v5162
    %v5164 = vsel %vm5072, %v4950, -inf
    %v5165 = vrot.slane %v5164, 4
    %v5166 = vmax.f32 %v5164, %v5165
    %v5167 = vrot.slane %v5166, 2
    %v5168 = vmax.f32 %v5166, %v5167
    %v5169 = vrot.slane %v5168, 1
    %v5170 = vmax.f32 %v5168, %v5169
    %v5171 = vsel %vm5072, %v4759, -inf
    %v5172 = vrot.slane %v5171, 4
    %v5173 = vmax.f32 %v5171, %v5172
    %v5174 = vrot.slane %v5173, 2
    %v5175 = vmax.f32 %v5173, %v5174
    %v5176 = vrot.slane %v5175, 1
    %v5177 = vmax.f32 %v5175, %v5176
    %v5178 = vsel %vm5072, %v4951, -inf
    %v5179 = vrot.slane %v5178, 4
    %v5180 = vmax.f32 %v5178, %v5179
    %v5181 = vrot.slane %v5180, 2
    %v5182 = vmax.f32 %v5180, %v5181
    %v5183 = vrot.slane %v5182, 1
    %v5184 = vmax.f32 %v5182, %v5183
    %v5185 = vsel %vm5072, %v4760, -inf
    %v5186 = vrot.slane %v5185, 4
    %v5187 = vmax.f32 %v5185, %v5186
    %v5188 = vrot.slane %v5187, 2
    %v5189 = vmax.f32 %v5187, %v5188
    %v5190 = vrot.slane %v5189, 1
    %v5191 = vmax.f32 %v5189, %v5190
    %v5192 = vsel %vm5072, %v4952, -inf
    %v5193 = vrot.slane %v5192, 4
    %v5194 = vmax.f32 %v5192, %v5193
    %v5195 = vrot.slane %v5194, 2
    %v5196 = vmax.f32 %v5194, %v5195
    %v5197 = vrot.slane %v5196, 1
    %v5198 = vmax.f32 %v5196, %v5197
    %v5199 = vsel %vm5072, %v4761, -inf
    %v5200 = vrot.slane %v5199, 4
    %v5201 = vmax.f32 %v5199, %v5200
    %v5202 = vrot.slane %v5201, 2
    %v5203 = vmax.f32 %v5201, %v5202
    %v5204 = vrot.slane %v5203, 1
    %v5205 = vmax.f32 %v5203, %v5204
    %v5206 = vsel %vm5072, %v4953, -inf
    %v5207 = vrot.slane %v5206, 4
    %v5208 = vmax.f32 %v5206, %v5207
    %v5209 = vrot.slane %v5208, 2
    %v5210 = vmax.f32 %v5208, %v5209
    %v5211 = vrot.slane %v5210, 1
    %v5212 = vmax.f32 %v5210, %v5211
    %v5213 = vsel %vm5072, %v4762, -inf
    %v5214 = vrot.slane %v5213, 4
    %v5215 = vmax.f32 %v5213, %v5214
    %v5216 = vrot.slane %v5215, 2
    %v5217 = vmax.f32 %v5215, %v5216
    %v5218 = vrot.slane %v5217, 1
    %v5219 = vmax.f32 %v5217, %v5218
    %v5220 = vsel %vm5072, %v4954, -inf
    %v5221 = vrot.slane %v5220, 4
    %v5222 = vmax.f32 %v5220, %v5221
    %v5223 = vrot.slane %v5222, 2
    %v5224 = vmax.f32 %v5222, %v5223
    %v5225 = vrot.slane %v5224, 1
    %v5226 = vmax.f32 %v5224, %v5225
    %v5227 = vsel %vm5072, %v4763, -inf
    %v5228 = vrot.slane %v5227, 4
    %v5229 = vmax.f32 %v5227, %v5228
    %v5230 = vrot.slane %v5229, 2
    %v5231 = vmax.f32 %v5229, %v5230
    %v5232 = vrot.slane %v5231, 1
    %v5233 = vmax.f32 %v5231, %v5232
    %v5234 = vsel %vm5072, %v4955, -inf
    %v5235 = vrot.slane %v5234, 4
    %v5236 = vmax.f32 %v5234, %v5235
    %v5237 = vrot.slane %v5236, 2
    %v5238 = vmax.f32 %v5236, %v5237
    %v5239 = vrot.slane %v5238, 1
    %v5240 = vmax.f32 %v5238, %v5239
    %v5241 = vsel %vm5072, %v4764, -inf
    %v5242 = vrot.slane %v5241, 4
    %v5243 = vmax.f32 %v5241, %v5242
    %v5244 = vrot.slane %v5243, 2
    %v5245 = vmax.f32 %v5243, %v5244
    %v5246 = vrot.slane %v5245, 1
    %v5247 = vmax.f32 %v5245, %v5246
    %v5248 = vsel %vm5072, %v4956, -inf
    %v5249 = vrot.slane %v5248, 4
    %v5250 = vmax.f32 %v5248, %v5249
    %v5251 = vrot.slane %v5250, 2
    %v5252 = vmax.f32 %v5250, %v5251
    %v5253 = vrot.slane %v5252, 1
    %v5254 = vmax.f32 %v5252, %v5253
    %v5255 = vsel %vm5072, %v4765, -inf
    %v5256 = vrot.slane %v5255, 4
    %v5257 = vmax.f32 %v5255, %v5256
    %v5258 = vrot.slane %v5257, 2
    %v5259 = vmax.f32 %v5257, %v5258
    %v5260 = vrot.slane %v5259, 1
    %v5261 = vmax.f32 %v5259, %v5260
    %v5262 = vsel %vm5072, %v4957, -inf
    %v5263 = vrot.slane %v5262, 4
    %v5264 = vmax.f32 %v5262, %v5263
    %v5265 = vrot.slane %v5264, 2
    %v5266 = vmax.f32 %v5264, %v5265
    %v5267 = vrot.slane %v5266, 1
    %v5268 = vmax.f32 %v5266, %v5267
    %v5269 = vsel %vm5072, %v4766, -inf
    %v5270 = vrot.slane %v5269, 4
    %v5271 = vmax.f32 %v5269, %v5270
    %v5272 = vrot.slane %v5271, 2
    %v5273 = vmax.f32 %v5271, %v5272
    %v5274 = vrot.slane %v5273, 1
    %v5275 = vmax.f32 %v5273, %v5274
    %v5276 = vsel %vm5072, %v4958, -inf
    %v5277 = vrot.slane %v5276, 4
    %v5278 = vmax.f32 %v5276, %v5277
    %v5279 = vrot.slane %v5278, 2
    %v5280 = vmax.f32 %v5278, %v5279
    %v5281 = vrot.slane %v5280, 1
    %v5282 = vmax.f32 %v5280, %v5281
    %v5283 = vsel %vm5072, %v4767, -inf
    %v5284 = vrot.slane %v5283, 4
    %v5285 = vmax.f32 %v5283, %v5284
    %v5286 = vrot.slane %v5285, 2
    %v5287 = vmax.f32 %v5285, %v5286
    %v5288 = vrot.slane %v5287, 1
    %v5289 = vmax.f32 %v5287, %v5288
    %v5290 = vsel %vm5072, %v4959, -inf
    %v5291 = vrot.slane %v5290, 4
    %v5292 = vmax.f32 %v5290, %v5291
    %v5293 = vrot.slane %v5292, 2
    %v5294 = vmax.f32 %v5292, %v5293
    %v5295 = vrot.slane %v5294, 1
    %v5296 = vmax.f32 %v5294, %v5295
    %v5297 = vsel %vm5072, %v4768, -inf
    %v5298 = vrot.slane %v5297, 4
    %v5299 = vmax.f32 %v5297, %v5298
    %v5300 = vrot.slane %v5299, 2
    %v5301 = vmax.f32 %v5299, %v5300
    %v5302 = vrot.slane %v5301, 1
    %v5303 = vmax.f32 %v5301, %v5302
    %v5304 = vsel %vm5072, %v4960, -inf
    %v5305 = vrot.slane %v5304, 4
    %v5306 = vmax.f32 %v5304, %v5305
    %v5307 = vrot.slane %v5306, 2
    %v5308 = vmax.f32 %v5306, %v5307
    %v5309 = vrot.slane %v5308, 1
    %v5310 = vmax.f32 %v5308, %v5309
    %v5311 = vsel %vm5072, %v4769, -inf
    %v5312 = vrot.slane %v5311, 4
    %v5313 = vmax.f32 %v5311, %v5312
    %v5314 = vrot.slane %v5313, 2
    %v5315 = vmax.f32 %v5313, %v5314
    %v5316 = vrot.slane %v5315, 1
    %v5317 = vmax.f32 %v5315, %v5316
    %v5318 = vsel %vm5072, %v4961, -inf
    %v5319 = vrot.slane %v5318, 4
    %v5320 = vmax.f32 %v5318, %v5319
    %v5321 = vrot.slane %v5320, 2
    %v5322 = vmax.f32 %v5320, %v5321
    %v5323 = vrot.slane %v5322, 1
    %v5324 = vmax.f32 %v5322, %v5323
    %v5325 = vsel %vm5072, %v4770, -inf
    %v5326 = vrot.slane %v5325, 4
    %v5327 = vmax.f32 %v5325, %v5326
    %v5328 = vrot.slane %v5327, 2
    %v5329 = vmax.f32 %v5327, %v5328
    %v5330 = vrot.slane %v5329, 1
    %v5331 = vmax.f32 %v5329, %v5330
    %v5332 = vsel %vm5072, %v4962, -inf
    %v5333 = vrot.slane %v5332, 4
    %v5334 = vmax.f32 %v5332, %v5333
    %v5335 = vrot.slane %v5334, 2
    %v5336 = vmax.f32 %v5334, %v5335
    %v5337 = vrot.slane %v5336, 1
    %v5338 = vmax.f32 %v5336, %v5337
    %v5339 = vsel %vm5072, %v4771, -inf
    %v5340 = vrot.slane %v5339, 4
    %v5341 = vmax.f32 %v5339, %v5340
    %v5342 = vrot.slane %v5341, 2
    %v5343 = vmax.f32 %v5341, %v5342
    %v5344 = vrot.slane %v5343, 1
    %v5345 = vmax.f32 %v5343, %v5344
    %v5346 = vsel %vm5072, %v4963, -inf
    %v5347 = vrot.slane %v5346, 4
    %v5348 = vmax.f32 %v5346, %v5347
    %v5349 = vrot.slane %v5348, 2
    %v5350 = vmax.f32 %v5348, %v5349
    %v5351 = vrot.slane %v5350, 1
    %v5352 = vmax.f32 %v5350, %v5351
    %v5353 = vsel %vm5072, %v4772, -inf
    %v5354 = vrot.slane %v5353, 4
    %v5355 = vmax.f32 %v5353, %v5354
    %v5356 = vrot.slane %v5355, 2
    %v5357 = vmax.f32 %v5355, %v5356
    %v5358 = vrot.slane %v5357, 1
    %v5359 = vmax.f32 %v5357, %v5358
    %v5360 = vsel %vm5072, %v4964, -inf
    %v5361 = vrot.slane %v5360, 4
    %v5362 = vmax.f32 %v5360, %v5361
    %v5363 = vrot.slane %v5362, 2
    %v5364 = vmax.f32 %v5362, %v5363
    %v5365 = vrot.slane %v5364, 1
    %v5366 = vmax.f32 %v5364, %v5365
    %v5367 = vsel %vm5072, %v4773, -inf
    %v5368 = vrot.slane %v5367, 4
    %v5369 = vmax.f32 %v5367, %v5368
    %v5370 = vrot.slane %v5369, 2
    %v5371 = vmax.f32 %v5369, %v5370
    %v5372 = vrot.slane %v5371, 1
    %v5373 = vmax.f32 %v5371, %v5372
    %v5374 = vsel %vm5072, %v4965, -inf
    %v5375 = vrot.slane %v5374, 4
    %v5376 = vmax.f32 %v5374, %v5375
    %v5377 = vrot.slane %v5376, 2
    %v5378 = vmax.f32 %v5376, %v5377
    %v5379 = vrot.slane %v5378, 1
    %v5380 = vmax.f32 %v5378, %v5379
    %v5381 = vsel %vm5072, %v4774, -inf
    %v5382 = vrot.slane %v5381, 4
    %v5383 = vmax.f32 %v5381, %v5382
    %v5384 = vrot.slane %v5383, 2
    %v5385 = vmax.f32 %v5383, %v5384
    %v5386 = vrot.slane %v5385, 1
    %v5387 = vmax.f32 %v5385, %v5386
    %v5388 = vsel %vm5072, %v4966, -inf
    %v5389 = vrot.slane %v5388, 4
    %v5390 = vmax.f32 %v5388, %v5389
    %v5391 = vrot.slane %v5390, 2
    %v5392 = vmax.f32 %v5390, %v5391
    %v5393 = vrot.slane %v5392, 1
    %v5394 = vmax.f32 %v5392, %v5393
    %v5395 = vsel %vm5072, %v4775, -inf
    %v5396 = vrot.slane %v5395, 4
    %v5397 = vmax.f32 %v5395, %v5396
    %v5398 = vrot.slane %v5397, 2
    %v5399 = vmax.f32 %v5397, %v5398
    %v5400 = vrot.slane %v5399, 1
    %v5401 = vmax.f32 %v5399, %v5400
    %v5402 = vsel %vm5072, %v4967, -inf
    %v5403 = vrot.slane %v5402, 4
    %v5404 = vmax.f32 %v5402, %v5403
    %v5405 = vrot.slane %v5404, 2
    %v5406 = vmax.f32 %v5404, %v5405
    %v5407 = vrot.slane %v5406, 1
    %v5408 = vmax.f32 %v5406, %v5407
    %v5409 = vsel %vm5072, %v4776, -inf
    %v5410 = vrot.slane %v5409, 4
    %v5411 = vmax.f32 %v5409, %v5410
    %v5412 = vrot.slane %v5411, 2
    %v5413 = vmax.f32 %v5411, %v5412
    %v5414 = vrot.slane %v5413, 1
    %v5415 = vmax.f32 %v5413, %v5414
    %v5416 = vsel %vm5072, %v4968, -inf
    %v5417 = vrot.slane %v5416, 4
    %v5418 = vmax.f32 %v5416, %v5417
    %v5419 = vrot.slane %v5418, 2
    %v5420 = vmax.f32 %v5418, %v5419
    %v5421 = vrot.slane %v5420, 1
    %v5422 = vmax.f32 %v5420, %v5421
    %v5423 = vsel %vm5072, %v4777, -inf
    %v5424 = vrot.slane %v5423, 4
    %v5425 = vmax.f32 %v5423, %v5424
    %v5426 = vrot.slane %v5425, 2
    %v5427 = vmax.f32 %v5425, %v5426
    %v5428 = vrot.slane %v5427, 1
    %v5429 = vmax.f32 %v5427, %v5428
    %v5430 = vsel %vm5072, %v4969, -inf
    %v5431 = vrot.slane %v5430, 4
    %v5432 = vmax.f32 %v5430, %v5431
    %v5433 = vrot.slane %v5432, 2
    %v5434 = vmax.f32 %v5432, %v5433
    %v5435 = vrot.slane %v5434, 1
    %v5436 = vmax.f32 %v5434, %v5435
    %v5437 = vsel %vm5072, %v4778, -inf
    %v5438 = vrot.slane %v5437, 4
    %v5439 = vmax.f32 %v5437, %v5438
    %v5440 = vrot.slane %v5439, 2
    %v5441 = vmax.f32 %v5439, %v5440
    %v5442 = vrot.slane %v5441, 1
    %v5443 = vmax.f32 %v5441, %v5442
    %v5444 = vsel %vm5072, %v4970, -inf
    %v5445 = vrot.slane %v5444, 4
    %v5446 = vmax.f32 %v5444, %v5445
    %v5447 = vrot.slane %v5446, 2
    %v5448 = vmax.f32 %v5446, %v5447
    %v5449 = vrot.slane %v5448, 1
    %v5450 = vmax.f32 %v5448, %v5449
    %v5451 = vsel %vm5072, %v4779, -inf
    %v5452 = vrot.slane %v5451, 4
    %v5453 = vmax.f32 %v5451, %v5452
    %v5454 = vrot.slane %v5453, 2
    %v5455 = vmax.f32 %v5453, %v5454
    %v5456 = vrot.slane %v5455, 1
    %v5457 = vmax.f32 %v5455, %v5456
    %v5458 = vsel %vm5072, %v4971, -inf
    %v5459 = vrot.slane %v5458, 4
    %v5460 = vmax.f32 %v5458, %v5459
    %v5461 = vrot.slane %v5460, 2
    %v5462 = vmax.f32 %v5460, %v5461
    %v5463 = vrot.slane %v5462, 1
    %v5464 = vmax.f32 %v5462, %v5463
    %v5465 = vsel %vm5072, %v4780, -inf
    %v5466 = vrot.slane %v5465, 4
    %v5467 = vmax.f32 %v5465, %v5466
    %v5468 = vrot.slane %v5467, 2
    %v5469 = vmax.f32 %v5467, %v5468
    %v5470 = vrot.slane %v5469, 1
    %v5471 = vmax.f32 %v5469, %v5470
    %v5472 = vsel %vm5072, %v4972, -inf
    %v5473 = vrot.slane %v5472, 4
    %v5474 = vmax.f32 %v5472, %v5473
    %v5475 = vrot.slane %v5474, 2
    %v5476 = vmax.f32 %v5474, %v5475
    %v5477 = vrot.slane %v5476, 1
    %v5478 = vmax.f32 %v5476, %v5477
    %v5479 = vsel %vm5072, %v4781, -inf
    %v5480 = vrot.slane %v5479, 4
    %v5481 = vmax.f32 %v5479, %v5480
    %v5482 = vrot.slane %v5481, 2
    %v5483 = vmax.f32 %v5481, %v5482
    %v5484 = vrot.slane %v5483, 1
    %v5485 = vmax.f32 %v5483, %v5484
    %v5486 = vsel %vm5072, %v4973, -inf
    %v5487 = vrot.slane %v5486, 4
    %v5488 = vmax.f32 %v5486, %v5487
    %v5489 = vrot.slane %v5488, 2
    %v5490 = vmax.f32 %v5488, %v5489
    %v5491 = vrot.slane %v5490, 1
    %v5492 = vmax.f32 %v5490, %v5491
    %v5493 = vsel %vm5072, %v4782, -inf
    %v5494 = vrot.slane %v5493, 4
    %v5495 = vmax.f32 %v5493, %v5494
    %v5496 = vrot.slane %v5495, 2
    %v5497 = vmax.f32 %v5495, %v5496
    %v5498 = vrot.slane %v5497, 1
    %v5499 = vmax.f32 %v5497, %v5498
    %v5500 = vsel %vm5072, %v4974, -inf
    %v5501 = vrot.slane %v5500, 4
    %v5502 = vmax.f32 %v5500, %v5501
    %v5503 = vrot.slane %v5502, 2
    %v5504 = vmax.f32 %v5502, %v5503
    %v5505 = vrot.slane %v5504, 1
    %v5506 = vmax.f32 %v5504, %v5505
    %v5507 = vsel %vm5072, %v4783, -inf
    %v5508 = vrot.slane %v5507, 4
    %v5509 = vmax.f32 %v5507, %v5508
    %v5510 = vrot.slane %v5509, 2
    %v5511 = vmax.f32 %v5509, %v5510
    %v5512 = vrot.slane %v5511, 1
    %v5513 = vmax.f32 %v5511, %v5512
    %v5514 = vsel %vm5072, %v4975, -inf
    %v5515 = vrot.slane %v5514, 4
    %v5516 = vmax.f32 %v5514, %v5515
    %v5517 = vrot.slane %v5516, 2
    %v5518 = vmax.f32 %v5516, %v5517
    %v5519 = vrot.slane %v5518, 1
    %v5520 = vmax.f32 %v5518, %v5519
    %v5521 = vsel %vm5072, %v4784, -inf
    %v5522 = vrot.slane %v5521, 4
    %v5523 = vmax.f32 %v5521, %v5522
    %v5524 = vrot.slane %v5523, 2
    %v5525 = vmax.f32 %v5523, %v5524
    %v5526 = vrot.slane %v5525, 1
    %v5527 = vmax.f32 %v5525, %v5526
    %v5528 = vsel %vm5072, %v4976, -inf
    %v5529 = vrot.slane %v5528, 4
    %v5530 = vmax.f32 %v5528, %v5529
    %v5531 = vrot.slane %v5530, 2
    %v5532 = vmax.f32 %v5530, %v5531
    %v5533 = vrot.slane %v5532, 1
    %v5534 = vmax.f32 %v5532, %v5533
    %v5535 = vsel %vm5072, %v4785, -inf
    %v5536 = vrot.slane %v5535, 4
    %v5537 = vmax.f32 %v5535, %v5536
    %v5538 = vrot.slane %v5537, 2
    %v5539 = vmax.f32 %v5537, %v5538
    %v5540 = vrot.slane %v5539, 1
    %v5541 = vmax.f32 %v5539, %v5540
    %v5542 = vsel %vm5072, %v4977, -inf
    %v5543 = vrot.slane %v5542, 4
    %v5544 = vmax.f32 %v5542, %v5543
    %v5545 = vrot.slane %v5544, 2
    %v5546 = vmax.f32 %v5544, %v5545
    %v5547 = vrot.slane %v5546, 1
    %v5548 = vmax.f32 %v5546, %v5547
    %v5549 = vsel %vm5072, %v4786, -inf
    %v5550 = vrot.slane %v5549, 4
    %v5551 = vmax.f32 %v5549, %v5550
    %v5552 = vrot.slane %v5551, 2
    %v5553 = vmax.f32 %v5551, %v5552
    %v5554 = vrot.slane %v5553, 1
    %v5555 = vmax.f32 %v5553, %v5554
    %v5556 = vsel %vm5072, %v4978, -inf
    %v5557 = vrot.slane %v5556, 4
    %v5558 = vmax.f32 %v5556, %v5557
    %v5559 = vrot.slane %v5558, 2
    %v5560 = vmax.f32 %v5558, %v5559
    %v5561 = vrot.slane %v5560, 1
    %v5562 = vmax.f32 %v5560, %v5561
    %v5563 = vsel %vm5072, %v4787, -inf
    %v5564 = vrot.slane %v5563, 4
    %v5565 = vmax.f32 %v5563, %v5564
    %v5566 = vrot.slane %v5565, 2
    %v5567 = vmax.f32 %v5565, %v5566
    %v5568 = vrot.slane %v5567, 1
    %v5569 = vmax.f32 %v5567, %v5568
    %v5570 = vsel %vm5072, %v4979, -inf
    %v5571 = vrot.slane %v5570, 4
    %v5572 = vmax.f32 %v5570, %v5571
    %v5573 = vrot.slane %v5572, 2
    %v5574 = vmax.f32 %v5572, %v5573
    %v5575 = vrot.slane %v5574, 1
    %v5576 = vmax.f32 %v5574, %v5575
    %v5577 = vsel %vm5072, %v4788, -inf
    %v5578 = vrot.slane %v5577, 4
    %v5579 = vmax.f32 %v5577, %v5578
    %v5580 = vrot.slane %v5579, 2
    %v5581 = vmax.f32 %v5579, %v5580
    %v5582 = vrot.slane %v5581, 1
    %v5583 = vmax.f32 %v5581, %v5582
    %v5584 = vsel %vm5072, %v4980, -inf
    %v5585 = vrot.slane %v5584, 4
    %v5586 = vmax.f32 %v5584, %v5585
    %v5587 = vrot.slane %v5586, 2
    %v5588 = vmax.f32 %v5586, %v5587
    %v5589 = vrot.slane %v5588, 1
    %v5590 = vmax.f32 %v5588, %v5589
    %v5591 = vsel %vm5072, %v4789, -inf
    %v5592 = vrot.slane %v5591, 4
    %v5593 = vmax.f32 %v5591, %v5592
    %v5594 = vrot.slane %v5593, 2
    %v5595 = vmax.f32 %v5593, %v5594
    %v5596 = vrot.slane %v5595, 1
    %v5597 = vmax.f32 %v5595, %v5596
    %v5598 = vsel %vm5072, %v4981, -inf
    %v5599 = vrot.slane %v5598, 4
    %v5600 = vmax.f32 %v5598, %v5599
    %v5601 = vrot.slane %v5600, 2
    %v5602 = vmax.f32 %v5600, %v5601
    %v5603 = vrot.slane %v5602, 1
    %v5604 = vmax.f32 %v5602, %v5603
    %v5605 = vsel %vm5072, %v4790, -inf
    %v5606 = vrot.slane %v5605, 4
    %v5607 = vmax.f32 %v5605, %v5606
    %v5608 = vrot.slane %v5607, 2
    %v5609 = vmax.f32 %v5607, %v5608
    %v5610 = vrot.slane %v5609, 1
    %v5611 = vmax.f32 %v5609, %v5610
    %v5612 = vsel %vm5072, %v4982, -inf
    %v5613 = vrot.slane %v5612, 4
    %v5614 = vmax.f32 %v5612, %v5613
    %v5615 = vrot.slane %v5614, 2
    %v5616 = vmax.f32 %v5614, %v5615
    %v5617 = vrot.slane %v5616, 1
    %v5618 = vmax.f32 %v5616, %v5617
    %v5619 = vsel %vm5072, %v4791, -inf
    %v5620 = vrot.slane %v5619, 4
    %v5621 = vmax.f32 %v5619, %v5620
    %v5622 = vrot.slane %v5621, 2
    %v5623 = vmax.f32 %v5621, %v5622
    %v5624 = vrot.slane %v5623, 1
    %v5625 = vmax.f32 %v5623, %v5624
    %v5626 = vsel %vm5072, %v4983, -inf
    %v5627 = vrot.slane %v5626, 4
    %v5628 = vmax.f32 %v5626, %v5627
    %v5629 = vrot.slane %v5628, 2
    %v5630 = vmax.f32 %v5628, %v5629
    %v5631 = vrot.slane %v5630, 1
    %v5632 = vmax.f32 %v5630, %v5631
    %v5633 = vsel %vm5072, %v4792, -inf
    %v5634 = vrot.slane %v5633, 4
    %v5635 = vmax.f32 %v5633, %v5634
    %v5636 = vrot.slane %v5635, 2
    %v5637 = vmax.f32 %v5635, %v5636
    %v5638 = vrot.slane %v5637, 1
    %v5639 = vmax.f32 %v5637, %v5638
    %v5640 = vsel %vm5072, %v4984, -inf
    %v5641 = vrot.slane %v5640, 4
    %v5642 = vmax.f32 %v5640, %v5641
    %v5643 = vrot.slane %v5642, 2
    %v5644 = vmax.f32 %v5642, %v5643
    %v5645 = vrot.slane %v5644, 1
    %v5646 = vmax.f32 %v5644, %v5645
    %v5647 = vsel %vm5072, %v4793, -inf
    %v5648 = vrot.slane %v5647, 4
    %v5649 = vmax.f32 %v5647, %v5648
    %v5650 = vrot.slane %v5649, 2
    %v5651 = vmax.f32 %v5649, %v5650
    %v5652 = vrot.slane %v5651, 1
    %v5653 = vmax.f32 %v5651, %v5652
    %v5654 = vsel %vm5072, %v4985, -inf
    %v5655 = vrot.slane %v5654, 4
    %v5656 = vmax.f32 %v5654, %v5655
    %v5657 = vrot.slane %v5656, 2
    %v5658 = vmax.f32 %v5656, %v5657
    %v5659 = vrot.slane %v5658, 1
    %v5660 = vmax.f32 %v5658, %v5659
    %v5661 = vsel %vm5072, %v4794, -inf
    %v5662 = vrot.slane %v5661, 4
    %v5663 = vmax.f32 %v5661, %v5662
    %v5664 = vrot.slane %v5663, 2
    %v5665 = vmax.f32 %v5663, %v5664
    %v5666 = vrot.slane %v5665, 1
    %v5667 = vmax.f32 %v5665, %v5666
    %v5668 = vsel %vm5072, %v4986, -inf
    %v5669 = vrot.slane %v5668, 4
    %v5670 = vmax.f32 %v5668, %v5669
    %v5671 = vrot.slane %v5670, 2
    %v5672 = vmax.f32 %v5670, %v5671
    %v5673 = vrot.slane %v5672, 1
    %v5674 = vmax.f32 %v5672, %v5673
    %v5675 = vsel %vm5072, %v4795, -inf
    %v5676 = vrot.slane %v5675, 4
    %v5677 = vmax.f32 %v5675, %v5676
    %v5678 = vrot.slane %v5677, 2
    %v5679 = vmax.f32 %v5677, %v5678
    %v5680 = vrot.slane %v5679, 1
    %v5681 = vmax.f32 %v5679, %v5680
    %v5682 = vsel %vm5072, %v4987, -inf
    %v5683 = vrot.slane %v5682, 4
    %v5684 = vmax.f32 %v5682, %v5683
    %v5685 = vrot.slane %v5684, 2
    %v5686 = vmax.f32 %v5684, %v5685
    %v5687 = vrot.slane %v5686, 1
    %v5688 = vmax.f32 %v5686, %v5687
    %v5689 = vsel %vm5072, %v4796, -inf
    %v5690 = vrot.slane %v5689, 4
    %v5691 = vmax.f32 %v5689, %v5690
    %v5692 = vrot.slane %v5691, 2
    %v5693 = vmax.f32 %v5691, %v5692
    %v5694 = vrot.slane %v5693, 1
    %v5695 = vmax.f32 %v5693, %v5694
    %v5696 = vsel %vm5072, %v4988, -inf
    %v5697 = vrot.slane %v5696, 4
    %v5698 = vmax.f32 %v5696, %v5697
    %v5699 = vrot.slane %v5698, 2
    %v5700 = vmax.f32 %v5698, %v5699
    %v5701 = vrot.slane %v5700, 1
    %v5702 = vmax.f32 %v5700, %v5701
    %v5703 = vsel %vm5072, %v4797, -inf
    %v5704 = vrot.slane %v5703, 4
    %v5705 = vmax.f32 %v5703, %v5704
    %v5706 = vrot.slane %v5705, 2
    %v5707 = vmax.f32 %v5705, %v5706
    %v5708 = vrot.slane %v5707, 1
    %v5709 = vmax.f32 %v5707, %v5708
    %v5710 = vsel %vm5072, %v4989, -inf
    %v5711 = vrot.slane %v5710, 4
    %v5712 = vmax.f32 %v5710, %v5711
    %v5713 = vrot.slane %v5712, 2
    %v5714 = vmax.f32 %v5712, %v5713
    %v5715 = vrot.slane %v5714, 1
    %v5716 = vmax.f32 %v5714, %v5715
    %v5717 = vsel %vm5072, %v4798, -inf
    %v5718 = vrot.slane %v5717, 4
    %v5719 = vmax.f32 %v5717, %v5718
    %v5720 = vrot.slane %v5719, 2
    %v5721 = vmax.f32 %v5719, %v5720
    %v5722 = vrot.slane %v5721, 1
    %v5723 = vmax.f32 %v5721, %v5722
    %v5724 = vsel %vm5072, %v4990, -inf
    %v5725 = vrot.slane %v5724, 4
    %v5726 = vmax.f32 %v5724, %v5725
    %v5727 = vrot.slane %v5726, 2
    %v5728 = vmax.f32 %v5726, %v5727
    %v5729 = vrot.slane %v5728, 1
    %v5730 = vmax.f32 %v5728, %v5729
    %v5731 = vsel %vm5072, %v4799, -inf
    %v5732 = vrot.slane %v5731, 4
    %v5733 = vmax.f32 %v5731, %v5732
    %v5734 = vrot.slane %v5733, 2
    %v5735 = vmax.f32 %v5733, %v5734
    %v5736 = vrot.slane %v5735, 1
    %v5737 = vmax.f32 %v5735, %v5736
    %v5738 = vsel %vm5072, %v4991, -inf
    %v5739 = vrot.slane %v5738, 4
    %v5740 = vmax.f32 %v5738, %v5739
    %v5741 = vrot.slane %v5740, 2
    %v5742 = vmax.f32 %v5740, %v5741
    %v5743 = vrot.slane %v5742, 1
    %v5744 = vmax.f32 %v5742, %v5743
    %v5745 = vsel %vm5072, %v4800, -inf
    %v5746 = vrot.slane %v5745, 4
    %v5747 = vmax.f32 %v5745, %v5746
    %v5748 = vrot.slane %v5747, 2
    %v5749 = vmax.f32 %v5747, %v5748
    %v5750 = vrot.slane %v5749, 1
    %v5751 = vmax.f32 %v5749, %v5750
    %v5752 = vsel %vm5072, %v4992, -inf
    %v5753 = vrot.slane %v5752, 4
    %v5754 = vmax.f32 %v5752, %v5753
    %v5755 = vrot.slane %v5754, 2
    %v5756 = vmax.f32 %v5754, %v5755
    %v5757 = vrot.slane %v5756, 1
    %v5758 = vmax.f32 %v5756, %v5757
    %v5759 = vsel %vm5072, %v4801, -inf
    %v5760 = vrot.slane %v5759, 4
    %v5761 = vmax.f32 %v5759, %v5760
    %v5762 = vrot.slane %v5761, 2
    %v5763 = vmax.f32 %v5761, %v5762
    %v5764 = vrot.slane %v5763, 1
    %v5765 = vmax.f32 %v5763, %v5764
    %v5766 = vsel %vm5072, %v4993, -inf
    %v5767 = vrot.slane %v5766, 4
    %v5768 = vmax.f32 %v5766, %v5767
    %v5769 = vrot.slane %v5768, 2
    %v5770 = vmax.f32 %v5768, %v5769
    %v5771 = vrot.slane %v5770, 1
    %v5772 = vmax.f32 %v5770, %v5771
    %v5773 = vsel %vm5072, %v4802, -inf
    %v5774 = vrot.slane %v5773, 4
    %v5775 = vmax.f32 %v5773, %v5774
    %v5776 = vrot.slane %v5775, 2
    %v5777 = vmax.f32 %v5775, %v5776
    %v5778 = vrot.slane %v5777, 1
    %v5779 = vmax.f32 %v5777, %v5778
    %v5780 = vsel %vm5072, %v4994, -inf
    %v5781 = vrot.slane %v5780, 4
    %v5782 = vmax.f32 %v5780, %v5781
    %v5783 = vrot.slane %v5782, 2
    %v5784 = vmax.f32 %v5782, %v5783
    %v5785 = vrot.slane %v5784, 1
    %v5786 = vmax.f32 %v5784, %v5785
    %v5787 = vsel %vm5072, %v4803, -inf
    %v5788 = vrot.slane %v5787, 4
    %v5789 = vmax.f32 %v5787, %v5788
    %v5790 = vrot.slane %v5789, 2
    %v5791 = vmax.f32 %v5789, %v5790
    %v5792 = vrot.slane %v5791, 1
    %v5793 = vmax.f32 %v5791, %v5792
    %v5794 = vsel %vm5072, %v4995, -inf
    %v5795 = vrot.slane %v5794, 4
    %v5796 = vmax.f32 %v5794, %v5795
    %v5797 = vrot.slane %v5796, 2
    %v5798 = vmax.f32 %v5796, %v5797
    %v5799 = vrot.slane %v5798, 1
    %v5800 = vmax.f32 %v5798, %v5799
    %v5801 = vsel %vm5072, %v4804, -inf
    %v5802 = vrot.slane %v5801, 4
    %v5803 = vmax.f32 %v5801, %v5802
    %v5804 = vrot.slane %v5803, 2
    %v5805 = vmax.f32 %v5803, %v5804
    %v5806 = vrot.slane %v5805, 1
    %v5807 = vmax.f32 %v5805, %v5806
    %v5808 = vsel %vm5072, %v4996, -inf
    %v5809 = vrot.slane %v5808, 4
    %v5810 = vmax.f32 %v5808, %v5809
    %v5811 = vrot.slane %v5810, 2
    %v5812 = vmax.f32 %v5810, %v5811
    %v5813 = vrot.slane %v5812, 1
    %v5814 = vmax.f32 %v5812, %v5813
    %v5815 = vsel %vm5072, %v4805, -inf
    %v5816 = vrot.slane %v5815, 4
    %v5817 = vmax.f32 %v5815, %v5816
    %v5818 = vrot.slane %v5817, 2
    %v5819 = vmax.f32 %v5817, %v5818
    %v5820 = vrot.slane %v5819, 1
    %v5821 = vmax.f32 %v5819, %v5820
    %v5822 = vsel %vm5072, %v4997, -inf
    %v5823 = vrot.slane %v5822, 4
    %v5824 = vmax.f32 %v5822, %v5823
    %v5825 = vrot.slane %v5824, 2
    %v5826 = vmax.f32 %v5824, %v5825
    %v5827 = vrot.slane %v5826, 1
    %v5828 = vmax.f32 %v5826, %v5827
    %v5829 = vsel %vm5072, %v4806, -inf
    %v5830 = vrot.slane %v5829, 4
    %v5831 = vmax.f32 %v5829, %v5830
    %v5832 = vrot.slane %v5831, 2
    %v5833 = vmax.f32 %v5831, %v5832
    %v5834 = vrot.slane %v5833, 1
    %v5835 = vmax.f32 %v5833, %v5834
    %v5836 = vsel %vm5072, %v4998, -inf
    %v5837 = vrot.slane %v5836, 4
    %v5838 = vmax.f32 %v5836, %v5837
    %v5839 = vrot.slane %v5838, 2
    %v5840 = vmax.f32 %v5838, %v5839
    %v5841 = vrot.slane %v5840, 1
    %v5842 = vmax.f32 %v5840, %v5841
    %v5843 = vsel %vm5072, %v4807, -inf
    %v5844 = vrot.slane %v5843, 4
    %v5845 = vmax.f32 %v5843, %v5844
    %v5846 = vrot.slane %v5845, 2
    %v5847 = vmax.f32 %v5845, %v5846
    %v5848 = vrot.slane %v5847, 1
    %v5849 = vmax.f32 %v5847, %v5848
    %v5850 = vsel %vm5072, %v4999, -inf
    %v5851 = vrot.slane %v5850, 4
    %v5852 = vmax.f32 %v5850, %v5851
    %v5853 = vrot.slane %v5852, 2
    %v5854 = vmax.f32 %v5852, %v5853
    %v5855 = vrot.slane %v5854, 1
    %v5856 = vmax.f32 %v5854, %v5855
    %v5857 = vsel %vm5072, %v4808, -inf
    %v5858 = vrot.slane %v5857, 4
    %v5859 = vmax.f32 %v5857, %v5858
    %v5860 = vrot.slane %v5859, 2
    %v5861 = vmax.f32 %v5859, %v5860
    %v5862 = vrot.slane %v5861, 1
    %v5863 = vmax.f32 %v5861, %v5862
    %v5864 = vsel %vm5072, %v5000, -inf
    %v5865 = vrot.slane %v5864, 4
    %v5866 = vmax.f32 %v5864, %v5865
    %v5867 = vrot.slane %v5866, 2
    %v5868 = vmax.f32 %v5866, %v5867
    %v5869 = vrot.slane %v5868, 1
    %v5870 = vmax.f32 %v5868, %v5869
    %v5871 = vsel %vm5072, %v4809, -inf
    %v5872 = vrot.slane %v5871, 4
    %v5873 = vmax.f32 %v5871, %v5872
    %v5874 = vrot.slane %v5873, 2
    %v5875 = vmax.f32 %v5873, %v5874
    %v5876 = vrot.slane %v5875, 1
    %v5877 = vmax.f32 %v5875, %v5876
    %v5878 = vsel %vm5072, %v5001, -inf
    %v5879 = vrot.slane %v5878, 4
    %v5880 = vmax.f32 %v5878, %v5879
    %v5881 = vrot.slane %v5880, 2
    %v5882 = vmax.f32 %v5880, %v5881
    %v5883 = vrot.slane %v5882, 1
    %v5884 = vmax.f32 %v5882, %v5883
    %v5885 = vsel %vm5072, %v4810, -inf
    %v5886 = vrot.slane %v5885, 4
    %v5887 = vmax.f32 %v5885, %v5886
    %v5888 = vrot.slane %v5887, 2
    %v5889 = vmax.f32 %v5887, %v5888
    %v5890 = vrot.slane %v5889, 1
    %v5891 = vmax.f32 %v5889, %v5890
    %v5892 = vsel %vm5072, %v5002, -inf
    %v5893 = vrot.slane %v5892, 4
    %v5894 = vmax.f32 %v5892, %v5893
    %v5895 = vrot.slane %v5894, 2
    %v5896 = vmax.f32 %v5894, %v5895
    %v5897 = vrot.slane %v5896, 1
    %v5898 = vmax.f32 %v5896, %v5897
    %v5899 = vsel %vm5072, %v4811, -inf
    %v5900 = vrot.slane %v5899, 4
    %v5901 = vmax.f32 %v5899, %v5900
    %v5902 = vrot.slane %v5901, 2
    %v5903 = vmax.f32 %v5901, %v5902
    %v5904 = vrot.slane %v5903, 1
    %v5905 = vmax.f32 %v5903, %v5904
    %v5906 = vsel %vm5072, %v5003, -inf
    %v5907 = vrot.slane %v5906, 4
    %v5908 = vmax.f32 %v5906, %v5907
    %v5909 = vrot.slane %v5908, 2
    %v5910 = vmax.f32 %v5908, %v5909
    %v5911 = vrot.slane %v5910, 1
    %v5912 = vmax.f32 %v5910, %v5911
    %v5913 = vsel %vm5072, %v4812, -inf
    %v5914 = vrot.slane %v5913, 4
    %v5915 = vmax.f32 %v5913, %v5914
    %v5916 = vrot.slane %v5915, 2
    %v5917 = vmax.f32 %v5915, %v5916
    %v5918 = vrot.slane %v5917, 1
    %v5919 = vmax.f32 %v5917, %v5918
    %v5920 = vsel %vm5072, %v5004, -inf
    %v5921 = vrot.slane %v5920, 4
    %v5922 = vmax.f32 %v5920, %v5921
    %v5923 = vrot.slane %v5922, 2
    %v5924 = vmax.f32 %v5922, %v5923
    %v5925 = vrot.slane %v5924, 1
    %v5926 = vmax.f32 %v5924, %v5925
    %v5927 = vsel %vm5072, %v4813, -inf
    %v5928 = vrot.slane %v5927, 4
    %v5929 = vmax.f32 %v5927, %v5928
    %v5930 = vrot.slane %v5929, 2
    %v5931 = vmax.f32 %v5929, %v5930
    %v5932 = vrot.slane %v5931, 1
    %v5933 = vmax.f32 %v5931, %v5932
    %v5934 = vsel %vm5072, %v5005, -inf
    %v5935 = vrot.slane %v5934, 4
    %v5936 = vmax.f32 %v5934, %v5935
    %v5937 = vrot.slane %v5936, 2
    %v5938 = vmax.f32 %v5936, %v5937
    %v5939 = vrot.slane %v5938, 1
    %v5940 = vmax.f32 %v5938, %v5939
    %v5941 = vsel %vm5072, %v4814, -inf
    %v5942 = vrot.slane %v5941, 4
    %v5943 = vmax.f32 %v5941, %v5942
    %v5944 = vrot.slane %v5943, 2
    %v5945 = vmax.f32 %v5943, %v5944
    %v5946 = vrot.slane %v5945, 1
    %v5947 = vmax.f32 %v5945, %v5946
    %v5948 = vsel %vm5072, %v5006, -inf
    %v5949 = vrot.slane %v5948, 4
    %v5950 = vmax.f32 %v5948, %v5949
    %v5951 = vrot.slane %v5950, 2
    %v5952 = vmax.f32 %v5950, %v5951
    %v5953 = vrot.slane %v5952, 1
    %v5954 = vmax.f32 %v5952, %v5953
    %v5955 = vsel %vm5072, %v4815, -inf
    %v5956 = vrot.slane %v5955, 4
    %v5957 = vmax.f32 %v5955, %v5956
    %v5958 = vrot.slane %v5957, 2
    %v5959 = vmax.f32 %v5957, %v5958
    %v5960 = vrot.slane %v5959, 1
    %v5961 = vmax.f32 %v5959, %v5960
    %v5962 = vsel %vm5072, %v5007, -inf
    %v5963 = vrot.slane %v5962, 4
    %v5964 = vmax.f32 %v5962, %v5963
    %v5965 = vrot.slane %v5964, 2
    %v5966 = vmax.f32 %v5964, %v5965
    %v5967 = vrot.slane %v5966, 1
    %v5968 = vmax.f32 %v5966, %v5967
    %v5969 = vld [vmem:[%s2] sm:$0xf]
    %v5970 = vld [vmem:[%s2 + $0x4] sm:$0xf]
    %v5971 = vld [vmem:[%s2 + $0x8] sm:$0xf]
    %v5972 = vld [vmem:[%s2 + $0xc] sm:$0xf]
    %v5973 = vld [vmem:[%s2 + $0x10] sm:$0xf]
    %v5974 = vld [vmem:[%s2 + $0x14] sm:$0xf]
    %v5975 = vld [vmem:[%s2 + $0x18] sm:$0xf]
    %v5976 = vld [vmem:[%s2 + $0x1c] sm:$0xf]
    %v5977 = vpack.c.bf16 %v5079, %v5079
    %v5978 = vpack.c.bf16 %v5086, %v5086
    %v5979 = vpack.c.bf16 %v5093, %v5093
    %v5980 = vpack.c.bf16 %v5100, %v5100
    %v5981 = vpack.c.bf16 %v5107, %v5107
    %v5982 = vpack.c.bf16 %v5114, %v5114
    %v5983 = vpack.c.bf16 %v5121, %v5121
    %v5984 = vpack.c.bf16 %v5128, %v5128
    %v5985 = vpack.c.bf16 %v5135, %v5135
    %v5986 = vpack.c.bf16 %v5142, %v5142
    %v5987 = vpack.c.bf16 %v5149, %v5149
    %v5988 = vpack.c.bf16 %v5156, %v5156
    %v5989 = vpack.c.bf16 %v5163, %v5163
    %v5990 = vpack.c.bf16 %v5170, %v5170
    %v5991 = vpack.c.bf16 %v5177, %v5177
    %v5992 = vpack.c.bf16 %v5184, %v5184
    %v5993 = vpack.c.bf16 %v5191, %v5191
    %v5994 = vpack.c.bf16 %v5198, %v5198
    %v5995 = vpack.c.bf16 %v5205, %v5205
    %v5996 = vpack.c.bf16 %v5212, %v5212
    %v5997 = vpack.c.bf16 %v5219, %v5219
    %v5998 = vpack.c.bf16 %v5226, %v5226
    %v5999 = vpack.c.bf16 %v5233, %v5233
    %v6000 = vpack.c.bf16 %v5240, %v5240
    %v6001 = vpack.c.bf16 %v5247, %v5247
    %v6002 = vpack.c.bf16 %v5254, %v5254
    %v6003 = vpack.c.bf16 %v5261, %v5261
    %v6004 = vpack.c.bf16 %v5268, %v5268
    %v6005 = vpack.c.bf16 %v5275, %v5275
    %v6006 = vpack.c.bf16 %v5282, %v5282
    %v6007 = vpack.c.bf16 %v5289, %v5289
    %v6008 = vpack.c.bf16 %v5296, %v5296
    %v6009 = vpack.c.bf16 %v5303, %v5303
    %v6010 = vpack.c.bf16 %v5310, %v5310
    %v6011 = vpack.c.bf16 %v5317, %v5317
    %v6012 = vpack.c.bf16 %v5324, %v5324
    %v6013 = vpack.c.bf16 %v5331, %v5331
    %v6014 = vpack.c.bf16 %v5338, %v5338
    %v6015 = vpack.c.bf16 %v5345, %v5345
    %v6016 = vpack.c.bf16 %v5352, %v5352
    %v6017 = vpack.c.bf16 %v5359, %v5359
    %v6018 = vpack.c.bf16 %v5366, %v5366
    %v6019 = vpack.c.bf16 %v5373, %v5373
    %v6020 = vpack.c.bf16 %v5380, %v5380
    %v6021 = vpack.c.bf16 %v5387, %v5387
    %v6022 = vpack.c.bf16 %v5394, %v5394
    %v6023 = vpack.c.bf16 %v5401, %v5401
    %v6024 = vpack.c.bf16 %v5408, %v5408
    %v6025 = vpack.c.bf16 %v5415, %v5415
    %v6026 = vpack.c.bf16 %v5422, %v5422
    %v6027 = vpack.c.bf16 %v5429, %v5429
    %v6028 = vpack.c.bf16 %v5436, %v5436
    %v6029 = vpack.c.bf16 %v5443, %v5443
    %v6030 = vpack.c.bf16 %v5450, %v5450
    %v6031 = vpack.c.bf16 %v5457, %v5457
    %v6032 = vpack.c.bf16 %v5464, %v5464
    %v6033 = vpack.c.bf16 %v5471, %v5471
    %v6034 = vpack.c.bf16 %v5478, %v5478
    %v6035 = vpack.c.bf16 %v5485, %v5485
    %v6036 = vpack.c.bf16 %v5492, %v5492
    %v6037 = vpack.c.bf16 %v5499, %v5499
    %v6038 = vpack.c.bf16 %v5506, %v5506
    %v6039 = vpack.c.bf16 %v5513, %v5513
    %v6040 = vpack.c.bf16 %v5520, %v5520
    %v6105 = vunpack.c.l.b16 %v5977
    %v6106 = vunpack.c.l.b16 %v5978
    %v6107 = vunpack.c.l.b16 %v5979
    %v6108 = vunpack.c.l.b16 %v5980
    %v6109 = vunpack.c.l.b16 %v5981
    %v6110 = vunpack.c.l.b16 %v5982
    %v6111 = vunpack.c.l.b16 %v5983
    %v6112 = vunpack.c.l.b16 %v5984
    %v6113 = vunpack.c.l.b16 %v5985
    %v6114 = vunpack.c.l.b16 %v5986
    %v6115 = vunpack.c.l.b16 %v5987
    %v6116 = vunpack.c.l.b16 %v5988
    %v6117 = vunpack.c.l.b16 %v5989
    %v6118 = vunpack.c.l.b16 %v5990
    %v6119 = vunpack.c.l.b16 %v5991
    %v6120 = vunpack.c.l.b16 %v5992
    %v6121 = vunpack.c.l.b16 %v5993
    %v6122 = vunpack.c.l.b16 %v5994
    %v6123 = vunpack.c.l.b16 %v5995
    %v6124 = vunpack.c.l.b16 %v5996
    %v6125 = vunpack.c.l.b16 %v5997
    %v6126 = vunpack.c.l.b16 %v5998
    %v6127 = vunpack.c.l.b16 %v5999
    %v6128 = vunpack.c.l.b16 %v6000
    %v6129 = vunpack.c.l.b16 %v6001
    %v6130 = vunpack.c.l.b16 %v6002
    %v6131 = vunpack.c.l.b16 %v6003
    %v6132 = vunpack.c.l.b16 %v6004
    %v6133 = vunpack.c.l.b16 %v6005
    %v6134 = vunpack.c.l.b16 %v6006
    %v6135 = vunpack.c.l.b16 %v6007
    %v6136 = vunpack.c.l.b16 %v6008
    %v6137 = vunpack.c.l.b16 %v6009
    %v6138 = vunpack.c.l.b16 %v6010
    %v6139 = vunpack.c.l.b16 %v6011
    %v6140 = vunpack.c.l.b16 %v6012
    %v6141 = vunpack.c.l.b16 %v6013
    %v6142 = vunpack.c.l.b16 %v6014
    %v6143 = vunpack.c.l.b16 %v6015
    %v6144 = vunpack.c.l.b16 %v6016
    %v6145 = vunpack.c.l.b16 %v6017
    %v6146 = vunpack.c.l.b16 %v6018
    %v6147 = vunpack.c.l.b16 %v6019
    %v6148 = vunpack.c.l.b16 %v6020
    %v6149 = vunpack.c.l.b16 %v6021
    %v6150 = vunpack.c.l.b16 %v6022
    %v6151 = vunpack.c.l.b16 %v6023
    %v6152 = vunpack.c.l.b16 %v6024
    %v6153 = vunpack.c.l.b16 %v6025
    %v6154 = vunpack.c.l.b16 %v6026
    %v6155 = vunpack.c.l.b16 %v6027
    %v6156 = vunpack.c.l.b16 %v6028
    %v6157 = vunpack.c.l.b16 %v6029
    %v6158 = vunpack.c.l.b16 %v6030
    %v6159 = vunpack.c.l.b16 %v6031
    %v6160 = vunpack.c.l.b16 %v6032
    %v6161 = vunpack.c.l.b16 %v6033
    %v6162 = vunpack.c.l.b16 %v6034
    %v6163 = vunpack.c.l.b16 %v6035
    %v6164 = vunpack.c.l.b16 %v6036
    %v6165 = vunpack.c.l.b16 %v6037
    %v6166 = vunpack.c.l.b16 %v6038
    %v6167 = vunpack.c.l.b16 %v6039
    %v6168 = vunpack.c.l.b16 %v6040
    %vm6169 = vcmask 1041409
    %v6170 = vsel %vm6169, %v6106, %v6105
    %vm6171 = vcmask 1042434
    %v6172 = vsel %vm6171, %v6107, %v6170
    %vm6173 = vcmask 1043459
    %v6174 = vsel %vm6173, %v6108, %v6172
    %vm6175 = vcmask 1044484
    %v6176 = vsel %vm6175, %v6109, %v6174
    %vm6177 = vcmask 1045509
    %v6178 = vsel %vm6177, %v6110, %v6176
    %vm6179 = vcmask 1046534
    %v6180 = vsel %vm6179, %v6111, %v6178
    %vm6181 = vcmask 1047559
    %v6182 = vsel %vm6181, %v6112, %v6180
    %v6183 = vsel %vm6169, %v6114, %v6113
    %v6184 = vsel %vm6171, %v6115, %v6183
    %v6185 = vsel %vm6173, %v6116, %v6184
    %v6186 = vsel %vm6175, %v6117, %v6185
    %v6187 = vsel %vm6177, %v6118, %v6186
    %v6188 = vsel %vm6179, %v6119, %v6187
    %v6189 = vsel %vm6181, %v6120, %v6188
    %v6190 = vsel %vm6169, %v6122, %v6121
    %v6191 = vsel %vm6171, %v6123, %v6190
    %v6192 = vsel %vm6173, %v6124, %v6191
    %v6193 = vsel %vm6175, %v6125, %v6192
    %v6194 = vsel %vm6177, %v6126, %v6193
    %v6195 = vsel %vm6179, %v6127, %v6194
    %v6196 = vsel %vm6181, %v6128, %v6195
    %v6197 = vsel %vm6169, %v6130, %v6129
    %v6198 = vsel %vm6171, %v6131, %v6197
    %v6199 = vsel %vm6173, %v6132, %v6198
    %v6200 = vsel %vm6175, %v6133, %v6199
    %v6201 = vsel %vm6177, %v6134, %v6200
    %v6202 = vsel %vm6179, %v6135, %v6201
    %v6203 = vsel %vm6181, %v6136, %v6202
    %v6204 = vsel %vm6169, %v6138, %v6137
    %v6205 = vsel %vm6171, %v6139, %v6204
    %v6206 = vsel %vm6173, %v6140, %v6205
    %v6207 = vsel %vm6175, %v6141, %v6206
    %v6208 = vsel %vm6177, %v6142, %v6207
    %v6209 = vsel %vm6179, %v6143, %v6208
    %v6210 = vsel %vm6181, %v6144, %v6209
    %v6211 = vsel %vm6169, %v6146, %v6145
    %v6212 = vsel %vm6171, %v6147, %v6211
    %v6213 = vsel %vm6173, %v6148, %v6212
    %v6214 = vsel %vm6175, %v6149, %v6213
    %v6215 = vsel %vm6177, %v6150, %v6214
    %v6216 = vsel %vm6179, %v6151, %v6215
    %v6217 = vsel %vm6181, %v6152, %v6216
    %v6218 = vsel %vm6169, %v6154, %v6153
    %v6219 = vsel %vm6171, %v6155, %v6218
    %v6220 = vsel %vm6173, %v6156, %v6219
    %v6221 = vsel %vm6175, %v6157, %v6220
    %v6222 = vsel %vm6177, %v6158, %v6221
    %v6223 = vsel %vm6179, %v6159, %v6222
    %v6224 = vsel %vm6181, %v6160, %v6223
    %v6225 = vsel %vm6169, %v6162, %v6161
    %v6226 = vsel %vm6171, %v6163, %v6225
    %v6227 = vsel %vm6173, %v6164, %v6226
    %v6228 = vsel %vm6175, %v6165, %v6227
    %v6229 = vsel %vm6177, %v6166, %v6228
    %v6230 = vsel %vm6179, %v6167, %v6229
    %v6231 = vsel %vm6181, %v6168, %v6230
    %v6232 = vpack.c.b16 %v6189, %v6182
    %v6233 = vpack.c.b16 %v6203, %v6196
    %v6234 = vpack.c.b16 %v6217, %v6210
    %v6235 = vpack.c.b16 %v6231, %v6224
    %6240 = vst.msk [vmem:[#allocation3] sm:$0xff] %vm4210, %v6232
    %6241 = vst.msk [vmem:[#allocation3 + $0x10] sm:$0xff] %vm4210, %v6233
    %6242 = vst.msk [vmem:[#allocation3 + $0x20] sm:$0xff] %vm4210, %v6234
    %6243 = vst.msk [vmem:[#allocation3 + $0x30] sm:$0xff] %vm4210, %v6235
    %v6252 = vunpack.c.l.b16 %v5969
    %v6253 = vunpack.c.l.b16 %v5970
    %v6254 = vunpack.c.l.b16 %v5971
    %v6255 = vunpack.c.l.b16 %v5972
    %v6256 = vunpack.c.l.b16 %v5973
    %v6257 = vunpack.c.l.b16 %v5974
    %v6258 = vunpack.c.l.b16 %v5975
    %v6259 = vunpack.c.l.b16 %v5976
    %v6260 = vpack.c.b16 %v6253, %v6252
    %v6261 = vpack.c.b16 %v6255, %v6254
    %v6262 = vpack.c.b16 %v6257, %v6256
    %v6263 = vpack.c.b16 %v6259, %v6258
    %v6265 = vsel %vm4210, %v6260, 0
    %v6268 = vsel %vm4210, %v6261, 0
    %v6271 = vsel %vm4210, %v6262, 0
    %v6274 = vsel %vm4210, %v6263, 0
    %6276 = vmatprep.subr.bf16.mxu0 0
    %6277 = vmatpush1.bf16.msra.mxu0 %v6232
    %6278 = vmatprep.subr.bf16.mxu0 0
    %6279 = vmatpush1.bf16.msra.mxu0 %v6233
    %6280 = vmatprep.subr.bf16.mxu0 0
    %6281 = vmatpush1.bf16.msra.mxu0 %v6234
    %6282 = vmatprep.subr.bf16.mxu0 0
    %6283 = vmatpush1.bf16.msra.mxu0 %v6235
    %6284 = vmatprep.subr.bf16.mxu0 0
    %6285 = vmatpush1.bf16.msra.mxu0 0
    %6286 = vmatprep.subr.bf16.mxu0 0
    %6287 = vmatpush1.bf16.msra.mxu0 0
    %6288 = vmatprep.subr.bf16.mxu0 0
    %6289 = vmatpush1.bf16.msra.mxu0 0
    %6290 = vmatprep.subr.bf16.mxu0 0
    %6291 = vmatpush1.bf16.msra.mxu0 0
    %6292 = vmatprep.subr.bf16.mxu0 0
    %6293 = vmatpush1.bf16.msra.mxu0 0
    %6294 = vmatprep.subr.bf16.mxu0 0
    %6295 = vmatpush1.bf16.msra.mxu0 0
    %6296 = vmatprep.subr.bf16.mxu0 0
    %6297 = vmatpush1.bf16.msra.mxu0 0
    %6298 = vmatprep.subr.bf16.mxu0 0
    %6299 = vmatpush1.bf16.msra.mxu0 0
    %6300 = vmatprep.subr.bf16.mxu0 0
    %6301 = vmatpush1.bf16.msra.mxu0 0
    %6302 = vmatprep.subr.bf16.mxu0 0
    %6303 = vmatpush1.bf16.msra.mxu0 0
    %6304 = vmatprep.subr.bf16.mxu0 0
    %6305 = vmatpush1.bf16.msra.mxu0 0
    %6306 = vmatprep.subr.bf16.mxu0 0
    %6307 = vmatpush1.bf16.msra.mxu0 0
    %6308 = vmatprep.mubr.bf16.mxu0 0
    %6309 = vmatmul.mubr.bf16.gmra.mrb[0].mxu0 %v6265
    %v6310 = vpop.f32.mrb[0].mxu0
    %v6311 = vadd.f32 0.0, %v6310
    %v6312 = vpop.f32.mrb[0].mxu0
    %v6313 = vpop.f32.mrb[0].mxu0
    %v6314 = vadd.f32 0.0, %v6313
    %v6315 = vpop.f32.mrb[0].mxu0
    %6316 = vmatprep.mubr.bf16.mxu0 0
    %6317 = vmatmul.mubr.bf16.gmra.mrb[0].mxu0 %v6268
    %v6318 = vpop.f32.mrb[0].mxu0
    %v6319 = vadd.f32 0.0, %v6318
    %v6320 = vpop.f32.mrb[0].mxu0
    %v6321 = vpop.f32.mrb[0].mxu0
    %v6322 = vadd.f32 0.0, %v6321
    %v6323 = vpop.f32.mrb[0].mxu0
    %6324 = vmatprep.mubr.bf16.mxu0 0
    %6325 = vmatmul.mubr.bf16.gmra.mrb[0].mxu0 %v6271
    %v6326 = vpop.f32.mrb[0].mxu0
    %v6327 = vadd.f32 0.0, %v6326
    %v6328 = vpop.f32.mrb[0].mxu0
    %v6329 = vpop.f32.mrb[0].mxu0
    %v6330 = vadd.f32 0.0, %v6329
    %v6331 = vpop.f32.mrb[0].mxu0
    %6332 = vmatprep.mubr.bf16.mxu0 0
    %6333 = vmatmul.mubr.bf16.gmra.mrb[0].mxu0 %v6274
    %v6334 = vpop.f32.mrb[0].mxu0
    %v6335 = vadd.f32 0.0, %v6334
    %v6336 = vpop.f32.mrb[0].mxu0
    %v6337 = vpop.f32.mrb[0].mxu0
    %v6338 = vadd.f32 0.0, %v6337
    %v6339 = vpop.f32.mrb[0].mxu0
    %6340 = vdwg.mxu0
    %v6341 = vpack.c.bf16 %v6314, %v6311
    %v6342 = vpack.c.bf16 %v6322, %v6319
    %v6343 = vpack.c.bf16 %v6330, %v6327
    %v6344 = vpack.c.bf16 %v6338, %v6335
    %6349 = vrot.lane.b32.xlu0 %v6341, 64
    %v6350 = vpop.permute.xlu0 %6349
    %6351 = vrot.lane.b32.xlu0 %v6342, 64
    %v6352 = vpop.permute.xlu0 %6351
    %6353 = vrot.lane.b32.xlu0 %v6343, 64
    %v6354 = vpop.permute.xlu0 %6353
    %6355 = vrot.lane.b32.xlu0 %v6344, 64
    %v6356 = vpop.permute.xlu0 %6355
    %vm6361 = vcmask 1048064
    %6362 = vst.msk [vmem:[#allocation3] sm:$0xff] %vm6361, %v6350
    %6363 = vst.msk [vmem:[#allocation3 + $0x10] sm:$0xff] %vm6361, %v6352
    %6364 = vst.msk [vmem:[#allocation3 + $0x20] sm:$0xff] %vm6361, %v6354
    %6365 = vst.msk [vmem:[#allocation3 + $0x30] sm:$0xff] %vm6361, %v6356
    %6366 = vmatprep.subr.bf16.mxu0 0
    %6367 = vmatpush1.bf16.msra.mxu0 %v6341
    %6368 = vmatprep.subr.bf16.mxu0 0
    %6369 = vmatpush1.bf16.msra.mxu0 %v6342
    %6370 = vmatprep.subr.bf16.mxu0 0
    %6371 = vmatpush1.bf16.msra.mxu0 %v6343
    %6372 = vmatprep.subr.bf16.mxu0 0
    %6373 = vmatpush1.bf16.msra.mxu0 %v6344
    %6374 = vmatprep.subr.bf16.mxu0 0
    %6375 = vmatpush1.bf16.msra.mxu0 0
    %6376 = vmatprep.subr.bf16.mxu0 0
    %6377 = vmatpush1.bf16.msra.mxu0 0
    %6378 = vmatprep.subr.bf16.mxu0 0
    %6379 = vmatpush1.bf16.msra.mxu0 0
    %6380 = vmatprep.subr.bf16.mxu0 0
    %6381 = vmatpush1.bf16.msra.mxu0 0
    %6382 = vmatprep.subr.bf16.mxu0 0
    %6383 = vmatpush1.bf16.msra.mxu0 0
    %6384 = vmatprep.subr.bf16.mxu0 0
    %6385 = vmatpush1.bf16.msra.mxu0 0
    %6386 = vmatprep.subr.bf16.mxu0 0
    %6387 = vmatpush1.bf16.msra.mxu0 0
    %6388 = vmatprep.subr.bf16.mxu0 0
    %6389 = vmatpush1.bf16.msra.mxu0 0
    %6390 = vmatprep.subr.bf16.mxu0 0
    %6391 = vmatpush1.bf16.msra.mxu0 0
    %6392 = vmatprep.subr.bf16.mxu0 0
    %6393 = vmatpush1.bf16.msra.mxu0 0
    %6394 = vmatprep.subr.bf16.mxu0 0
    %6395 = vmatpush1.bf16.msra.mxu0 0
    %6396 = vmatprep.subr.bf16.mxu0 0
    %6397 = vmatpush1.bf16.msra.mxu0 0
    %6398 = vmatprep.mubr.bf16.mxu0 0
    %6399 = vmatmul.mubr.bf16.gmra.mrb[0].mxu0 %v6265
    %v6400 = vpop.f32.mrb[0].mxu0
    %v6401 = vadd.f32 0.0, %v6400
    %v6402 = vpop.f32.mrb[0].mxu0
    %v6403 = vpop.f32.mrb[0].mxu0
    %v6404 = vadd.f32 0.0, %v6403
    %v6405 = vpop.f32.mrb[0].mxu0
    %6406 = vmatprep.mubr.bf16.mxu0 0
    %6407 = vmatmul.mubr.bf16.gmra.mrb[0].mxu0 %v6268
    %v6408 = vpop.f32.mrb[0].mxu0
    %v6409 = vadd.f32 0.0, %v6408
    %v6410 = vpop.f32.mrb[0].mxu0
    %v6411 = vpop.f32.mrb[0].mxu0
    %v6412 = vadd.f32 0.0, %v6411
    %v6413 = vpop.f32.mrb[0].mxu0
    %6414 = vmatprep.mubr.bf16.mxu0 0
    %6415 = vmatmul.mubr.bf16.gmra.mrb[0].mxu0 %v6271
    %v6416 = vpop.f32.mrb[0].mxu0
    %v6417 = vadd.f32 0.0, %v6416
    %v6418 = vpop.f32.mrb[0].mxu0
    %v6419 = vpop.f32.mrb[0].mxu0
    %v6420 = vadd.f32 0.0, %v6419
    %v6421 = vpop.f32.mrb[0].mxu0
    %6422 = vmatprep.mubr.bf16.mxu0 0
    %6423 = vmatmul.mubr.bf16.gmra.mrb[0].mxu0 %v6274
    %v6424 = vpop.f32.mrb[0].mxu0
    %v6425 = vadd.f32 0.0, %v6424
    %v6426 = vpop.f32.mrb[0].mxu0
    %v6427 = vpop.f32.mrb[0].mxu0
    %v6428 = vadd.f32 0.0, %v6427
    %v6429 = vpop.f32.mrb[0].mxu0
    %6430 = vdwg.mxu0
    %v6431 = vmul.f32 %v6401, 2.0
    %v6432 = vmul.f32 %v6404, 2.0
    %v6433 = vmul.f32 %v6409, 2.0
    %v6434 = vmul.f32 %v6412, 2.0
    %v6435 = vmul.f32 %v6417, 2.0
    %v6436 = vmul.f32 %v6420, 2.0
    %v6437 = vmul.f32 %v6425, 2.0
    %v6438 = vmul.f32 %v6428, 2.0
    %v6503 = vsel %vm6169, %v5086, %v5079
    %v6504 = vsel %vm6171, %v5093, %v6503
    %v6505 = vsel %vm6173, %v5100, %v6504
    %v6506 = vsel %vm6175, %v5107, %v6505
    %v6507 = vsel %vm6177, %v5114, %v6506
    %v6508 = vsel %vm6179, %v5121, %v6507
    %v6509 = vsel %vm6181, %v5128, %v6508
    %v6510 = vsel %vm6169, %v5142, %v5135
    %v6511 = vsel %vm6171, %v5149, %v6510
    %v6512 = vsel %vm6173, %v5156, %v6511
    %v6513 = vsel %vm6175, %v5163, %v6512
    %v6514 = vsel %vm6177, %v5170, %v6513
    %v6515 = vsel %vm6179, %v5177, %v6514
    %v6516 = vsel %vm6181, %v5184, %v6515
    %v6517 = vsel %vm6169, %v5198, %v5191
    %v6518 = vsel %vm6171, %v5205, %v6517
    %v6519 = vsel %vm6173, %v5212, %v6518
    %v6520 = vsel %vm6175, %v5219, %v6519
    %v6521 = vsel %vm6177, %v5226, %v6520
    %v6522 = vsel %vm6179, %v5233, %v6521
    %v6523 = vsel %vm6181, %v5240, %v6522
    %v6524 = vsel %vm6169, %v5254, %v5247
    %v6525 = vsel %vm6171, %v5261, %v6524
    %v6526 = vsel %vm6173, %v5268, %v6525
    %v6527 = vsel %vm6175, %v5275, %v6526
    %v6528 = vsel %vm6177, %v5282, %v6527
    %v6529 = vsel %vm6179, %v5289, %v6528
    %v6530 = vsel %vm6181, %v5296, %v6529
    %v6531 = vsel %vm6169, %v5310, %v5303
    %v6532 = vsel %vm6171, %v5317, %v6531
    %v6533 = vsel %vm6173, %v5324, %v6532
    %v6534 = vsel %vm6175, %v5331, %v6533
    %v6535 = vsel %vm6177, %v5338, %v6534
    %v6536 = vsel %vm6179, %v5345, %v6535
    %v6537 = vsel %vm6181, %v5352, %v6536
    %v6538 = vsel %vm6169, %v5366, %v5359
    %v6539 = vsel %vm6171, %v5373, %v6538
    %v6540 = vsel %vm6173, %v5380, %v6539
    %v6541 = vsel %vm6175, %v5387, %v6540
    %v6542 = vsel %vm6177, %v5394, %v6541
    %v6543 = vsel %vm6179, %v5401, %v6542
    %v6544 = vsel %vm6181, %v5408, %v6543
    %v6545 = vsel %vm6169, %v5422, %v5415
    %v6546 = vsel %vm6171, %v5429, %v6545
    %v6547 = vsel %vm6173, %v5436, %v6546
    %v6548 = vsel %vm6175, %v5443, %v6547
    %v6549 = vsel %vm6177, %v5450, %v6548
    %v6550 = vsel %vm6179, %v5457, %v6549
    %v6551 = vsel %vm6181, %v5464, %v6550
    %v6552 = vsel %vm6169, %v5478, %v5471
    %v6553 = vsel %vm6171, %v5485, %v6552
    %v6554 = vsel %vm6173, %v5492, %v6553
    %v6555 = vsel %vm6175, %v5499, %v6554
    %v6556 = vsel %vm6177, %v5506, %v6555
    %v6557 = vsel %vm6179, %v5513, %v6556
    %v6558 = vsel %vm6181, %v5520, %v6557
    %v6567 = vsub.f32 %v6431, %v6509
    %v6568 = vsub.f32 %v6432, %v6516
    %v6569 = vsub.f32 %v6433, %v6523
    %v6570 = vsub.f32 %v6434, %v6530
    %v6571 = vsub.f32 %v6435, %v6537
    %v6572 = vsub.f32 %v6436, %v6544
    %v6573 = vsub.f32 %v6437, %v6551
    %v6574 = vsub.f32 %v6438, %v6558
    %v6575 = vpack.c.bf16 %v6568, %v6567
    %v6576 = vpack.c.bf16 %v6570, %v6569
    %v6577 = vpack.c.bf16 %v6572, %v6571
    %v6578 = vpack.c.bf16 %v6574, %v6573
    %6579 = vst.msk [vmem:[#allocation3 + $0x8] sm:$0xff] %vm4210, %v6575
    %6580 = vst.msk [vmem:[#allocation3 + $0x18] sm:$0xff] %vm4210, %v6576
    %6581 = vst.msk [vmem:[#allocation3 + $0x28] sm:$0xff] %vm4210, %v6577
    %6582 = vst.msk [vmem:[#allocation3 + $0x38] sm:$0xff] %vm4210, %v6578
    %v6583 = vpack.c.bf16 %v5527, %v5527
    %v6584 = vpack.c.bf16 %v5534, %v5534
    %v6585 = vpack.c.bf16 %v5541, %v5541
    %v6586 = vpack.c.bf16 %v5548, %v5548
    %v6587 = vpack.c.bf16 %v5555, %v5555
    %v6588 = vpack.c.bf16 %v5562, %v5562
    %v6589 = vpack.c.bf16 %v5569, %v5569
    %v6590 = vpack.c.bf16 %v5576, %v5576
    %v6591 = vpack.c.bf16 %v5583, %v5583
    %v6592 = vpack.c.bf16 %v5590, %v5590
    %v6593 = vpack.c.bf16 %v5597, %v5597
    %v6594 = vpack.c.bf16 %v5604, %v5604
    %v6595 = vpack.c.bf16 %v5611, %v5611
    %v6596 = vpack.c.bf16 %v5618, %v5618
    %v6597 = vpack.c.bf16 %v5625, %v5625
    %v6598 = vpack.c.bf16 %v5632, %v5632
    %v6599 = vpack.c.bf16 %v5639, %v5639
    %v6600 = vpack.c.bf16 %v5646, %v5646
    %v6601 = vpack.c.bf16 %v5653, %v5653
    %v6602 = vpack.c.bf16 %v5660, %v5660
    %v6603 = vpack.c.bf16 %v5667, %v5667
    %v6604 = vpack.c.bf16 %v5674, %v5674
    %v6605 = vpack.c.bf16 %v5681, %v5681
    %v6606 = vpack.c.bf16 %v5688, %v5688
    %v6607 = vpack.c.bf16 %v5695, %v5695
    %v6608 = vpack.c.bf16 %v5702, %v5702
    %v6609 = vpack.c.bf16 %v5709, %v5709
    %v6610 = vpack.c.bf16 %v5716, %v5716
    %v6611 = vpack.c.bf16 %v5723, %v5723
    %v6612 = vpack.c.bf16 %v5730, %v5730
    %v6613 = vpack.c.bf16 %v5737, %v5737
    %v6614 = vpack.c.bf16 %v5744, %v5744
    %v6615 = vpack.c.bf16 %v5751, %v5751
    %v6616 = vpack.c.bf16 %v5758, %v5758
    %v6617 = vpack.c.bf16 %v5765, %v5765
    %v6618 = vpack.c.bf16 %v5772, %v5772
    %v6619 = vpack.c.bf16 %v5779, %v5779
    %v6620 = vpack.c.bf16 %v5786, %v5786
    %v6621 = vpack.c.bf16 %v5793, %v5793
    %v6622 = vpack.c.bf16 %v5800, %v5800
    %v6623 = vpack.c.bf16 %v5807, %v5807
    %v6624 = vpack.c.bf16 %v5814, %v5814
    %v6625 = vpack.c.bf16 %v5821, %v5821
    %v6626 = vpack.c.bf16 %v5828, %v5828
    %v6627 = vpack.c.bf16 %v5835, %v5835
    %v6628 = vpack.c.bf16 %v5842, %v5842
    %v6629 = vpack.c.bf16 %v5849, %v5849
    %v6630 = vpack.c.bf16 %v5856, %v5856
    %v6631 = vpack.c.bf16 %v5863, %v5863
    %v6632 = vpack.c.bf16 %v5870, %v5870
    %v6633 = vpack.c.bf16 %v5877, %v5877
    %v6634 = vpack.c.bf16 %v5884, %v5884
    %v6635 = vpack.c.bf16 %v5891, %v5891
    %v6636 = vpack.c.bf16 %v5898, %v5898
    %v6637 = vpack.c.bf16 %v5905, %v5905
    %v6638 = vpack.c.bf16 %v5912, %v5912
    %v6639 = vpack.c.bf16 %v5919, %v5919
    %v6640 = vpack.c.bf16 %v5926, %v5926
    %v6641 = vpack.c.bf16 %v5933, %v5933
    %v6642 = vpack.c.bf16 %v5940, %v5940
    %v6643 = vpack.c.bf16 %v5947, %v5947
    %v6644 = vpack.c.bf16 %v5954, %v5954
    %v6645 = vpack.c.bf16 %v5961, %v5961
    %v6646 = vpack.c.bf16 %v5968, %v5968
    %v6711 = vunpack.c.l.b16 %v6583
    %v6712 = vunpack.c.l.b16 %v6584
    %v6713 = vunpack.c.l.b16 %v6585
    %v6714 = vunpack.c.l.b16 %v6586
    %v6715 = vunpack.c.l.b16 %v6587
    %v6716 = vunpack.c.l.b16 %v6588
    %v6717 = vunpack.c.l.b16 %v6589
    %v6718 = vunpack.c.l.b16 %v6590
    %v6719 = vunpack.c.l.b16 %v6591
    %v6720 = vunpack.c.l.b16 %v6592
    %v6721 = vunpack.c.l.b16 %v6593
    %v6722 = vunpack.c.l.b16 %v6594
    %v6723 = vunpack.c.l.b16 %v6595
    %v6724 = vunpack.c.l.b16 %v6596
    %v6725 = vunpack.c.l.b16 %v6597
    %v6726 = vunpack.c.l.b16 %v6598
    %v6727 = vunpack.c.l.b16 %v6599
    %v6728 = vunpack.c.l.b16 %v6600
    %v6729 = vunpack.c.l.b16 %v6601
    %v6730 = vunpack.c.l.b16 %v6602
    %v6731 = vunpack.c.l.b16 %v6603
    %v6732 = vunpack.c.l.b16 %v6604
    %v6733 = vunpack.c.l.b16 %v6605
    %v6734 = vunpack.c.l.b16 %v6606
    %v6735 = vunpack.c.l.b16 %v6607
    %v6736 = vunpack.c.l.b16 %v6608
    %v6737 = vunpack.c.l.b16 %v6609
    %v6738 = vunpack.c.l.b16 %v6610
    %v6739 = vunpack.c.l.b16 %v6611
    %v6740 = vunpack.c.l.b16 %v6612
    %v6741 = vunpack.c.l.b16 %v6613
    %v6742 = vunpack.c.l.b16 %v6614
    %v6743 = vunpack.c.l.b16 %v6615
    %v6744 = vunpack.c.l.b16 %v6616
    %v6745 = vunpack.c.l.b16 %v6617
    %v6746 = vunpack.c.l.b16 %v6618
    %v6747 = vunpack.c.l.b16 %v6619
    %v6748 = vunpack.c.l.b16 %v6620
    %v6749 = vunpack.c.l.b16 %v6621
    %v6750 = vunpack.c.l.b16 %v6622
    %v6751 = vunpack.c.l.b16 %v6623
    %v6752 = vunpack.c.l.b16 %v6624
    %v6753 = vunpack.c.l.b16 %v6625
    %v6754 = vunpack.c.l.b16 %v6626
    %v6755 = vunpack.c.l.b16 %v6627
    %v6756 = vunpack.c.l.b16 %v6628
    %v6757 = vunpack.c.l.b16 %v6629
    %v6758 = vunpack.c.l.b16 %v6630
    %v6759 = vunpack.c.l.b16 %v6631
    %v6760 = vunpack.c.l.b16 %v6632
    %v6761 = vunpack.c.l.b16 %v6633
    %v6762 = vunpack.c.l.b16 %v6634
    %v6763 = vunpack.c.l.b16 %v6635
    %v6764 = vunpack.c.l.b16 %v6636
    %v6765 = vunpack.c.l.b16 %v6637
    %v6766 = vunpack.c.l.b16 %v6638
    %v6767 = vunpack.c.l.b16 %v6639
    %v6768 = vunpack.c.l.b16 %v6640
    %v6769 = vunpack.c.l.b16 %v6641
    %v6770 = vunpack.c.l.b16 %v6642
    %v6771 = vunpack.c.l.b16 %v6643
    %v6772 = vunpack.c.l.b16 %v6644
    %v6773 = vunpack.c.l.b16 %v6645
    %v6774 = vunpack.c.l.b16 %v6646
    %v6775 = vsel %vm6169, %v6712, %v6711
    %v6776 = vsel %vm6171, %v6713, %v6775
    %v6777 = vsel %vm6173, %v6714, %v6776
    %v6778 = vsel %vm6175, %v6715, %v6777
    %v6779 = vsel %vm6177, %v6716, %v6778
    %v6780 = vsel %vm6179, %v6717, %v6779
    %v6781 = vsel %vm6181, %v6718, %v6780
    %v6782 = vsel %vm6169, %v6720, %v6719
    %v6783 = vsel %vm6171, %v6721, %v6782
    %v6784 = vsel %vm6173, %v6722, %v6783
    %v6785 = vsel %vm6175, %v6723, %v6784
    %v6786 = vsel %vm6177, %v6724, %v6785
    %v6787 = vsel %vm6179, %v6725, %v6786
    %v6788 = vsel %vm6181, %v6726, %v6787
    %v6789 = vsel %vm6169, %v6728, %v6727
    %v6790 = vsel %vm6171, %v6729, %v6789
    %v6791 = vsel %vm6173, %v6730, %v6790
    %v6792 = vsel %vm6175, %v6731, %v6791
    %v6793 = vsel %vm6177, %v6732, %v6792
    %v6794 = vsel %vm6179, %v6733, %v6793
    %v6795 = vsel %vm6181, %v6734, %v6794
    %v6796 = vsel %vm6169, %v6736, %v6735
    %v6797 = vsel %vm6171, %v6737, %v6796
    %v6798 = vsel %vm6173, %v6738, %v6797
    %v6799 = vsel %vm6175, %v6739, %v6798
    %v6800 = vsel %vm6177, %v6740, %v6799
    %v6801 = vsel %vm6179, %v6741, %v6800
    %v6802 = vsel %vm6181, %v6742, %v6801
    %v6803 = vsel %vm6169, %v6744, %v6743
    %v6804 = vsel %vm6171, %v6745, %v6803
    %v6805 = vsel %vm6173, %v6746, %v6804
    %v6806 = vsel %vm6175, %v6747, %v6805
    %v6807 = vsel %vm6177, %v6748, %v6806
    %v6808 = vsel %vm6179, %v6749, %v6807
    %v6809 = vsel %vm6181, %v6750, %v6808
    %v6810 = vsel %vm6169, %v6752, %v6751
    %v6811 = vsel %vm6171, %v6753, %v6810
    %v6812 = vsel %vm6173, %v6754, %v6811
    %v6813 = vsel %vm6175, %v6755, %v6812
    %v6814 = vsel %vm6177, %v6756, %v6813
    %v6815 = vsel %vm6179, %v6757, %v6814
    %v6816 = vsel %vm6181, %v6758, %v6815
    %v6817 = vsel %vm6169, %v6760, %v6759
    %v6818 = vsel %vm6171, %v6761, %v6817
    %v6819 = vsel %vm6173, %v6762, %v6818
    %v6820 = vsel %vm6175, %v6763, %v6819
    %v6821 = vsel %vm6177, %v6764, %v6820
    %v6822 = vsel %vm6179, %v6765, %v6821
    %v6823 = vsel %vm6181, %v6766, %v6822
    %v6824 = vsel %vm6169, %v6768, %v6767
    %v6825 = vsel %vm6171, %v6769, %v6824
    %v6826 = vsel %vm6173, %v6770, %v6825
    %v6827 = vsel %vm6175, %v6771, %v6826
    %v6828 = vsel %vm6177, %v6772, %v6827
    %v6829 = vsel %vm6179, %v6773, %v6828
    %v6830 = vsel %vm6181, %v6774, %v6829
    %v6831 = vpack.c.b16 %v6788, %v6781
    %v6832 = vpack.c.b16 %v6802, %v6795
    %v6833 = vpack.c.b16 %v6816, %v6809
    %v6834 = vpack.c.b16 %v6830, %v6823
    %6839 = vst.msk [vmem:[#allocation3 + $0x40] sm:$0xff] %vm4210, %v6831
    %6840 = vst.msk [vmem:[#allocation3 + $0x50] sm:$0xff] %vm4210, %v6832
    %6841 = vst.msk [vmem:[#allocation3 + $0x60] sm:$0xff] %vm4210, %v6833
    %6842 = vst.msk [vmem:[#allocation3 + $0x70] sm:$0xff] %vm4210, %v6834
    %6843 = vmatprep.subr.bf16.mxu0 0
    %6844 = vmatpush1.bf16.msra.mxu0 %v6831
    %6845 = vmatprep.subr.bf16.mxu0 0
    %6846 = vmatpush1.bf16.msra.mxu0 %v6832
    %6847 = vmatprep.subr.bf16.mxu0 0
    %6848 = vmatpush1.bf16.msra.mxu0 %v6833
    %6849 = vmatprep.subr.bf16.mxu0 0
    %6850 = vmatpush1.bf16.msra.mxu0 %v6834
    %6851 = vmatprep.subr.bf16.mxu0 0
    %6852 = vmatpush1.bf16.msra.mxu0 0
    %6853 = vmatprep.subr.bf16.mxu0 0
    %6854 = vmatpush1.bf16.msra.mxu0 0
    %6855 = vmatprep.subr.bf16.mxu0 0
    %6856 = vmatpush1.bf16.msra.mxu0 0
    %6857 = vmatprep.subr.bf16.mxu0 0
    %6858 = vmatpush1.bf16.msra.mxu0 0
    %6859 = vmatprep.subr.bf16.mxu0 0
    %6860 = vmatpush1.bf16.msra.mxu0 0
    %6861 = vmatprep.subr.bf16.mxu0 0
    %6862 = vmatpush1.bf16.msra.mxu0 0
    %6863 = vmatprep.subr.bf16.mxu0 0
    %6864 = vmatpush1.bf16.msra.mxu0 0
    %6865 = vmatprep.subr.bf16.mxu0 0
    %6866 = vmatpush1.bf16.msra.mxu0 0
    %6867 = vmatprep.subr.bf16.mxu0 0
    %6868 = vmatpush1.bf16.msra.mxu0 0
    %6869 = vmatprep.subr.bf16.mxu0 0
    %6870 = vmatpush1.bf16.msra.mxu0 0
    %6871 = vmatprep.subr.bf16.mxu0 0
    %6872 = vmatpush1.bf16.msra.mxu0 0
    %6873 = vmatprep.subr.bf16.mxu0 0
    %6874 = vmatpush1.bf16.msra.mxu0 0
    %6875 = vmatprep.mubr.bf16.mxu0 0
    %6876 = vmatmul.mubr.bf16.gmra.mrb[0].mxu0 %v6265
    %v6877 = vpop.f32.mrb[0].mxu0
    %v6878 = vadd.f32 0.0, %v6877
    %v6879 = vpop.f32.mrb[0].mxu0
    %v6880 = vpop.f32.mrb[0].mxu0
    %v6881 = vadd.f32 0.0, %v6880
    %v6882 = vpop.f32.mrb[0].mxu0
    %6883 = vmatprep.mubr.bf16.mxu0 0
    %6884 = vmatmul.mubr.bf16.gmra.mrb[0].mxu0 %v6268
    %v6885 = vpop.f32.mrb[0].mxu0
    %v6886 = vadd.f32 0.0, %v6885
    %v6887 = vpop.f32.mrb[0].mxu0
    %v6888 = vpop.f32.mrb[0].mxu0
    %v6889 = vadd.f32 0.0, %v6888
    %v6890 = vpop.f32.mrb[0].mxu0
    %6891 = vmatprep.mubr.bf16.mxu0 0
    %6892 = vmatmul.mubr.bf16.gmra.mrb[0].mxu0 %v6271
    %v6893 = vpop.f32.mrb[0].mxu0
    %v6894 = vadd.f32 0.0, %v6893
    %v6895 = vpop.f32.mrb[0].mxu0
    %v6896 = vpop.f32.mrb[0].mxu0
    %v6897 = vadd.f32 0.0, %v6896
    %v6898 = vpop.f32.mrb[0].mxu0
    %6899 = vmatprep.mubr.bf16.mxu0 0
    %6900 = vmatmul.mubr.bf16.gmra.mrb[0].mxu0 %v6274
    %v6901 = vpop.f32.mrb[0].mxu0
    %v6902 = vadd.f32 0.0, %v6901
    %v6903 = vpop.f32.mrb[0].mxu0
    %v6904 = vpop.f32.mrb[0].mxu0
    %v6905 = vadd.f32 0.0, %v6904
    %v6906 = vpop.f32.mrb[0].mxu0
    %6907 = vdwg.mxu0
    %v6908 = vpack.c.bf16 %v6881, %v6878
    %v6909 = vpack.c.bf16 %v6889, %v6886
    %v6910 = vpack.c.bf16 %v6897, %v6894
    %v6911 = vpack.c.bf16 %v6905, %v6902
    %6916 = vrot.lane.b32.xlu0 %v6908, 64
    %v6917 = vpop.permute.xlu0 %6916
    %6918 = vrot.lane.b32.xlu0 %v6909, 64
    %v6919 = vpop.permute.xlu0 %6918
    %6920 = vrot.lane.b32.xlu0 %v6910, 64
    %v6921 = vpop.permute.xlu0 %6920
    %6922 = vrot.lane.b32.xlu0 %v6911, 64
    %v6923 = vpop.permute.xlu0 %6922
    %6928 = vst.msk [vmem:[#allocation3 + $0x40] sm:$0xff] %vm6361, %v6917
    %6929 = vst.msk [vmem:[#allocation3 + $0x50] sm:$0xff] %vm6361, %v6919
    %6930 = vst.msk [vmem:[#allocation3 + $0x60] sm:$0xff] %vm6361, %v6921
    %6931 = vst.msk [vmem:[#allocation3 + $0x70] sm:$0xff] %vm6361, %v6923
    %6932 = vmatprep.subr.bf16.mxu0 0
    %6933 = vmatpush1.bf16.msra.mxu0 %v6908
    %6934 = vmatprep.subr.bf16.mxu0 0
    %6935 = vmatpush1.bf16.msra.mxu0 %v6909
    %6936 = vmatprep.subr.bf16.mxu0 0
    %6937 = vmatpush1.bf16.msra.mxu0 %v6910
    %6938 = vmatprep.subr.bf16.mxu0 0
    %6939 = vmatpush1.bf16.msra.mxu0 %v6911
    %6940 = vmatprep.subr.bf16.mxu0 0
    %6941 = vmatpush1.bf16.msra.mxu0 0
    %6942 = vmatprep.subr.bf16.mxu0 0
    %6943 = vmatpush1.bf16.msra.mxu0 0
    %6944 = vmatprep.subr.bf16.mxu0 0
    %6945 = vmatpush1.bf16.msra.mxu0 0
    %6946 = vmatprep.subr.bf16.mxu0 0
    %6947 = vmatpush1.bf16.msra.mxu0 0
    %6948 = vmatprep.subr.bf16.mxu0 0
    %6949 = vmatpush1.bf16.msra.mxu0 0
    %6950 = vmatprep.subr.bf16.mxu0 0
    %6951 = vmatpush1.bf16.msra.mxu0 0
    %6952 = vmatprep.subr.bf16.mxu0 0
    %6953 = vmatpush1.bf16.msra.mxu0 0
    %6954 = vmatprep.subr.bf16.mxu0 0
    %6955 = vmatpush1.bf16.msra.mxu0 0
    %6956 = vmatprep.subr.bf16.mxu0 0
    %6957 = vmatpush1.bf16.msra.mxu0 0
    %6958 = vmatprep.subr.bf16.mxu0 0
    %6959 = vmatpush1.bf16.msra.mxu0 0
    %6960 = vmatprep.subr.bf16.mxu0 0
    %6961 = vmatpush1.bf16.msra.mxu0 0
    %6962 = vmatprep.subr.bf16.mxu0 0
    %6963 = vmatpush1.bf16.msra.mxu0 0
    %6964 = vmatprep.mubr.bf16.mxu0 0
    %6965 = vmatmul.mubr.bf16.gmra.mrb[0].mxu0 %v6265
    %v6966 = vpop.f32.mrb[0].mxu0
    %v6967 = vadd.f32 0.0, %v6966
    %v6968 = vpop.f32.mrb[0].mxu0
    %v6969 = vpop.f32.mrb[0].mxu0
    %v6970 = vadd.f32 0.0, %v6969
    %v6971 = vpop.f32.mrb[0].mxu0
    %6972 = vmatprep.mubr.bf16.mxu0 0
    %6973 = vmatmul.mubr.bf16.gmra.mrb[0].mxu0 %v6268
    %v6974 = vpop.f32.mrb[0].mxu0
    %v6975 = vadd.f32 0.0, %v6974
    %v6976 = vpop.f32.mrb[0].mxu0
    %v6977 = vpop.f32.mrb[0].mxu0
    %v6978 = vadd.f32 0.0, %v6977
    %v6979 = vpop.f32.mrb[0].mxu0
    %6980 = vmatprep.mubr.bf16.mxu0 0
    %6981 = vmatmul.mubr.bf16.gmra.mrb[0].mxu0 %v6271
    %v6982 = vpop.f32.mrb[0].mxu0
    %v6983 = vadd.f32 0.0, %v6982
    %v6984 = vpop.f32.mrb[0].mxu0
    %v6985 = vpop.f32.mrb[0].mxu0
    %v6986 = vadd.f32 0.0, %v6985
    %v6987 = vpop.f32.mrb[0].mxu0
    %6988 = vmatprep.mubr.bf16.mxu0 0
    %6989 = vmatmul.mubr.bf16.gmra.mrb[0].mxu0 %v6274
    %v6990 = vpop.f32.mrb[0].mxu0
    %v6991 = vadd.f32 0.0, %v6990
    %v6992 = vpop.f32.mrb[0].mxu0
    %v6993 = vpop.f32.mrb[0].mxu0
    %v6994 = vadd.f32 0.0, %v6993
    %v6995 = vpop.f32.mrb[0].mxu0
    %6996 = vdwg.mxu0
    %v6997 = vmul.f32 %v6967, 2.0
    %v6998 = vmul.f32 %v6970, 2.0
    %v6999 = vmul.f32 %v6975, 2.0
    %v7000 = vmul.f32 %v6978, 2.0
    %v7001 = vmul.f32 %v6983, 2.0
    %v7002 = vmul.f32 %v6986, 2.0
    %v7003 = vmul.f32 %v6991, 2.0
    %v7004 = vmul.f32 %v6994, 2.0
    %v7069 = vsel %vm6169, %v5534, %v5527
    %v7070 = vsel %vm6171, %v5541, %v7069
    %v7071 = vsel %vm6173, %v5548, %v7070
    %v7072 = vsel %vm6175, %v5555, %v7071
    %v7073 = vsel %vm6177, %v5562, %v7072
    %v7074 = vsel %vm6179, %v5569, %v7073
    %v7075 = vsel %vm6181, %v5576, %v7074
    %v7076 = vsel %vm6169, %v5590, %v5583
    %v7077 = vsel %vm6171, %v5597, %v7076
    %v7078 = vsel %vm6173, %v5604, %v7077
    %v7079 = vsel %vm6175, %v5611, %v7078
    %v7080 = vsel %vm6177, %v5618, %v7079
    %v7081 = vsel %vm6179, %v5625, %v7080
    %v7082 = vsel %vm6181, %v5632, %v7081
    %v7083 = vsel %vm6169, %v5646, %v5639
    %v7084 = vsel %vm6171, %v5653, %v7083
    %v7085 = vsel %vm6173, %v5660, %v7084
    %v7086 = vsel %vm6175, %v5667, %v7085
    %v7087 = vsel %vm6177, %v5674, %v7086
    %v7088 = vsel %vm6179, %v5681, %v7087
    %v7089 = vsel %vm6181, %v5688, %v7088
    %v7090 = vsel %vm6169, %v5702, %v5695
    %v7091 = vsel %vm6171, %v5709, %v7090
    %v7092 = vsel %vm6173, %v5716, %v7091
    %v7093 = vsel %vm6175, %v5723, %v7092
    %v7094 = vsel %vm6177, %v5730, %v7093
    %v7095 = vsel %vm6179, %v5737, %v7094
    %v7096 = vsel %vm6181, %v5744, %v7095
    %v7097 = vsel %vm6169, %v5758, %v5751
    %v7098 = vsel %vm6171, %v5765, %v7097
    %v7099 = vsel %vm6173, %v5772, %v7098
    %v7100 = vsel %vm6175, %v5779, %v7099
    %v7101 = vsel %vm6177, %v5786, %v7100
    %v7102 = vsel %vm6179, %v5793, %v7101
    %v7103 = vsel %vm6181, %v5800, %v7102
    %v7104 = vsel %vm6169, %v5814, %v5807
    %v7105 = vsel %vm6171, %v5821, %v7104
    %v7106 = vsel %vm6173, %v5828, %v7105
    %v7107 = vsel %vm6175, %v5835, %v7106
    %v7108 = vsel %vm6177, %v5842, %v7107
    %v7109 = vsel %vm6179, %v5849, %v7108
    %v7110 = vsel %vm6181, %v5856, %v7109
    %v7111 = vsel %vm6169, %v5870, %v5863
    %v7112 = vsel %vm6171, %v5877, %v7111
    %v7113 = vsel %vm6173, %v5884, %v7112
    %v7114 = vsel %vm6175, %v5891, %v7113
    %v7115 = vsel %vm6177, %v5898, %v7114
    %v7116 = vsel %vm6179, %v5905, %v7115
    %v7117 = vsel %vm6181, %v5912, %v7116
    %v7118 = vsel %vm6169, %v5926, %v5919
    %v7119 = vsel %vm6171, %v5933, %v7118
    %v7120 = vsel %vm6173, %v5940, %v7119
    %v7121 = vsel %vm6175, %v5947, %v7120
    %v7122 = vsel %vm6177, %v5954, %v7121
    %v7123 = vsel %vm6179, %v5961, %v7122
    %v7124 = vsel %vm6181, %v5968, %v7123
    %v7133 = vsub.f32 %v6997, %v7075
    %v7134 = vsub.f32 %v6998, %v7082
    %v7135 = vsub.f32 %v6999, %v7089
    %v7136 = vsub.f32 %v7000, %v7096
    %v7137 = vsub.f32 %v7001, %v7103
    %v7138 = vsub.f32 %v7002, %v7110
    %v7139 = vsub.f32 %v7003, %v7117
    %v7140 = vsub.f32 %v7004, %v7124
    %v7141 = vpack.c.bf16 %v7134, %v7133
    %v7142 = vpack.c.bf16 %v7136, %v7135
    %v7143 = vpack.c.bf16 %v7138, %v7137
    %v7144 = vpack.c.bf16 %v7140, %v7139
    %7145 = vst.msk [vmem:[#allocation3 + $0x48] sm:$0xff] %vm4210, %v7141
    %7146 = vst.msk [vmem:[#allocation3 + $0x58] sm:$0xff] %vm4210, %v7142
    %7147 = vst.msk [vmem:[#allocation3 + $0x68] sm:$0xff] %vm4210, %v7143
    %7148 = vst.msk [vmem:[#allocation3 + $0x78] sm:$0xff] %vm4210, %v7144
    %v7149 = vld [vmem:[#allocation3] sm:$0xff]
    %v7150 = vld [vmem:[#allocation3 + $0x8] sm:$0xff]
    %v7151 = vld [vmem:[#allocation3 + $0x10] sm:$0xff]
    %v7152 = vld [vmem:[#allocation3 + $0x18] sm:$0xff]
    %v7153 = vld [vmem:[#allocation3 + $0x20] sm:$0xff]
    %v7154 = vld [vmem:[#allocation3 + $0x28] sm:$0xff]
    %v7155 = vld [vmem:[#allocation3 + $0x30] sm:$0xff]
    %v7156 = vld [vmem:[#allocation3 + $0x38] sm:$0xff]
    %v7157 = vld [vmem:[#allocation3 + $0x40] sm:$0xff]
    %v7158 = vld [vmem:[#allocation3 + $0x48] sm:$0xff]
    %v7159 = vld [vmem:[#allocation3 + $0x50] sm:$0xff]
    %v7160 = vld [vmem:[#allocation3 + $0x58] sm:$0xff]
    %v7161 = vld [vmem:[#allocation3 + $0x60] sm:$0xff]
    %v7162 = vld [vmem:[#allocation3 + $0x68] sm:$0xff]
    %v7163 = vld [vmem:[#allocation3 + $0x70] sm:$0xff]
    %v7164 = vld [vmem:[#allocation3 + $0x78] sm:$0xff]
    %v7165 = vld [vmem:[%s11] sm:$0xf]
    %v7166 = vld [vmem:[%s11 + $0x4] sm:$0xf]
    %v7167 = vld [vmem:[%s11 + $0x8] sm:$0xf]
    %v7168 = vld [vmem:[%s11 + $0xc] sm:$0xf]
    %v7169 = vld [vmem:[%s11 + $0x10] sm:$0xf]
    %v7170 = vld [vmem:[%s11 + $0x14] sm:$0xf]
    %v7171 = vld [vmem:[%s11 + $0x18] sm:$0xf]
    %v7172 = vld [vmem:[%s11 + $0x1c] sm:$0xf]
    %v7173 = vld [vmem:[%s11 + $0x20] sm:$0xf]
    %v7174 = vld [vmem:[%s11 + $0x24] sm:$0xf]
    %v7175 = vld [vmem:[%s11 + $0x28] sm:$0xf]
    %v7176 = vld [vmem:[%s11 + $0x2c] sm:$0xf]
    %v7177 = vld [vmem:[%s11 + $0x30] sm:$0xf]
    %v7178 = vld [vmem:[%s11 + $0x34] sm:$0xf]
    %v7179 = vld [vmem:[%s11 + $0x38] sm:$0xf]
    %v7180 = vld [vmem:[%s11 + $0x3c] sm:$0xf]
    %v7181 = vld [vmem:[%s11 + $0x40] sm:$0xf]
    %v7182 = vld [vmem:[%s11 + $0x44] sm:$0xf]
    %v7183 = vld [vmem:[%s11 + $0x48] sm:$0xf]
    %v7184 = vld [vmem:[%s11 + $0x4c] sm:$0xf]
    %v7185 = vld [vmem:[%s11 + $0x50] sm:$0xf]
    %v7186 = vld [vmem:[%s11 + $0x54] sm:$0xf]
    %v7187 = vld [vmem:[%s11 + $0x58] sm:$0xf]
    %v7188 = vld [vmem:[%s11 + $0x5c] sm:$0xf]
    %v7213 = vunpack.c.l.b16 %v7165
    %v7214 = vunpack.c.l.b16 %v7166
    %v7215 = vunpack.c.l.b16 %v7167
    %v7216 = vunpack.c.l.b16 %v7168
    %v7217 = vunpack.c.l.b16 %v7169
    %v7218 = vunpack.c.l.b16 %v7170
    %v7219 = vunpack.c.l.b16 %v7171
    %v7220 = vunpack.c.l.b16 %v7172
    %v7221 = vunpack.c.l.b16 %v7173
    %v7222 = vunpack.c.l.b16 %v7174
    %v7223 = vunpack.c.l.b16 %v7175
    %v7224 = vunpack.c.l.b16 %v7176
    %v7225 = vunpack.c.l.b16 %v7177
    %v7226 = vunpack.c.l.b16 %v7178
    %v7227 = vunpack.c.l.b16 %v7179
    %v7228 = vunpack.c.l.b16 %v7180
    %v7229 = vunpack.c.l.b16 %v7181
    %v7230 = vunpack.c.l.b16 %v7182
    %v7231 = vunpack.c.l.b16 %v7183
    %v7232 = vunpack.c.l.b16 %v7184
    %v7233 = vunpack.c.l.b16 %v7185
    %v7234 = vunpack.c.l.b16 %v7186
    %v7235 = vunpack.c.l.b16 %v7187
    %v7236 = vunpack.c.l.b16 %v7188
    %v7237 = vpack.c.b16 %v7214, %v7213
    %v7238 = vpack.c.b16 %v7216, %v7215
    %v7239 = vpack.c.b16 %v7218, %v7217
    %v7240 = vpack.c.b16 %v7220, %v7219
    %v7241 = vpack.c.b16 %v7222, %v7221
    %v7242 = vpack.c.b16 %v7224, %v7223
    %v7243 = vpack.c.b16 %v7226, %v7225
    %v7244 = vpack.c.b16 %v7228, %v7227
    %v7245 = vpack.c.b16 %v7230, %v7229
    %v7246 = vpack.c.b16 %v7232, %v7231
    %v7247 = vpack.c.b16 %v7234, %v7233
    %v7248 = vpack.c.b16 %v7236, %v7235
    %v7262 = vsel %vm4210, %v7150, 0
    %v7265 = vsel %vm4210, %v7152, 0
    %v7268 = vsel %vm4210, %v7154, 0
    %v7271 = vsel %vm4210, %v7156, 0
    %v7274 = vsel %vm4210, %v7158, 0
    %v7277 = vsel %vm4210, %v7160, 0
    %v7280 = vsel %vm4210, %v7162, 0
    %v7283 = vsel %vm4210, %v7164, 0
    %7285 = vmatprep.subr.bf16.mxu0 0
    %7286 = vmatpush1.bf16.msra.mxu0 %v7237
    %7287 = vmatprep.subr.bf16.mxu0 0
    %7288 = vmatpush1.bf16.msra.mxu0 %v7238
    %7289 = vmatprep.subr.bf16.mxu0 0
    %7290 = vmatpush1.bf16.msra.mxu0 %v7239
    %7291 = vmatprep.subr.bf16.mxu0 0
    %7292 = vmatpush1.bf16.msra.mxu0 %v7240
    %7293 = vmatprep.subr.bf16.mxu0 0
    %7294 = vmatpush1.bf16.msra.mxu0 %v7241
    %7295 = vmatprep.subr.bf16.mxu0 0
    %7296 = vmatpush1.bf16.msra.mxu0 %v7242
    %7297 = vmatprep.subr.bf16.mxu0 0
    %7298 = vmatpush1.bf16.msra.mxu0 %v7243
    %7299 = vmatprep.subr.bf16.mxu0 0
    %7300 = vmatpush1.bf16.msra.mxu0 %v7244
    %7301 = vmatprep.subr.bf16.mxu0 0
    %7302 = vmatpush1.bf16.msra.mxu0 %v7245
    %7303 = vmatprep.subr.bf16.mxu0 0
    %7304 = vmatpush1.bf16.msra.mxu0 %v7246
    %7305 = vmatprep.subr.bf16.mxu0 0
    %7306 = vmatpush1.bf16.msra.mxu0 %v7247
    %7307 = vmatprep.subr.bf16.mxu0 0
    %7308 = vmatpush1.bf16.msra.mxu0 %v7248
    %7309 = vmatprep.subr.bf16.mxu0 0
    %7310 = vmatpush1.bf16.msra.mxu0 0
    %7311 = vmatprep.subr.bf16.mxu0 0
    %7312 = vmatpush1.bf16.msra.mxu0 0
    %7313 = vmatprep.subr.bf16.mxu0 0
    %7314 = vmatpush1.bf16.msra.mxu0 0
    %7315 = vmatprep.subr.bf16.mxu0 0
    %7316 = vmatpush1.bf16.msra.mxu0 0
    %7317 = vmatprep.mubr.bf16.mxu0 %v7262
    %7318 = vmatmul.mubr.bf16.gmra.mrb[0].mxu0 %v7149
    %v7319 = vpop.f32.mrb[0].mxu0
    %v7320 = vadd.f32 0.0, %v7319
    %v7321 = vpop.f32.mrb[0].mxu0
    %v7322 = vpop.f32.mrb[0].mxu0
    %v7323 = vadd.f32 0.0, %v7322
    %v7324 = vpop.f32.mrb[0].mxu0
    %7325 = vmatprep.mubr.bf16.mxu0 %v7265
    %7326 = vmatmul.mubr.bf16.gmra.mrb[0].mxu0 %v7151
    %v7327 = vpop.f32.mrb[0].mxu0
    %v7328 = vadd.f32 0.0, %v7327
    %v7329 = vpop.f32.mrb[0].mxu0
    %v7330 = vpop.f32.mrb[0].mxu0
    %v7331 = vadd.f32 0.0, %v7330
    %v7332 = vpop.f32.mrb[0].mxu0
    %7333 = vmatprep.mubr.bf16.mxu0 %v7268
    %7334 = vmatmul.mubr.bf16.gmra.mrb[0].mxu0 %v7153
    %v7335 = vpop.f32.mrb[0].mxu0
    %v7336 = vadd.f32 0.0, %v7335
    %v7337 = vpop.f32.mrb[0].mxu0
    %v7338 = vpop.f32.mrb[0].mxu0
    %v7339 = vadd.f32 0.0, %v7338
    %v7340 = vpop.f32.mrb[0].mxu0
    %7341 = vmatprep.mubr.bf16.mxu0 %v7271
    %7342 = vmatmul.mubr.bf16.gmra.mrb[0].mxu0 %v7155
    %v7343 = vpop.f32.mrb[0].mxu0
    %v7344 = vadd.f32 0.0, %v7343
    %v7345 = vpop.f32.mrb[0].mxu0
    %v7346 = vpop.f32.mrb[0].mxu0
    %v7347 = vadd.f32 0.0, %v7346
    %v7348 = vpop.f32.mrb[0].mxu0
    %7349 = vmatprep.mubr.bf16.mxu0 %v7274
    %7350 = vmatmul.mubr.bf16.gmra.mrb[0].mxu0 %v7157
    %v7351 = vpop.f32.mrb[0].mxu0
    %v7352 = vadd.f32 0.0, %v7351
    %v7353 = vpop.f32.mrb[0].mxu0
    %v7354 = vpop.f32.mrb[0].mxu0
    %v7355 = vadd.f32 0.0, %v7354
    %v7356 = vpop.f32.mrb[0].mxu0
    %7357 = vmatprep.mubr.bf16.mxu0 %v7277
    %7358 = vmatmul.mubr.bf16.gmra.mrb[0].mxu0 %v7159
    %v7359 = vpop.f32.mrb[0].mxu0
    %v7360 = vadd.f32 0.0, %v7359
    %v7361 = vpop.f32.mrb[0].mxu0
    %v7362 = vpop.f32.mrb[0].mxu0
    %v7363 = vadd.f32 0.0, %v7362
    %v7364 = vpop.f32.mrb[0].mxu0
    %7365 = vmatprep.mubr.bf16.mxu0 %v7280
    %7366 = vmatmul.mubr.bf16.gmra.mrb[0].mxu0 %v7161
    %v7367 = vpop.f32.mrb[0].mxu0
    %v7368 = vadd.f32 0.0, %v7367
    %v7369 = vpop.f32.mrb[0].mxu0
    %v7370 = vpop.f32.mrb[0].mxu0
    %v7371 = vadd.f32 0.0, %v7370
    %v7372 = vpop.f32.mrb[0].mxu0
    %7373 = vmatprep.mubr.bf16.mxu0 %v7283
    %7374 = vmatmul.mubr.bf16.gmra.mrb[0].mxu0 %v7163
    %v7375 = vpop.f32.mrb[0].mxu0
    %v7376 = vadd.f32 0.0, %v7375
    %v7377 = vpop.f32.mrb[0].mxu0
    %v7378 = vpop.f32.mrb[0].mxu0
    %v7379 = vadd.f32 0.0, %v7378
    %v7380 = vpop.f32.mrb[0].mxu0
    %7381 = vdwg.mxu0
    %v7382 = vld [vmem:[%s12] sm:$0x1]
    %v7383 = vld [vmem:[%s13] sm:$0x1]
    %v7384 = vadd.f32 %v7320, %v7323
    %v7385 = vadd.f32 %v7384, %v7328
    %v7386 = vadd.f32 %v7385, %v7331
    %v7387 = vadd.f32 %v7386, %v7336
    %v7388 = vadd.f32 %v7387, %v7339
    %v7389 = vadd.f32 %v7388, %v7344
    %v7390 = vadd.f32 %v7389, %v7347
    %v7391 = vadd.f32 %v7390, %v7352
    %v7392 = vadd.f32 %v7391, %v7355
    %v7393 = vadd.f32 %v7392, %v7360
    %v7394 = vadd.f32 %v7393, %v7363
    %v7395 = vadd.f32 %v7394, %v7368
    %v7396 = vadd.f32 %v7395, %v7371
    %v7397 = vadd.f32 %v7396, %v7376
    %v7398 = vadd.f32 %v7397, %v7379
    %v7399 = vrot.slane %v7398, 4
    %v7400 = vadd.f32 %v7398, %v7399
    %v7401 = vrot.slane %v7400, 2
    %v7402 = vadd.f32 %v7400, %v7401
    %v7403 = vrot.slane %v7402, 1
    %v7404 = vadd.f32 %v7402, %v7403
    %v7405 = vrcp.pop 128.0
    %v7406 = vmul.f32 %v7404, %v7405
    %v7407 = vsub.f32 %v7320, %v7406
    %v7408 = vsub.f32 %v7323, %v7406
    %v7409 = vsub.f32 %v7328, %v7406
    %v7410 = vsub.f32 %v7331, %v7406
    %v7411 = vsub.f32 %v7336, %v7406
    %v7412 = vsub.f32 %v7339, %v7406
    %v7413 = vsub.f32 %v7344, %v7406
    %v7414 = vsub.f32 %v7347, %v7406
    %v7415 = vsub.f32 %v7352, %v7406
    %v7416 = vsub.f32 %v7355, %v7406
    %v7417 = vsub.f32 %v7360, %v7406
    %v7418 = vsub.f32 %v7363, %v7406
    %v7419 = vsub.f32 %v7368, %v7406
    %v7420 = vsub.f32 %v7371, %v7406
    %v7421 = vsub.f32 %v7376, %v7406
    %v7422 = vsub.f32 %v7379, %v7406
    %v7423 = vmul.f32 %v7407, %v7407
    %v7424 = vmul.f32 %v7408, %v7408
    %v7425 = vmul.f32 %v7409, %v7409
    %v7426 = vmul.f32 %v7410, %v7410
    %v7427 = vmul.f32 %v7411, %v7411
    %v7428 = vmul.f32 %v7412, %v7412
    %v7429 = vmul.f32 %v7413, %v7413
    %v7430 = vmul.f32 %v7414, %v7414
    %v7431 = vmul.f32 %v7415, %v7415
    %v7432 = vmul.f32 %v7416, %v7416
    %v7433 = vmul.f32 %v7417, %v7417
    %v7434 = vmul.f32 %v7418, %v7418
    %v7435 = vmul.f32 %v7419, %v7419
    %v7436 = vmul.f32 %v7420, %v7420
    %v7437 = vmul.f32 %v7421, %v7421
    %v7438 = vmul.f32 %v7422, %v7422
    %v7439 = vadd.f32 %v7423, %v7424
    %v7440 = vadd.f32 %v7439, %v7425
    %v7441 = vadd.f32 %v7440, %v7426
    %v7442 = vadd.f32 %v7441, %v7427
    %v7443 = vadd.f32 %v7442, %v7428
    %v7444 = vadd.f32 %v7443, %v7429
    %v7445 = vadd.f32 %v7444, %v7430
    %v7446 = vadd.f32 %v7445, %v7431
    %v7447 = vadd.f32 %v7446, %v7432
    %v7448 = vadd.f32 %v7447, %v7433
    %v7449 = vadd.f32 %v7448, %v7434
    %v7450 = vadd.f32 %v7449, %v7435
    %v7451 = vadd.f32 %v7450, %v7436
    %v7452 = vadd.f32 %v7451, %v7437
    %v7453 = vadd.f32 %v7452, %v7438
    %v7454 = vrot.slane %v7453, 4
    %v7455 = vadd.f32 %v7453, %v7454
    %v7456 = vrot.slane %v7455, 2
    %v7457 = vadd.f32 %v7455, %v7456
    %v7458 = vrot.slane %v7457, 1
    %v7459 = vadd.f32 %v7457, %v7458
    %v7460 = vmul.f32 %v7459, %v7405
    %v7461 = vadd.f32 %v7460, 1e-05
    %v7462 = vrsqrt.pop %v7461
    %v7463 = vmul.f32 %v7382, %v7462
    %v7464 = vmul.f32 %v7406, %v7463
    %v7465 = vsub.f32 %v7383, %v7464
    %v7467 = vlaneseq
    %v7468 = vshrl.u32 %v7467, 7
    %v7469 = vsub.s32 0, %v7468
    %v7470 = vrot.slane %v7463, %v7469
    %v7472 = vmul.f32 %v7320, %v7470
    %v7473 = vmul.f32 %v7323, %v7470
    %v7474 = vmul.f32 %v7328, %v7470
    %v7475 = vmul.f32 %v7331, %v7470
    %v7476 = vmul.f32 %v7336, %v7470
    %v7477 = vmul.f32 %v7339, %v7470
    %v7478 = vmul.f32 %v7344, %v7470
    %v7479 = vmul.f32 %v7347, %v7470
    %v7480 = vmul.f32 %v7352, %v7470
    %v7481 = vmul.f32 %v7355, %v7470
    %v7482 = vmul.f32 %v7360, %v7470
    %v7483 = vmul.f32 %v7363, %v7470
    %v7484 = vmul.f32 %v7368, %v7470
    %v7485 = vmul.f32 %v7371, %v7470
    %v7486 = vmul.f32 %v7376, %v7470
    %v7487 = vmul.f32 %v7379, %v7470
    %v7489 = vlaneseq
    %v7490 = vshrl.u32 %v7489, 7
    %v7491 = vsub.s32 0, %v7490
    %v7492 = vrot.slane %v7465, %v7491
    %v7494 = vadd.f32 %v7472, %v7492
    %v7495 = vadd.f32 %v7473, %v7492
    %v7496 = vadd.f32 %v7474, %v7492
    %v7497 = vadd.f32 %v7475, %v7492
    %v7498 = vadd.f32 %v7476, %v7492
    %v7499 = vadd.f32 %v7477, %v7492
    %v7500 = vadd.f32 %v7478, %v7492
    %v7501 = vadd.f32 %v7479, %v7492
    %v7502 = vadd.f32 %v7480, %v7492
    %v7503 = vadd.f32 %v7481, %v7492
    %v7504 = vadd.f32 %v7482, %v7492
    %v7505 = vadd.f32 %v7483, %v7492
    %v7506 = vadd.f32 %v7484, %v7492
    %v7507 = vadd.f32 %v7485, %v7492
    %v7508 = vadd.f32 %v7486, %v7492
    %v7509 = vadd.f32 %v7487, %v7492
    %v7510 = vmax.f32 %v7494, 0.0
    %v7511 = vmax.f32 %v7495, 0.0
    %v7512 = vmax.f32 %v7496, 0.0
    %v7513 = vmax.f32 %v7497, 0.0
    %v7514 = vmax.f32 %v7498, 0.0
    %v7515 = vmax.f32 %v7499, 0.0
    %v7516 = vmax.f32 %v7500, 0.0
    %v7517 = vmax.f32 %v7501, 0.0
    %v7518 = vmax.f32 %v7502, 0.0
    %v7519 = vmax.f32 %v7503, 0.0
    %v7520 = vmax.f32 %v7504, 0.0
    %v7521 = vmax.f32 %v7505, 0.0
    %v7522 = vmax.f32 %v7506, 0.0
    %v7523 = vmax.f32 %v7507, 0.0
    %v7524 = vmax.f32 %v7508, 0.0
    %v7525 = vmax.f32 %v7509, 0.0
    %7526 = vst [vmem:[#allocation8] sm:$0xff] %v7510
    %7527 = vst [vmem:[#allocation8 + $0x8] sm:$0xff] %v7511
    %7528 = vst [vmem:[#allocation8 + $0x10] sm:$0xff] %v7512
    %7529 = vst [vmem:[#allocation8 + $0x18] sm:$0xff] %v7513
    %7530 = vst [vmem:[#allocation8 + $0x20] sm:$0xff] %v7514
    %7531 = vst [vmem:[#allocation8 + $0x28] sm:$0xff] %v7515
    %7532 = vst [vmem:[#allocation8 + $0x30] sm:$0xff] %v7516
    %7533 = vst [vmem:[#allocation8 + $0x38] sm:$0xff] %v7517
    %7534 = vst [vmem:[#allocation8 + $0x40] sm:$0xff] %v7518
    %7535 = vst [vmem:[#allocation8 + $0x48] sm:$0xff] %v7519
    %7536 = vst [vmem:[#allocation8 + $0x50] sm:$0xff] %v7520
    %7537 = vst [vmem:[#allocation8 + $0x58] sm:$0xff] %v7521
    %7538 = vst [vmem:[#allocation8 + $0x60] sm:$0xff] %v7522
    %7539 = vst [vmem:[#allocation8 + $0x68] sm:$0xff] %v7523
    %7540 = vst [vmem:[#allocation8 + $0x70] sm:$0xff] %v7524
    %7541 = vst [vmem:[#allocation8 + $0x78] sm:$0xff] %v7525
    %v7558 = vcombine.high %v7510, %v7510
    %v7559 = vcombine.high %v7511, %v7511
    %v7560 = vcombine.high %v7512, %v7512
    %v7561 = vcombine.high %v7513, %v7513
    %v7562 = vcombine.high %v7514, %v7514
    %v7563 = vcombine.high %v7515, %v7515
    %v7564 = vcombine.high %v7516, %v7516
    %v7565 = vcombine.high %v7517, %v7517
    %v7566 = vcombine.high %v7518, %v7518
    %v7567 = vcombine.high %v7519, %v7519
    %v7568 = vcombine.high %v7520, %v7520
    %v7569 = vcombine.high %v7521, %v7521
    %v7570 = vcombine.high %v7522, %v7522
    %v7571 = vcombine.high %v7523, %v7523
    %v7572 = vcombine.high %v7524, %v7524
    %v7573 = vcombine.high %v7525, %v7525
    %vm7590 = vcmask 1043456
    %v7591 = vsel %vm7590, %v7510, -inf
    %v7592 = vrot.slane %v7591, 4
    %v7593 = vmax.f32 %v7591, %v7592
    %v7594 = vrot.slane %v7593, 2
    %v7595 = vmax.f32 %v7593, %v7594
    %v7596 = vrot.slane %v7595, 1
    %v7597 = vmax.f32 %v7595, %v7596
    %v7598 = vsel %vm7590, %v7558, -inf
    %v7599 = vrot.slane %v7598, 4
    %v7600 = vmax.f32 %v7598, %v7599
    %v7601 = vrot.slane %v7600, 2
    %v7602 = vmax.f32 %v7600, %v7601
    %v7603 = vrot.slane %v7602, 1
    %v7604 = vmax.f32 %v7602, %v7603
    %v7605 = vsel %vm7590, %v7511, -inf
    %v7606 = vrot.slane %v7605, 4
    %v7607 = vmax.f32 %v7605, %v7606
    %v7608 = vrot.slane %v7607, 2
    %v7609 = vmax.f32 %v7607, %v7608
    %v7610 = vrot.slane %v7609, 1
    %v7611 = vmax.f32 %v7609, %v7610
    %v7612 = vsel %vm7590, %v7559, -inf
    %v7613 = vrot.slane %v7612, 4
    %v7614 = vmax.f32 %v7612, %v7613
    %v7615 = vrot.slane %v7614, 2
    %v7616 = vmax.f32 %v7614, %v7615
    %v7617 = vrot.slane %v7616, 1
    %v7618 = vmax.f32 %v7616, %v7617
    %v7619 = vsel %vm7590, %v7512, -inf
    %v7620 = vrot.slane %v7619, 4
    %v7621 = vmax.f32 %v7619, %v7620
    %v7622 = vrot.slane %v7621, 2
    %v7623 = vmax.f32 %v7621, %v7622
    %v7624 = vrot.slane %v7623, 1
    %v7625 = vmax.f32 %v7623, %v7624
    %v7626 = vsel %vm7590, %v7560, -inf
    %v7627 = vrot.slane %v7626, 4
    %v7628 = vmax.f32 %v7626, %v7627
    %v7629 = vrot.slane %v7628, 2
    %v7630 = vmax.f32 %v7628, %v7629
    %v7631 = vrot.slane %v7630, 1
    %v7632 = vmax.f32 %v7630, %v7631
    %v7633 = vsel %vm7590, %v7513, -inf
    %v7634 = vrot.slane %v7633, 4
    %v7635 = vmax.f32 %v7633, %v7634
    %v7636 = vrot.slane %v7635, 2
    %v7637 = vmax.f32 %v7635, %v7636
    %v7638 = vrot.slane %v7637, 1
    %v7639 = vmax.f32 %v7637, %v7638
    %v7640 = vsel %vm7590, %v7561, -inf
    %v7641 = vrot.slane %v7640, 4
    %v7642 = vmax.f32 %v7640, %v7641
    %v7643 = vrot.slane %v7642, 2
    %v7644 = vmax.f32 %v7642, %v7643
    %v7645 = vrot.slane %v7644, 1
    %v7646 = vmax.f32 %v7644, %v7645
    %v7647 = vsel %vm7590, %v7514, -inf
    %v7648 = vrot.slane %v7647, 4
    %v7649 = vmax.f32 %v7647, %v7648
    %v7650 = vrot.slane %v7649, 2
    %v7651 = vmax.f32 %v7649, %v7650
    %v7652 = vrot.slane %v7651, 1
    %v7653 = vmax.f32 %v7651, %v7652
    %v7654 = vsel %vm7590, %v7562, -inf
    %v7655 = vrot.slane %v7654, 4
    %v7656 = vmax.f32 %v7654, %v7655
    %v7657 = vrot.slane %v7656, 2
    %v7658 = vmax.f32 %v7656, %v7657
    %v7659 = vrot.slane %v7658, 1
    %v7660 = vmax.f32 %v7658, %v7659
    %v7661 = vsel %vm7590, %v7515, -inf
    %v7662 = vrot.slane %v7661, 4
    %v7663 = vmax.f32 %v7661, %v7662
    %v7664 = vrot.slane %v7663, 2
    %v7665 = vmax.f32 %v7663, %v7664
    %v7666 = vrot.slane %v7665, 1
    %v7667 = vmax.f32 %v7665, %v7666
    %v7668 = vsel %vm7590, %v7563, -inf
    %v7669 = vrot.slane %v7668, 4
    %v7670 = vmax.f32 %v7668, %v7669
    %v7671 = vrot.slane %v7670, 2
    %v7672 = vmax.f32 %v7670, %v7671
    %v7673 = vrot.slane %v7672, 1
    %v7674 = vmax.f32 %v7672, %v7673
    %v7675 = vsel %vm7590, %v7516, -inf
    %v7676 = vrot.slane %v7675, 4
    %v7677 = vmax.f32 %v7675, %v7676
    %v7678 = vrot.slane %v7677, 2
    %v7679 = vmax.f32 %v7677, %v7678
    %v7680 = vrot.slane %v7679, 1
    %v7681 = vmax.f32 %v7679, %v7680
    %v7682 = vsel %vm7590, %v7564, -inf
    %v7683 = vrot.slane %v7682, 4
    %v7684 = vmax.f32 %v7682, %v7683
    %v7685 = vrot.slane %v7684, 2
    %v7686 = vmax.f32 %v7684, %v7685
    %v7687 = vrot.slane %v7686, 1
    %v7688 = vmax.f32 %v7686, %v7687
    %v7689 = vsel %vm7590, %v7517, -inf
    %v7690 = vrot.slane %v7689, 4
    %v7691 = vmax.f32 %v7689, %v7690
    %v7692 = vrot.slane %v7691, 2
    %v7693 = vmax.f32 %v7691, %v7692
    %v7694 = vrot.slane %v7693, 1
    %v7695 = vmax.f32 %v7693, %v7694
    %v7696 = vsel %vm7590, %v7565, -inf
    %v7697 = vrot.slane %v7696, 4
    %v7698 = vmax.f32 %v7696, %v7697
    %v7699 = vrot.slane %v7698, 2
    %v7700 = vmax.f32 %v7698, %v7699
    %v7701 = vrot.slane %v7700, 1
    %v7702 = vmax.f32 %v7700, %v7701
    %v7703 = vsel %vm7590, %v7518, -inf
    %v7704 = vrot.slane %v7703, 4
    %v7705 = vmax.f32 %v7703, %v7704
    %v7706 = vrot.slane %v7705, 2
    %v7707 = vmax.f32 %v7705, %v7706
    %v7708 = vrot.slane %v7707, 1
    %v7709 = vmax.f32 %v7707, %v7708
    %v7710 = vsel %vm7590, %v7566, -inf
    %v7711 = vrot.slane %v7710, 4
    %v7712 = vmax.f32 %v7710, %v7711
    %v7713 = vrot.slane %v7712, 2
    %v7714 = vmax.f32 %v7712, %v7713
    %v7715 = vrot.slane %v7714, 1
    %v7716 = vmax.f32 %v7714, %v7715
    %v7717 = vsel %vm7590, %v7519, -inf
    %v7718 = vrot.slane %v7717, 4
    %v7719 = vmax.f32 %v7717, %v7718
    %v7720 = vrot.slane %v7719, 2
    %v7721 = vmax.f32 %v7719, %v7720
    %v7722 = vrot.slane %v7721, 1
    %v7723 = vmax.f32 %v7721, %v7722
    %v7724 = vsel %vm7590, %v7567, -inf
    %v7725 = vrot.slane %v7724, 4
    %v7726 = vmax.f32 %v7724, %v7725
    %v7727 = vrot.slane %v7726, 2
    %v7728 = vmax.f32 %v7726, %v7727
    %v7729 = vrot.slane %v7728, 1
    %v7730 = vmax.f32 %v7728, %v7729
    %v7731 = vsel %vm7590, %v7520, -inf
    %v7732 = vrot.slane %v7731, 4
    %v7733 = vmax.f32 %v7731, %v7732
    %v7734 = vrot.slane %v7733, 2
    %v7735 = vmax.f32 %v7733, %v7734
    %v7736 = vrot.slane %v7735, 1
    %v7737 = vmax.f32 %v7735, %v7736
    %v7738 = vsel %vm7590, %v7568, -inf
    %v7739 = vrot.slane %v7738, 4
    %v7740 = vmax.f32 %v7738, %v7739
    %v7741 = vrot.slane %v7740, 2
    %v7742 = vmax.f32 %v7740, %v7741
    %v7743 = vrot.slane %v7742, 1
    %v7744 = vmax.f32 %v7742, %v7743
    %v7745 = vsel %vm7590, %v7521, -inf
    %v7746 = vrot.slane %v7745, 4
    %v7747 = vmax.f32 %v7745, %v7746
    %v7748 = vrot.slane %v7747, 2
    %v7749 = vmax.f32 %v7747, %v7748
    %v7750 = vrot.slane %v7749, 1
    %v7751 = vmax.f32 %v7749, %v7750
    %v7752 = vsel %vm7590, %v7569, -inf
    %v7753 = vrot.slane %v7752, 4
    %v7754 = vmax.f32 %v7752, %v7753
    %v7755 = vrot.slane %v7754, 2
    %v7756 = vmax.f32 %v7754, %v7755
    %v7757 = vrot.slane %v7756, 1
    %v7758 = vmax.f32 %v7756, %v7757
    %v7759 = vsel %vm7590, %v7522, -inf
    %v7760 = vrot.slane %v7759, 4
    %v7761 = vmax.f32 %v7759, %v7760
    %v7762 = vrot.slane %v7761, 2
    %v7763 = vmax.f32 %v7761, %v7762
    %v7764 = vrot.slane %v7763, 1
    %v7765 = vmax.f32 %v7763, %v7764
    %v7766 = vsel %vm7590, %v7570, -inf
    %v7767 = vrot.slane %v7766, 4
    %v7768 = vmax.f32 %v7766, %v7767
    %v7769 = vrot.slane %v7768, 2
    %v7770 = vmax.f32 %v7768, %v7769
    %v7771 = vrot.slane %v7770, 1
    %v7772 = vmax.f32 %v7770, %v7771
    %v7773 = vsel %vm7590, %v7523, -inf
    %v7774 = vrot.slane %v7773, 4
    %v7775 = vmax.f32 %v7773, %v7774
    %v7776 = vrot.slane %v7775, 2
    %v7777 = vmax.f32 %v7775, %v7776
    %v7778 = vrot.slane %v7777, 1
    %v7779 = vmax.f32 %v7777, %v7778
    %v7780 = vsel %vm7590, %v7571, -inf
    %v7781 = vrot.slane %v7780, 4
    %v7782 = vmax.f32 %v7780, %v7781
    %v7783 = vrot.slane %v7782, 2
    %v7784 = vmax.f32 %v7782, %v7783
    %v7785 = vrot.slane %v7784, 1
    %v7786 = vmax.f32 %v7784, %v7785
    %v7787 = vsel %vm7590, %v7524, -inf
    %v7788 = vrot.slane %v7787, 4
    %v7789 = vmax.f32 %v7787, %v7788
    %v7790 = vrot.slane %v7789, 2
    %v7791 = vmax.f32 %v7789, %v7790
    %v7792 = vrot.slane %v7791, 1
    %v7793 = vmax.f32 %v7791, %v7792
    %v7794 = vsel %vm7590, %v7572, -inf
    %v7795 = vrot.slane %v7794, 4
    %v7796 = vmax.f32 %v7794, %v7795
    %v7797 = vrot.slane %v7796, 2
    %v7798 = vmax.f32 %v7796, %v7797
    %v7799 = vrot.slane %v7798, 1
    %v7800 = vmax.f32 %v7798, %v7799
    %v7801 = vsel %vm7590, %v7525, -inf
    %v7802 = vrot.slane %v7801, 4
    %v7803 = vmax.f32 %v7801, %v7802
    %v7804 = vrot.slane %v7803, 2
    %v7805 = vmax.f32 %v7803, %v7804
    %v7806 = vrot.slane %v7805, 1
    %v7807 = vmax.f32 %v7805, %v7806
    %v7808 = vsel %vm7590, %v7573, -inf
    %v7809 = vrot.slane %v7808, 4
    %v7810 = vmax.f32 %v7808, %v7809
    %v7811 = vrot.slane %v7810, 2
    %v7812 = vmax.f32 %v7810, %v7811
    %v7813 = vrot.slane %v7812, 1
    %v7814 = vmax.f32 %v7812, %v7813
    %v7815 = vld [vmem:[%s3] sm:$0xf]
    %v7816 = vld [vmem:[%s3 + $0x4] sm:$0xf]
    %v7817 = vpack.c.bf16 %v7597, %v7597
    %v7818 = vpack.c.bf16 %v7604, %v7604
    %v7819 = vpack.c.bf16 %v7611, %v7611
    %v7820 = vpack.c.bf16 %v7618, %v7618
    %v7821 = vpack.c.bf16 %v7625, %v7625
    %v7822 = vpack.c.bf16 %v7632, %v7632
    %v7823 = vpack.c.bf16 %v7639, %v7639
    %v7824 = vpack.c.bf16 %v7646, %v7646
    %v7825 = vpack.c.bf16 %v7653, %v7653
    %v7826 = vpack.c.bf16 %v7660, %v7660
    %v7827 = vpack.c.bf16 %v7667, %v7667
    %v7828 = vpack.c.bf16 %v7674, %v7674
    %v7829 = vpack.c.bf16 %v7681, %v7681
    %v7830 = vpack.c.bf16 %v7688, %v7688
    %v7831 = vpack.c.bf16 %v7695, %v7695
    %v7832 = vpack.c.bf16 %v7702, %v7702
    %v7849 = vunpack.c.l.b16 %v7817
    %v7850 = vunpack.c.l.b16 %v7818
    %v7851 = vunpack.c.l.b16 %v7819
    %v7852 = vunpack.c.l.b16 %v7820
    %v7853 = vunpack.c.l.b16 %v7821
    %v7854 = vunpack.c.l.b16 %v7822
    %v7855 = vunpack.c.l.b16 %v7823
    %v7856 = vunpack.c.l.b16 %v7824
    %v7857 = vunpack.c.l.b16 %v7825
    %v7858 = vunpack.c.l.b16 %v7826
    %v7859 = vunpack.c.l.b16 %v7827
    %v7860 = vunpack.c.l.b16 %v7828
    %v7861 = vunpack.c.l.b16 %v7829
    %v7862 = vunpack.c.l.b16 %v7830
    %v7863 = vunpack.c.l.b16 %v7831
    %v7864 = vunpack.c.l.b16 %v7832
    %v7865 = vsel %vm6169, %v7850, %v7849
    %v7866 = vsel %vm6171, %v7851, %v7865
    %v7867 = vsel %vm6173, %v7852, %v7866
    %v7868 = vsel %vm6175, %v7853, %v7867
    %v7869 = vsel %vm6177, %v7854, %v7868
    %v7870 = vsel %vm6179, %v7855, %v7869
    %v7871 = vsel %vm6181, %v7856, %v7870
    %v7872 = vsel %vm6169, %v7858, %v7857
    %v7873 = vsel %vm6171, %v7859, %v7872
    %v7874 = vsel %vm6173, %v7860, %v7873
    %v7875 = vsel %vm6175, %v7861, %v7874
    %v7876 = vsel %vm6177, %v7862, %v7875
    %v7877 = vsel %vm6179, %v7863, %v7876
    %v7878 = vsel %vm6181, %v7864, %v7877
    %v7879 = vpack.c.b16 %v7878, %v7871
    %7881 = vst [vmem:[#allocation4] sm:$0xff] %v7879
    %v7884 = vunpack.c.l.b16 %v7815
    %v7885 = vunpack.c.l.b16 %v7816
    %v7886 = vpack.c.b16 %v7885, %v7884
    %vm7887 = vcmask 130048
    %v7889 = vsel %vm7887, %v7886, 0
    %7891 = vmatprep.subr.bf16.mxu0 0
    %7892 = vmatpush1.bf16.msra.mxu0 %v7879
    %7893 = vmatprep.subr.bf16.mxu0 0
    %7894 = vmatpush1.bf16.msra.mxu0 0
    %7895 = vmatprep.subr.bf16.mxu0 0
    %7896 = vmatpush1.bf16.msra.mxu0 0
    %7897 = vmatprep.subr.bf16.mxu0 0
    %7898 = vmatpush1.bf16.msra.mxu0 0
    %7899 = vmatprep.subr.bf16.mxu0 0
    %7900 = vmatpush1.bf16.msra.mxu0 0
    %7901 = vmatprep.subr.bf16.mxu0 0
    %7902 = vmatpush1.bf16.msra.mxu0 0
    %7903 = vmatprep.subr.bf16.mxu0 0
    %7904 = vmatpush1.bf16.msra.mxu0 0
    %7905 = vmatprep.subr.bf16.mxu0 0
    %7906 = vmatpush1.bf16.msra.mxu0 0
    %7907 = vmatprep.subr.bf16.mxu0 0
    %7908 = vmatpush1.bf16.msra.mxu0 0
    %7909 = vmatprep.subr.bf16.mxu0 0
    %7910 = vmatpush1.bf16.msra.mxu0 0
    %7911 = vmatprep.subr.bf16.mxu0 0
    %7912 = vmatpush1.bf16.msra.mxu0 0
    %7913 = vmatprep.subr.bf16.mxu0 0
    %7914 = vmatpush1.bf16.msra.mxu0 0
    %7915 = vmatprep.subr.bf16.mxu0 0
    %7916 = vmatpush1.bf16.msra.mxu0 0
    %7917 = vmatprep.subr.bf16.mxu0 0
    %7918 = vmatpush1.bf16.msra.mxu0 0
    %7919 = vmatprep.subr.bf16.mxu0 0
    %7920 = vmatpush1.bf16.msra.mxu0 0
    %7921 = vmatprep.subr.bf16.mxu0 0
    %7922 = vmatpush1.bf16.msra.mxu0 0
    %7923 = vmatprep.mubr.bf16.mxu0 0
    %7924 = vmatmul.mubr.bf16.gmra.mrb[0].mxu0 %v7889
    %v7925 = vpop.f32.mrb[0].mxu0
    %v7926 = vadd.f32 0.0, %v7925
    %v7927 = vpop.f32.mrb[0].mxu0
    %v7928 = vpop.f32.mrb[0].mxu0
    %v7929 = vadd.f32 0.0, %v7928
    %v7930 = vpop.f32.mrb[0].mxu0
    %7931 = vdwg.mxu0
    %v7932 = vpack.c.bf16 %v7929, %v7926
    %7933 = vst [vmem:[#allocation4 + $0x8] sm:$0xff] %v7932
    %7934 = vmatprep.subr.bf16.mxu0 0
    %7935 = vmatpush1.bf16.msra.mxu0 %v7932
    %7936 = vmatprep.subr.bf16.mxu0 0
    %7937 = vmatpush1.bf16.msra.mxu0 0
    %7938 = vmatprep.subr.bf16.mxu0 0
    %7939 = vmatpush1.bf16.msra.mxu0 0
    %7940 = vmatprep.subr.bf16.mxu0 0
    %7941 = vmatpush1.bf16.msra.mxu0 0
    %7942 = vmatprep.subr.bf16.mxu0 0
    %7943 = vmatpush1.bf16.msra.mxu0 0
    %7944 = vmatprep.subr.bf16.mxu0 0
    %7945 = vmatpush1.bf16.msra.mxu0 0
    %7946 = vmatprep.subr.bf16.mxu0 0
    %7947 = vmatpush1.bf16.msra.mxu0 0
    %7948 = vmatprep.subr.bf16.mxu0 0
    %7949 = vmatpush1.bf16.msra.mxu0 0
    %7950 = vmatprep.subr.bf16.mxu0 0
    %7951 = vmatpush1.bf16.msra.mxu0 0
    %7952 = vmatprep.subr.bf16.mxu0 0
    %7953 = vmatpush1.bf16.msra.mxu0 0
    %7954 = vmatprep.subr.bf16.mxu0 0
    %7955 = vmatpush1.bf16.msra.mxu0 0
    %7956 = vmatprep.subr.bf16.mxu0 0
    %7957 = vmatpush1.bf16.msra.mxu0 0
    %7958 = vmatprep.subr.bf16.mxu0 0
    %7959 = vmatpush1.bf16.msra.mxu0 0
    %7960 = vmatprep.subr.bf16.mxu0 0
    %7961 = vmatpush1.bf16.msra.mxu0 0
    %7962 = vmatprep.subr.bf16.mxu0 0
    %7963 = vmatpush1.bf16.msra.mxu0 0
    %7964 = vmatprep.subr.bf16.mxu0 0
    %7965 = vmatpush1.bf16.msra.mxu0 0
    %7966 = vmatprep.mubr.bf16.mxu0 0
    %7967 = vmatmul.mubr.bf16.gmra.mrb[0].mxu0 %v7889
    %v7968 = vpop.f32.mrb[0].mxu0
    %v7969 = vadd.f32 0.0, %v7968
    %v7970 = vpop.f32.mrb[0].mxu0
    %v7971 = vpop.f32.mrb[0].mxu0
    %v7972 = vadd.f32 0.0, %v7971
    %v7973 = vpop.f32.mrb[0].mxu0
    %7974 = vdwg.mxu0
    %v7975 = vmul.f32 %v7969, 2.0
    %v7976 = vmul.f32 %v7972, 2.0
    %v7993 = vsel %vm6169, %v7604, %v7597
    %v7994 = vsel %vm6171, %v7611, %v7993
    %v7995 = vsel %vm6173, %v7618, %v7994
    %v7996 = vsel %vm6175, %v7625, %v7995
    %v7997 = vsel %vm6177, %v7632, %v7996
    %v7998 = vsel %vm6179, %v7639, %v7997
    %v7999 = vsel %vm6181, %v7646, %v7998
    %v8000 = vsel %vm6169, %v7660, %v7653
    %v8001 = vsel %vm6171, %v7667, %v8000
    %v8002 = vsel %vm6173, %v7674, %v8001
    %v8003 = vsel %vm6175, %v7681, %v8002
    %v8004 = vsel %vm6177, %v7688, %v8003
    %v8005 = vsel %vm6179, %v7695, %v8004
    %v8006 = vsel %vm6181, %v7702, %v8005
    %v8009 = vsub.f32 %v7975, %v7999
    %v8010 = vsub.f32 %v7976, %v8006
    %v8011 = vpack.c.bf16 %v8010, %v8009
    %8012 = vst [vmem:[#allocation4 + $0x10] sm:$0xff] %v8011
    %v8013 = vpack.c.bf16 %v7709, %v7709
    %v8014 = vpack.c.bf16 %v7716, %v7716
    %v8015 = vpack.c.bf16 %v7723, %v7723
    %v8016 = vpack.c.bf16 %v7730, %v7730
    %v8017 = vpack.c.bf16 %v7737, %v7737
    %v8018 = vpack.c.bf16 %v7744, %v7744
    %v8019 = vpack.c.bf16 %v7751, %v7751
    %v8020 = vpack.c.bf16 %v7758, %v7758
    %v8021 = vpack.c.bf16 %v7765, %v7765
    %v8022 = vpack.c.bf16 %v7772, %v7772
    %v8023 = vpack.c.bf16 %v7779, %v7779
    %v8024 = vpack.c.bf16 %v7786, %v7786
    %v8025 = vpack.c.bf16 %v7793, %v7793
    %v8026 = vpack.c.bf16 %v7800, %v7800
    %v8027 = vpack.c.bf16 %v7807, %v7807
    %v8028 = vpack.c.bf16 %v7814, %v7814
    %v8045 = vunpack.c.l.b16 %v8013
    %v8046 = vunpack.c.l.b16 %v8014
    %v8047 = vunpack.c.l.b16 %v8015
    %v8048 = vunpack.c.l.b16 %v8016
    %v8049 = vunpack.c.l.b16 %v8017
    %v8050 = vunpack.c.l.b16 %v8018
    %v8051 = vunpack.c.l.b16 %v8019
    %v8052 = vunpack.c.l.b16 %v8020
    %v8053 = vunpack.c.l.b16 %v8021
    %v8054 = vunpack.c.l.b16 %v8022
    %v8055 = vunpack.c.l.b16 %v8023
    %v8056 = vunpack.c.l.b16 %v8024
    %v8057 = vunpack.c.l.b16 %v8025
    %v8058 = vunpack.c.l.b16 %v8026
    %v8059 = vunpack.c.l.b16 %v8027
    %v8060 = vunpack.c.l.b16 %v8028
    %v8061 = vsel %vm6169, %v8046, %v8045
    %v8062 = vsel %vm6171, %v8047, %v8061
    %v8063 = vsel %vm6173, %v8048, %v8062
    %v8064 = vsel %vm6175, %v8049, %v8063
    %v8065 = vsel %vm6177, %v8050, %v8064
    %v8066 = vsel %vm6179, %v8051, %v8065
    %v8067 = vsel %vm6181, %v8052, %v8066
    %v8068 = vsel %vm6169, %v8054, %v8053
    %v8069 = vsel %vm6171, %v8055, %v8068
    %v8070 = vsel %vm6173, %v8056, %v8069
    %v8071 = vsel %vm6175, %v8057, %v8070
    %v8072 = vsel %vm6177, %v8058, %v8071
    %v8073 = vsel %vm6179, %v8059, %v8072
    %v8074 = vsel %vm6181, %v8060, %v8073
    %v8075 = vpack.c.b16 %v8074, %v8067
    %8077 = vst [vmem:[#allocation4 + $0x18] sm:$0xff] %v8075
    %8078 = vmatprep.subr.bf16.mxu0 0
    %8079 = vmatpush1.bf16.msra.mxu0 %v8075
    %8080 = vmatprep.subr.bf16.mxu0 0
    %8081 = vmatpush1.bf16.msra.mxu0 0
    %8082 = vmatprep.subr.bf16.mxu0 0
    %8083 = vmatpush1.bf16.msra.mxu0 0
    %8084 = vmatprep.subr.bf16.mxu0 0
    %8085 = vmatpush1.bf16.msra.mxu0 0
    %8086 = vmatprep.subr.bf16.mxu0 0
    %8087 = vmatpush1.bf16.msra.mxu0 0
    %8088 = vmatprep.subr.bf16.mxu0 0
    %8089 = vmatpush1.bf16.msra.mxu0 0
    %8090 = vmatprep.subr.bf16.mxu0 0
    %8091 = vmatpush1.bf16.msra.mxu0 0
    %8092 = vmatprep.subr.bf16.mxu0 0
    %8093 = vmatpush1.bf16.msra.mxu0 0
    %8094 = vmatprep.subr.bf16.mxu0 0
    %8095 = vmatpush1.bf16.msra.mxu0 0
    %8096 = vmatprep.subr.bf16.mxu0 0
    %8097 = vmatpush1.bf16.msra.mxu0 0
    %8098 = vmatprep.subr.bf16.mxu0 0
    %8099 = vmatpush1.bf16.msra.mxu0 0
    %8100 = vmatprep.subr.bf16.mxu0 0
    %8101 = vmatpush1.bf16.msra.mxu0 0
    %8102 = vmatprep.subr.bf16.mxu0 0
    %8103 = vmatpush1.bf16.msra.mxu0 0
    %8104 = vmatprep.subr.bf16.mxu0 0
    %8105 = vmatpush1.bf16.msra.mxu0 0
    %8106 = vmatprep.subr.bf16.mxu0 0
    %8107 = vmatpush1.bf16.msra.mxu0 0
    %8108 = vmatprep.subr.bf16.mxu0 0
    %8109 = vmatpush1.bf16.msra.mxu0 0
    %8110 = vmatprep.mubr.bf16.mxu0 0
    %8111 = vmatmul.mubr.bf16.gmra.mrb[0].mxu0 %v7889
    %v8112 = vpop.f32.mrb[0].mxu0
    %v8113 = vadd.f32 0.0, %v8112
    %v8114 = vpop.f32.mrb[0].mxu0
    %v8115 = vpop.f32.mrb[0].mxu0
    %v8116 = vadd.f32 0.0, %v8115
    %v8117 = vpop.f32.mrb[0].mxu0
    %8118 = vdwg.mxu0
    %v8119 = vpack.c.bf16 %v8116, %v8113
    %8120 = vst [vmem:[#allocation4 + $0x20] sm:$0xff] %v8119
    %8121 = vmatprep.subr.bf16.mxu0 0
    %8122 = vmatpush1.bf16.msra.mxu0 %v8119
    %8123 = vmatprep.subr.bf16.mxu0 0
    %8124 = vmatpush1.bf16.msra.mxu0 0
    %8125 = vmatprep.subr.bf16.mxu0 0
    %8126 = vmatpush1.bf16.msra.mxu0 0
    %8127 = vmatprep.subr.bf16.mxu0 0
    %8128 = vmatpush1.bf16.msra.mxu0 0
    %8129 = vmatprep.subr.bf16.mxu0 0
    %8130 = vmatpush1.bf16.msra.mxu0 0
    %8131 = vmatprep.subr.bf16.mxu0 0
    %8132 = vmatpush1.bf16.msra.mxu0 0
    %8133 = vmatprep.subr.bf16.mxu0 0
    %8134 = vmatpush1.bf16.msra.mxu0 0
    %8135 = vmatprep.subr.bf16.mxu0 0
    %8136 = vmatpush1.bf16.msra.mxu0 0
    %8137 = vmatprep.subr.bf16.mxu0 0
    %8138 = vmatpush1.bf16.msra.mxu0 0
    %8139 = vmatprep.subr.bf16.mxu0 0
    %8140 = vmatpush1.bf16.msra.mxu0 0
    %8141 = vmatprep.subr.bf16.mxu0 0
    %8142 = vmatpush1.bf16.msra.mxu0 0
    %8143 = vmatprep.subr.bf16.mxu0 0
    %8144 = vmatpush1.bf16.msra.mxu0 0
    %8145 = vmatprep.subr.bf16.mxu0 0
    %8146 = vmatpush1.bf16.msra.mxu0 0
    %8147 = vmatprep.subr.bf16.mxu0 0
    %8148 = vmatpush1.bf16.msra.mxu0 0
    %8149 = vmatprep.subr.bf16.mxu0 0
    %8150 = vmatpush1.bf16.msra.mxu0 0
    %8151 = vmatprep.subr.bf16.mxu0 0
    %8152 = vmatpush1.bf16.msra.mxu0 0
    %8153 = vmatprep.mubr.bf16.mxu0 0
    %8154 = vmatmul.mubr.bf16.gmra.mrb[0].mxu0 %v7889
    %v8155 = vpop.f32.mrb[0].mxu0
    %v8156 = vadd.f32 0.0, %v8155
    %v8157 = vpop.f32.mrb[0].mxu0
    %v8158 = vpop.f32.mrb[0].mxu0
    %v8159 = vadd.f32 0.0, %v8158
    %v8160 = vpop.f32.mrb[0].mxu0
    %8161 = vdwg.mxu0
    %v8162 = vmul.f32 %v8156, 2.0
    %v8163 = vmul.f32 %v8159, 2.0
    %v8180 = vsel %vm6169, %v7716, %v7709
    %v8181 = vsel %vm6171, %v7723, %v8180
    %v8182 = vsel %vm6173, %v7730, %v8181
    %v8183 = vsel %vm6175, %v7737, %v8182
    %v8184 = vsel %vm6177, %v7744, %v8183
    %v8185 = vsel %vm6179, %v7751, %v8184
    %v8186 = vsel %vm6181, %v7758, %v8185
    %v8187 = vsel %vm6169, %v7772, %v7765
    %v8188 = vsel %vm6171, %v7779, %v8187
    %v8189 = vsel %vm6173, %v7786, %v8188
    %v8190 = vsel %vm6175, %v7793, %v8189
    %v8191 = vsel %vm6177, %v7800, %v8190
    %v8192 = vsel %vm6179, %v7807, %v8191
    %v8193 = vsel %vm6181, %v7814, %v8192
    %v8196 = vsub.f32 %v8162, %v8186
    %v8197 = vsub.f32 %v8163, %v8193
    %v8198 = vpack.c.bf16 %v8197, %v8196
    %8199 = vst [vmem:[#allocation4 + $0x28] sm:$0xff] %v8198
    %v8200 = vld [vmem:[#allocation4] sm:$0xff]
    %v8201 = vld [vmem:[#allocation4 + $0x8] sm:$0xff]
    %v8202 = vld [vmem:[#allocation4 + $0x10] sm:$0xff]
    %v8203 = vld [vmem:[#allocation4 + $0x18] sm:$0xff]
    %v8204 = vld [vmem:[#allocation4 + $0x20] sm:$0xff]
    %v8205 = vld [vmem:[#allocation4 + $0x28] sm:$0xff]
    %v8206 = vld [vmem:[%s14] sm:$0xff]
    %v8207 = vld [vmem:[%s14 + $0x8] sm:$0xff]
    %v8208 = vld [vmem:[%s14 + $0x10] sm:$0xff]
    %v8209 = vld [vmem:[%s14 + $0x18] sm:$0xff]
    %v8210 = vld [vmem:[%s14 + $0x20] sm:$0xff]
    %v8211 = vld [vmem:[%s14 + $0x28] sm:$0xff]
    %v8212 = vld [vmem:[%s14 + $0x30] sm:$0xff]
    %v8213 = vld [vmem:[%s14 + $0x38] sm:$0xff]
    %v8214 = vld [vmem:[%s14 + $0x40] sm:$0xff]
    %v8215 = vld [vmem:[%s14 + $0x48] sm:$0xff]
    %v8216 = vld [vmem:[%s14 + $0x50] sm:$0xff]
    %v8217 = vld [vmem:[%s14 + $0x58] sm:$0xff]
    %v8218 = vld [vmem:[%s14 + $0x60] sm:$0xff]
    %v8219 = vld [vmem:[%s14 + $0x68] sm:$0xff]
    %v8220 = vld [vmem:[%s14 + $0x70] sm:$0xff]
    %v8221 = vld [vmem:[%s14 + $0x78] sm:$0xff]
    %v8222 = vld [vmem:[%s14 + $0x80] sm:$0xff]
    %v8223 = vld [vmem:[%s14 + $0x88] sm:$0xff]
    %v8224 = vld [vmem:[%s14 + $0x90] sm:$0xff]
    %v8225 = vld [vmem:[%s14 + $0x98] sm:$0xff]
    %v8226 = vld [vmem:[%s14 + $0xa0] sm:$0xff]
    %v8227 = vld [vmem:[%s14 + $0xa8] sm:$0xff]
    %v8228 = vld [vmem:[%s14 + $0xb0] sm:$0xff]
    %v8229 = vld [vmem:[%s14 + $0xb8] sm:$0xff]
    %v8230 = vld [vmem:[%s14 + $0xc0] sm:$0xff]
    %v8231 = vld [vmem:[%s14 + $0xc8] sm:$0xff]
    %v8232 = vld [vmem:[%s14 + $0xd0] sm:$0xff]
    %v8233 = vld [vmem:[%s14 + $0xd8] sm:$0xff]
    %v8234 = vld [vmem:[%s14 + $0xe0] sm:$0xff]
    %v8235 = vld [vmem:[%s14 + $0xe8] sm:$0xff]
    %v8236 = vld [vmem:[%s14 + $0xf0] sm:$0xff]
    %v8237 = vld [vmem:[%s14 + $0xf8] sm:$0xff]
    %v8238 = vld [vmem:[%s14 + $0x100] sm:$0xff]
    %v8239 = vld [vmem:[%s14 + $0x108] sm:$0xff]
    %v8240 = vld [vmem:[%s14 + $0x110] sm:$0xff]
    %v8241 = vld [vmem:[%s14 + $0x118] sm:$0xff]
    %v8242 = vld [vmem:[%s14 + $0x120] sm:$0xff]
    %v8243 = vld [vmem:[%s14 + $0x128] sm:$0xff]
    %v8244 = vld [vmem:[%s14 + $0x130] sm:$0xff]
    %v8245 = vld [vmem:[%s14 + $0x138] sm:$0xff]
    %v8246 = vld [vmem:[%s14 + $0x140] sm:$0xff]
    %v8247 = vld [vmem:[%s14 + $0x148] sm:$0xff]
    %v8248 = vld [vmem:[%s14 + $0x150] sm:$0xff]
    %v8249 = vld [vmem:[%s14 + $0x158] sm:$0xff]
    %v8250 = vld [vmem:[%s14 + $0x160] sm:$0xff]
    %v8251 = vld [vmem:[%s14 + $0x168] sm:$0xff]
    %v8252 = vld [vmem:[%s14 + $0x170] sm:$0xff]
    %v8253 = vld [vmem:[%s14 + $0x178] sm:$0xff]
    %v8302 = vunpack.c.l.b16 %v8206
    %v8303 = vunpack.c.h.b16 %v8206
    %v8304 = vunpack.c.l.b16 %v8207
    %v8305 = vunpack.c.h.b16 %v8207
    %v8306 = vunpack.c.l.b16 %v8208
    %v8307 = vunpack.c.h.b16 %v8208
    %v8308 = vunpack.c.l.b16 %v8209
    %v8309 = vunpack.c.h.b16 %v8209
    %v8310 = vunpack.c.l.b16 %v8210
    %v8311 = vunpack.c.h.b16 %v8210
    %v8312 = vunpack.c.l.b16 %v8211
    %v8313 = vunpack.c.h.b16 %v8211
    %v8314 = vunpack.c.l.b16 %v8212
    %v8315 = vunpack.c.h.b16 %v8212
    %v8316 = vunpack.c.l.b16 %v8213
    %v8317 = vunpack.c.h.b16 %v8213
    %v8318 = vunpack.c.l.b16 %v8214
    %v8319 = vunpack.c.h.b16 %v8214
    %v8320 = vunpack.c.l.b16 %v8215
    %v8321 = vunpack.c.h.b16 %v8215
    %v8322 = vunpack.c.l.b16 %v8216
    %v8323 = vunpack.c.h.b16 %v8216
    %v8324 = vunpack.c.l.b16 %v8217
    %v8325 = vunpack.c.h.b16 %v8217
    %v8326 = vunpack.c.l.b16 %v8218
    %v8327 = vunpack.c.h.b16 %v8218
    %v8328 = vunpack.c.l.b16 %v8219
    %v8329 = vunpack.c.h.b16 %v8219
    %v8330 = vunpack.c.l.b16 %v8220
    %v8331 = vunpack.c.h.b16 %v8220
    %v8332 = vunpack.c.l.b16 %v8221
    %v8333 = vunpack.c.h.b16 %v8221
    %v8334 = vunpack.c.l.b16 %v8222
    %v8335 = vunpack.c.h.b16 %v8222
    %v8336 = vunpack.c.l.b16 %v8223
    %v8337 = vunpack.c.h.b16 %v8223
    %v8338 = vunpack.c.l.b16 %v8224
    %v8339 = vunpack.c.h.b16 %v8224
    %v8340 = vunpack.c.l.b16 %v8225
    %v8341 = vunpack.c.h.b16 %v8225
    %v8342 = vunpack.c.l.b16 %v8226
    %v8343 = vunpack.c.h.b16 %v8226
    %v8344 = vunpack.c.l.b16 %v8227
    %v8345 = vunpack.c.h.b16 %v8227
    %v8346 = vunpack.c.l.b16 %v8228
    %v8347 = vunpack.c.h.b16 %v8228
    %v8348 = vunpack.c.l.b16 %v8229
    %v8349 = vunpack.c.h.b16 %v8229
    %v8350 = vunpack.c.l.b16 %v8230
    %v8351 = vunpack.c.h.b16 %v8230
    %v8352 = vunpack.c.l.b16 %v8231
    %v8353 = vunpack.c.h.b16 %v8231
    %v8354 = vunpack.c.l.b16 %v8232
    %v8355 = vunpack.c.h.b16 %v8232
    %v8356 = vunpack.c.l.b16 %v8233
    %v8357 = vunpack.c.h.b16 %v8233
    %v8358 = vunpack.c.l.b16 %v8234
    %v8359 = vunpack.c.h.b16 %v8234
    %v8360 = vunpack.c.l.b16 %v8235
    %v8361 = vunpack.c.h.b16 %v8235
    %v8362 = vunpack.c.l.b16 %v8236
    %v8363 = vunpack.c.h.b16 %v8236
    %v8364 = vunpack.c.l.b16 %v8237
    %v8365 = vunpack.c.h.b16 %v8237
    %v8366 = vunpack.c.l.b16 %v8238
    %v8367 = vunpack.c.h.b16 %v8238
    %v8368 = vunpack.c.l.b16 %v8239
    %v8369 = vunpack.c.h.b16 %v8239
    %v8370 = vunpack.c.l.b16 %v8240
    %v8371 = vunpack.c.h.b16 %v8240
    %v8372 = vunpack.c.l.b16 %v8241
    %v8373 = vunpack.c.h.b16 %v8241
    %v8374 = vunpack.c.l.b16 %v8242
    %v8375 = vunpack.c.h.b16 %v8242
    %v8376 = vunpack.c.l.b16 %v8243
    %v8377 = vunpack.c.h.b16 %v8243
    %v8378 = vunpack.c.l.b16 %v8244
    %v8379 = vunpack.c.h.b16 %v8244
    %v8380 = vunpack.c.l.b16 %v8245
    %v8381 = vunpack.c.h.b16 %v8245
    %v8382 = vunpack.c.l.b16 %v8246
    %v8383 = vunpack.c.h.b16 %v8246
    %v8384 = vunpack.c.l.b16 %v8247
    %v8385 = vunpack.c.h.b16 %v8247
    %v8386 = vunpack.c.l.b16 %v8248
    %v8387 = vunpack.c.h.b16 %v8248
    %v8388 = vunpack.c.l.b16 %v8249
    %v8389 = vunpack.c.h.b16 %v8249
    %v8390 = vunpack.c.l.b16 %v8250
    %v8391 = vunpack.c.h.b16 %v8250
    %v8392 = vunpack.c.l.b16 %v8251
    %v8393 = vunpack.c.h.b16 %v8251
    %v8394 = vunpack.c.l.b16 %v8252
    %v8395 = vunpack.c.h.b16 %v8252
    %v8396 = vunpack.c.l.b16 %v8253
    %v8397 = vunpack.c.h.b16 %v8253
    %v8398 = vpack.c.b16 %v8304, %v8302
    %v8399 = vpack.c.b16 %v8305, %v8303
    %v8400 = vpack.c.b16 %v8308, %v8306
    %v8401 = vpack.c.b16 %v8309, %v8307
    %v8402 = vpack.c.b16 %v8312, %v8310
    %v8403 = vpack.c.b16 %v8313, %v8311
    %v8404 = vpack.c.b16 %v8316, %v8314
    %v8405 = vpack.c.b16 %v8317, %v8315
    %v8406 = vpack.c.b16 %v8320, %v8318
    %v8407 = vpack.c.b16 %v8321, %v8319
    %v8408 = vpack.c.b16 %v8324, %v8322
    %v8409 = vpack.c.b16 %v8325, %v8323
    %v8410 = vpack.c.b16 %v8328, %v8326
    %v8411 = vpack.c.b16 %v8329, %v8327
    %v8412 = vpack.c.b16 %v8332, %v8330
    %v8413 = vpack.c.b16 %v8333, %v8331
    %v8414 = vpack.c.b16 %v8336, %v8334
    %v8415 = vpack.c.b16 %v8337, %v8335
    %v8416 = vpack.c.b16 %v8340, %v8338
    %v8417 = vpack.c.b16 %v8341, %v8339
    %v8418 = vpack.c.b16 %v8344, %v8342
    %v8419 = vpack.c.b16 %v8345, %v8343
    %v8420 = vpack.c.b16 %v8348, %v8346
    %v8421 = vpack.c.b16 %v8349, %v8347
    %v8422 = vpack.c.b16 %v8352, %v8350
    %v8423 = vpack.c.b16 %v8353, %v8351
    %v8424 = vpack.c.b16 %v8356, %v8354
    %v8425 = vpack.c.b16 %v8357, %v8355
    %v8426 = vpack.c.b16 %v8360, %v8358
    %v8427 = vpack.c.b16 %v8361, %v8359
    %v8428 = vpack.c.b16 %v8364, %v8362
    %v8429 = vpack.c.b16 %v8365, %v8363
    %v8430 = vpack.c.b16 %v8368, %v8366
    %v8431 = vpack.c.b16 %v8369, %v8367
    %v8432 = vpack.c.b16 %v8372, %v8370
    %v8433 = vpack.c.b16 %v8373, %v8371
    %v8434 = vpack.c.b16 %v8376, %v8374
    %v8435 = vpack.c.b16 %v8377, %v8375
    %v8436 = vpack.c.b16 %v8380, %v8378
    %v8437 = vpack.c.b16 %v8381, %v8379
    %v8438 = vpack.c.b16 %v8384, %v8382
    %v8439 = vpack.c.b16 %v8385, %v8383
    %v8440 = vpack.c.b16 %v8388, %v8386
    %v8441 = vpack.c.b16 %v8389, %v8387
    %v8442 = vpack.c.b16 %v8392, %v8390
    %v8443 = vpack.c.b16 %v8393, %v8391
    %v8444 = vpack.c.b16 %v8396, %v8394
    %v8445 = vpack.c.b16 %v8397, %v8395
    %8494 = vmatprep.subr.bf16.mxu0 %v8399
    %8495 = vmatpush1.bf16.msra.mxu0 %v8398
    %8496 = vmatprep.subr.bf16.mxu0 %v8401
    %8497 = vmatpush1.bf16.msra.mxu0 %v8400
    %8498 = vmatprep.subr.bf16.mxu0 %v8403
    %8499 = vmatpush1.bf16.msra.mxu0 %v8402
    %8500 = vmatprep.subr.bf16.mxu0 %v8405
    %8501 = vmatpush1.bf16.msra.mxu0 %v8404
    %8502 = vmatprep.subr.bf16.mxu0 %v8407
    %8503 = vmatpush1.bf16.msra.mxu0 %v8406
    %8504 = vmatprep.subr.bf16.mxu0 %v8409
    %8505 = vmatpush1.bf16.msra.mxu0 %v8408
    %8506 = vmatprep.subr.bf16.mxu0 %v8411
    %8507 = vmatpush1.bf16.msra.mxu0 %v8410
    %8508 = vmatprep.subr.bf16.mxu0 %v8413
    %8509 = vmatpush1.bf16.msra.mxu0 %v8412
    %8510 = vmatprep.subr.bf16.mxu0 %v8415
    %8511 = vmatpush1.bf16.msra.mxu0 %v8414
    %8512 = vmatprep.subr.bf16.mxu0 %v8417
    %8513 = vmatpush1.bf16.msra.mxu0 %v8416
    %8514 = vmatprep.subr.bf16.mxu0 %v8419
    %8515 = vmatpush1.bf16.msra.mxu0 %v8418
    %8516 = vmatprep.subr.bf16.mxu0 %v8421
    %8517 = vmatpush1.bf16.msra.mxu0 %v8420
    %8518 = vmatprep.subr.bf16.mxu0 %v8423
    %8519 = vmatpush1.bf16.msra.mxu0 %v8422
    %8520 = vmatprep.subr.bf16.mxu0 %v8425
    %8521 = vmatpush1.bf16.msra.mxu0 %v8424
    %8522 = vmatprep.subr.bf16.mxu0 %v8427
    %8523 = vmatpush1.bf16.msra.mxu0 %v8426
    %8524 = vmatprep.subr.bf16.mxu0 %v8429
    %8525 = vmatpush1.bf16.msra.mxu0 %v8428
    %8526 = vmatprep.mubr.bf16.mxu0 %v8201
    %8527 = vmatmul.mubr.bf16.gmra.mrb[0].mxu0 %v8200
    %v8528 = vpop.f32.mrb[0].mxu0
    %v8529 = vadd.f32 0.0, %v8528
    %v8530 = vpop.f32.mrb[0].mxu0
    %v8531 = vadd.f32 0.0, %v8530
    %v8532 = vpop.f32.mrb[0].mxu0
    %v8533 = vadd.f32 0.0, %v8532
    %v8534 = vpop.f32.mrb[0].mxu0
    %v8535 = vadd.f32 0.0, %v8534
    %8536 = vmatprep.mubr.bf16.mxu0 %v8204
    %8537 = vmatmul.mubr.bf16.gmra.mrb[0].mxu0 %v8203
    %v8538 = vpop.f32.mrb[0].mxu0
    %v8539 = vadd.f32 0.0, %v8538
    %v8540 = vpop.f32.mrb[0].mxu0
    %v8541 = vadd.f32 0.0, %v8540
    %v8542 = vpop.f32.mrb[0].mxu0
    %v8543 = vadd.f32 0.0, %v8542
    %v8544 = vpop.f32.mrb[0].mxu0
    %v8545 = vadd.f32 0.0, %v8544
    %8546 = vdwg.mxu0
    %8547 = vmatprep.subr.bf16.mxu0 %v8431
    %8548 = vmatpush1.bf16.msra.mxu0 %v8430
    %8549 = vmatprep.subr.bf16.mxu0 %v8433
    %8550 = vmatpush1.bf16.msra.mxu0 %v8432
    %8551 = vmatprep.subr.bf16.mxu0 %v8435
    %8552 = vmatpush1.bf16.msra.mxu0 %v8434
    %8553 = vmatprep.subr.bf16.mxu0 %v8437
    %8554 = vmatpush1.bf16.msra.mxu0 %v8436
    %8555 = vmatprep.subr.bf16.mxu0 %v8439
    %8556 = vmatpush1.bf16.msra.mxu0 %v8438
    %8557 = vmatprep.subr.bf16.mxu0 %v8441
    %8558 = vmatpush1.bf16.msra.mxu0 %v8440
    %8559 = vmatprep.subr.bf16.mxu0 %v8443
    %8560 = vmatpush1.bf16.msra.mxu0 %v8442
    %8561 = vmatprep.subr.bf16.mxu0 %v8445
    %8562 = vmatpush1.bf16.msra.mxu0 %v8444
    %8563 = vmatprep.subr.bf16.mxu0 0
    %8564 = vmatpush1.bf16.msra.mxu0 0
    %8565 = vmatprep.subr.bf16.mxu0 0
    %8566 = vmatpush1.bf16.msra.mxu0 0
    %8567 = vmatprep.subr.bf16.mxu0 0
    %8568 = vmatpush1.bf16.msra.mxu0 0
    %8569 = vmatprep.subr.bf16.mxu0 0
    %8570 = vmatpush1.bf16.msra.mxu0 0
    %8571 = vmatprep.subr.bf16.mxu0 0
    %8572 = vmatpush1.bf16.msra.mxu0 0
    %8573 = vmatprep.subr.bf16.mxu0 0
    %8574 = vmatpush1.bf16.msra.mxu0 0
    %8575 = vmatprep.subr.bf16.mxu0 0
    %8576 = vmatpush1.bf16.msra.mxu0 0
    %8577 = vmatprep.subr.bf16.mxu0 0
    %8578 = vmatpush1.bf16.msra.mxu0 0
    %8579 = vmatprep.mubr.bf16.mxu0 0
    %8580 = vmatmul.mubr.bf16.gmra.mrb[0].mxu0 %v8202
    %v8581 = vpop.f32.mrb[0].mxu0
    %v8582 = vadd.f32 %v8529, %v8581
    %v8583 = vpop.f32.mrb[0].mxu0
    %v8584 = vadd.f32 %v8531, %v8583
    %v8585 = vpop.f32.mrb[0].mxu0
    %v8586 = vadd.f32 %v8533, %v8585
    %v8587 = vpop.f32.mrb[0].mxu0
    %v8588 = vadd.f32 %v8535, %v8587
    %8589 = vmatprep.mubr.bf16.mxu0 0
    %8590 = vmatmul.mubr.bf16.gmra.mrb[0].mxu0 %v8205
    %v8591 = vpop.f32.mrb[0].mxu0
    %v8592 = vadd.f32 %v8539, %v8591
    %v8593 = vpop.f32.mrb[0].mxu0
    %v8594 = vadd.f32 %v8541, %v8593
    %v8595 = vpop.f32.mrb[0].mxu0
    %v8596 = vadd.f32 %v8543, %v8595
    %v8597 = vpop.f32.mrb[0].mxu0
    %v8598 = vadd.f32 %v8545, %v8597
    %8599 = vdwg.mxu0
    %v8600 = vld [vmem:[%s15] sm:$0x3]
    %v8601 = vld [vmem:[%s16] sm:$0x3]
    %v8602 = vadd.f32 %v8582, %v8586
    %v8603 = vadd.f32 %v8602, %v8592
    %v8604 = vadd.f32 %v8603, %v8596
    %v8605 = vrot.slane %v8604, 4
    %v8606 = vadd.f32 %v8604, %v8605
    %v8607 = vrot.slane %v8606, 2
    %v8608 = vadd.f32 %v8606, %v8607
    %v8609 = vrot.slane %v8608, 1
    %v8610 = vadd.f32 %v8608, %v8609
    %v8611 = vadd.f32 %v8584, %v8588
    %v8612 = vadd.f32 %v8611, %v8594
    %v8613 = vadd.f32 %v8612, %v8598
    %v8614 = vrot.slane %v8613, 4
    %v8615 = vadd.f32 %v8613, %v8614
    %v8616 = vrot.slane %v8615, 2
    %v8617 = vadd.f32 %v8615, %v8616
    %v8618 = vrot.slane %v8617, 1
    %v8619 = vadd.f32 %v8617, %v8618
    %v8620 = vrcp.pop 32.0
    %v8621 = vmul.f32 %v8610, %v8620
    %v8622 = vmul.f32 %v8619, %v8620
    %v8623 = vsub.f32 %v8582, %v8621
    %v8624 = vsub.f32 %v8584, %v8622
    %v8625 = vsub.f32 %v8586, %v8621
    %v8626 = vsub.f32 %v8588, %v8622
    %v8627 = vsub.f32 %v8592, %v8621
    %v8628 = vsub.f32 %v8594, %v8622
    %v8629 = vsub.f32 %v8596, %v8621
    %v8630 = vsub.f32 %v8598, %v8622
    %v8631 = vmul.f32 %v8623, %v8623
    %v8632 = vmul.f32 %v8624, %v8624
    %v8633 = vmul.f32 %v8625, %v8625
    %v8634 = vmul.f32 %v8626, %v8626
    %v8635 = vmul.f32 %v8627, %v8627
    %v8636 = vmul.f32 %v8628, %v8628
    %v8637 = vmul.f32 %v8629, %v8629
    %v8638 = vmul.f32 %v8630, %v8630
    %v8639 = vadd.f32 %v8631, %v8633
    %v8640 = vadd.f32 %v8639, %v8635
    %v8641 = vadd.f32 %v8640, %v8637
    %v8642 = vrot.slane %v8641, 4
    %v8643 = vadd.f32 %v8641, %v8642
    %v8644 = vrot.slane %v8643, 2
    %v8645 = vadd.f32 %v8643, %v8644
    %v8646 = vrot.slane %v8645, 1
    %v8647 = vadd.f32 %v8645, %v8646
    %v8648 = vadd.f32 %v8632, %v8634
    %v8649 = vadd.f32 %v8648, %v8636
    %v8650 = vadd.f32 %v8649, %v8638
    %v8651 = vrot.slane %v8650, 4
    %v8652 = vadd.f32 %v8650, %v8651
    %v8653 = vrot.slane %v8652, 2
    %v8654 = vadd.f32 %v8652, %v8653
    %v8655 = vrot.slane %v8654, 1
    %v8656 = vadd.f32 %v8654, %v8655
    %v8657 = vmul.f32 %v8647, %v8620
    %v8658 = vmul.f32 %v8656, %v8620
    %v8659 = vadd.f32 %v8657, 1e-05
    %v8660 = vadd.f32 %v8658, 1e-05
    %v8661 = vrsqrt.pop %v8659
    %v8662 = vrsqrt.pop %v8660
    %v8665 = vcombine.low %v8661, %v8662
    %v8667 = vunpack.c.l.s4 1966171168
    %v8668 = vunpack.c.0.s8 %v8667
    %v8669 = vlaneseq
    %v8670 = vshrl.u32 %v8669, 7
    %v8671 = vsub.s32 %v8668, %v8670
    %v8672 = vrot.slane %v8665, %v8671
    %v8674 = vunpack.c.l.s4 1966171168
    %v8675 = vunpack.c.0.s8 %v8674
    %v8676 = vlaneseq
    %v8677 = vshrl.u32 %v8676, 7
    %v8678 = vsub.s32 %v8675, %v8677
    %v8679 = vrot.slane %v8672, %v8678
    %v8681 = vmul.f32 %v8600, %v8679
    %v8683 = vlaneseq
    %v8684 = vshrl.u32 %v8683, 7
    %v8685 = vsub.s32 0, %v8684
    %v8686 = vrot.slane %v8681, %v8685
    %v8687 = vlaneseq
    %v8688 = vshrl.u32 %v8687, 7
    %v8689 = vsub.s32 1, %v8688
    %v8690 = vrot.slane %v8681, %v8689
    %v8693 = vmul.f32 %v8621, %v8686
    %v8694 = vmul.f32 %v8622, %v8690
    %v8697 = vcombine.low %v8693, %v8694
    %v8699 = vunpack.c.l.s4 1966171168
    %v8700 = vunpack.c.0.s8 %v8699
    %v8701 = vlaneseq
    %v8702 = vshrl.u32 %v8701, 7
    %v8703 = vsub.s32 %v8700, %v8702
    %v8704 = vrot.slane %v8697, %v8703
    %v8706 = vunpack.c.l.s4 1966171168
    %v8707 = vunpack.c.0.s8 %v8706
    %v8708 = vlaneseq
    %v8709 = vshrl.u32 %v8708, 7
    %v8710 = vsub.s32 %v8707, %v8709
    %v8711 = vrot.slane %v8704, %v8710
    %v8713 = vsub.f32 %v8601, %v8711
    %v8714 = vmul.f32 %v8582, %v8686
    %v8715 = vmul.f32 %v8584, %v8690
    %v8716 = vmul.f32 %v8586, %v8686
    %v8717 = vmul.f32 %v8588, %v8690
    %v8718 = vmul.f32 %v8592, %v8686
    %v8719 = vmul.f32 %v8594, %v8690
    %v8720 = vmul.f32 %v8596, %v8686
    %v8721 = vmul.f32 %v8598, %v8690
    %v8723 = vlaneseq
    %v8724 = vshrl.u32 %v8723, 7
    %v8725 = vsub.s32 0, %v8724
    %v8726 = vrot.slane %v8713, %v8725
    %v8727 = vlaneseq
    %v8728 = vshrl.u32 %v8727, 7
    %v8729 = vsub.s32 1, %v8728
    %v8730 = vrot.slane %v8713, %v8729
    %v8733 = vadd.f32 %v8714, %v8726
    %v8734 = vadd.f32 %v8715, %v8730
    %v8735 = vadd.f32 %v8716, %v8726
    %v8736 = vadd.f32 %v8717, %v8730
    %v8737 = vadd.f32 %v8718, %v8726
    %v8738 = vadd.f32 %v8719, %v8730
    %v8739 = vadd.f32 %v8720, %v8726
    %v8740 = vadd.f32 %v8721, %v8730
    %v8741 = vmax.f32 %v8733, 0.0
    %v8742 = vmax.f32 %v8734, 0.0
    %v8743 = vmax.f32 %v8735, 0.0
    %v8744 = vmax.f32 %v8736, 0.0
    %v8745 = vmax.f32 %v8737, 0.0
    %v8746 = vmax.f32 %v8738, 0.0
    %v8747 = vmax.f32 %v8739, 0.0
    %v8748 = vmax.f32 %v8740, 0.0
    %8749 = vst [vmem:[#allocation6] sm:$0xff] %v8741
    %8750 = vst [vmem:[#allocation6 + $0x8] sm:$0xff] %v8742
    %8751 = vst [vmem:[#allocation6 + $0x10] sm:$0xff] %v8743
    %8752 = vst [vmem:[#allocation6 + $0x18] sm:$0xff] %v8744
    %8753 = vst [vmem:[#allocation6 + $0x20] sm:$0xff] %v8745
    %8754 = vst [vmem:[#allocation6 + $0x28] sm:$0xff] %v8746
    %8755 = vst [vmem:[#allocation6 + $0x30] sm:$0xff] %v8747
    %8756 = vst [vmem:[#allocation6 + $0x38] sm:$0xff] %v8748
    %v8765 = vcombine.low %v8741, %v8742
    %v8766 = vcombine.high %v8741, %v8742
    %v8767 = vcombine.low %v8743, %v8744
    %v8768 = vcombine.high %v8743, %v8744
    %v8769 = vcombine.low %v8745, %v8746
    %v8770 = vcombine.high %v8745, %v8746
    %v8771 = vcombine.low %v8747, %v8748
    %v8772 = vcombine.high %v8747, %v8748
    %v8781 = vcombine.high %v8765, %v8765
    %v8782 = vcombine.high %v8766, %v8766
    %v8783 = vcombine.high %v8767, %v8767
    %v8784 = vcombine.high %v8768, %v8768
    %v8785 = vcombine.high %v8769, %v8769
    %v8786 = vcombine.high %v8770, %v8770
    %v8787 = vcombine.high %v8771, %v8771
    %v8788 = vcombine.high %v8772, %v8772
    %v8797 = vsel %vm7590, %v8765, -inf
    %v8798 = vrot.slane %v8797, 4
    %v8799 = vmax.f32 %v8797, %v8798
    %v8800 = vrot.slane %v8799, 2
    %v8801 = vmax.f32 %v8799, %v8800
    %v8802 = vrot.slane %v8801, 1
    %v8803 = vmax.f32 %v8801, %v8802
    %v8804 = vsel %vm7590, %v8781, -inf
    %v8805 = vrot.slane %v8804, 4
    %v8806 = vmax.f32 %v8804, %v8805
    %v8807 = vrot.slane %v8806, 2
    %v8808 = vmax.f32 %v8806, %v8807
    %v8809 = vrot.slane %v8808, 1
    %v8810 = vmax.f32 %v8808, %v8809
    %v8811 = vsel %vm7590, %v8766, -inf
    %v8812 = vrot.slane %v8811, 4
    %v8813 = vmax.f32 %v8811, %v8812
    %v8814 = vrot.slane %v8813, 2
    %v8815 = vmax.f32 %v8813, %v8814
    %v8816 = vrot.slane %v8815, 1
    %v8817 = vmax.f32 %v8815, %v8816
    %v8818 = vsel %vm7590, %v8782, -inf
    %v8819 = vrot.slane %v8818, 4
    %v8820 = vmax.f32 %v8818, %v8819
    %v8821 = vrot.slane %v8820, 2
    %v8822 = vmax.f32 %v8820, %v8821
    %v8823 = vrot.slane %v8822, 1
    %v8824 = vmax.f32 %v8822, %v8823
    %v8825 = vsel %vm7590, %v8767, -inf
    %v8826 = vrot.slane %v8825, 4
    %v8827 = vmax.f32 %v8825, %v8826
    %v8828 = vrot.slane %v8827, 2
    %v8829 = vmax.f32 %v8827, %v8828
    %v8830 = vrot.slane %v8829, 1
    %v8831 = vmax.f32 %v8829, %v8830
    %v8832 = vsel %vm7590, %v8783, -inf
    %v8833 = vrot.slane %v8832, 4
    %v8834 = vmax.f32 %v8832, %v8833
    %v8835 = vrot.slane %v8834, 2
    %v8836 = vmax.f32 %v8834, %v8835
    %v8837 = vrot.slane %v8836, 1
    %v8838 = vmax.f32 %v8836, %v8837
    %v8839 = vsel %vm7590, %v8768, -inf
    %v8840 = vrot.slane %v8839, 4
    %v8841 = vmax.f32 %v8839, %v8840
    %v8842 = vrot.slane %v8841, 2
    %v8843 = vmax.f32 %v8841, %v8842
    %v8844 = vrot.slane %v8843, 1
    %v8845 = vmax.f32 %v8843, %v8844
    %v8846 = vsel %vm7590, %v8784, -inf
    %v8847 = vrot.slane %v8846, 4
    %v8848 = vmax.f32 %v8846, %v8847
    %v8849 = vrot.slane %v8848, 2
    %v8850 = vmax.f32 %v8848, %v8849
    %v8851 = vrot.slane %v8850, 1
    %v8852 = vmax.f32 %v8850, %v8851
    %v8853 = vsel %vm7590, %v8769, -inf
    %v8854 = vrot.slane %v8853, 4
    %v8855 = vmax.f32 %v8853, %v8854
    %v8856 = vrot.slane %v8855, 2
    %v8857 = vmax.f32 %v8855, %v8856
    %v8858 = vrot.slane %v8857, 1
    %v8859 = vmax.f32 %v8857, %v8858
    %v8860 = vsel %vm7590, %v8785, -inf
    %v8861 = vrot.slane %v8860, 4
    %v8862 = vmax.f32 %v8860, %v8861
    %v8863 = vrot.slane %v8862, 2
    %v8864 = vmax.f32 %v8862, %v8863
    %v8865 = vrot.slane %v8864, 1
    %v8866 = vmax.f32 %v8864, %v8865
    %v8867 = vsel %vm7590, %v8770, -inf
    %v8868 = vrot.slane %v8867, 4
    %v8869 = vmax.f32 %v8867, %v8868
    %v8870 = vrot.slane %v8869, 2
    %v8871 = vmax.f32 %v8869, %v8870
    %v8872 = vrot.slane %v8871, 1
    %v8873 = vmax.f32 %v8871, %v8872
    %v8874 = vsel %vm7590, %v8786, -inf
    %v8875 = vrot.slane %v8874, 4
    %v8876 = vmax.f32 %v8874, %v8875
    %v8877 = vrot.slane %v8876, 2
    %v8878 = vmax.f32 %v8876, %v8877
    %v8879 = vrot.slane %v8878, 1
    %v8880 = vmax.f32 %v8878, %v8879
    %v8881 = vsel %vm7590, %v8771, -inf
    %v8882 = vrot.slane %v8881, 4
    %v8883 = vmax.f32 %v8881, %v8882
    %v8884 = vrot.slane %v8883, 2
    %v8885 = vmax.f32 %v8883, %v8884
    %v8886 = vrot.slane %v8885, 1
    %v8887 = vmax.f32 %v8885, %v8886
    %v8888 = vsel %vm7590, %v8787, -inf
    %v8889 = vrot.slane %v8888, 4
    %v8890 = vmax.f32 %v8888, %v8889
    %v8891 = vrot.slane %v8890, 2
    %v8892 = vmax.f32 %v8890, %v8891
    %v8893 = vrot.slane %v8892, 1
    %v8894 = vmax.f32 %v8892, %v8893
    %v8895 = vsel %vm7590, %v8772, -inf
    %v8896 = vrot.slane %v8895, 4
    %v8897 = vmax.f32 %v8895, %v8896
    %v8898 = vrot.slane %v8897, 2
    %v8899 = vmax.f32 %v8897, %v8898
    %v8900 = vrot.slane %v8899, 1
    %v8901 = vmax.f32 %v8899, %v8900
    %v8902 = vsel %vm7590, %v8788, -inf
    %v8903 = vrot.slane %v8902, 4
    %v8904 = vmax.f32 %v8902, %v8903
    %v8905 = vrot.slane %v8904, 2
    %v8906 = vmax.f32 %v8904, %v8905
    %v8907 = vrot.slane %v8906, 1
    %v8908 = vmax.f32 %v8906, %v8907
    %v8909 = vld [vmem:[%s4] sm:$0x3]
    %v8910 = vpack.c.bf16 %v8803, %v8803
    %v8911 = vpack.c.bf16 %v8810, %v8810
    %v8912 = vpack.c.bf16 %v8817, %v8817
    %v8913 = vpack.c.bf16 %v8824, %v8824
    %v8914 = vpack.c.bf16 %v8831, %v8831
    %v8915 = vpack.c.bf16 %v8838, %v8838
    %v8916 = vpack.c.bf16 %v8845, %v8845
    %v8917 = vpack.c.bf16 %v8852, %v8852
    %v8926 = vunpack.c.l.b16 %v8910
    %v8927 = vunpack.c.l.b16 %v8911
    %v8928 = vunpack.c.l.b16 %v8912
    %v8929 = vunpack.c.l.b16 %v8913
    %v8930 = vunpack.c.l.b16 %v8914
    %v8931 = vunpack.c.l.b16 %v8915
    %v8932 = vunpack.c.l.b16 %v8916
    %v8933 = vunpack.c.l.b16 %v8917
    %v8934 = vpack.c.b16 %v8927, %v8926
    %v8935 = vpack.c.b16 %v8929, %v8928
    %v8936 = vpack.c.b16 %v8931, %v8930
    %v8937 = vpack.c.b16 %v8933, %v8932
    %v8938 = vunpack.c.l.b16 %v8934
    %v8939 = vunpack.c.h.b16 %v8934
    %v8940 = vunpack.c.l.b16 %v8935
    %v8941 = vunpack.c.h.b16 %v8935
    %v8942 = vunpack.c.l.b16 %v8936
    %v8943 = vunpack.c.h.b16 %v8936
    %v8944 = vunpack.c.l.b16 %v8937
    %v8945 = vunpack.c.h.b16 %v8937
    %v8946 = vsel %vm6169, %v8940, %v8938
    %v8947 = vsel %vm6171, %v8942, %v8946
    %v8948 = vsel %vm6173, %v8944, %v8947
    %v8949 = vsel %vm6169, %v8941, %v8939
    %v8950 = vsel %vm6171, %v8943, %v8949
    %v8951 = vsel %vm6173, %v8945, %v8950
    %v8952 = vpack.c.b16 %v8951, %v8948
    %8954 = vst [vmem:[#allocation5] sm:$0x33] %v8952
    %v8955 = vsel %vm6169, %v8928, %v8926
    %v8956 = vsel %vm6171, %v8930, %v8955
    %v8957 = vsel %vm6173, %v8932, %v8956
    %v8958 = vsel %vm6169, %v8929, %v8927
    %v8959 = vsel %vm6171, %v8931, %v8958
    %v8960 = vsel %vm6173, %v8933, %v8959
    %v8961 = vpack.c.b16 %v8957, %v8957
    %v8962 = vpack.c.b16 %v8960, %v8960
    %vm8963 = vcmask 31744
    %v8965 = vsel %vm8963, %v8909, 0
    %vm8967 = vcmask 1041408
    %v8969 = vsel %vm8967, %v8961, 0
    %v8972 = vsel %vm8967, %v8962, 0
    %8974 = vmatprep.subr.bf16.mxu0 %v8972
    %8975 = vmatpush1.bf16.msra.mxu0 %v8969
    %8976 = vmatprep.subr.bf16.mxu0 0
    %8977 = vmatpush1.bf16.msra.mxu0 0
    %8978 = vmatprep.subr.bf16.mxu0 0
    %8979 = vmatpush1.bf16.msra.mxu0 0
    %8980 = vmatprep.subr.bf16.mxu0 0
    %8981 = vmatpush1.bf16.msra.mxu0 0
    %8982 = vmatprep.subr.bf16.mxu0 0
    %8983 = vmatpush1.bf16.msra.mxu0 0
    %8984 = vmatprep.subr.bf16.mxu0 0
    %8985 = vmatpush1.bf16.msra.mxu0 0
    %8986 = vmatprep.subr.bf16.mxu0 0
    %8987 = vmatpush1.bf16.msra.mxu0 0
    %8988 = vmatprep.subr.bf16.mxu0 0
    %8989 = vmatpush1.bf16.msra.mxu0 0
    %8990 = vmatprep.subr.bf16.mxu0 0
    %8991 = vmatpush1.bf16.msra.mxu0 0
    %8992 = vmatprep.subr.bf16.mxu0 0
    %8993 = vmatpush1.bf16.msra.mxu0 0
    %8994 = vmatprep.subr.bf16.mxu0 0
    %8995 = vmatpush1.bf16.msra.mxu0 0
    %8996 = vmatprep.subr.bf16.mxu0 0
    %8997 = vmatpush1.bf16.msra.mxu0 0
    %8998 = vmatprep.subr.bf16.mxu0 0
    %8999 = vmatpush1.bf16.msra.mxu0 0
    %9000 = vmatprep.subr.bf16.mxu0 0
    %9001 = vmatpush1.bf16.msra.mxu0 0
    %9002 = vmatprep.subr.bf16.mxu0 0
    %9003 = vmatpush1.bf16.msra.mxu0 0
    %9004 = vmatprep.subr.bf16.mxu0 0
    %9005 = vmatpush1.bf16.msra.mxu0 0
    %9006 = vmatprep.mubr.bf16.mxu0 0
    %9007 = vmatmul.mubr.bf16.gmra.mrb[0].mxu0 %v8965
    %v9008 = vpop.f32.mrb[0].mxu0
    %v9009 = vadd.f32 0.0, %v9008
    %v9010 = vpop.f32.mrb[0].mxu0
    %v9011 = vadd.f32 0.0, %v9010
    %v9012 = vpop.f32.mrb[0].mxu0
    %v9013 = vpop.f32.mrb[0].mxu0
    %9014 = vdwg.mxu0
    %v9015 = vpack.c.bf16 %v9009, %v9009
    %v9016 = vpack.c.bf16 %v9011, %v9011
    %v9019 = vunpack.c.l.b16 %v9015
    %v9020 = vunpack.c.l.b16 %v9016
    %v9021 = vpack.c.b16 %v9020, %v9019
    %9023 = vst [vmem:[#allocation5 + $0x8] sm:$0x33] %v9021
    %v9025 = vsel %vm8967, %v9015, 0
    %v9028 = vsel %vm8967, %v9016, 0
    %9030 = vmatprep.subr.bf16.mxu0 %v9028
    %9031 = vmatpush1.bf16.msra.mxu0 %v9025
    %9032 = vmatprep.subr.bf16.mxu0 0
    %9033 = vmatpush1.bf16.msra.mxu0 0
    %9034 = vmatprep.subr.bf16.mxu0 0
    %9035 = vmatpush1.bf16.msra.mxu0 0
    %9036 = vmatprep.subr.bf16.mxu0 0
    %9037 = vmatpush1.bf16.msra.mxu0 0
    %9038 = vmatprep.subr.bf16.mxu0 0
    %9039 = vmatpush1.bf16.msra.mxu0 0
    %9040 = vmatprep.subr.bf16.mxu0 0
    %9041 = vmatpush1.bf16.msra.mxu0 0
    %9042 = vmatprep.subr.bf16.mxu0 0
    %9043 = vmatpush1.bf16.msra.mxu0 0
    %9044 = vmatprep.subr.bf16.mxu0 0
    %9045 = vmatpush1.bf16.msra.mxu0 0
    %9046 = vmatprep.subr.bf16.mxu0 0
    %9047 = vmatpush1.bf16.msra.mxu0 0
    %9048 = vmatprep.subr.bf16.mxu0 0
    %9049 = vmatpush1.bf16.msra.mxu0 0
    %9050 = vmatprep.subr.bf16.mxu0 0
    %9051 = vmatpush1.bf16.msra.mxu0 0
    %9052 = vmatprep.subr.bf16.mxu0 0
    %9053 = vmatpush1.bf16.msra.mxu0 0
    %9054 = vmatprep.subr.bf16.mxu0 0
    %9055 = vmatpush1.bf16.msra.mxu0 0
    %9056 = vmatprep.subr.bf16.mxu0 0
    %9057 = vmatpush1.bf16.msra.mxu0 0
    %9058 = vmatprep.subr.bf16.mxu0 0
    %9059 = vmatpush1.bf16.msra.mxu0 0
    %9060 = vmatprep.subr.bf16.mxu0 0
    %9061 = vmatpush1.bf16.msra.mxu0 0
    %9062 = vmatprep.mubr.bf16.mxu0 0
    %9063 = vmatmul.mubr.bf16.gmra.mrb[0].mxu0 %v8965
    %v9064 = vpop.f32.mrb[0].mxu0
    %v9065 = vadd.f32 0.0, %v9064
    %v9066 = vpop.f32.mrb[0].mxu0
    %v9067 = vadd.f32 0.0, %v9066
    %v9068 = vpop.f32.mrb[0].mxu0
    %v9069 = vpop.f32.mrb[0].mxu0
    %9070 = vdwg.mxu0
    %v9071 = vmul.f32 %v9065, 2.0
    %v9072 = vmul.f32 %v9067, 2.0
    %v9081 = vsel %vm6169, %v8817, %v8803
    %v9082 = vsel %vm6171, %v8831, %v9081
    %v9083 = vsel %vm6173, %v8845, %v9082
    %v9084 = vsel %vm6169, %v8824, %v8810
    %v9085 = vsel %vm6171, %v8838, %v9084
    %v9086 = vsel %vm6173, %v8852, %v9085
    %v9089 = vsub.f32 %v9071, %v9083
    %v9090 = vsub.f32 %v9072, %v9086
    %v9091 = vpack.c.bf16 %v9089, %v9089
    %v9092 = vpack.c.bf16 %v9090, %v9090
    %v9095 = vunpack.c.l.b16 %v9091
    %v9096 = vunpack.c.l.b16 %v9092
    %v9097 = vpack.c.b16 %v9096, %v9095
    %9099 = vst [vmem:[#allocation5 + $0x10] sm:$0x33] %v9097
    %v9100 = vpack.c.bf16 %v8859, %v8859
    %v9101 = vpack.c.bf16 %v8866, %v8866
    %v9102 = vpack.c.bf16 %v8873, %v8873
    %v9103 = vpack.c.bf16 %v8880, %v8880
    %v9104 = vpack.c.bf16 %v8887, %v8887
    %v9105 = vpack.c.bf16 %v8894, %v8894
    %v9106 = vpack.c.bf16 %v8901, %v8901
    %v9107 = vpack.c.bf16 %v8908, %v8908
    %v9116 = vunpack.c.l.b16 %v9100
    %v9117 = vunpack.c.l.b16 %v9101
    %v9118 = vunpack.c.l.b16 %v9102
    %v9119 = vunpack.c.l.b16 %v9103
    %v9120 = vunpack.c.l.b16 %v9104
    %v9121 = vunpack.c.l.b16 %v9105
    %v9122 = vunpack.c.l.b16 %v9106
    %v9123 = vunpack.c.l.b16 %v9107
    %v9124 = vpack.c.b16 %v9117, %v9116
    %v9125 = vpack.c.b16 %v9119, %v9118
    %v9126 = vpack.c.b16 %v9121, %v9120
    %v9127 = vpack.c.b16 %v9123, %v9122
    %v9128 = vunpack.c.l.b16 %v9124
    %v9129 = vunpack.c.h.b16 %v9124
    %v9130 = vunpack.c.l.b16 %v9125
    %v9131 = vunpack.c.h.b16 %v9125
    %v9132 = vunpack.c.l.b16 %v9126
    %v9133 = vunpack.c.h.b16 %v9126
    %v9134 = vunpack.c.l.b16 %v9127
    %v9135 = vunpack.c.h.b16 %v9127
    %v9136 = vsel %vm6177, %v9130, %v9128
    %v9137 = vsel %vm6179, %v9132, %v9136
    %v9138 = vsel %vm6181, %v9134, %v9137
    %v9139 = vsel %vm6177, %v9131, %v9129
    %v9140 = vsel %vm6179, %v9133, %v9139
    %v9141 = vsel %vm6181, %v9135, %v9140
    %v9142 = vpack.c.b16 %v9141, %v9138
    %9144 = vst [vmem:[#allocation5] sm:$0xcc] %v9142
    %v9145 = vsel %vm6169, %v9118, %v9116
    %v9146 = vsel %vm6171, %v9120, %v9145
    %v9147 = vsel %vm6173, %v9122, %v9146
    %v9148 = vsel %vm6169, %v9119, %v9117
    %v9149 = vsel %vm6171, %v9121, %v9148
    %v9150 = vsel %vm6173, %v9123, %v9149
    %v9151 = vpack.c.b16 %v9147, %v9147
    %v9152 = vpack.c.b16 %v9150, %v9150
    %v9154 = vsel %vm8967, %v9151, 0
    %v9157 = vsel %vm8967, %v9152, 0
    %9159 = vmatprep.subr.bf16.mxu0 %v9157
    %9160 = vmatpush1.bf16.msra.mxu0 %v9154
    %9161 = vmatprep.subr.bf16.mxu0 0
    %9162 = vmatpush1.bf16.msra.mxu0 0
    %9163 = vmatprep.subr.bf16.mxu0 0
    %9164 = vmatpush1.bf16.msra.mxu0 0
    %9165 = vmatprep.subr.bf16.mxu0 0
    %9166 = vmatpush1.bf16.msra.mxu0 0
    %9167 = vmatprep.subr.bf16.mxu0 0
    %9168 = vmatpush1.bf16.msra.mxu0 0
    %9169 = vmatprep.subr.bf16.mxu0 0
    %9170 = vmatpush1.bf16.msra.mxu0 0
    %9171 = vmatprep.subr.bf16.mxu0 0
    %9172 = vmatpush1.bf16.msra.mxu0 0
    %9173 = vmatprep.subr.bf16.mxu0 0
    %9174 = vmatpush1.bf16.msra.mxu0 0
    %9175 = vmatprep.subr.bf16.mxu0 0
    %9176 = vmatpush1.bf16.msra.mxu0 0
    %9177 = vmatprep.subr.bf16.mxu0 0
    %9178 = vmatpush1.bf16.msra.mxu0 0
    %9179 = vmatprep.subr.bf16.mxu0 0
    %9180 = vmatpush1.bf16.msra.mxu0 0
    %9181 = vmatprep.subr.bf16.mxu0 0
    %9182 = vmatpush1.bf16.msra.mxu0 0
    %9183 = vmatprep.subr.bf16.mxu0 0
    %9184 = vmatpush1.bf16.msra.mxu0 0
    %9185 = vmatprep.subr.bf16.mxu0 0
    %9186 = vmatpush1.bf16.msra.mxu0 0
    %9187 = vmatprep.subr.bf16.mxu0 0
    %9188 = vmatpush1.bf16.msra.mxu0 0
    %9189 = vmatprep.subr.bf16.mxu0 0
    %9190 = vmatpush1.bf16.msra.mxu0 0
    %9191 = vmatprep.mubr.bf16.mxu0 0
    %9192 = vmatmul.mubr.bf16.gmra.mrb[0].mxu0 %v8965
    %v9193 = vpop.f32.mrb[0].mxu0
    %v9194 = vadd.f32 0.0, %v9193
    %v9195 = vpop.f32.mrb[0].mxu0
    %v9196 = vadd.f32 0.0, %v9195
    %v9197 = vpop.f32.mrb[0].mxu0
    %v9198 = vpop.f32.mrb[0].mxu0
    %9199 = vdwg.mxu0
    %v9200 = vpack.c.bf16 %v9194, %v9194
    %v9201 = vpack.c.bf16 %v9196, %v9196
    %v9204 = vunpack.c.l.b16 %v9200
    %v9205 = vunpack.c.l.b16 %v9201
    %v9206 = vpack.c.b16 %v9205, %v9204
    %v9207 = vrot.slane %v9206, 6
    %9209 = vst [vmem:[#allocation5 + $0x8] sm:$0xcc] %v9207
    %v9211 = vsel %vm8967, %v9200, 0
    %v9214 = vsel %vm8967, %v9201, 0
    %9216 = vmatprep.subr.bf16.mxu0 %v9214
    %9217 = vmatpush1.bf16.msra.mxu0 %v9211
    %9218 = vmatprep.subr.bf16.mxu0 0
    %9219 = vmatpush1.bf16.msra.mxu0 0
    %9220 = vmatprep.subr.bf16.mxu0 0
    %9221 = vmatpush1.bf16.msra.mxu0 0
    %9222 = vmatprep.subr.bf16.mxu0 0
    %9223 = vmatpush1.bf16.msra.mxu0 0
    %9224 = vmatprep.subr.bf16.mxu0 0
    %9225 = vmatpush1.bf16.msra.mxu0 0
    %9226 = vmatprep.subr.bf16.mxu0 0
    %9227 = vmatpush1.bf16.msra.mxu0 0
    %9228 = vmatprep.subr.bf16.mxu0 0
    %9229 = vmatpush1.bf16.msra.mxu0 0
    %9230 = vmatprep.subr.bf16.mxu0 0
    %9231 = vmatpush1.bf16.msra.mxu0 0
    %9232 = vmatprep.subr.bf16.mxu0 0
    %9233 = vmatpush1.bf16.msra.mxu0 0
    %9234 = vmatprep.subr.bf16.mxu0 0
    %9235 = vmatpush1.bf16.msra.mxu0 0
    %9236 = vmatprep.subr.bf16.mxu0 0
    %9237 = vmatpush1.bf16.msra.mxu0 0
    %9238 = vmatprep.subr.bf16.mxu0 0
    %9239 = vmatpush1.bf16.msra.mxu0 0
    %9240 = vmatprep.subr.bf16.mxu0 0
    %9241 = vmatpush1.bf16.msra.mxu0 0
    %9242 = vmatprep.subr.bf16.mxu0 0
    %9243 = vmatpush1.bf16.msra.mxu0 0
    %9244 = vmatprep.subr.bf16.mxu0 0
    %9245 = vmatpush1.bf16.msra.mxu0 0
    %9246 = vmatprep.subr.bf16.mxu0 0
    %9247 = vmatpush1.bf16.msra.mxu0 0
    %9248 = vmatprep.mubr.bf16.mxu0 0
    %9249 = vmatmul.mubr.bf16.gmra.mrb[0].mxu0 %v8965
    %v9250 = vpop.f32.mrb[0].mxu0
    %v9251 = vadd.f32 0.0, %v9250
    %v9252 = vpop.f32.mrb[0].mxu0
    %v9253 = vadd.f32 0.0, %v9252
    %v9254 = vpop.f32.mrb[0].mxu0
    %v9255 = vpop.f32.mrb[0].mxu0
    %9256 = vdwg.mxu0
    %v9257 = vmul.f32 %v9251, 2.0
    %v9258 = vmul.f32 %v9253, 2.0
    %v9267 = vsel %vm6169, %v8873, %v8859
    %v9268 = vsel %vm6171, %v8887, %v9267
    %v9269 = vsel %vm6173, %v8901, %v9268
    %v9270 = vsel %vm6169, %v8880, %v8866
    %v9271 = vsel %vm6171, %v8894, %v9270
    %v9272 = vsel %vm6173, %v8908, %v9271
    %v9275 = vsub.f32 %v9257, %v9269
    %v9276 = vsub.f32 %v9258, %v9272
    %v9277 = vpack.c.bf16 %v9275, %v9275
    %v9278 = vpack.c.bf16 %v9276, %v9276
    %v9281 = vunpack.c.l.b16 %v9277
    %v9282 = vunpack.c.l.b16 %v9278
    %v9283 = vpack.c.b16 %v9282, %v9281
    %v9284 = vrot.slane %v9283, 6
    %9286 = vst [vmem:[#allocation5 + $0x10] sm:$0xcc] %v9284
    %v9287 = vld [vmem:[#allocation5] sm:$0xff]
    %v9288 = vld [vmem:[#allocation5 + $0x8] sm:$0xff]
    %v9289 = vld [vmem:[#allocation5 + $0x10] sm:$0xff]
    %v9290 = vld [vmem:[%s17] sm:$0xff]
    %v9291 = vld [vmem:[%s17 + $0x8] sm:$0xff]
    %v9292 = vld [vmem:[%s17 + $0x10] sm:$0xff]
    %v9293 = vld [vmem:[%s17 + $0x18] sm:$0xff]
    %v9294 = vld [vmem:[%s17 + $0x20] sm:$0xff]
    %v9295 = vld [vmem:[%s17 + $0x28] sm:$0xff]
    %v9296 = vld [vmem:[%s17 + $0x30] sm:$0xff]
    %v9297 = vld [vmem:[%s17 + $0x38] sm:$0xff]
    %v9298 = vld [vmem:[%s17 + $0x40] sm:$0xff]
    %v9299 = vld [vmem:[%s17 + $0x48] sm:$0xff]
    %v9300 = vld [vmem:[%s17 + $0x50] sm:$0xff]
    %v9301 = vld [vmem:[%s17 + $0x58] sm:$0xff]
    %v9302 = vld [vmem:[%s17 + $0x60] sm:$0xff]
    %v9303 = vld [vmem:[%s17 + $0x68] sm:$0xff]
    %v9304 = vld [vmem:[%s17 + $0x70] sm:$0xff]
    %v9305 = vld [vmem:[%s17 + $0x78] sm:$0xff]
    %v9306 = vld [vmem:[%s17 + $0x80] sm:$0xff]
    %v9307 = vld [vmem:[%s17 + $0x88] sm:$0xff]
    %v9308 = vld [vmem:[%s17 + $0x90] sm:$0xff]
    %v9309 = vld [vmem:[%s17 + $0x98] sm:$0xff]
    %v9310 = vld [vmem:[%s17 + $0xa0] sm:$0xff]
    %v9311 = vld [vmem:[%s17 + $0xa8] sm:$0xff]
    %v9312 = vld [vmem:[%s17 + $0xb0] sm:$0xff]
    %v9313 = vld [vmem:[%s17 + $0xb8] sm:$0xff]
    %v9314 = vld [vmem:[%s17 + $0xc0] sm:$0xff]
    %v9315 = vld [vmem:[%s17 + $0xc8] sm:$0xff]
    %v9316 = vld [vmem:[%s17 + $0xd0] sm:$0xff]
    %v9317 = vld [vmem:[%s17 + $0xd8] sm:$0xff]
    %v9318 = vld [vmem:[%s17 + $0xe0] sm:$0xff]
    %v9319 = vld [vmem:[%s17 + $0xe8] sm:$0xff]
    %v9320 = vld [vmem:[%s17 + $0xf0] sm:$0xff]
    %v9321 = vld [vmem:[%s17 + $0xf8] sm:$0xff]
    %v9322 = vld [vmem:[%s17 + $0x100] sm:$0xff]
    %v9323 = vld [vmem:[%s17 + $0x108] sm:$0xff]
    %v9324 = vld [vmem:[%s17 + $0x110] sm:$0xff]
    %v9325 = vld [vmem:[%s17 + $0x118] sm:$0xff]
    %v9326 = vld [vmem:[%s17 + $0x120] sm:$0xff]
    %v9327 = vld [vmem:[%s17 + $0x128] sm:$0xff]
    %v9328 = vld [vmem:[%s17 + $0x130] sm:$0xff]
    %v9329 = vld [vmem:[%s17 + $0x138] sm:$0xff]
    %v9330 = vld [vmem:[%s17 + $0x140] sm:$0xff]
    %v9331 = vld [vmem:[%s17 + $0x148] sm:$0xff]
    %v9332 = vld [vmem:[%s17 + $0x150] sm:$0xff]
    %v9333 = vld [vmem:[%s17 + $0x158] sm:$0xff]
    %v9334 = vld [vmem:[%s17 + $0x160] sm:$0xff]
    %v9335 = vld [vmem:[%s17 + $0x168] sm:$0xff]
    %v9336 = vld [vmem:[%s17 + $0x170] sm:$0xff]
    %v9337 = vld [vmem:[%s17 + $0x178] sm:$0xff]
    %v9338 = vld [vmem:[%s17 + $0x180] sm:$0xff]
    %v9339 = vld [vmem:[%s17 + $0x188] sm:$0xff]
    %v9340 = vld [vmem:[%s17 + $0x190] sm:$0xff]
    %v9341 = vld [vmem:[%s17 + $0x198] sm:$0xff]
    %v9342 = vld [vmem:[%s17 + $0x1a0] sm:$0xff]
    %v9343 = vld [vmem:[%s17 + $0x1a8] sm:$0xff]
    %v9344 = vld [vmem:[%s17 + $0x1b0] sm:$0xff]
    %v9345 = vld [vmem:[%s17 + $0x1b8] sm:$0xff]
    %v9346 = vld [vmem:[%s17 + $0x1c0] sm:$0xff]
    %v9347 = vld [vmem:[%s17 + $0x1c8] sm:$0xff]
    %v9348 = vld [vmem:[%s17 + $0x1d0] sm:$0xff]
    %v9349 = vld [vmem:[%s17 + $0x1d8] sm:$0xff]
    %v9350 = vld [vmem:[%s17 + $0x1e0] sm:$0xff]
    %v9351 = vld [vmem:[%s17 + $0x1e8] sm:$0xff]
    %v9352 = vld [vmem:[%s17 + $0x1f0] sm:$0xff]
    %v9353 = vld [vmem:[%s17 + $0x1f8] sm:$0xff]
    %v9354 = vld [vmem:[%s17 + $0x200] sm:$0xff]
    %v9355 = vld [vmem:[%s17 + $0x208] sm:$0xff]
    %v9356 = vld [vmem:[%s17 + $0x210] sm:$0xff]
    %v9357 = vld [vmem:[%s17 + $0x218] sm:$0xff]
    %v9358 = vld [vmem:[%s17 + $0x220] sm:$0xff]
    %v9359 = vld [vmem:[%s17 + $0x228] sm:$0xff]
    %v9360 = vld [vmem:[%s17 + $0x230] sm:$0xff]
    %v9361 = vld [vmem:[%s17 + $0x238] sm:$0xff]
    %v9362 = vld [vmem:[%s17 + $0x240] sm:$0xff]
    %v9363 = vld [vmem:[%s17 + $0x248] sm:$0xff]
    %v9364 = vld [vmem:[%s17 + $0x250] sm:$0xff]
    %v9365 = vld [vmem:[%s17 + $0x258] sm:$0xff]
    %v9366 = vld [vmem:[%s17 + $0x260] sm:$0xff]
    %v9367 = vld [vmem:[%s17 + $0x268] sm:$0xff]
    %v9368 = vld [vmem:[%s17 + $0x270] sm:$0xff]
    %v9369 = vld [vmem:[%s17 + $0x278] sm:$0xff]
    %v9370 = vld [vmem:[%s17 + $0x280] sm:$0xff]
    %v9371 = vld [vmem:[%s17 + $0x288] sm:$0xff]
    %v9372 = vld [vmem:[%s17 + $0x290] sm:$0xff]
    %v9373 = vld [vmem:[%s17 + $0x298] sm:$0xff]
    %v9374 = vld [vmem:[%s17 + $0x2a0] sm:$0xff]
    %v9375 = vld [vmem:[%s17 + $0x2a8] sm:$0xff]
    %v9376 = vld [vmem:[%s17 + $0x2b0] sm:$0xff]
    %v9377 = vld [vmem:[%s17 + $0x2b8] sm:$0xff]
    %v9378 = vld [vmem:[%s17 + $0x2c0] sm:$0xff]
    %v9379 = vld [vmem:[%s17 + $0x2c8] sm:$0xff]
    %v9380 = vld [vmem:[%s17 + $0x2d0] sm:$0xff]
    %v9381 = vld [vmem:[%s17 + $0x2d8] sm:$0xff]
    %v9382 = vld [vmem:[%s17 + $0x2e0] sm:$0xff]
    %v9383 = vld [vmem:[%s17 + $0x2e8] sm:$0xff]
    %v9384 = vld [vmem:[%s17 + $0x2f0] sm:$0xff]
    %v9385 = vld [vmem:[%s17 + $0x2f8] sm:$0xff]
    %v9386 = vld [vmem:[%s17 + $0x300] sm:$0xff]
    %v9387 = vld [vmem:[%s17 + $0x308] sm:$0xff]
    %v9388 = vld [vmem:[%s17 + $0x310] sm:$0xff]
    %v9389 = vld [vmem:[%s17 + $0x318] sm:$0xff]
    %v9390 = vld [vmem:[%s17 + $0x320] sm:$0xff]
    %v9391 = vld [vmem:[%s17 + $0x328] sm:$0xff]
    %v9392 = vld [vmem:[%s17 + $0x330] sm:$0xff]
    %v9393 = vld [vmem:[%s17 + $0x338] sm:$0xff]
    %v9394 = vld [vmem:[%s17 + $0x340] sm:$0xff]
    %v9395 = vld [vmem:[%s17 + $0x348] sm:$0xff]
    %v9396 = vld [vmem:[%s17 + $0x350] sm:$0xff]
    %v9397 = vld [vmem:[%s17 + $0x358] sm:$0xff]
    %v9398 = vld [vmem:[%s17 + $0x360] sm:$0xff]
    %v9399 = vld [vmem:[%s17 + $0x368] sm:$0xff]
    %v9400 = vld [vmem:[%s17 + $0x370] sm:$0xff]
    %v9401 = vld [vmem:[%s17 + $0x378] sm:$0xff]
    %v9402 = vld [vmem:[%s17 + $0x380] sm:$0xff]
    %v9403 = vld [vmem:[%s17 + $0x388] sm:$0xff]
    %v9404 = vld [vmem:[%s17 + $0x390] sm:$0xff]
    %v9405 = vld [vmem:[%s17 + $0x398] sm:$0xff]
    %v9406 = vld [vmem:[%s17 + $0x3a0] sm:$0xff]
    %v9407 = vld [vmem:[%s17 + $0x3a8] sm:$0xff]
    %v9408 = vld [vmem:[%s17 + $0x3b0] sm:$0xff]
    %v9409 = vld [vmem:[%s17 + $0x3b8] sm:$0xff]
    %v9410 = vld [vmem:[%s17 + $0x3c0] sm:$0xff]
    %v9411 = vld [vmem:[%s17 + $0x3c8] sm:$0xff]
    %v9412 = vld [vmem:[%s17 + $0x3d0] sm:$0xff]
    %v9413 = vld [vmem:[%s17 + $0x3d8] sm:$0xff]
    %v9414 = vld [vmem:[%s17 + $0x3e0] sm:$0xff]
    %v9415 = vld [vmem:[%s17 + $0x3e8] sm:$0xff]
    %v9416 = vld [vmem:[%s17 + $0x3f0] sm:$0xff]
    %v9417 = vld [vmem:[%s17 + $0x3f8] sm:$0xff]
    %v9418 = vld [vmem:[%s17 + $0x400] sm:$0xff]
    %v9419 = vld [vmem:[%s17 + $0x408] sm:$0xff]
    %v9420 = vld [vmem:[%s17 + $0x410] sm:$0xff]
    %v9421 = vld [vmem:[%s17 + $0x418] sm:$0xff]
    %v9422 = vld [vmem:[%s17 + $0x420] sm:$0xff]
    %v9423 = vld [vmem:[%s17 + $0x428] sm:$0xff]
    %v9424 = vld [vmem:[%s17 + $0x430] sm:$0xff]
    %v9425 = vld [vmem:[%s17 + $0x438] sm:$0xff]
    %v9426 = vld [vmem:[%s17 + $0x440] sm:$0xff]
    %v9427 = vld [vmem:[%s17 + $0x448] sm:$0xff]
    %v9428 = vld [vmem:[%s17 + $0x450] sm:$0xff]
    %v9429 = vld [vmem:[%s17 + $0x458] sm:$0xff]
    %v9430 = vld [vmem:[%s17 + $0x460] sm:$0xff]
    %v9431 = vld [vmem:[%s17 + $0x468] sm:$0xff]
    %v9432 = vld [vmem:[%s17 + $0x470] sm:$0xff]
    %v9433 = vld [vmem:[%s17 + $0x478] sm:$0xff]
    %v9434 = vld [vmem:[%s17 + $0x480] sm:$0xff]
    %v9435 = vld [vmem:[%s17 + $0x488] sm:$0xff]
    %v9436 = vld [vmem:[%s17 + $0x490] sm:$0xff]
    %v9437 = vld [vmem:[%s17 + $0x498] sm:$0xff]
    %v9438 = vld [vmem:[%s17 + $0x4a0] sm:$0xff]
    %v9439 = vld [vmem:[%s17 + $0x4a8] sm:$0xff]
    %v9440 = vld [vmem:[%s17 + $0x4b0] sm:$0xff]
    %v9441 = vld [vmem:[%s17 + $0x4b8] sm:$0xff]
    %v9442 = vld [vmem:[%s17 + $0x4c0] sm:$0xff]
    %v9443 = vld [vmem:[%s17 + $0x4c8] sm:$0xff]
    %v9444 = vld [vmem:[%s17 + $0x4d0] sm:$0xff]
    %v9445 = vld [vmem:[%s17 + $0x4d8] sm:$0xff]
    %v9446 = vld [vmem:[%s17 + $0x4e0] sm:$0xff]
    %v9447 = vld [vmem:[%s17 + $0x4e8] sm:$0xff]
    %v9448 = vld [vmem:[%s17 + $0x4f0] sm:$0xff]
    %v9449 = vld [vmem:[%s17 + $0x4f8] sm:$0xff]
    %v9450 = vld [vmem:[%s17 + $0x500] sm:$0xff]
    %v9451 = vld [vmem:[%s17 + $0x508] sm:$0xff]
    %v9452 = vld [vmem:[%s17 + $0x510] sm:$0xff]
    %v9453 = vld [vmem:[%s17 + $0x518] sm:$0xff]
    %v9454 = vld [vmem:[%s17 + $0x520] sm:$0xff]
    %v9455 = vld [vmem:[%s17 + $0x528] sm:$0xff]
    %v9456 = vld [vmem:[%s17 + $0x530] sm:$0xff]
    %v9457 = vld [vmem:[%s17 + $0x538] sm:$0xff]
    %v9458 = vld [vmem:[%s17 + $0x540] sm:$0xff]
    %v9459 = vld [vmem:[%s17 + $0x548] sm:$0xff]
    %v9460 = vld [vmem:[%s17 + $0x550] sm:$0xff]
    %v9461 = vld [vmem:[%s17 + $0x558] sm:$0xff]
    %v9462 = vld [vmem:[%s17 + $0x560] sm:$0xff]
    %v9463 = vld [vmem:[%s17 + $0x568] sm:$0xff]
    %v9464 = vld [vmem:[%s17 + $0x570] sm:$0xff]
    %v9465 = vld [vmem:[%s17 + $0x578] sm:$0xff]
    %v9466 = vld [vmem:[%s17 + $0x580] sm:$0xff]
    %v9467 = vld [vmem:[%s17 + $0x588] sm:$0xff]
    %v9468 = vld [vmem:[%s17 + $0x590] sm:$0xff]
    %v9469 = vld [vmem:[%s17 + $0x598] sm:$0xff]
    %v9470 = vld [vmem:[%s17 + $0x5a0] sm:$0xff]
    %v9471 = vld [vmem:[%s17 + $0x5a8] sm:$0xff]
    %v9472 = vld [vmem:[%s17 + $0x5b0] sm:$0xff]
    %v9473 = vld [vmem:[%s17 + $0x5b8] sm:$0xff]
    %v9474 = vld [vmem:[%s17 + $0x5c0] sm:$0xff]
    %v9475 = vld [vmem:[%s17 + $0x5c8] sm:$0xff]
    %v9476 = vld [vmem:[%s17 + $0x5d0] sm:$0xff]
    %v9477 = vld [vmem:[%s17 + $0x5d8] sm:$0xff]
    %v9478 = vld [vmem:[%s17 + $0x5e0] sm:$0xff]
    %v9479 = vld [vmem:[%s17 + $0x5e8] sm:$0xff]
    %v9480 = vld [vmem:[%s17 + $0x5f0] sm:$0xff]
    %v9481 = vld [vmem:[%s17 + $0x5f8] sm:$0xff]
    %v9485 = vunpack.c.l.b16 %v9287
    %v9486 = vunpack.c.h.b16 %v9287
    %v9487 = vunpack.c.l.b16 %v9288
    %v9488 = vunpack.c.h.b16 %v9288
    %v9489 = vunpack.c.l.b16 %v9289
    %v9490 = vunpack.c.h.b16 %v9289
    %v9491 = vpack.c.b16 %v9485, %v9485
    %v9492 = vpack.c.b16 %v9486, %v9486
    %v9493 = vpack.c.b16 %v9487, %v9487
    %v9494 = vpack.c.b16 %v9488, %v9488
    %v9495 = vpack.c.b16 %v9489, %v9489
    %v9496 = vpack.c.b16 %v9490, %v9490
    %v9695 = vunpack.c.l.b16 %v9290
    %v9696 = vunpack.c.h.b16 %v9290
    %v9697 = vunpack.c.l.b16 %v9291
    %v9698 = vunpack.c.h.b16 %v9291
    %v9699 = vunpack.c.l.b16 %v9292
    %v9700 = vunpack.c.h.b16 %v9292
    %v9701 = vunpack.c.l.b16 %v9293
    %v9702 = vunpack.c.h.b16 %v9293
    %v9703 = vunpack.c.l.b16 %v9294
    %v9704 = vunpack.c.h.b16 %v9294
    %v9705 = vunpack.c.l.b16 %v9295
    %v9706 = vunpack.c.h.b16 %v9295
    %v9707 = vunpack.c.l.b16 %v9296
    %v9708 = vunpack.c.h.b16 %v9296
    %v9709 = vunpack.c.l.b16 %v9297
    %v9710 = vunpack.c.h.b16 %v9297
    %v9711 = vunpack.c.l.b16 %v9298
    %v9712 = vunpack.c.h.b16 %v9298
    %v9713 = vunpack.c.l.b16 %v9299
    %v9714 = vunpack.c.h.b16 %v9299
    %v9715 = vunpack.c.l.b16 %v9300
    %v9716 = vunpack.c.h.b16 %v9300
    %v9717 = vunpack.c.l.b16 %v9301
    %v9718 = vunpack.c.h.b16 %v9301
    %v9719 = vunpack.c.l.b16 %v9302
    %v9720 = vunpack.c.h.b16 %v9302
    %v9721 = vunpack.c.l.b16 %v9303
    %v9722 = vunpack.c.h.b16 %v9303
    %v9723 = vunpack.c.l.b16 %v9304
    %v9724 = vunpack.c.h.b16 %v9304
    %v9725 = vunpack.c.l.b16 %v9305
    %v9726 = vunpack.c.h.b16 %v9305
    %v9727 = vunpack.c.l.b16 %v9306
    %v9728 = vunpack.c.h.b16 %v9306
    %v9729 = vunpack.c.l.b16 %v9307
    %v9730 = vunpack.c.h.b16 %v9307
    %v9731 = vunpack.c.l.b16 %v9308
    %v9732 = vunpack.c.h.b16 %v9308
    %v9733 = vunpack.c.l.b16 %v9309
    %v9734 = vunpack.c.h.b16 %v9309
    %v9735 = vunpack.c.l.b16 %v9310
    %v9736 = vunpack.c.h.b16 %v9310
    %v9737 = vunpack.c.l.b16 %v9311
    %v9738 = vunpack.c.h.b16 %v9311
    %v9739 = vunpack.c.l.b16 %v9312
    %v9740 = vunpack.c.h.b16 %v9312
    %v9741 = vunpack.c.l.b16 %v9313
    %v9742 = vunpack.c.h.b16 %v9313
    %v9743 = vunpack.c.l.b16 %v9314
    %v9744 = vunpack.c.h.b16 %v9314
    %v9745 = vunpack.c.l.b16 %v9315
    %v9746 = vunpack.c.h.b16 %v9315
    %v9747 = vunpack.c.l.b16 %v9316
    %v9748 = vunpack.c.h.b16 %v9316
    %v9749 = vunpack.c.l.b16 %v9317
    %v9750 = vunpack.c.h.b16 %v9317
    %v9751 = vunpack.c.l.b16 %v9318
    %v9752 = vunpack.c.h.b16 %v9318
    %v9753 = vunpack.c.l.b16 %v9319
    %v9754 = vunpack.c.h.b16 %v9319
    %v9755 = vunpack.c.l.b16 %v9320
    %v9756 = vunpack.c.h.b16 %v9320
    %v9757 = vunpack.c.l.b16 %v9321
    %v9758 = vunpack.c.h.b16 %v9321
    %v9759 = vunpack.c.l.b16 %v9322
    %v9760 = vunpack.c.h.b16 %v9322
    %v9761 = vunpack.c.l.b16 %v9323
    %v9762 = vunpack.c.h.b16 %v9323
    %v9763 = vunpack.c.l.b16 %v9324
    %v9764 = vunpack.c.h.b16 %v9324
    %v9765 = vunpack.c.l.b16 %v9325
    %v9766 = vunpack.c.h.b16 %v9325
    %v9767 = vunpack.c.l.b16 %v9326
    %v9768 = vunpack.c.h.b16 %v9326
    %v9769 = vunpack.c.l.b16 %v9327
    %v9770 = vunpack.c.h.b16 %v9327
    %v9771 = vunpack.c.l.b16 %v9328
    %v9772 = vunpack.c.h.b16 %v9328
    %v9773 = vunpack.c.l.b16 %v9329
    %v9774 = vunpack.c.h.b16 %v9329
    %v9775 = vunpack.c.l.b16 %v9330
    %v9776 = vunpack.c.h.b16 %v9330
    %v9777 = vunpack.c.l.b16 %v9331
    %v9778 = vunpack.c.h.b16 %v9331
    %v9779 = vunpack.c.l.b16 %v9332
    %v9780 = vunpack.c.h.b16 %v9332
    %v9781 = vunpack.c.l.b16 %v9333
    %v9782 = vunpack.c.h.b16 %v9333
    %v9783 = vunpack.c.l.b16 %v9334
    %v9784 = vunpack.c.h.b16 %v9334
    %v9785 = vunpack.c.l.b16 %v9335
    %v9786 = vunpack.c.h.b16 %v9335
    %v9787 = vunpack.c.l.b16 %v9336
    %v9788 = vunpack.c.h.b16 %v9336
    %v9789 = vunpack.c.l.b16 %v9337
    %v9790 = vunpack.c.h.b16 %v9337
    %v9791 = vunpack.c.l.b16 %v9338
    %v9792 = vunpack.c.h.b16 %v9338
    %v9793 = vunpack.c.l.b16 %v9339
    %v9794 = vunpack.c.h.b16 %v9339
    %v9795 = vunpack.c.l.b16 %v9340
    %v9796 = vunpack.c.h.b16 %v9340
    %v9797 = vunpack.c.l.b16 %v9341
    %v9798 = vunpack.c.h.b16 %v9341
    %v9799 = vunpack.c.l.b16 %v9342
    %v9800 = vunpack.c.h.b16 %v9342
    %v9801 = vunpack.c.l.b16 %v9343
    %v9802 = vunpack.c.h.b16 %v9343
    %v9803 = vunpack.c.l.b16 %v9344
    %v9804 = vunpack.c.h.b16 %v9344
    %v9805 = vunpack.c.l.b16 %v9345
    %v9806 = vunpack.c.h.b16 %v9345
    %v9807 = vunpack.c.l.b16 %v9346
    %v9808 = vunpack.c.h.b16 %v9346
    %v9809 = vunpack.c.l.b16 %v9347
    %v9810 = vunpack.c.h.b16 %v9347
    %v9811 = vunpack.c.l.b16 %v9348
    %v9812 = vunpack.c.h.b16 %v9348
    %v9813 = vunpack.c.l.b16 %v9349
    %v9814 = vunpack.c.h.b16 %v9349
    %v9815 = vunpack.c.l.b16 %v9350
    %v9816 = vunpack.c.h.b16 %v9350
    %v9817 = vunpack.c.l.b16 %v9351
    %v9818 = vunpack.c.h.b16 %v9351
    %v9819 = vunpack.c.l.b16 %v9352
    %v9820 = vunpack.c.h.b16 %v9352
    %v9821 = vunpack.c.l.b16 %v9353
    %v9822 = vunpack.c.h.b16 %v9353
    %v9823 = vunpack.c.l.b16 %v9354
    %v9824 = vunpack.c.h.b16 %v9354
    %v9825 = vunpack.c.l.b16 %v9355
    %v9826 = vunpack.c.h.b16 %v9355
    %v9827 = vunpack.c.l.b16 %v9356
    %v9828 = vunpack.c.h.b16 %v9356
    %v9829 = vunpack.c.l.b16 %v9357
    %v9830 = vunpack.c.h.b16 %v9357
    %v9831 = vunpack.c.l.b16 %v9358
    %v9832 = vunpack.c.h.b16 %v9358
    %v9833 = vunpack.c.l.b16 %v9359
    %v9834 = vunpack.c.h.b16 %v9359
    %v9835 = vunpack.c.l.b16 %v9360
    %v9836 = vunpack.c.h.b16 %v9360
    %v9837 = vunpack.c.l.b16 %v9361
    %v9838 = vunpack.c.h.b16 %v9361
    %v9839 = vunpack.c.l.b16 %v9362
    %v9840 = vunpack.c.h.b16 %v9362
    %v9841 = vunpack.c.l.b16 %v9363
    %v9842 = vunpack.c.h.b16 %v9363
    %v9843 = vunpack.c.l.b16 %v9364
    %v9844 = vunpack.c.h.b16 %v9364
    %v9845 = vunpack.c.l.b16 %v9365
    %v9846 = vunpack.c.h.b16 %v9365
    %v9847 = vunpack.c.l.b16 %v9366
    %v9848 = vunpack.c.h.b16 %v9366
    %v9849 = vunpack.c.l.b16 %v9367
    %v9850 = vunpack.c.h.b16 %v9367
    %v9851 = vunpack.c.l.b16 %v9368
    %v9852 = vunpack.c.h.b16 %v9368
    %v9853 = vunpack.c.l.b16 %v9369
    %v9854 = vunpack.c.h.b16 %v9369
    %v9855 = vunpack.c.l.b16 %v9370
    %v9856 = vunpack.c.h.b16 %v9370
    %v9857 = vunpack.c.l.b16 %v9371
    %v9858 = vunpack.c.h.b16 %v9371
    %v9859 = vunpack.c.l.b16 %v9372
    %v9860 = vunpack.c.h.b16 %v9372
    %v9861 = vunpack.c.l.b16 %v9373
    %v9862 = vunpack.c.h.b16 %v9373
    %v9863 = vunpack.c.l.b16 %v9374
    %v9864 = vunpack.c.h.b16 %v9374
    %v9865 = vunpack.c.l.b16 %v9375
    %v9866 = vunpack.c.h.b16 %v9375
    %v9867 = vunpack.c.l.b16 %v9376
    %v9868 = vunpack.c.h.b16 %v9376
    %v9869 = vunpack.c.l.b16 %v9377
    %v9870 = vunpack.c.h.b16 %v9377
    %v9871 = vunpack.c.l.b16 %v9378
    %v9872 = vunpack.c.h.b16 %v9378
    %v9873 = vunpack.c.l.b16 %v9379
    %v9874 = vunpack.c.h.b16 %v9379
    %v9875 = vunpack.c.l.b16 %v9380
    %v9876 = vunpack.c.h.b16 %v9380
    %v9877 = vunpack.c.l.b16 %v9381
    %v9878 = vunpack.c.h.b16 %v9381
    %v9879 = vunpack.c.l.b16 %v9382
    %v9880 = vunpack.c.h.b16 %v9382
    %v9881 = vunpack.c.l.b16 %v9383
    %v9882 = vunpack.c.h.b16 %v9383
    %v9883 = vunpack.c.l.b16 %v9384
    %v9884 = vunpack.c.h.b16 %v9384
    %v9885 = vunpack.c.l.b16 %v9385
    %v9886 = vunpack.c.h.b16 %v9385
    %v9887 = vunpack.c.l.b16 %v9386
    %v9888 = vunpack.c.h.b16 %v9386
    %v9889 = vunpack.c.l.b16 %v9387
    %v9890 = vunpack.c.h.b16 %v9387
    %v9891 = vunpack.c.l.b16 %v9388
    %v9892 = vunpack.c.h.b16 %v9388
    %v9893 = vunpack.c.l.b16 %v9389
    %v9894 = vunpack.c.h.b16 %v9389
    %v9895 = vunpack.c.l.b16 %v9390
    %v9896 = vunpack.c.h.b16 %v9390
    %v9897 = vunpack.c.l.b16 %v9391
    %v9898 = vunpack.c.h.b16 %v9391
    %v9899 = vunpack.c.l.b16 %v9392
    %v9900 = vunpack.c.h.b16 %v9392
    %v9901 = vunpack.c.l.b16 %v9393
    %v9902 = vunpack.c.h.b16 %v9393
    %v9903 = vunpack.c.l.b16 %v9394
    %v9904 = vunpack.c.h.b16 %v9394
    %v9905 = vunpack.c.l.b16 %v9395
    %v9906 = vunpack.c.h.b16 %v9395
    %v9907 = vunpack.c.l.b16 %v9396
    %v9908 = vunpack.c.h.b16 %v9396
    %v9909 = vunpack.c.l.b16 %v9397
    %v9910 = vunpack.c.h.b16 %v9397
    %v9911 = vunpack.c.l.b16 %v9398
    %v9912 = vunpack.c.h.b16 %v9398
    %v9913 = vunpack.c.l.b16 %v9399
    %v9914 = vunpack.c.h.b16 %v9399
    %v9915 = vunpack.c.l.b16 %v9400
    %v9916 = vunpack.c.h.b16 %v9400
    %v9917 = vunpack.c.l.b16 %v9401
    %v9918 = vunpack.c.h.b16 %v9401
    %v9919 = vunpack.c.l.b16 %v9402
    %v9920 = vunpack.c.h.b16 %v9402
    %v9921 = vunpack.c.l.b16 %v9403
    %v9922 = vunpack.c.h.b16 %v9403
    %v9923 = vunpack.c.l.b16 %v9404
    %v9924 = vunpack.c.h.b16 %v9404
    %v9925 = vunpack.c.l.b16 %v9405
    %v9926 = vunpack.c.h.b16 %v9405
    %v9927 = vunpack.c.l.b16 %v9406
    %v9928 = vunpack.c.h.b16 %v9406
    %v9929 = vunpack.c.l.b16 %v9407
    %v9930 = vunpack.c.h.b16 %v9407
    %v9931 = vunpack.c.l.b16 %v9408
    %v9932 = vunpack.c.h.b16 %v9408
    %v9933 = vunpack.c.l.b16 %v9409
    %v9934 = vunpack.c.h.b16 %v9409
    %v9935 = vunpack.c.l.b16 %v9410
    %v9936 = vunpack.c.h.b16 %v9410
    %v9937 = vunpack.c.l.b16 %v9411
    %v9938 = vunpack.c.h.b16 %v9411
    %v9939 = vunpack.c.l.b16 %v9412
    %v9940 = vunpack.c.h.b16 %v9412
    %v9941 = vunpack.c.l.b16 %v9413
    %v9942 = vunpack.c.h.b16 %v9413
    %v9943 = vunpack.c.l.b16 %v9414
    %v9944 = vunpack.c.h.b16 %v9414
    %v9945 = vunpack.c.l.b16 %v9415
    %v9946 = vunpack.c.h.b16 %v9415
    %v9947 = vunpack.c.l.b16 %v9416
    %v9948 = vunpack.c.h.b16 %v9416
    %v9949 = vunpack.c.l.b16 %v9417
    %v9950 = vunpack.c.h.b16 %v9417
    %v9951 = vunpack.c.l.b16 %v9418
    %v9952 = vunpack.c.h.b16 %v9418
    %v9953 = vunpack.c.l.b16 %v9419
    %v9954 = vunpack.c.h.b16 %v9419
    %v9955 = vunpack.c.l.b16 %v9420
    %v9956 = vunpack.c.h.b16 %v9420
    %v9957 = vunpack.c.l.b16 %v9421
    %v9958 = vunpack.c.h.b16 %v9421
    %v9959 = vunpack.c.l.b16 %v9422
    %v9960 = vunpack.c.h.b16 %v9422
    %v9961 = vunpack.c.l.b16 %v9423
    %v9962 = vunpack.c.h.b16 %v9423
    %v9963 = vunpack.c.l.b16 %v9424
    %v9964 = vunpack.c.h.b16 %v9424
    %v9965 = vunpack.c.l.b16 %v9425
    %v9966 = vunpack.c.h.b16 %v9425
    %v9967 = vunpack.c.l.b16 %v9426
    %v9968 = vunpack.c.h.b16 %v9426
    %v9969 = vunpack.c.l.b16 %v9427
    %v9970 = vunpack.c.h.b16 %v9427
    %v9971 = vunpack.c.l.b16 %v9428
    %v9972 = vunpack.c.h.b16 %v9428
    %v9973 = vunpack.c.l.b16 %v9429
    %v9974 = vunpack.c.h.b16 %v9429
    %v9975 = vunpack.c.l.b16 %v9430
    %v9976 = vunpack.c.h.b16 %v9430
    %v9977 = vunpack.c.l.b16 %v9431
    %v9978 = vunpack.c.h.b16 %v9431
    %v9979 = vunpack.c.l.b16 %v9432
    %v9980 = vunpack.c.h.b16 %v9432
    %v9981 = vunpack.c.l.b16 %v9433
    %v9982 = vunpack.c.h.b16 %v9433
    %v9983 = vunpack.c.l.b16 %v9434
    %v9984 = vunpack.c.h.b16 %v9434
    %v9985 = vunpack.c.l.b16 %v9435
    %v9986 = vunpack.c.h.b16 %v9435
    %v9987 = vunpack.c.l.b16 %v9436
    %v9988 = vunpack.c.h.b16 %v9436
    %v9989 = vunpack.c.l.b16 %v9437
    %v9990 = vunpack.c.h.b16 %v9437
    %v9991 = vunpack.c.l.b16 %v9438
    %v9992 = vunpack.c.h.b16 %v9438
    %v9993 = vunpack.c.l.b16 %v9439
    %v9994 = vunpack.c.h.b16 %v9439
    %v9995 = vunpack.c.l.b16 %v9440
    %v9996 = vunpack.c.h.b16 %v9440
    %v9997 = vunpack.c.l.b16 %v9441
    %v9998 = vunpack.c.h.b16 %v9441
    %v9999 = vunpack.c.l.b16 %v9442
    %v10000 = vunpack.c.h.b16 %v9442
    %v10001 = vunpack.c.l.b16 %v9443
    %v10002 = vunpack.c.h.b16 %v9443
    %v10003 = vunpack.c.l.b16 %v9444
    %v10004 = vunpack.c.h.b16 %v9444
    %v10005 = vunpack.c.l.b16 %v9445
    %v10006 = vunpack.c.h.b16 %v9445
    %v10007 = vunpack.c.l.b16 %v9446
    %v10008 = vunpack.c.h.b16 %v9446
    %v10009 = vunpack.c.l.b16 %v9447
    %v10010 = vunpack.c.h.b16 %v9447
    %v10011 = vunpack.c.l.b16 %v9448
    %v10012 = vunpack.c.h.b16 %v9448
    %v10013 = vunpack.c.l.b16 %v9449
    %v10014 = vunpack.c.h.b16 %v9449
    %v10015 = vunpack.c.l.b16 %v9450
    %v10016 = vunpack.c.h.b16 %v9450
    %v10017 = vunpack.c.l.b16 %v9451
    %v10018 = vunpack.c.h.b16 %v9451
    %v10019 = vunpack.c.l.b16 %v9452
    %v10020 = vunpack.c.h.b16 %v9452
    %v10021 = vunpack.c.l.b16 %v9453
    %v10022 = vunpack.c.h.b16 %v9453
    %v10023 = vunpack.c.l.b16 %v9454
    %v10024 = vunpack.c.h.b16 %v9454
    %v10025 = vunpack.c.l.b16 %v9455
    %v10026 = vunpack.c.h.b16 %v9455
    %v10027 = vunpack.c.l.b16 %v9456
    %v10028 = vunpack.c.h.b16 %v9456
    %v10029 = vunpack.c.l.b16 %v9457
    %v10030 = vunpack.c.h.b16 %v9457
    %v10031 = vunpack.c.l.b16 %v9458
    %v10032 = vunpack.c.h.b16 %v9458
    %v10033 = vunpack.c.l.b16 %v9459
    %v10034 = vunpack.c.h.b16 %v9459
    %v10035 = vunpack.c.l.b16 %v9460
    %v10036 = vunpack.c.h.b16 %v9460
    %v10037 = vunpack.c.l.b16 %v9461
    %v10038 = vunpack.c.h.b16 %v9461
    %v10039 = vunpack.c.l.b16 %v9462
    %v10040 = vunpack.c.h.b16 %v9462
    %v10041 = vunpack.c.l.b16 %v9463
    %v10042 = vunpack.c.h.b16 %v9463
    %v10043 = vunpack.c.l.b16 %v9464
    %v10044 = vunpack.c.h.b16 %v9464
    %v10045 = vunpack.c.l.b16 %v9465
    %v10046 = vunpack.c.h.b16 %v9465
    %v10047 = vunpack.c.l.b16 %v9466
    %v10048 = vunpack.c.h.b16 %v9466
    %v10049 = vunpack.c.l.b16 %v9467
    %v10050 = vunpack.c.h.b16 %v9467
    %v10051 = vunpack.c.l.b16 %v9468
    %v10052 = vunpack.c.h.b16 %v9468
    %v10053 = vunpack.c.l.b16 %v9469
    %v10054 = vunpack.c.h.b16 %v9469
    %v10055 = vunpack.c.l.b16 %v9470
    %v10056 = vunpack.c.h.b16 %v9470
    %v10057 = vunpack.c.l.b16 %v9471
    %v10058 = vunpack.c.h.b16 %v9471
    %v10059 = vunpack.c.l.b16 %v9472
    %v10060 = vunpack.c.h.b16 %v9472
    %v10061 = vunpack.c.l.b16 %v9473
    %v10062 = vunpack.c.h.b16 %v9473
    %v10063 = vunpack.c.l.b16 %v9474
    %v10064 = vunpack.c.h.b16 %v9474
    %v10065 = vunpack.c.l.b16 %v9475
    %v10066 = vunpack.c.h.b16 %v9475
    %v10067 = vunpack.c.l.b16 %v9476
    %v10068 = vunpack.c.h.b16 %v9476
    %v10069 = vunpack.c.l.b16 %v9477
    %v10070 = vunpack.c.h.b16 %v9477
    %v10071 = vunpack.c.l.b16 %v9478
    %v10072 = vunpack.c.h.b16 %v9478
    %v10073 = vunpack.c.l.b16 %v9479
    %v10074 = vunpack.c.h.b16 %v9479
    %v10075 = vunpack.c.l.b16 %v9480
    %v10076 = vunpack.c.h.b16 %v9480
    %v10077 = vunpack.c.l.b16 %v9481
    %v10078 = vunpack.c.h.b16 %v9481
    %v10079 = vpack.c.b16 %v9699, %v9695
    %v10080 = vpack.c.b16 %v9700, %v9696
    %v10081 = vpack.c.b16 %v9701, %v9697
    %v10082 = vpack.c.b16 %v9702, %v9698
    %v10083 = vpack.c.b16 %v9707, %v9703
    %v10084 = vpack.c.b16 %v9708, %v9704
    %v10085 = vpack.c.b16 %v9709, %v9705
    %v10086 = vpack.c.b16 %v9710, %v9706
    %v10087 = vpack.c.b16 %v9715, %v9711
    %v10088 = vpack.c.b16 %v9716, %v9712
    %v10089 = vpack.c.b16 %v9717, %v9713
    %v10090 = vpack.c.b16 %v9718, %v9714
    %v10091 = vpack.c.b16 %v9723, %v9719
    %v10092 = vpack.c.b16 %v9724, %v9720
    %v10093 = vpack.c.b16 %v9725, %v9721
    %v10094 = vpack.c.b16 %v9726, %v9722
    %v10095 = vpack.c.b16 %v9731, %v9727
    %v10096 = vpack.c.b16 %v9732, %v9728
    %v10097 = vpack.c.b16 %v9733, %v9729
    %v10098 = vpack.c.b16 %v9734, %v9730
    %v10099 = vpack.c.b16 %v9739, %v9735
    %v10100 = vpack.c.b16 %v9740, %v9736
    %v10101 = vpack.c.b16 %v9741, %v9737
    %v10102 = vpack.c.b16 %v9742, %v9738
    %v10103 = vpack.c.b16 %v9747, %v9743
    %v10104 = vpack.c.b16 %v9748, %v9744
    %v10105 = vpack.c.b16 %v9749, %v9745
    %v10106 = vpack.c.b16 %v9750, %v9746
    %v10107 = vpack.c.b16 %v9755, %v9751
    %v10108 = vpack.c.b16 %v9756, %v9752
    %v10109 = vpack.c.b16 %v9757, %v9753
    %v10110 = vpack.c.b16 %v9758, %v9754
    %v10111 = vpack.c.b16 %v9763, %v9759
    %v10112 = vpack.c.b16 %v9764, %v9760
    %v10113 = vpack.c.b16 %v9765, %v9761
    %v10114 = vpack.c.b16 %v9766, %v9762
    %v10115 = vpack.c.b16 %v9771, %v9767
    %v10116 = vpack.c.b16 %v9772, %v9768
    %v10117 = vpack.c.b16 %v9773, %v9769
    %v10118 = vpack.c.b16 %v9774, %v9770
    %v10119 = vpack.c.b16 %v9779, %v9775
    %v10120 = vpack.c.b16 %v9780, %v9776
    %v10121 = vpack.c.b16 %v9781, %v9777
    %v10122 = vpack.c.b16 %v9782, %v9778
    %v10123 = vpack.c.b16 %v9787, %v9783
    %v10124 = vpack.c.b16 %v9788, %v9784
    %v10125 = vpack.c.b16 %v9789, %v9785
    %v10126 = vpack.c.b16 %v9790, %v9786
    %v10127 = vpack.c.b16 %v9795, %v9791
    %v10128 = vpack.c.b16 %v9796, %v9792
    %v10129 = vpack.c.b16 %v9797, %v9793
    %v10130 = vpack.c.b16 %v9798, %v9794
    %v10131 = vpack.c.b16 %v9803, %v9799
    %v10132 = vpack.c.b16 %v9804, %v9800
    %v10133 = vpack.c.b16 %v9805, %v9801
    %v10134 = vpack.c.b16 %v9806, %v9802
    %v10135 = vpack.c.b16 %v9811, %v9807
    %v10136 = vpack.c.b16 %v9812, %v9808
    %v10137 = vpack.c.b16 %v9813, %v9809
    %v10138 = vpack.c.b16 %v9814, %v9810
    %v10139 = vpack.c.b16 %v9819, %v9815
    %v10140 = vpack.c.b16 %v9820, %v9816
    %v10141 = vpack.c.b16 %v9821, %v9817
    %v10142 = vpack.c.b16 %v9822, %v9818
    %v10143 = vpack.c.b16 %v9827, %v9823
    %v10144 = vpack.c.b16 %v9828, %v9824
    %v10145 = vpack.c.b16 %v9829, %v9825
    %v10146 = vpack.c.b16 %v9830, %v9826
    %v10147 = vpack.c.b16 %v9835, %v9831
    %v10148 = vpack.c.b16 %v9836, %v9832
    %v10149 = vpack.c.b16 %v9837, %v9833
    %v10150 = vpack.c.b16 %v9838, %v9834
    %v10151 = vpack.c.b16 %v9843, %v9839
    %v10152 = vpack.c.b16 %v9844, %v9840
    %v10153 = vpack.c.b16 %v9845, %v9841
    %v10154 = vpack.c.b16 %v9846, %v9842
    %v10155 = vpack.c.b16 %v9851, %v9847
    %v10156 = vpack.c.b16 %v9852, %v9848
    %v10157 = vpack.c.b16 %v9853, %v9849
    %v10158 = vpack.c.b16 %v9854, %v9850
    %v10159 = vpack.c.b16 %v9859, %v9855
    %v10160 = vpack.c.b16 %v9860, %v9856
    %v10161 = vpack.c.b16 %v9861, %v9857
    %v10162 = vpack.c.b16 %v9862, %v9858
    %v10163 = vpack.c.b16 %v9867, %v9863
    %v10164 = vpack.c.b16 %v9868, %v9864
    %v10165 = vpack.c.b16 %v9869, %v9865
    %v10166 = vpack.c.b16 %v9870, %v9866
    %v10167 = vpack.c.b16 %v9875, %v9871
    %v10168 = vpack.c.b16 %v9876, %v9872
    %v10169 = vpack.c.b16 %v9877, %v9873
    %v10170 = vpack.c.b16 %v9878, %v9874
    %v10171 = vpack.c.b16 %v9883, %v9879
    %v10172 = vpack.c.b16 %v9884, %v9880
    %v10173 = vpack.c.b16 %v9885, %v9881
    %v10174 = vpack.c.b16 %v9886, %v9882
    %v10175 = vpack.c.b16 %v9891, %v9887
    %v10176 = vpack.c.b16 %v9892, %v9888
    %v10177 = vpack.c.b16 %v9893, %v9889
    %v10178 = vpack.c.b16 %v9894, %v9890
    %v10179 = vpack.c.b16 %v9899, %v9895
    %v10180 = vpack.c.b16 %v9900, %v9896
    %v10181 = vpack.c.b16 %v9901, %v9897
    %v10182 = vpack.c.b16 %v9902, %v9898
    %v10183 = vpack.c.b16 %v9907, %v9903
    %v10184 = vpack.c.b16 %v9908, %v9904
    %v10185 = vpack.c.b16 %v9909, %v9905
    %v10186 = vpack.c.b16 %v9910, %v9906
    %v10187 = vpack.c.b16 %v9915, %v9911
    %v10188 = vpack.c.b16 %v9916, %v9912
    %v10189 = vpack.c.b16 %v9917, %v9913
    %v10190 = vpack.c.b16 %v9918, %v9914
    %v10191 = vpack.c.b16 %v9923, %v9919
    %v10192 = vpack.c.b16 %v9924, %v9920
    %v10193 = vpack.c.b16 %v9925, %v9921
    %v10194 = vpack.c.b16 %v9926, %v9922
    %v10195 = vpack.c.b16 %v9931, %v9927
    %v10196 = vpack.c.b16 %v9932, %v9928
    %v10197 = vpack.c.b16 %v9933, %v9929
    %v10198 = vpack.c.b16 %v9934, %v9930
    %v10199 = vpack.c.b16 %v9939, %v9935
    %v10200 = vpack.c.b16 %v9940, %v9936
    %v10201 = vpack.c.b16 %v9941, %v9937
    %v10202 = vpack.c.b16 %v9942, %v9938
    %v10203 = vpack.c.b16 %v9947, %v9943
    %v10204 = vpack.c.b16 %v9948, %v9944
    %v10205 = vpack.c.b16 %v9949, %v9945
    %v10206 = vpack.c.b16 %v9950, %v9946
    %v10207 = vpack.c.b16 %v9955, %v9951
    %v10208 = vpack.c.b16 %v9956, %v9952
    %v10209 = vpack.c.b16 %v9957, %v9953
    %v10210 = vpack.c.b16 %v9958, %v9954
    %v10211 = vpack.c.b16 %v9963, %v9959
    %v10212 = vpack.c.b16 %v9964, %v9960
    %v10213 = vpack.c.b16 %v9965, %v9961
    %v10214 = vpack.c.b16 %v9966, %v9962
    %v10215 = vpack.c.b16 %v9971, %v9967
    %v10216 = vpack.c.b16 %v9972, %v9968
    %v10217 = vpack.c.b16 %v9973, %v9969
    %v10218 = vpack.c.b16 %v9974, %v9970
    %v10219 = vpack.c.b16 %v9979, %v9975
    %v10220 = vpack.c.b16 %v9980, %v9976
    %v10221 = vpack.c.b16 %v9981, %v9977
    %v10222 = vpack.c.b16 %v9982, %v9978
    %v10223 = vpack.c.b16 %v9987, %v9983
    %v10224 = vpack.c.b16 %v9988, %v9984
    %v10225 = vpack.c.b16 %v9989, %v9985
    %v10226 = vpack.c.b16 %v9990, %v9986
    %v10227 = vpack.c.b16 %v9995, %v9991
    %v10228 = vpack.c.b16 %v9996, %v9992
    %v10229 = vpack.c.b16 %v9997, %v9993
    %v10230 = vpack.c.b16 %v9998, %v9994
    %v10231 = vpack.c.b16 %v10003, %v9999
    %v10232 = vpack.c.b16 %v10004, %v10000
    %v10233 = vpack.c.b16 %v10005, %v10001
    %v10234 = vpack.c.b16 %v10006, %v10002
    %v10235 = vpack.c.b16 %v10011, %v10007
    %v10236 = vpack.c.b16 %v10012, %v10008
    %v10237 = vpack.c.b16 %v10013, %v10009
    %v10238 = vpack.c.b16 %v10014, %v10010
    %v10239 = vpack.c.b16 %v10019, %v10015
    %v10240 = vpack.c.b16 %v10020, %v10016
    %v10241 = vpack.c.b16 %v10021, %v10017
    %v10242 = vpack.c.b16 %v10022, %v10018
    %v10243 = vpack.c.b16 %v10027, %v10023
    %v10244 = vpack.c.b16 %v10028, %v10024
    %v10245 = vpack.c.b16 %v10029, %v10025
    %v10246 = vpack.c.b16 %v10030, %v10026
    %v10247 = vpack.c.b16 %v10035, %v10031
    %v10248 = vpack.c.b16 %v10036, %v10032
    %v10249 = vpack.c.b16 %v10037, %v10033
    %v10250 = vpack.c.b16 %v10038, %v10034
    %v10251 = vpack.c.b16 %v10043, %v10039
    %v10252 = vpack.c.b16 %v10044, %v10040
    %v10253 = vpack.c.b16 %v10045, %v10041
    %v10254 = vpack.c.b16 %v10046, %v10042
    %v10255 = vpack.c.b16 %v10051, %v10047
    %v10256 = vpack.c.b16 %v10052, %v10048
    %v10257 = vpack.c.b16 %v10053, %v10049
    %v10258 = vpack.c.b16 %v10054, %v10050
    %v10259 = vpack.c.b16 %v10059, %v10055
    %v10260 = vpack.c.b16 %v10060, %v10056
    %v10261 = vpack.c.b16 %v10061, %v10057
    %v10262 = vpack.c.b16 %v10062, %v10058
    %v10263 = vpack.c.b16 %v10067, %v10063
    %v10264 = vpack.c.b16 %v10068, %v10064
    %v10265 = vpack.c.b16 %v10069, %v10065
    %v10266 = vpack.c.b16 %v10070, %v10066
    %v10267 = vpack.c.b16 %v10075, %v10071
    %v10268 = vpack.c.b16 %v10076, %v10072
    %v10269 = vpack.c.b16 %v10077, %v10073
    %v10270 = vpack.c.b16 %v10078, %v10074
    %10463 = vmatprep.subr.bf16.mxu0 %v10080
    %10464 = vmatpush1.bf16.msra.mxu0 %v10079
    %10465 = vmatprep.subr.bf16.mxu0 %v10084
    %10466 = vmatpush1.bf16.msra.mxu0 %v10083
    %10467 = vmatprep.subr.bf16.mxu0 %v10088
    %10468 = vmatpush1.bf16.msra.mxu0 %v10087
    %10469 = vmatprep.subr.bf16.mxu0 %v10092
    %10470 = vmatpush1.bf16.msra.mxu0 %v10091
    %10471 = vmatprep.subr.bf16.mxu0 %v10096
    %10472 = vmatpush1.bf16.msra.mxu0 %v10095
    %10473 = vmatprep.subr.bf16.mxu0 %v10100
    %10474 = vmatpush1.bf16.msra.mxu0 %v10099
    %10475 = vmatprep.subr.bf16.mxu0 %v10104
    %10476 = vmatpush1.bf16.msra.mxu0 %v10103
    %10477 = vmatprep.subr.bf16.mxu0 %v10108
    %10478 = vmatpush1.bf16.msra.mxu0 %v10107
    %10479 = vmatprep.subr.bf16.mxu0 %v10112
    %10480 = vmatpush1.bf16.msra.mxu0 %v10111
    %10481 = vmatprep.subr.bf16.mxu0 %v10116
    %10482 = vmatpush1.bf16.msra.mxu0 %v10115
    %10483 = vmatprep.subr.bf16.mxu0 %v10120
    %10484 = vmatpush1.bf16.msra.mxu0 %v10119
    %10485 = vmatprep.subr.bf16.mxu0 %v10124
    %10486 = vmatpush1.bf16.msra.mxu0 %v10123
    %10487 = vmatprep.subr.bf16.mxu0 %v10128
    %10488 = vmatpush1.bf16.msra.mxu0 %v10127
    %10489 = vmatprep.subr.bf16.mxu0 %v10132
    %10490 = vmatpush1.bf16.msra.mxu0 %v10131
    %10491 = vmatprep.subr.bf16.mxu0 %v10136
    %10492 = vmatpush1.bf16.msra.mxu0 %v10135
    %10493 = vmatprep.subr.bf16.mxu0 %v10140
    %10494 = vmatpush1.bf16.msra.mxu0 %v10139
    %10495 = vmatprep.mubr.bf16.mxu0 %v9492
    %10496 = vmatmul.mubr.bf16.gmra.mrb[0].mxu0 %v9491
    %v10497 = vpop.f32.mrb[0].mxu0
    %v10498 = vadd.f32 0.0, %v10497
    %v10499 = vpop.f32.mrb[0].mxu0
    %v10500 = vadd.f32 0.0, %v10499
    %v10501 = vpop.f32.mrb[0].mxu0
    %v10502 = vpop.f32.mrb[0].mxu0
    %10503 = vdwg.mxu0
    %10504 = vmatprep.subr.bf16.mxu0 %v10144
    %10505 = vmatpush1.bf16.msra.mxu0 %v10143
    %10506 = vmatprep.subr.bf16.mxu0 %v10148
    %10507 = vmatpush1.bf16.msra.mxu0 %v10147
    %10508 = vmatprep.subr.bf16.mxu0 %v10152
    %10509 = vmatpush1.bf16.msra.mxu0 %v10151
    %10510 = vmatprep.subr.bf16.mxu0 %v10156
    %10511 = vmatpush1.bf16.msra.mxu0 %v10155
    %10512 = vmatprep.subr.bf16.mxu0 %v10160
    %10513 = vmatpush1.bf16.msra.mxu0 %v10159
    %10514 = vmatprep.subr.bf16.mxu0 %v10164
    %10515 = vmatpush1.bf16.msra.mxu0 %v10163
    %10516 = vmatprep.subr.bf16.mxu0 %v10168
    %10517 = vmatpush1.bf16.msra.mxu0 %v10167
    %10518 = vmatprep.subr.bf16.mxu0 %v10172
    %10519 = vmatpush1.bf16.msra.mxu0 %v10171
    %10520 = vmatprep.subr.bf16.mxu0 %v10176
    %10521 = vmatpush1.bf16.msra.mxu0 %v10175
    %10522 = vmatprep.subr.bf16.mxu0 %v10180
    %10523 = vmatpush1.bf16.msra.mxu0 %v10179
    %10524 = vmatprep.subr.bf16.mxu0 %v10184
    %10525 = vmatpush1.bf16.msra.mxu0 %v10183
    %10526 = vmatprep.subr.bf16.mxu0 %v10188
    %10527 = vmatpush1.bf16.msra.mxu0 %v10187
    %10528 = vmatprep.subr.bf16.mxu0 %v10192
    %10529 = vmatpush1.bf16.msra.mxu0 %v10191
    %10530 = vmatprep.subr.bf16.mxu0 %v10196
    %10531 = vmatpush1.bf16.msra.mxu0 %v10195
    %10532 = vmatprep.subr.bf16.mxu0 %v10200
    %10533 = vmatpush1.bf16.msra.mxu0 %v10199
    %10534 = vmatprep.subr.bf16.mxu0 %v10204
    %10535 = vmatpush1.bf16.msra.mxu0 %v10203
    %10536 = vmatprep.mubr.bf16.mxu0 %v9494
    %10537 = vmatmul.mubr.bf16.gmra.mrb[0].mxu0 %v9493
    %v10538 = vpop.f32.mrb[0].mxu0
    %v10539 = vadd.f32 %v10498, %v10538
    %v10540 = vpop.f32.mrb[0].mxu0
    %v10541 = vadd.f32 %v10500, %v10540
    %v10542 = vpop.f32.mrb[0].mxu0
    %v10543 = vpop.f32.mrb[0].mxu0
    %10544 = vdwg.mxu0
    %10545 = vmatprep.subr.bf16.mxu0 %v10208
    %10546 = vmatpush1.bf16.msra.mxu0 %v10207
    %10547 = vmatprep.subr.bf16.mxu0 %v10212
    %10548 = vmatpush1.bf16.msra.mxu0 %v10211
    %10549 = vmatprep.subr.bf16.mxu0 %v10216
    %10550 = vmatpush1.bf16.msra.mxu0 %v10215
    %10551 = vmatprep.subr.bf16.mxu0 %v10220
    %10552 = vmatpush1.bf16.msra.mxu0 %v10219
    %10553 = vmatprep.subr.bf16.mxu0 %v10224
    %10554 = vmatpush1.bf16.msra.mxu0 %v10223
    %10555 = vmatprep.subr.bf16.mxu0 %v10228
    %10556 = vmatpush1.bf16.msra.mxu0 %v10227
    %10557 = vmatprep.subr.bf16.mxu0 %v10232
    %10558 = vmatpush1.bf16.msra.mxu0 %v10231
    %10559 = vmatprep.subr.bf16.mxu0 %v10236
    %10560 = vmatpush1.bf16.msra.mxu0 %v10235
    %10561 = vmatprep.subr.bf16.mxu0 %v10240
    %10562 = vmatpush1.bf16.msra.mxu0 %v10239
    %10563 = vmatprep.subr.bf16.mxu0 %v10244
    %10564 = vmatpush1.bf16.msra.mxu0 %v10243
    %10565 = vmatprep.subr.bf16.mxu0 %v10248
    %10566 = vmatpush1.bf16.msra.mxu0 %v10247
    %10567 = vmatprep.subr.bf16.mxu0 %v10252
    %10568 = vmatpush1.bf16.msra.mxu0 %v10251
    %10569 = vmatprep.subr.bf16.mxu0 %v10256
    %10570 = vmatpush1.bf16.msra.mxu0 %v10255
    %10571 = vmatprep.subr.bf16.mxu0 %v10260
    %10572 = vmatpush1.bf16.msra.mxu0 %v10259
    %10573 = vmatprep.subr.bf16.mxu0 %v10264
    %10574 = vmatpush1.bf16.msra.mxu0 %v10263
    %10575 = vmatprep.subr.bf16.mxu0 %v10268
    %10576 = vmatpush1.bf16.msra.mxu0 %v10267
    %10577 = vmatprep.mubr.bf16.mxu0 %v9496
    %10578 = vmatmul.mubr.bf16.gmra.mrb[0].mxu0 %v9495
    %v10579 = vpop.f32.mrb[0].mxu0
    %v10580 = vadd.f32 %v10539, %v10579
    %v10581 = vpop.f32.mrb[0].mxu0
    %v10582 = vadd.f32 %v10541, %v10581
    %v10583 = vpop.f32.mrb[0].mxu0
    %v10584 = vpop.f32.mrb[0].mxu0
    %10585 = vdwg.mxu0
    %10586 = vmatprep.subr.bf16.mxu0 %v10082
    %10587 = vmatpush1.bf16.msra.mxu0 %v10081
    %10588 = vmatprep.subr.bf16.mxu0 %v10086
    %10589 = vmatpush1.bf16.msra.mxu0 %v10085
    %10590 = vmatprep.subr.bf16.mxu0 %v10090
    %10591 = vmatpush1.bf16.msra.mxu0 %v10089
    %10592 = vmatprep.subr.bf16.mxu0 %v10094
    %10593 = vmatpush1.bf16.msra.mxu0 %v10093
    %10594 = vmatprep.subr.bf16.mxu0 %v10098
    %10595 = vmatpush1.bf16.msra.mxu0 %v10097
    %10596 = vmatprep.subr.bf16.mxu0 %v10102
    %10597 = vmatpush1.bf16.msra.mxu0 %v10101
    %10598 = vmatprep.subr.bf16.mxu0 %v10106
    %10599 = vmatpush1.bf16.msra.mxu0 %v10105
    %10600 = vmatprep.subr.bf16.mxu0 %v10110
    %10601 = vmatpush1.bf16.msra.mxu0 %v10109
    %10602 = vmatprep.subr.bf16.mxu0 %v10114
    %10603 = vmatpush1.bf16.msra.mxu0 %v10113
    %10604 = vmatprep.subr.bf16.mxu0 %v10118
    %10605 = vmatpush1.bf16.msra.mxu0 %v10117
    %10606 = vmatprep.subr.bf16.mxu0 %v10122
    %10607 = vmatpush1.bf16.msra.mxu0 %v10121
    %10608 = vmatprep.subr.bf16.mxu0 %v10126
    %10609 = vmatpush1.bf16.msra.mxu0 %v10125
    %10610 = vmatprep.subr.bf16.mxu0 %v10130
    %10611 = vmatpush1.bf16.msra.mxu0 %v10129
    %10612 = vmatprep.subr.bf16.mxu0 %v10134
    %10613 = vmatpush1.bf16.msra.mxu0 %v10133
    %10614 = vmatprep.subr.bf16.mxu0 %v10138
    %10615 = vmatpush1.bf16.msra.mxu0 %v10137
    %10616 = vmatprep.subr.bf16.mxu0 %v10142
    %10617 = vmatpush1.bf16.msra.mxu0 %v10141
    %10618 = vmatprep.mubr.bf16.mxu0 %v9492
    %10619 = vmatmul.mubr.bf16.gmra.mrb[0].mxu0 %v9491
    %v10620 = vpop.f32.mrb[0].mxu0
    %v10621 = vadd.f32 0.0, %v10620
    %v10622 = vpop.f32.mrb[0].mxu0
    %v10623 = vadd.f32 0.0, %v10622
    %v10624 = vpop.f32.mrb[0].mxu0
    %v10625 = vpop.f32.mrb[0].mxu0
    %10626 = vdwg.mxu0
    %10627 = vmatprep.subr.bf16.mxu0 %v10146
    %10628 = vmatpush1.bf16.msra.mxu0 %v10145
    %10629 = vmatprep.subr.bf16.mxu0 %v10150
    %10630 = vmatpush1.bf16.msra.mxu0 %v10149
    %10631 = vmatprep.subr.bf16.mxu0 %v10154
    %10632 = vmatpush1.bf16.msra.mxu0 %v10153
    %10633 = vmatprep.subr.bf16.mxu0 %v10158
    %10634 = vmatpush1.bf16.msra.mxu0 %v10157
    %10635 = vmatprep.subr.bf16.mxu0 %v10162
    %10636 = vmatpush1.bf16.msra.mxu0 %v10161
    %10637 = vmatprep.subr.bf16.mxu0 %v10166
    %10638 = vmatpush1.bf16.msra.mxu0 %v10165
    %10639 = vmatprep.subr.bf16.mxu0 %v10170
    %10640 = vmatpush1.bf16.msra.mxu0 %v10169
    %10641 = vmatprep.subr.bf16.mxu0 %v10174
    %10642 = vmatpush1.bf16.msra.mxu0 %v10173
    %10643 = vmatprep.subr.bf16.mxu0 %v10178
    %10644 = vmatpush1.bf16.msra.mxu0 %v10177
    %10645 = vmatprep.subr.bf16.mxu0 %v10182
    %10646 = vmatpush1.bf16.msra.mxu0 %v10181
    %10647 = vmatprep.subr.bf16.mxu0 %v10186
    %10648 = vmatpush1.bf16.msra.mxu0 %v10185
    %10649 = vmatprep.subr.bf16.mxu0 %v10190
    %10650 = vmatpush1.bf16.msra.mxu0 %v10189
    %10651 = vmatprep.subr.bf16.mxu0 %v10194
    %10652 = vmatpush1.bf16.msra.mxu0 %v10193
    %10653 = vmatprep.subr.bf16.mxu0 %v10198
    %10654 = vmatpush1.bf16.msra.mxu0 %v10197
    %10655 = vmatprep.subr.bf16.mxu0 %v10202
    %10656 = vmatpush1.bf16.msra.mxu0 %v10201
    %10657 = vmatprep.subr.bf16.mxu0 %v10206
    %10658 = vmatpush1.bf16.msra.mxu0 %v10205
    %10659 = vmatprep.mubr.bf16.mxu0 %v9494
    %10660 = vmatmul.mubr.bf16.gmra.mrb[0].mxu0 %v9493
    %v10661 = vpop.f32.mrb[0].mxu0
    %v10662 = vadd.f32 %v10621, %v10661
    %v10663 = vpop.f32.mrb[0].mxu0
    %v10664 = vadd.f32 %v10623, %v10663
    %v10665 = vpop.f32.mrb[0].mxu0
    %v10666 = vpop.f32.mrb[0].mxu0
    %10667 = vdwg.mxu0
    %10668 = vmatprep.subr.bf16.mxu0 %v10210
    %10669 = vmatpush1.bf16.msra.mxu0 %v10209
    %10670 = vmatprep.subr.bf16.mxu0 %v10214
    %10671 = vmatpush1.bf16.msra.mxu0 %v10213
    %10672 = vmatprep.subr.bf16.mxu0 %v10218
    %10673 = vmatpush1.bf16.msra.mxu0 %v10217
    %10674 = vmatprep.subr.bf16.mxu0 %v10222
    %10675 = vmatpush1.bf16.msra.mxu0 %v10221
    %10676 = vmatprep.subr.bf16.mxu0 %v10226
    %10677 = vmatpush1.bf16.msra.mxu0 %v10225
    %10678 = vmatprep.subr.bf16.mxu0 %v10230
    %10679 = vmatpush1.bf16.msra.mxu0 %v10229
    %10680 = vmatprep.subr.bf16.mxu0 %v10234
    %10681 = vmatpush1.bf16.msra.mxu0 %v10233
    %10682 = vmatprep.subr.bf16.mxu0 %v10238
    %10683 = vmatpush1.bf16.msra.mxu0 %v10237
    %10684 = vmatprep.subr.bf16.mxu0 %v10242
    %10685 = vmatpush1.bf16.msra.mxu0 %v10241
    %10686 = vmatprep.subr.bf16.mxu0 %v10246
    %10687 = vmatpush1.bf16.msra.mxu0 %v10245
    %10688 = vmatprep.subr.bf16.mxu0 %v10250
    %10689 = vmatpush1.bf16.msra.mxu0 %v10249
    %10690 = vmatprep.subr.bf16.mxu0 %v10254
    %10691 = vmatpush1.bf16.msra.mxu0 %v10253
    %10692 = vmatprep.subr.bf16.mxu0 %v10258
    %10693 = vmatpush1.bf16.msra.mxu0 %v10257
    %10694 = vmatprep.subr.bf16.mxu0 %v10262
    %10695 = vmatpush1.bf16.msra.mxu0 %v10261
    %10696 = vmatprep.subr.bf16.mxu0 %v10266
    %10697 = vmatpush1.bf16.msra.mxu0 %v10265
    %10698 = vmatprep.subr.bf16.mxu0 %v10270
    %10699 = vmatpush1.bf16.msra.mxu0 %v10269
    %10700 = vmatprep.mubr.bf16.mxu0 %v9496
    %10701 = vmatmul.mubr.bf16.gmra.mrb[0].mxu0 %v9495
    %v10702 = vpop.f32.mrb[0].mxu0
    %v10703 = vadd.f32 %v10662, %v10702
    %v10704 = vpop.f32.mrb[0].mxu0
    %v10705 = vadd.f32 %v10664, %v10704
    %v10706 = vpop.f32.mrb[0].mxu0
    %v10707 = vpop.f32.mrb[0].mxu0
    %10708 = vdwg.mxu0
    %v10709 = vld [vmem:[%s18] sm:$0xf]
    %v10710 = vld [vmem:[%s19] sm:$0xf]
    %v10711 = vrot.slane %v10580, 4
    %v10712 = vadd.f32 %v10580, %v10711
    %v10713 = vrot.slane %v10712, 2
    %v10714 = vadd.f32 %v10712, %v10713
    %v10715 = vrot.slane %v10714, 1
    %v10716 = vadd.f32 %v10714, %v10715
    %v10717 = vrot.slane %v10582, 4
    %v10718 = vadd.f32 %v10582, %v10717
    %v10719 = vrot.slane %v10718, 2
    %v10720 = vadd.f32 %v10718, %v10719
    %v10721 = vrot.slane %v10720, 1
    %v10722 = vadd.f32 %v10720, %v10721
    %v10723 = vrot.slane %v10703, 4
    %v10724 = vadd.f32 %v10703, %v10723
    %v10725 = vrot.slane %v10724, 2
    %v10726 = vadd.f32 %v10724, %v10725
    %v10727 = vrot.slane %v10726, 1
    %v10728 = vadd.f32 %v10726, %v10727
    %v10729 = vrot.slane %v10705, 4
    %v10730 = vadd.f32 %v10705, %v10729
    %v10731 = vrot.slane %v10730, 2
    %v10732 = vadd.f32 %v10730, %v10731
    %v10733 = vrot.slane %v10732, 1
    %v10734 = vadd.f32 %v10732, %v10733
    %v10735 = vrcp.pop 8.0
    %v10736 = vmul.f32 %v10716, %v10735
    %v10737 = vmul.f32 %v10722, %v10735
    %v10738 = vmul.f32 %v10728, %v10735
    %v10739 = vmul.f32 %v10734, %v10735
    %v10740 = vsub.f32 %v10580, %v10736
    %v10741 = vsub.f32 %v10582, %v10737
    %v10742 = vsub.f32 %v10703, %v10738
    %v10743 = vsub.f32 %v10705, %v10739
    %v10744 = vmul.f32 %v10740, %v10740
    %v10745 = vmul.f32 %v10741, %v10741
    %v10746 = vmul.f32 %v10742, %v10742
    %v10747 = vmul.f32 %v10743, %v10743
    %v10748 = vrot.slane %v10744, 4
    %v10749 = vadd.f32 %v10744, %v10748
    %v10750 = vrot.slane %v10749, 2
    %v10751 = vadd.f32 %v10749, %v10750
    %v10752 = vrot.slane %v10751, 1
    %v10753 = vadd.f32 %v10751, %v10752
    %v10754 = vrot.slane %v10745, 4
    %v10755 = vadd.f32 %v10745, %v10754
    %v10756 = vrot.slane %v10755, 2
    %v10757 = vadd.f32 %v10755, %v10756
    %v10758 = vrot.slane %v10757, 1
    %v10759 = vadd.f32 %v10757, %v10758
    %v10760 = vrot.slane %v10746, 4
    %v10761 = vadd.f32 %v10746, %v10760
    %v10762 = vrot.slane %v10761, 2
    %v10763 = vadd.f32 %v10761, %v10762
    %v10764 = vrot.slane %v10763, 1
    %v10765 = vadd.f32 %v10763, %v10764
    %v10766 = vrot.slane %v10747, 4
    %v10767 = vadd.f32 %v10747, %v10766
    %v10768 = vrot.slane %v10767, 2
    %v10769 = vadd.f32 %v10767, %v10768
    %v10770 = vrot.slane %v10769, 1
    %v10771 = vadd.f32 %v10769, %v10770
    %v10772 = vmul.f32 %v10753, %v10735
    %v10773 = vmul.f32 %v10759, %v10735
    %v10774 = vmul.f32 %v10765, %v10735
    %v10775 = vmul.f32 %v10771, %v10735
    %v10776 = vadd.f32 %v10772, 1e-05
    %v10777 = vadd.f32 %v10773, 1e-05
    %v10778 = vadd.f32 %v10774, 1e-05
    %v10779 = vadd.f32 %v10775, 1e-05
    %v10780 = vrsqrt.pop %v10776
    %v10781 = vrsqrt.pop %v10777
    %v10782 = vrsqrt.pop %v10778
    %v10783 = vrsqrt.pop %v10779
    %v10788 = vcombine.low %v10780, %v10781
    %v10789 = vcombine.low %v10782, %v10783
    %v10791 = vunpack.c.l.s4 1966171168
    %v10792 = vunpack.c.0.s8 %v10791
    %v10793 = vlaneseq
    %v10794 = vshrl.u32 %v10793, 7
    %v10795 = vsub.s32 %v10792, %v10794
    %v10796 = vrot.slane %v10788, %v10795
    %v10798 = vunpack.c.l.s4 1966171168
    %v10799 = vunpack.c.0.s8 %v10798
    %v10800 = vlaneseq
    %v10801 = vshrl.u32 %v10800, 7
    %v10802 = vsub.s32 %v10799, %v10801
    %v10803 = vrot.slane %v10789, %v10802
    %v10804 = vcombine.low %v10796, %v10803
    %v10806 = vunpack.c.l.s4 1966171168
    %v10807 = vunpack.c.0.s8 %v10806
    %v10808 = vlaneseq
    %v10809 = vshrl.u32 %v10808, 7
    %v10810 = vsub.s32 %v10807, %v10809
    %v10811 = vrot.slane %v10804, %v10810
    %v10813 = vmul.f32 %v10709, %v10811
    %v10815 = vlaneseq
    %v10816 = vshrl.u32 %v10815, 7
    %v10817 = vsub.s32 0, %v10816
    %v10818 = vrot.slane %v10813, %v10817
    %v10819 = vlaneseq
    %v10820 = vshrl.u32 %v10819, 7
    %v10821 = vsub.s32 1, %v10820
    %v10822 = vrot.slane %v10813, %v10821
    %v10823 = vlaneseq
    %v10824 = vshrl.u32 %v10823, 7
    %v10825 = vsub.s32 2, %v10824
    %v10826 = vrot.slane %v10813, %v10825
    %v10827 = vlaneseq
    %v10828 = vshrl.u32 %v10827, 7
    %v10829 = vsub.s32 3, %v10828
    %v10830 = vrot.slane %v10813, %v10829
    %v10835 = vmul.f32 %v10736, %v10818
    %v10836 = vmul.f32 %v10737, %v10822
    %v10837 = vmul.f32 %v10738, %v10826
    %v10838 = vmul.f32 %v10739, %v10830
    %v10843 = vcombine.low %v10835, %v10836
    %v10844 = vcombine.low %v10837, %v10838
    %v10846 = vunpack.c.l.s4 1966171168
    %v10847 = vunpack.c.0.s8 %v10846
    %v10848 = vlaneseq
    %v10849 = vshrl.u32 %v10848, 7
    %v10850 = vsub.s32 %v10847, %v10849
    %v10851 = vrot.slane %v10843, %v10850
    %v10853 = vunpack.c.l.s4 1966171168
    %v10854 = vunpack.c.0.s8 %v10853
    %v10855 = vlaneseq
    %v10856 = vshrl.u32 %v10855, 7
    %v10857 = vsub.s32 %v10854, %v10856
    %v10858 = vrot.slane %v10844, %v10857
    %v10859 = vcombine.low %v10851, %v10858
    %v10861 = vunpack.c.l.s4 1966171168
    %v10862 = vunpack.c.0.s8 %v10861
    %v10863 = vlaneseq
    %v10864 = vshrl.u32 %v10863, 7
    %v10865 = vsub.s32 %v10862, %v10864
    %v10866 = vrot.slane %v10859, %v10865
    %v10868 = vsub.f32 %v10710, %v10866
    %v10869 = vmul.f32 %v10580, %v10818
    %v10870 = vmul.f32 %v10582, %v10822
    %v10871 = vmul.f32 %v10703, %v10826
    %v10872 = vmul.f32 %v10705, %v10830
    %v10874 = vlaneseq
    %v10875 = vshrl.u32 %v10874, 7
    %v10876 = vsub.s32 0, %v10875
    %v10877 = vrot.slane %v10868, %v10876
    %v10878 = vlaneseq
    %v10879 = vshrl.u32 %v10878, 7
    %v10880 = vsub.s32 1, %v10879
    %v10881 = vrot.slane %v10868, %v10880
    %v10882 = vlaneseq
    %v10883 = vshrl.u32 %v10882, 7
    %v10884 = vsub.s32 2, %v10883
    %v10885 = vrot.slane %v10868, %v10884
    %v10886 = vlaneseq
    %v10887 = vshrl.u32 %v10886, 7
    %v10888 = vsub.s32 3, %v10887
    %v10889 = vrot.slane %v10868, %v10888
    %v10894 = vadd.f32 %v10869, %v10877
    %v10895 = vadd.f32 %v10870, %v10881
    %v10896 = vadd.f32 %v10871, %v10885
    %v10897 = vadd.f32 %v10872, %v10889
    %v10898 = vmax.f32 %v10894, 0.0
    %v10899 = vmax.f32 %v10895, 0.0
    %v10900 = vmax.f32 %v10896, 0.0
    %v10901 = vmax.f32 %v10897, 0.0
    %10902 = vst [vmem:[%s20] sm:$0xff] %v10898
    %10903 = vst [vmem:[%s20 + $0x8] sm:$0xff] %v10899
    %10904 = vst [vmem:[%s20 + $0x10] sm:$0xff] %v10900
    %10905 = vst [vmem:[%s20 + $0x18] sm:$0xff] %v10901
    // Predicated region
    $region82: #{encoder_forward.1} parent=1 // pred_check
      _
    $region83: #{encoder_forward.1} parent=1 // pred_check_branch
      %10907 = sbr.rel (0) target = $region85
    $region84: #{encoder_forward.1} parent=1 // pred_region
      _
    $region85: #{encoder_forward.1} parent=1 // pred_fallthru
      _
    // Predicated region
    $region86: #{encoder_forward.1} parent=1 // pred_check
      _
    $region87: #{encoder_forward.1} parent=1 // pred_check_branch
      %10909 = sbr.rel (0) target = $region89
    $region88: #{encoder_forward.1} parent=1 // pred_region
      %s10911 = ssub.s32 1024, 1024
      %10912 = vsyncadd [#allocation7], %s10911
      %s10913 = sshll.u32 [#allocation6], 4
      %s10914 = int_to_ptr.vmem [resolvable:$true] %s10913
      %10919 = dma.vmem_to_hbm [thread:$0]  %s10914, 1024, %s21, [#allocation7], 256, 256, 16
    $region89: #{encoder_forward.1} parent=1 // pred_fallthru
      _
    // Predicated region
    $region90: #{encoder_forward.1} parent=1 // pred_check
      _
    $region91: #{encoder_forward.1} parent=1 // pred_check_branch
      %10921 = sbr.rel (0) target = $region93
    $region92: #{encoder_forward.1} parent=1 // pred_region
      %s10923 = ssub.s32 2048, 2048
      %10924 = vsyncadd [#allocation9], %s10923
      %s10925 = sshll.u32 [#allocation8], 4
      %s10926 = int_to_ptr.vmem [resolvable:$true] %s10925
      %10931 = dma.vmem_to_hbm [thread:$0]  %s10926, 2048, %s22, [#allocation9], 128, 128, 8
    $region93: #{encoder_forward.1} parent=1 // pred_fallthru
      _
    // Predicated region
    $region94: #{encoder_forward.1} parent=1 // pred_check
      _
    $region95: #{encoder_forward.1} parent=1 // pred_check_branch
      %10933 = sbr.rel (0) target = $region97
    $region96: #{encoder_forward.1} parent=1 // pred_region
      _
    $region97: #{encoder_forward.1} parent=1 // pred_fallthru
      _
    // Predicated region
    $region98: #{encoder_forward.1} parent=1 // pred_check
      _
    $region99: #{encoder_forward.1} parent=1 // pred_check_branch
      %10935 = sbr.rel (0) target = $region101
    $region100: #{encoder_forward.1} parent=1 // pred_region
      _
    $region101: #{encoder_forward.1} parent=1 // pred_fallthru
      _
    // Predicated region
    $region102: #{encoder_forward.1} parent=1 // pred_check
      _
    $region103: #{encoder_forward.1} parent=1 // pred_check_branch
      %10937 = sbr.rel (0) target = $region105
    $region104: #{encoder_forward.1} parent=1 // pred_region
      %10938 = dma.done [#allocation7], 1024
    $region105: #{encoder_forward.1} parent=1 // pred_fallthru
      _
    // Predicated region
    $region106: #{encoder_forward.1} parent=1 // pred_check
      _
    $region107: #{encoder_forward.1} parent=1 // pred_check_branch
      %10940 = sbr.rel (0) target = $region109
    $region108: #{encoder_forward.1} parent=1 // pred_region
      %10941 = dma.done [#allocation9], 2048
    $region109: #{encoder_forward.1} parent=1 // pred_fallthru
      _
    // Predicated region
    $region110: #{encoder_forward.1} parent=1 // pred_check
      _
    $region111: #{encoder_forward.1} parent=1 // pred_check_branch
      %10943 = sbr.rel (0) target = $region113
    $region112: #{encoder_forward.1} parent=1 // pred_region
      _
    $region113: #{encoder_forward.1} parent=1 // pred_fallthru
      _
    %10944 = vsyncpa [#allocation7], 1
    %10945 = vsyncpa [#allocation9], 1

</llo_original>
